<compile_context>
chip_gen: v7x
topology: tpu7x:2x2x1
jax: 0.10.0
libtpu: 0.0.40
codegen_flags: <defaults>
</compile_context>

<pallas_src>
import functools

import jax
import jax.numpy as jnp
from jax import lax
from jax.experimental import pallas as pl
from jax.experimental.pallas import tpu as pltpu

EPS = 1e-5
MAX_TILE_HW = 2048             # pixels (lanes) per stats-kernel grid step
VMEM_LIMIT = 32 * 1024 * 1024  # safe on v5e/v6e (128 MiB) and v7x (64 MiB)
MXU_PRECISION = lax.Precision.HIGHEST  # pin full-f32 matmul behaviour


def _round_up(x, m):
    return (x + m - 1) // m * m


def _pixel_tiling(hw):
    """(tile, num_tiles, ragged) for the pixel (lane) axis of the stats kernels.

    tile == full HW when it fits (full-dim blocks are always legal); otherwise
    a 128-multiple tile with a cdiv grid and an in-kernel mask on the ragged
    last tile (no more "one giant tile" fallback).
    """
    if hw <= MAX_TILE_HW:
        return hw, 1, False
    tile = MAX_TILE_HW
    return tile, pl.cdiv(hw, tile), (hw % tile) != 0


# ------------------------- kernel A: x moments ----------------------------- #
# Single fused pass over x producing per-channel sum / sum-of-squares for the
# BN1 batch statistics.  The (C,1) outputs use constant block indices, so they
# stay resident in VMEM across the whole grid and hit HBM exactly once.

def _x_moments_kernel(x_ref, sum_ref, sq_ref, *, hw, ragged):
    n, t = pl.program_id(0), pl.program_id(1)

    @pl.when((n == 0) & (t == 0))
    def _init():
        sum_ref[...] = jnp.zeros_like(sum_ref)
        sq_ref[...] = jnp.zeros_like(sq_ref)

    x = x_ref[0]                                                   # (C, tile)
    if ragged:  # static branch: mask out-of-range pixels of the last tile
        tile = x.shape[1]
        col = t * tile + lax.broadcasted_iota(jnp.int32, (1, tile), 1)
        x = jnp.where(col < hw, x, 0.0)
    sum_ref[...] += jnp.sum(x, axis=1, keepdims=True)
    sq_ref[...] += jnp.sum(x * x, axis=1, keepdims=True)


def x_moments(xf):
    N, C, HW = xf.shape
    tile, nt, ragged = _pixel_tiling(HW)
    kernel = functools.partial(_x_moments_kernel, hw=HW, ragged=ragged)
    return pl.pallas_call(
        kernel,
        out_shape=(jax.ShapeDtypeStruct((C, 1), jnp.float32),
                   jax.ShapeDtypeStruct((C, 1), jnp.float32)),
        grid_spec=pltpu.PrefetchScalarGridSpec(
            num_scalar_prefetch=0,
            grid=(N, nt),
            in_specs=[pl.BlockSpec((1, C, tile), lambda n, t: (n, 0, t))],
            out_specs=(pl.BlockSpec((C, 1), lambda n, t: (0, 0)),
                       pl.BlockSpec((C, 1), lambda n, t: (0, 0))),
        ),
        compiler_params=pltpu.CompilerParams(
            # accumulator output spans both grid axes -> both "arbitrary"
            dimension_semantics=("arbitrary", "arbitrary"),
            vmem_limit_bytes=VMEM_LIMIT,
        ),
    )(xf)


# ------------------------- kernel B: y1 moments ---------------------------- #
# BN1 fold + ReLU + 1x1 conv, but only the per-channel sum / sum-of-squares of
# y1 leave the chip (BN2 statistics).  y1 itself never touches HBM.

def _y1_moments_kernel(x_ref, scale_ref, shift_ref, w_ref, sum_ref, sq_ref,
                       *, hw, ragged):
    n, t = pl.program_id(0), pl.program_id(1)

    @pl.when((n == 0) & (t == 0))
    def _init():
        sum_ref[...] = jnp.zeros_like(sum_ref)
        sq_ref[...] = jnp.zeros_like(sq_ref)

    a = jnp.maximum(x_ref[0] * scale_ref[...] + shift_ref[...], 0.0)  # (Cin,T)
    if ragged:  # zero padded columns -> zero y columns -> correct sums
        tile = a.shape[1]
        col = t * tile + lax.broadcasted_iota(jnp.int32, (1, tile), 1)
        a = jnp.where(col < hw, a, 0.0)
    y = jnp.dot(w_ref[...], a, preferred_element_type=jnp.float32,
                precision=MXU_PRECISION)                              # (C4, T)
    sum_ref[...] += jnp.sum(y, axis=1, keepdims=True)
    sq_ref[...] += jnp.sum(y * y, axis=1, keepdims=True)


def y1_moments(xf, scale1, shift1, w1t):
    N, Cin, HW = xf.shape
    C4 = w1t.shape[0]
    tile, nt, ragged = _pixel_tiling(HW)
    kernel = functools.partial(_y1_moments_kernel, hw=HW, ragged=ragged)
    return pl.pallas_call(
        kernel,
        out_shape=(jax.ShapeDtypeStruct((C4, 1), jnp.float32),
                   jax.ShapeDtypeStruct((C4, 1), jnp.float32)),
        grid_spec=pltpu.PrefetchScalarGridSpec(
            num_scalar_prefetch=0,
            grid=(N, nt),
            in_specs=[
                pl.BlockSpec((1, Cin, tile), lambda n, t: (n, 0, t)),
                pl.BlockSpec((Cin, 1), lambda n, t: (0, 0)),
                pl.BlockSpec((Cin, 1), lambda n, t: (0, 0)),
                pl.BlockSpec((C4, Cin), lambda n, t: (0, 0)),
            ],
            out_specs=(pl.BlockSpec((C4, 1), lambda n, t: (0, 0)),
                       pl.BlockSpec((C4, 1), lambda n, t: (0, 0))),
        ),
        compiler_params=pltpu.CompilerParams(
            dimension_semantics=("arbitrary", "arbitrary"),
            vmem_limit_bytes=VMEM_LIMIT,
        ),
    )(xf, scale1, shift1, w1t)


# ----------------- kernel C: fused conv1+bn2+relu+conv2+cat ---------------- #

def _fused_block_kernel(x_ref, scale1_ref, shift1_ref, w1_ref,
                        scale2_ref, shift2_ref, w2_ref, mask_ref,
                        o_ref, zpad_ref, acc_ref, *, cin, W, OFF):
    HW = x_ref.shape[2]
    C4, L = zpad_ref.shape
    G = acc_ref.shape[0]

    # torch.cat([x, out], 1) fused: x passes straight through to channels
    # [0, Cin) of the output block (no separate XLA concat read/write of y2).
    x = x_ref[0]                                                   # (Cin, HW)
    o_ref[0, 0:cin, :] = x

    # Recompute y1 = conv1(relu(bn1(x))) from the x tile already in VMEM:
    # the cheap repeated 1x1 matmul replaces the f32 y1 HBM round trip.
    a1 = jnp.maximum(x * scale1_ref[...] + shift1_ref[...], 0.0)
    y1 = jnp.dot(w1_ref[...], a1, preferred_element_type=jnp.float32,
                 precision=MXU_PRECISION)                          # (C4, HW)

    # BN2 fold + ReLU.
    a2 = jnp.maximum(y1 * scale2_ref[...] + shift2_ref[...], 0.0)  # (C4, HW)

    # Zero only the halo strips; the interior is fully overwritten each image.
    # (Per-image strip zeroing keeps the image grid axis megacore-safe.)
    zpad_ref[:, 0:OFF] = jnp.zeros((C4, OFF), jnp.float32)
    zpad_ref[:, OFF + HW:L] = jnp.zeros((C4, L - OFF - HW), jnp.float32)
    zpad_ref[:, OFF:OFF + HW] = a2

    m_left = mask_ref[0:1, :]    # 0 where the tap would read column j-1 < 0
    m_right = mask_ref[1:2, :]   # 0 where the tap would read column j+1 >= W

    def tap(dy, dx):
        start = OFF + (dy - 1) * W + (dx - 1)      # static slice start
        sl = zpad_ref[:, start:start + HW]                         # (C4, HW)
        # TODO(synk): if a v6e/v7x bundle dump shows the MXU path binding, fold
        # the three dy taps of one column into K (3 matmuls with K=3*C4).
        return jnp.dot(w2_ref[dy * 3 + dx], sl,
                       preferred_element_type=jnp.float32,
                       precision=MXU_PRECISION)                    # (G, HW)

    # 3x3 conv as 9 shifted matmuls, accumulated into a VMEM scratch
    # (ref accumulation -> MRB-friendly on v7x).  Centre column needs no edge
    # mask; left/right column groups share one mask multiply each.
    acc_ref[...] = tap(0, 1)
    acc_ref[...] += tap(1, 1)
    acc_ref[...] += tap(2, 1)
    acc_ref[...] += (tap(0, 0) + tap(1, 0) + tap(2, 0)) * m_left
    acc_ref[...] += (tap(0, 2) + tap(1, 2) + tap(2, 2)) * m_right

    o_ref[0, cin:cin + G, :] = acc_ref[...]


def fused_block(xf, scale1, shift1, w1t, scale2, shift2, w2t, edge_mask, W):
    # TODO(synk): halo-tile the H*W axis in row bands for very large images and
    # fold multiple images into the lane axis for very small ones; one image
    # per grid step is ample for DenseNet block shapes exercised here.
    N, Cin, HW = xf.shape
    C4 = w1t.shape[0]
    G = w2t.shape[1]
    OFF = _round_up(W + 1, 128)   # lane-aligned interior offset in the scratch
    L = 2 * OFF + HW
    kernel = functools.partial(_fused_block_kernel, cin=Cin, W=W, OFF=OFF)
    return pl.pallas_call(
        kernel,
        out_shape=jax.ShapeDtypeStruct((N, Cin + G, HW), jnp.float32),
        grid_spec=pltpu.PrefetchScalarGridSpec(
            num_scalar_prefetch=0,
            grid=(N,),
            in_specs=[
                pl.BlockSpec((1, Cin, HW), lambda n: (n, 0, 0)),
                pl.BlockSpec((Cin, 1), lambda n: (0, 0)),
                pl.BlockSpec((Cin, 1), lambda n: (0, 0)),
                pl.BlockSpec((C4, Cin), lambda n: (0, 0)),
                pl.BlockSpec((C4, 1), lambda n: (0, 0)),
                pl.BlockSpec((C4, 1), lambda n: (0, 0)),
                pl.BlockSpec((9, G, C4), lambda n: (0, 0, 0)),
                pl.BlockSpec((2, HW), lambda n: (0, 0)),
            ],
            out_specs=pl.BlockSpec((1, Cin + G, HW), lambda n: (n, 0, 0)),
            scratch_shapes=[pltpu.VMEM((C4, L), jnp.float32),
                            pltpu.VMEM((G, HW), jnp.float32)],
        ),
        compiler_params=pltpu.CompilerParams(
            dimension_semantics=("parallel",),
            vmem_limit_bytes=VMEM_LIMIT,
        ),
    )(xf, scale1, shift1, w1t, scale2, shift2, w2t, edge_mask)


# --------------------------- bottleneck forward ---------------------------- #

@jax.jit
def bottleneck_forward(x, w1, w2, g1, b1, g2, b2):
    """x: (N, C_in, H, W) NCHW float32 -> (N, C_in + growth, H, W) NCHW."""
    N, Cin, H, W = x.shape
    C4 = w1.shape[0]          # growth_rate * 4
    G = w2.shape[0]           # growth_rate
    HW = H * W
    cnt = float(N * HW)

    xf = x.reshape(N, Cin, HW)            # free reshape; stays NCHW

    # BN1 batch statistics (training mode) from one fused pass over x.
    s1, q1 = x_moments(xf)
    mean1 = s1[:, 0] / cnt
    # TODO(synk): E[x^2]-E[x]^2 in f32 can lose precision for huge N*HW; use a
    # compensated two-level accumulation if the tolerance ever tightens.
    var1 = q1[:, 0] / cnt - mean1 * mean1            # biased, as BatchNorm2d
    inv1 = g1 / jnp.sqrt(var1 + EPS)
    scale1 = inv1.reshape(Cin, 1)
    shift1 = (b1 - mean1 * inv1).reshape(Cin, 1)

    w1t = w1[:, :, 0, 0]                  # (C4, Cin): y1 = w1t @ activated(x)

    # BN2 batch statistics from one pass; y1 never touches HBM.
    s2, q2 = y1_moments(xf, scale1, shift1, w1t)
    mean2 = s2[:, 0] / cnt
    var2 = q2[:, 0] / cnt - mean2 * mean2
    inv2 = g2 / jnp.sqrt(var2 + EPS)
    scale2 = inv2.reshape(C4, 1)
    shift2 = (b2 - mean2 * inv2).reshape(C4, 1)

    # conv2 weights per 3x3 tap, transposed for the (G,C4)@(C4,HW) matmuls.
    w2t = jnp.transpose(w2, (2, 3, 0, 1)).reshape(9, G, C4)

    # Masks zeroing the taps that would wrap across the left/right image edge.
    w_idx = jnp.arange(HW, dtype=jnp.int32) % W
    edge_mask = jnp.stack([w_idx >= 1, w_idx <= W - 2]).astype(jnp.float32)

    out = fused_block(xf, scale1, shift1, w1t, scale2, shift2, w2t,
                      edge_mask, W)                   # (N, Cin+G, HW)
    return out.reshape(N, Cin + G, H, W)


# --------------------------- pure-JAX reference ----------------------------- #

def reference_forward(x, w1, w2, g1, b1, g2, b2):
    def bn(t, gamma, beta):
        mean = jnp.mean(t, axis=(0, 2, 3), keepdims=True)
        var = jnp.var(t, axis=(0, 2, 3), keepdims=True)
        return ((t - mean) / jnp.sqrt(var + EPS)) * gamma.reshape(1, -1, 1, 1) \
            + beta.reshape(1, -1, 1, 1)

    dn = ("NCHW", "OIHW", "NCHW")
    h = jax.nn.relu(bn(x, g1, b1))
    h = lax.conv_general_dilated(h, w1, (1, 1), "VALID", dimension_numbers=dn,
                                 precision=lax.Precision.HIGHEST)
    h = jax.nn.relu(bn(h, g2, b2))
    h = lax.conv_general_dilated(h, w2, (1, 1), "SAME", dimension_numbers=dn,
                                 precision=lax.Precision.HIGHEST)
    return jnp.concatenate([x, h], axis=1)


# ---------------------------------- main ----------------------------------- #

if __name__ == "__main__":
    N, Cin, H, W = 2, 4, 16, 16
    growth_rate = 4
    C4 = growth_rate * 4

    key = jax.random.PRNGKey(0)
    k = jax.random.split(key, 7)
    x = jax.random.normal(k[0], (N, Cin, H, W), jnp.float32)
    # Deterministic synthetic parameters (shapes follow the module __init__).
    w1 = 0.2 * jax.random.normal(k[1], (C4, Cin, 1, 1), jnp.float32)
    w2 = 0.1 * jax.random.normal(k[2], (growth_rate, C4, 3, 3), jnp.float32)
    g1 = 1.0 + 0.1 * jax.random.normal(k[3], (Cin,), jnp.float32)
    b1 = 0.1 * jax.random.normal(k[4], (Cin,), jnp.float32)
    g2 = 1.0 + 0.1 * jax.random.normal(k[5], (C4,), jnp.float32)
    b2 = 0.1 * jax.random.normal(k[6], (C4,), jnp.float32)

    out = bottleneck_forward(x, w1, w2, g1, b1, g2, b2)
    out = jax.block_until_ready(out)

    ref = reference_forward(x, w1, w2, g1, b1, g2, b2)
    assert out.shape == (N, Cin + growth_rate, H, W), out.shape
    err = float(jnp.max(jnp.abs(out - ref)))
    assert jnp.allclose(out, ref, atol=1e-4, rtol=1e-4), err

    print("KERNEL_OK")
</pallas_src>

<mosaic_0001>
module attributes {stable_mosaic.version = 11 : i64} {
  func.func @_x_moments_kernel(%arg0: i32, %arg1: i32, %arg2: memref<1x4x256xf32, #tpu.memory_space<vmem>>, %arg3: memref<4x1xf32, #tpu.memory_space<vmem>>, %arg4: memref<4x1xf32, #tpu.memory_space<vmem>>) attributes {dimension_semantics = [#tpu.dimension_semantics<arbitrary>, #tpu.dimension_semantics<arbitrary>], iteration_bounds = array<i64: 2, 1>, scalar_prefetch = 0 : i64, scratch_operands = 0 : i64, tpu.core_type = #tpu.core_type<tc>, window_params = [{transform_indices = @transform_0, window_bounds = array<i64: 1, 4, 256>}, {pipeline_mode = #tpu.pipeline_mode<synchronous>, transform_indices = @transform_1, window_bounds = array<i64: 4, 1>}, {pipeline_mode = #tpu.pipeline_mode<synchronous>, transform_indices = @transform_2, window_bounds = array<i64: 4, 1>}]} {
    %c0_i32 = arith.constant 0 : i32
    %0 = arith.cmpi eq, %arg0, %c0_i32 : i32
    %c0_i32_0 = arith.constant 0 : i32
    %1 = arith.cmpi eq, %arg1, %c0_i32_0 : i32
    %2 = arith.andi %0, %1 : i1
    %3 = arith.extui %2 : i1 to i32
    %c0_i32_1 = arith.constant 0 : i32
    %4 = arith.cmpi ne, %3, %c0_i32_1 : i32
    scf.if %4 {
      %cst_13 = arith.constant 0.000000e+00 : f32
      %18 = vector.broadcast %cst_13 : f32 to vector<4x1xf32>
      %c0_14 = arith.constant 0 : index
      %c0_15 = arith.constant 0 : index
      %19 = vector.load %arg3[%c0_14, %c0_15] : memref<4x1xf32, #tpu.memory_space<vmem>>, vector<4x1xf32>
      tpu.vector_store %arg3[%c0_14, %c0_15], %18 {strides = array<i32>} : memref<4x1xf32, #tpu.memory_space<vmem>>, vector<4x1xf32>,
      %cst_16 = arith.constant 0.000000e+00 : f32
      %20 = vector.broadcast %cst_16 : f32 to vector<4x1xf32>
      %c0_17 = arith.constant 0 : index
      %c0_18 = arith.constant 0 : index
      %21 = vector.load %arg4[%c0_17, %c0_18] : memref<4x1xf32, #tpu.memory_space<vmem>>, vector<4x1xf32>
      tpu.vector_store %arg4[%c0_17, %c0_18], %20 {strides = array<i32>} : memref<4x1xf32, #tpu.memory_space<vmem>>, vector<4x1xf32>,
    } else {
    }
    %c0 = arith.constant 0 : index
    %c0_2 = arith.constant 0 : index
    %c0_3 = arith.constant 0 : index
    %5 = vector.load %arg2[%c0, %c0_2, %c0_3] : memref<1x4x256xf32, #tpu.memory_space<vmem>>, vector<1x4x256xf32>
    %6 = vector.shape_cast %5 : vector<1x4x256xf32> to vector<4x256xf32>
    %c0_4 = arith.constant 0 : index
    %c0_5 = arith.constant 0 : index
    %7 = vector.load %arg3[%c0_4, %c0_5] : memref<4x1xf32, #tpu.memory_space<vmem>>, vector<4x1xf32>
    %cst = arith.constant dense<0.000000e+00> : vector<4xf32>
    %8 = vector.multi_reduction <add>, %6, %cst [1] : vector<4x256xf32> to vector<4xf32>
    %9 = vector.shape_cast %8 : vector<4xf32> to vector<4x1xf32>
    %10 = arith.addf %7, %9 : vector<4x1xf32>
    %c0_6 = arith.constant 0 : index
    %c0_7 = arith.constant 0 : index
    %11 = vector.load %arg3[%c0_6, %c0_7] : memref<4x1xf32, #tpu.memory_space<vmem>>, vector<4x1xf32>
    tpu.vector_store %arg3[%c0_6, %c0_7], %10 {strides = array<i32>} : memref<4x1xf32, #tpu.memory_space<vmem>>, vector<4x1xf32>,
    %c0_8 = arith.constant 0 : index
    %c0_9 = arith.constant 0 : index
    %12 = vector.load %arg4[%c0_8, %c0_9] : memref<4x1xf32, #tpu.memory_space<vmem>>, vector<4x1xf32>
    %13 = arith.mulf %6, %6 : vector<4x256xf32>
    %cst_10 = arith.constant dense<0.000000e+00> : vector<4xf32>
    %14 = vector.multi_reduction <add>, %13, %cst_10 [1] : vector<4x256xf32> to vector<4xf32>
    %15 = vector.shape_cast %14 : vector<4xf32> to vector<4x1xf32>
    %16 = arith.addf %12, %15 : vector<4x1xf32>
    %c0_11 = arith.constant 0 : index
    %c0_12 = arith.constant 0 : index
    %17 = vector.load %arg4[%c0_11, %c0_12] : memref<4x1xf32, #tpu.memory_space<vmem>>, vector<4x1xf32>
    tpu.vector_store %arg4[%c0_11, %c0_12], %16 {strides = array<i32>} : memref<4x1xf32, #tpu.memory_space<vmem>>, vector<4x1xf32>,
    return
  }
  func.func @transform_0(%arg0: i32, %arg1: i32) -> (i32, i32, i32) {
    %c0_i32 = arith.constant 0 : i32
    %c0_i32_0 = arith.constant 0 : i32
    return %arg0, %c0_i32, %arg1 : i32, i32, i32
  }
  func.func @transform_1(%arg0: i32, %arg1: i32) -> (i32, i32) {
    %c0_i32 = arith.constant 0 : i32
    %c0_i32_0 = arith.constant 0 : i32
    %c0_i32_1 = arith.constant 0 : i32
    return %c0_i32, %c0_i32_0 : i32, i32
  }
  func.func @transform_2(%arg0: i32, %arg1: i32) -> (i32, i32) {
    %c0_i32 = arith.constant 0 : i32
    %c0_i32_0 = arith.constant 0 : i32
    %c0_i32_1 = arith.constant 0 : i32
    return %c0_i32, %c0_i32_0 : i32, i32
  }
}

module attributes {stable_mosaic.version = 11 : i64} {
  func.func @_y1_moments_kernel(%arg0: i32, %arg1: i32, %arg2: memref<1x4x256xf32, #tpu.memory_space<vmem>>, %arg3: memref<4x1xf32, #tpu.memory_space<vmem>>, %arg4: memref<4x1xf32, #tpu.memory_space<vmem>>, %arg5: memref<16x4xf32, #tpu.memory_space<vmem>>, %arg6: memref<16x1xf32, #tpu.memory_space<vmem>>, %arg7: memref<16x1xf32, #tpu.memory_space<vmem>>) attributes {dimension_semantics = [#tpu.dimension_semantics<arbitrary>, #tpu.dimension_semantics<arbitrary>], iteration_bounds = array<i64: 2, 1>, scalar_prefetch = 0 : i64, scratch_operands = 0 : i64, tpu.core_type = #tpu.core_type<tc>, window_params = [{transform_indices = @transform_0, window_bounds = array<i64: 1, 4, 256>}, {pipeline_mode = #tpu.pipeline_mode<synchronous>, transform_indices = @transform_1, window_bounds = array<i64: 4, 1>}, {pipeline_mode = #tpu.pipeline_mode<synchronous>, transform_indices = @transform_2, window_bounds = array<i64: 4, 1>}, {pipeline_mode = #tpu.pipeline_mode<synchronous>, transform_indices = @transform_3, window_bounds = array<i64: 16, 4>}, {pipeline_mode = #tpu.pipeline_mode<synchronous>, transform_indices = @transform_4, window_bounds = array<i64: 16, 1>}, {pipeline_mode = #tpu.pipeline_mode<synchronous>, transform_indices = @transform_5, window_bounds = array<i64: 16, 1>}]} {
    %c0_i32 = arith.constant 0 : i32
    %0 = arith.cmpi eq, %arg0, %c0_i32 : i32
    %c0_i32_0 = arith.constant 0 : i32
    %1 = arith.cmpi eq, %arg1, %c0_i32_0 : i32
    %2 = arith.andi %0, %1 : i1
    %3 = arith.extui %2 : i1 to i32
    %c0_i32_1 = arith.constant 0 : i32
    %4 = arith.cmpi ne, %3, %c0_i32_1 : i32
    scf.if %4 {
      %cst_21 = arith.constant 0.000000e+00 : f32
      %28 = vector.broadcast %cst_21 : f32 to vector<16x1xf32>
      %c0_22 = arith.constant 0 : index
      %c0_23 = arith.constant 0 : index
      %29 = vector.load %arg6[%c0_22, %c0_23] : memref<16x1xf32, #tpu.memory_space<vmem>>, vector<16x1xf32>
      tpu.vector_store %arg6[%c0_22, %c0_23], %28 {strides = array<i32>} : memref<16x1xf32, #tpu.memory_space<vmem>>, vector<16x1xf32>,
      %cst_24 = arith.constant 0.000000e+00 : f32
      %30 = vector.broadcast %cst_24 : f32 to vector<16x1xf32>
      %c0_25 = arith.constant 0 : index
      %c0_26 = arith.constant 0 : index
      %31 = vector.load %arg7[%c0_25, %c0_26] : memref<16x1xf32, #tpu.memory_space<vmem>>, vector<16x1xf32>
      tpu.vector_store %arg7[%c0_25, %c0_26], %30 {strides = array<i32>} : memref<16x1xf32, #tpu.memory_space<vmem>>, vector<16x1xf32>,
    } else {
    }
    %c0 = arith.constant 0 : index
    %c0_2 = arith.constant 0 : index
    %c0_3 = arith.constant 0 : index
    %5 = vector.load %arg2[%c0, %c0_2, %c0_3] : memref<1x4x256xf32, #tpu.memory_space<vmem>>, vector<1x4x256xf32>
    %6 = vector.shape_cast %5 : vector<1x4x256xf32> to vector<4x256xf32>
    %c0_4 = arith.constant 0 : index
    %c0_5 = arith.constant 0 : index
    %7 = vector.load %arg3[%c0_4, %c0_5] : memref<4x1xf32, #tpu.memory_space<vmem>>, vector<4x1xf32>
    %8 = vector.broadcast %7 : vector<4x1xf32> to vector<4x256xf32>
    %9 = arith.mulf %6, %8 : vector<4x256xf32>
    %c0_6 = arith.constant 0 : index
    %c0_7 = arith.constant 0 : index
    %10 = vector.load %arg4[%c0_6, %c0_7] : memref<4x1xf32, #tpu.memory_space<vmem>>, vector<4x1xf32>
    %11 = vector.broadcast %10 : vector<4x1xf32> to vector<4x256xf32>
    %12 = arith.addf %9, %11 : vector<4x256xf32>
    %cst = arith.constant 0.000000e+00 : f32
    %13 = vector.broadcast %cst : f32 to vector<4x256xf32>
    %14 = arith.maximumf %12, %13 : vector<4x256xf32>
    %c0_8 = arith.constant 0 : index
    %c0_9 = arith.constant 0 : index
    %15 = vector.load %arg5[%c0_8, %c0_9] : memref<16x4xf32, #tpu.memory_space<vmem>>, vector<16x4xf32>
    %cst_10 = arith.constant dense<0.000000e+00> : vector<16x256xf32>
    %16 = tpu.matmul %15, %14, %cst_10 {dimension_numbers = #tpu.dot_dimension_numbers<[1], [0], [0], [1], [0, 0, 1, 1], [], []>, precision = #tpu.contract_precision<fp32>} : vector<16x4xf32>, vector<4x256xf32>, vector<16x256xf32> -> vector<16x256xf32>
    %c0_11 = arith.constant 0 : index
    %c0_12 = arith.constant 0 : index
    %17 = vector.load %arg6[%c0_11, %c0_12] : memref<16x1xf32, #tpu.memory_space<vmem>>, vector<16x1xf32>
    %cst_13 = arith.constant dense<0.000000e+00> : vector<16xf32>
    %18 = vector.multi_reduction <add>, %16, %cst_13 [1] : vector<16x256xf32> to vector<16xf32>
    %19 = vector.shape_cast %18 : vector<16xf32> to vector<16x1xf32>
    %20 = arith.addf %17, %19 : vector<16x1xf32>
    %c0_14 = arith.constant 0 : index
    %c0_15 = arith.constant 0 : index
    %21 = vector.load %arg6[%c0_14, %c0_15] : memref<16x1xf32, #tpu.memory_space<vmem>>, vector<16x1xf32>
    tpu.vector_store %arg6[%c0_14, %c0_15], %20 {strides = array<i32>} : memref<16x1xf32, #tpu.memory_space<vmem>>, vector<16x1xf32>,
    %c0_16 = arith.constant 0 : index
    %c0_17 = arith.constant 0 : index
    %22 = vector.load %arg7[%c0_16, %c0_17] : memref<16x1xf32, #tpu.memory_space<vmem>>, vector<16x1xf32>
    %23 = arith.mulf %16, %16 : vector<16x256xf32>
    %cst_18 = arith.constant dense<0.000000e+00> : vector<16xf32>
    %24 = vector.multi_reduction <add>, %23, %cst_18 [1] : vector<16x256xf32> to vector<16xf32>
    %25 = vector.shape_cast %24 : vector<16xf32> to vector<16x1xf32>
    %26 = arith.addf %22, %25 : vector<16x1xf32>
    %c0_19 = arith.constant 0 : index
    %c0_20 = arith.constant 0 : index
    %27 = vector.load %arg7[%c0_19, %c0_20] : memref<16x1xf32, #tpu.memory_space<vmem>>, vector<16x1xf32>
    tpu.vector_store %arg7[%c0_19, %c0_20], %26 {strides = array<i32>} : memref<16x1xf32, #tpu.memory_space<vmem>>, vector<16x1xf32>,
    return
  }
  func.func @transform_0(%arg0: i32, %arg1: i32) -> (i32, i32, i32) {
    %c0_i32 = arith.constant 0 : i32
    %c0_i32_0 = arith.constant 0 : i32
    return %arg0, %c0_i32, %arg1 : i32, i32, i32
  }
  func.func @transform_1(%arg0: i32, %arg1: i32) -> (i32, i32) {
    %c0_i32 = arith.constant 0 : i32
    %c0_i32_0 = arith.constant 0 : i32
    %c0_i32_1 = arith.constant 0 : i32
    return %c0_i32, %c0_i32_0 : i32, i32
  }
  func.func @transform_2(%arg0: i32, %arg1: i32) -> (i32, i32) {
    %c0_i32 = arith.constant 0 : i32
    %c0_i32_0 = arith.constant 0 : i32
    %c0_i32_1 = arith.constant 0 : i32
    return %c0_i32, %c0_i32_0 : i32, i32
  }
  func.func @transform_3(%arg0: i32, %arg1: i32) -> (i32, i32) {
    %c0_i32 = arith.constant 0 : i32
    %c0_i32_0 = arith.constant 0 : i32
    %c0_i32_1 = arith.constant 0 : i32
    return %c0_i32, %c0_i32_0 : i32, i32
  }
  func.func @transform_4(%arg0: i32, %arg1: i32) -> (i32, i32) {
    %c0_i32 = arith.constant 0 : i32
    %c0_i32_0 = arith.constant 0 : i32
    %c0_i32_1 = arith.constant 0 : i32
    return %c0_i32, %c0_i32_0 : i32, i32
  }
  func.func @transform_5(%arg0: i32, %arg1: i32) -> (i32, i32) {
    %c0_i32 = arith.constant 0 : i32
    %c0_i32_0 = arith.constant 0 : i32
    %c0_i32_1 = arith.constant 0 : i32
    return %c0_i32, %c0_i32_0 : i32, i32
  }
}

module attributes {stable_mosaic.version = 11 : i64} {
  func.func @_fused_block_kernel(%arg0: i32, %arg1: memref<1x4x256xf32, #tpu.memory_space<vmem>>, %arg2: memref<4x1xf32, #tpu.memory_space<vmem>>, %arg3: memref<4x1xf32, #tpu.memory_space<vmem>>, %arg4: memref<16x4xf32, #tpu.memory_space<vmem>>, %arg5: memref<16x1xf32, #tpu.memory_space<vmem>>, %arg6: memref<16x1xf32, #tpu.memory_space<vmem>>, %arg7: memref<9x4x16xf32, #tpu.memory_space<vmem>>, %arg8: memref<2x256xf32, #tpu.memory_space<vmem>>, %arg9: memref<1x8x256xf32, #tpu.memory_space<vmem>>, %arg10: memref<16x512xf32, #tpu.memory_space<vmem>>, %arg11: memref<4x256xf32, #tpu.memory_space<vmem>>) attributes {dimension_semantics = [#tpu.dimension_semantics<parallel>], iteration_bounds = array<i64: 2>, scalar_prefetch = 0 : i64, scratch_operands = 2 : i64, tpu.core_type = #tpu.core_type<tc>, window_params = [{transform_indices = @transform_0, window_bounds = array<i64: 1, 4, 256>}, {pipeline_mode = #tpu.pipeline_mode<synchronous>, transform_indices = @transform_1, window_bounds = array<i64: 4, 1>}, {pipeline_mode = #tpu.pipeline_mode<synchronous>, transform_indices = @transform_2, window_bounds = array<i64: 4, 1>}, {pipeline_mode = #tpu.pipeline_mode<synchronous>, transform_indices = @transform_3, window_bounds = array<i64: 16, 4>}, {pipeline_mode = #tpu.pipeline_mode<synchronous>, transform_indices = @transform_4, window_bounds = array<i64: 16, 1>}, {pipeline_mode = #tpu.pipeline_mode<synchronous>, transform_indices = @transform_5, window_bounds = array<i64: 16, 1>}, {pipeline_mode = #tpu.pipeline_mode<synchronous>, transform_indices = @transform_6, window_bounds = array<i64: 9, 4, 16>}, {pipeline_mode = #tpu.pipeline_mode<synchronous>, transform_indices = @transform_7, window_bounds = array<i64: 2, 256>}, {transform_indices = @transform_8, window_bounds = array<i64: 1, 8, 256>}]} {
    %c0 = arith.constant 0 : index
    %c0_0 = arith.constant 0 : index
    %c0_1 = arith.constant 0 : index
    %0 = vector.load %arg1[%c0, %c0_0, %c0_1] : memref<1x4x256xf32, #tpu.memory_space<vmem>>, vector<1x4x256xf32>
    %1 = vector.shape_cast %0 : vector<1x4x256xf32> to vector<4x256xf32>
    %c0_2 = arith.constant 0 : index
    %c0_3 = arith.constant 0 : index
    %c0_4 = arith.constant 0 : index
    %2 = vector.load %arg9[%c0_2, %c0_3, %c0_4] : memref<1x8x256xf32, #tpu.memory_space<vmem>>, vector<1x4x256xf32>
    %3 = vector.shape_cast %2 : vector<1x4x256xf32> to vector<4x256xf32>
    %4 = vector.shape_cast %1 : vector<4x256xf32> to vector<1x4x256xf32>
    tpu.vector_store %arg9[%c0_2, %c0_3, %c0_4], %4 {strides = array<i32>} : memref<1x8x256xf32, #tpu.memory_space<vmem>>, vector<1x4x256xf32>,
    %c0_5 = arith.constant 0 : index
    %c0_6 = arith.constant 0 : index
    %5 = vector.load %arg2[%c0_5, %c0_6] : memref<4x1xf32, #tpu.memory_space<vmem>>, vector<4x1xf32>
    %6 = vector.broadcast %5 : vector<4x1xf32> to vector<4x256xf32>
    %7 = arith.mulf %1, %6 : vector<4x256xf32>
    %c0_7 = arith.constant 0 : index
    %c0_8 = arith.constant 0 : index
    %8 = vector.load %arg3[%c0_7, %c0_8] : memref<4x1xf32, #tpu.memory_space<vmem>>, vector<4x1xf32>
    %9 = vector.broadcast %8 : vector<4x1xf32> to vector<4x256xf32>
    %10 = arith.addf %7, %9 : vector<4x256xf32>
    %cst = arith.constant 0.000000e+00 : f32
    %11 = vector.broadcast %cst : f32 to vector<4x256xf32>
    %12 = arith.maximumf %10, %11 : vector<4x256xf32>
    %c0_9 = arith.constant 0 : index
    %c0_10 = arith.constant 0 : index
    %13 = vector.load %arg4[%c0_9, %c0_10] : memref<16x4xf32, #tpu.memory_space<vmem>>, vector<16x4xf32>
    %cst_11 = arith.constant dense<0.000000e+00> : vector<16x256xf32>
    %14 = tpu.matmul %13, %12, %cst_11 {dimension_numbers = #tpu.dot_dimension_numbers<[1], [0], [0], [1], [0, 0, 1, 1], [], []>, precision = #tpu.contract_precision<fp32>} : vector<16x4xf32>, vector<4x256xf32>, vector<16x256xf32> -> vector<16x256xf32>
    %c0_12 = arith.constant 0 : index
    %c0_13 = arith.constant 0 : index
    %15 = vector.load %arg5[%c0_12, %c0_13] : memref<16x1xf32, #tpu.memory_space<vmem>>, vector<16x1xf32>
    %16 = vector.broadcast %15 : vector<16x1xf32> to vector<16x256xf32>
    %17 = arith.mulf %14, %16 : vector<16x256xf32>
    %c0_14 = arith.constant 0 : index
    %c0_15 = arith.constant 0 : index
    %18 = vector.load %arg6[%c0_14, %c0_15] : memref<16x1xf32, #tpu.memory_space<vmem>>, vector<16x1xf32>
    %19 = vector.broadcast %18 : vector<16x1xf32> to vector<16x256xf32>
    %20 = arith.addf %17, %19 : vector<16x256xf32>
    %cst_16 = arith.constant 0.000000e+00 : f32
    %21 = vector.broadcast %cst_16 : f32 to vector<16x256xf32>
    %22 = arith.maximumf %20, %21 : vector<16x256xf32>
    %cst_17 = arith.constant 0.000000e+00 : f32
    %23 = vector.broadcast %cst_17 : f32 to vector<16x128xf32>
    %c0_18 = arith.constant 0 : index
    %c0_19 = arith.constant 0 : index
    %24 = vector.load %arg10[%c0_18, %c0_19] : memref<16x512xf32, #tpu.memory_space<vmem>>, vector<16x128xf32>
    tpu.vector_store %arg10[%c0_18, %c0_19], %23 {strides = array<i32>} : memref<16x512xf32, #tpu.memory_space<vmem>>, vector<16x128xf32>,
    %cst_20 = arith.constant 0.000000e+00 : f32
    %25 = vector.broadcast %cst_20 : f32 to vector<16x128xf32>
    %c0_21 = arith.constant 0 : index
    %c384 = arith.constant 384 : index
    %26 = vector.load %arg10[%c0_21, %c384] : memref<16x512xf32, #tpu.memory_space<vmem>>, vector<16x128xf32>
    tpu.vector_store %arg10[%c0_21, %c384], %25 {strides = array<i32>} : memref<16x512xf32, #tpu.memory_space<vmem>>, vector<16x128xf32>,
    %c0_22 = arith.constant 0 : index
    %c128 = arith.constant 128 : index
    %27 = vector.load %arg10[%c0_22, %c128] : memref<16x512xf32, #tpu.memory_space<vmem>>, vector<16x256xf32>
    tpu.vector_store %arg10[%c0_22, %c128], %22 {strides = array<i32>} : memref<16x512xf32, #tpu.memory_space<vmem>>, vector<16x256xf32>,
    %c0_23 = arith.constant 0 : index
    %c0_24 = arith.constant 0 : index
    %28 = vector.load %arg8[%c0_23, %c0_24] : memref<2x256xf32, #tpu.memory_space<vmem>>, vector<1x256xf32>
    %c1 = arith.constant 1 : index
    %c0_25 = arith.constant 0 : index
    %29 = vector.load %arg8[%c1, %c0_25] : memref<2x256xf32, #tpu.memory_space<vmem>>, vector<1x256xf32>
    %c0_26 = arith.constant 0 : index
    %c112 = arith.constant 112 : index
    %30 = vector.load %arg10[%c0_26, %c112] : memref<16x512xf32, #tpu.memory_space<vmem>>, vector<16x256xf32>
    %c1_27 = arith.constant 1 : index
    %c0_28 = arith.constant 0 : index
    %c0_29 = arith.constant 0 : index
    %31 = vector.load %arg7[%c1_27, %c0_28, %c0_29] : memref<9x4x16xf32, #tpu.memory_space<vmem>>, vector<1x4x16xf32>
    %32 = vector.shape_cast %31 : vector<1x4x16xf32> to vector<4x16xf32>
    %cst_30 = arith.constant dense<0.000000e+00> : vector<4x256xf32>
    %33 = tpu.matmul %32, %30, %cst_30 {dimension_numbers = #tpu.dot_dimension_numbers<[1], [0], [0], [1], [0, 0, 1, 1], [], []>, precision = #tpu.contract_precision<fp32>} : vector<4x16xf32>, vector<16x256xf32>, vector<4x256xf32> -> vector<4x256xf32>
    %c0_31 = arith.constant 0 : index
    %c0_32 = arith.constant 0 : index
    %34 = vector.load %arg11[%c0_31, %c0_32] : memref<4x256xf32, #tpu.memory_space<vmem>>, vector<4x256xf32>
    tpu.vector_store %arg11[%c0_31, %c0_32], %33 {strides = array<i32>} : memref<4x256xf32, #tpu.memory_space<vmem>>, vector<4x256xf32>,
    %c0_33 = arith.constant 0 : index
    %c0_34 = arith.constant 0 : index
    %35 = vector.load %arg11[%c0_33, %c0_34] : memref<4x256xf32, #tpu.memory_space<vmem>>, vector<4x256xf32>
    %c0_35 = arith.constant 0 : index
    %c128_36 = arith.constant 128 : index
    %36 = vector.load %arg10[%c0_35, %c128_36] : memref<16x512xf32, #tpu.memory_space<vmem>>, vector<16x256xf32>
    %c4 = arith.constant 4 : index
    %c0_37 = arith.constant 0 : index
    %c0_38 = arith.constant 0 : index
    %37 = vector.load %arg7[%c4, %c0_37, %c0_38] : memref<9x4x16xf32, #tpu.memory_space<vmem>>, vector<1x4x16xf32>
    %38 = vector.shape_cast %37 : vector<1x4x16xf32> to vector<4x16xf32>
    %cst_39 = arith.constant dense<0.000000e+00> : vector<4x256xf32>
    %39 = tpu.matmul %38, %36, %cst_39 {dimension_numbers = #tpu.dot_dimension_numbers<[1], [0], [0], [1], [0, 0, 1, 1], [], []>, precision = #tpu.contract_precision<fp32>} : vector<4x16xf32>, vector<16x256xf32>, vector<4x256xf32> -> vector<4x256xf32>
    %40 = arith.addf %35, %39 : vector<4x256xf32>
    %c0_40 = arith.constant 0 : index
    %c0_41 = arith.constant 0 : index
    %41 = vector.load %arg11[%c0_40, %c0_41] : memref<4x256xf32, #tpu.memory_space<vmem>>, vector<4x256xf32>
    tpu.vector_store %arg11[%c0_40, %c0_41], %40 {strides = array<i32>} : memref<4x256xf32, #tpu.memory_space<vmem>>, vector<4x256xf32>,
    %c0_42 = arith.constant 0 : index
    %c0_43 = arith.constant 0 : index
    %42 = vector.load %arg11[%c0_42, %c0_43] : memref<4x256xf32, #tpu.memory_space<vmem>>, vector<4x256xf32>
    %c0_44 = arith.constant 0 : index
    %c144 = arith.constant 144 : index
    %43 = vector.load %arg10[%c0_44, %c144] : memref<16x512xf32, #tpu.memory_space<vmem>>, vector<16x256xf32>
    %c7 = arith.constant 7 : index
    %c0_45 = arith.constant 0 : index
    %c0_46 = arith.constant 0 : index
    %44 = vector.load %arg7[%c7, %c0_45, %c0_46] : memref<9x4x16xf32, #tpu.memory_space<vmem>>, vector<1x4x16xf32>
    %45 = vector.shape_cast %44 : vector<1x4x16xf32> to vector<4x16xf32>
    %cst_47 = arith.constant dense<0.000000e+00> : vector<4x256xf32>
    %46 = tpu.matmul %45, %43, %cst_47 {dimension_numbers = #tpu.dot_dimension_numbers<[1], [0], [0], [1], [0, 0, 1, 1], [], []>, precision = #tpu.contract_precision<fp32>} : vector<4x16xf32>, vector<16x256xf32>, vector<4x256xf32> -> vector<4x256xf32>
    %47 = arith.addf %42, %46 : vector<4x256xf32>
    %c0_48 = arith.constant 0 : index
    %c0_49 = arith.constant 0 : index
    %48 = vector.load %arg11[%c0_48, %c0_49] : memref<4x256xf32, #tpu.memory_space<vmem>>, vector<4x256xf32>
    tpu.vector_store %arg11[%c0_48, %c0_49], %47 {strides = array<i32>} : memref<4x256xf32, #tpu.memory_space<vmem>>, vector<4x256xf32>,
    %c0_50 = arith.constant 0 : index
    %c0_51 = arith.constant 0 : index
    %49 = vector.load %arg11[%c0_50, %c0_51] : memref<4x256xf32, #tpu.memory_space<vmem>>, vector<4x256xf32>
    %c0_52 = arith.constant 0 : index
    %c111 = arith.constant 111 : index
    %50 = vector.load %arg10[%c0_52, %c111] : memref<16x512xf32, #tpu.memory_space<vmem>>, vector<16x256xf32>
    %c0_53 = arith.constant 0 : index
    %c0_54 = arith.constant 0 : index
    %c0_55 = arith.constant 0 : index
    %51 = vector.load %arg7[%c0_53, %c0_54, %c0_55] : memref<9x4x16xf32, #tpu.memory_space<vmem>>, vector<1x4x16xf32>
    %52 = vector.shape_cast %51 : vector<1x4x16xf32> to vector<4x16xf32>
    %cst_56 = arith.constant dense<0.000000e+00> : vector<4x256xf32>
    %53 = tpu.matmul %52, %50, %cst_56 {dimension_numbers = #tpu.dot_dimension_numbers<[1], [0], [0], [1], [0, 0, 1, 1], [], []>, precision = #tpu.contract_precision<fp32>} : vector<4x16xf32>, vector<16x256xf32>, vector<4x256xf32> -> vector<4x256xf32>
    %c0_57 = arith.constant 0 : index
    %c127 = arith.constant 127 : index
    %54 = vector.load %arg10[%c0_57, %c127] : memref<16x512xf32, #tpu.memory_space<vmem>>, vector<16x256xf32>
    %c3 = arith.constant 3 : index
    %c0_58 = arith.constant 0 : index
    %c0_59 = arith.constant 0 : index
    %55 = vector.load %arg7[%c3, %c0_58, %c0_59] : memref<9x4x16xf32, #tpu.memory_space<vmem>>, vector<1x4x16xf32>
    %56 = vector.shape_cast %55 : vector<1x4x16xf32> to vector<4x16xf32>
    %cst_60 = arith.constant dense<0.000000e+00> : vector<4x256xf32>
    %57 = tpu.matmul %56, %54, %cst_60 {dimension_numbers = #tpu.dot_dimension_numbers<[1], [0], [0], [1], [0, 0, 1, 1], [], []>, precision = #tpu.contract_precision<fp32>} : vector<4x16xf32>, vector<16x256xf32>, vector<4x256xf32> -> vector<4x256xf32>
    %58 = arith.addf %53, %57 : vector<4x256xf32>
    %c0_61 = arith.constant 0 : index
    %c143 = arith.constant 143 : index
    %59 = vector.load %arg10[%c0_61, %c143] : memref<16x512xf32, #tpu.memory_space<vmem>>, vector<16x256xf32>
    %c6 = arith.constant 6 : index
    %c0_62 = arith.constant 0 : index
    %c0_63 = arith.constant 0 : index
    %60 = vector.load %arg7[%c6, %c0_62, %c0_63] : memref<9x4x16xf32, #tpu.memory_space<vmem>>, vector<1x4x16xf32>
    %61 = vector.shape_cast %60 : vector<1x4x16xf32> to vector<4x16xf32>
    %cst_64 = arith.constant dense<0.000000e+00> : vector<4x256xf32>
    %62 = tpu.matmul %61, %59, %cst_64 {dimension_numbers = #tpu.dot_dimension_numbers<[1], [0], [0], [1], [0, 0, 1, 1], [], []>, precision = #tpu.contract_precision<fp32>} : vector<4x16xf32>, vector<16x256xf32>, vector<4x256xf32> -> vector<4x256xf32>
    %63 = arith.addf %58, %62 : vector<4x256xf32>
    %64 = vector.broadcast %28 : vector<1x256xf32> to vector<4x256xf32>
    %65 = arith.mulf %63, %64 : vector<4x256xf32>
    %66 = arith.addf %49, %65 : vector<4x256xf32>
    %c0_65 = arith.constant 0 : index
    %c0_66 = arith.constant 0 : index
    %67 = vector.load %arg11[%c0_65, %c0_66] : memref<4x256xf32, #tpu.memory_space<vmem>>, vector<4x256xf32>
    tpu.vector_store %arg11[%c0_65, %c0_66], %66 {strides = array<i32>} : memref<4x256xf32, #tpu.memory_space<vmem>>, vector<4x256xf32>,
    %c0_67 = arith.constant 0 : index
    %c0_68 = arith.constant 0 : index
    %68 = vector.load %arg11[%c0_67, %c0_68] : memref<4x256xf32, #tpu.memory_space<vmem>>, vector<4x256xf32>
    %c0_69 = arith.constant 0 : index
    %c113 = arith.constant 113 : index
    %69 = vector.load %arg10[%c0_69, %c113] : memref<16x512xf32, #tpu.memory_space<vmem>>, vector<16x256xf32>
    %c2 = arith.constant 2 : index
    %c0_70 = arith.constant 0 : index
    %c0_71 = arith.constant 0 : index
    %70 = vector.load %arg7[%c2, %c0_70, %c0_71] : memref<9x4x16xf32, #tpu.memory_space<vmem>>, vector<1x4x16xf32>
    %71 = vector.shape_cast %70 : vector<1x4x16xf32> to vector<4x16xf32>
    %cst_72 = arith.constant dense<0.000000e+00> : vector<4x256xf32>
    %72 = tpu.matmul %71, %69, %cst_72 {dimension_numbers = #tpu.dot_dimension_numbers<[1], [0], [0], [1], [0, 0, 1, 1], [], []>, precision = #tpu.contract_precision<fp32>} : vector<4x16xf32>, vector<16x256xf32>, vector<4x256xf32> -> vector<4x256xf32>
    %c0_73 = arith.constant 0 : index
    %c129 = arith.constant 129 : index
    %73 = vector.load %arg10[%c0_73, %c129] : memref<16x512xf32, #tpu.memory_space<vmem>>, vector<16x256xf32>
    %c5 = arith.constant 5 : index
    %c0_74 = arith.constant 0 : index
    %c0_75 = arith.constant 0 : index
    %74 = vector.load %arg7[%c5, %c0_74, %c0_75] : memref<9x4x16xf32, #tpu.memory_space<vmem>>, vector<1x4x16xf32>
    %75 = vector.shape_cast %74 : vector<1x4x16xf32> to vector<4x16xf32>
    %cst_76 = arith.constant dense<0.000000e+00> : vector<4x256xf32>
    %76 = tpu.matmul %75, %73, %cst_76 {dimension_numbers = #tpu.dot_dimension_numbers<[1], [0], [0], [1], [0, 0, 1, 1], [], []>, precision = #tpu.contract_precision<fp32>} : vector<4x16xf32>, vector<16x256xf32>, vector<4x256xf32> -> vector<4x256xf32>
    %77 = arith.addf %72, %76 : vector<4x256xf32>
    %c0_77 = arith.constant 0 : index
    %c145 = arith.constant 145 : index
    %78 = vector.load %arg10[%c0_77, %c145] : memref<16x512xf32, #tpu.memory_space<vmem>>, vector<16x256xf32>
    %c8 = arith.constant 8 : index
    %c0_78 = arith.constant 0 : index
    %c0_79 = arith.constant 0 : index
    %79 = vector.load %arg7[%c8, %c0_78, %c0_79] : memref<9x4x16xf32, #tpu.memory_space<vmem>>, vector<1x4x16xf32>
    %80 = vector.shape_cast %79 : vector<1x4x16xf32> to vector<4x16xf32>
    %cst_80 = arith.constant dense<0.000000e+00> : vector<4x256xf32>
    %81 = tpu.matmul %80, %78, %cst_80 {dimension_numbers = #tpu.dot_dimension_numbers<[1], [0], [0], [1], [0, 0, 1, 1], [], []>, precision = #tpu.contract_precision<fp32>} : vector<4x16xf32>, vector<16x256xf32>, vector<4x256xf32> -> vector<4x256xf32>
    %82 = arith.addf %77, %81 : vector<4x256xf32>
    %83 = vector.broadcast %29 : vector<1x256xf32> to vector<4x256xf32>
    %84 = arith.mulf %82, %83 : vector<4x256xf32>
    %85 = arith.addf %68, %84 : vector<4x256xf32>
    %c0_81 = arith.constant 0 : index
    %c0_82 = arith.constant 0 : index
    %86 = vector.load %arg11[%c0_81, %c0_82] : memref<4x256xf32, #tpu.memory_space<vmem>>, vector<4x256xf32>
    tpu.vector_store %arg11[%c0_81, %c0_82], %85 {strides = array<i32>} : memref<4x256xf32, #tpu.memory_space<vmem>>, vector<4x256xf32>,
    %c0_83 = arith.constant 0 : index
    %c0_84 = arith.constant 0 : index
    %87 = vector.load %arg11[%c0_83, %c0_84] : memref<4x256xf32, #tpu.memory_space<vmem>>, vector<4x256xf32>
    %c0_85 = arith.constant 0 : index
    %c4_86 = arith.constant 4 : index
    %c0_87 = arith.constant 0 : index
    %88 = vector.load %arg9[%c0_85, %c4_86, %c0_87] : memref<1x8x256xf32, #tpu.memory_space<vmem>>, vector<1x4x256xf32>
    %89 = vector.shape_cast %88 : vector<1x4x256xf32> to vector<4x256xf32>
    %90 = vector.shape_cast %87 : vector<4x256xf32> to vector<1x4x256xf32>
    tpu.vector_store %arg9[%c0_85, %c4_86, %c0_87], %90 {strides = array<i32>} : memref<1x8x256xf32, #tpu.memory_space<vmem>>, vector<1x4x256xf32>,
    return
  }
  func.func @transform_0(%arg0: i32) -> (i32, i32, i32) {
    %c0_i32 = arith.constant 0 : i32
    %c0_i32_0 = arith.constant 0 : i32
    %c0_i32_1 = arith.constant 0 : i32
    return %arg0, %c0_i32, %c0_i32_0 : i32, i32, i32
  }
  func.func @transform_1(%arg0: i32) -> (i32, i32) {
    %c0_i32 = arith.constant 0 : i32
    %c0_i32_0 = arith.constant 0 : i32
    %c0_i32_1 = arith.constant 0 : i32
    return %c0_i32, %c0_i32_0 : i32, i32
  }
  func.func @transform_2(%arg0: i32) -> (i32, i32) {
    %c0_i32 = arith.constant 0 : i32
    %c0_i32_0 = arith.constant 0 : i32
    %c0_i32_1 = arith.constant 0 : i32
    return %c0_i32, %c0_i32_0 : i32, i32
  }
  func.func @transform_3(%arg0: i32) -> (i32, i32) {
    %c0_i32 = arith.constant 0 : i32
    %c0_i32_0 = arith.constant 0 : i32
    %c0_i32_1 = arith.constant 0 : i32
    return %c0_i32, %c0_i32_0 : i32, i32
  }
  func.func @transform_4(%arg0: i32) -> (i32, i32) {
    %c0_i32 = arith.constant 0 : i32
    %c0_i32_0 = arith.constant 0 : i32
    %c0_i32_1 = arith.constant 0 : i32
    return %c0_i32, %c0_i32_0 : i32, i32
  }
  func.func @transform_5(%arg0: i32) -> (i32, i32) {
    %c0_i32 = arith.constant 0 : i32
    %c0_i32_0 = arith.constant 0 : i32
    %c0_i32_1 = arith.constant 0 : i32
    return %c0_i32, %c0_i32_0 : i32, i32
  }
  func.func @transform_6(%arg0: i32) -> (i32, i32, i32) {
    %c0_i32 = arith.constant 0 : i32
    %c0_i32_0 = arith.constant 0 : i32
    %c0_i32_1 = arith.constant 0 : i32
    %c0_i32_2 = arith.constant 0 : i32
    return %c0_i32, %c0_i32_0, %c0_i32_1 : i32, i32, i32
  }
  func.func @transform_7(%arg0: i32) -> (i32, i32) {
    %c0_i32 = arith.constant 0 : i32
    %c0_i32_0 = arith.constant 0 : i32
    %c0_i32_1 = arith.constant 0 : i32
    return %c0_i32, %c0_i32_0 : i32, i32
  }
  func.func @transform_8(%arg0: i32) -> (i32, i32, i32) {
    %c0_i32 = arith.constant 0 : i32
    %c0_i32_0 = arith.constant 0 : i32
    %c0_i32_1 = arith.constant 0 : i32
    return %arg0, %c0_i32, %c0_i32_0 : i32, i32, i32
  }
}

</mosaic_0001>

<llo_original>
// kernel: bottleneck_forward.3
$region0: #{bottleneck_forward.3}
  #allocation0 [shape = 'u32[]', space=smem, size = 0x4, offset = 0x4, fixed_abs, tag = 'smem constant byte address 0x4 - core index']
  #allocation1 [shape = 'u32[144,128]{1,0:T(1,128)}', space=vmem, size = 0x12000, scoped, tag = 'internal scratch']
  %s0 = inlined_call_operand.vmem [shape: f32[2,4,256], index: 0, kind: input, shape index: {}]
  %s1 = inlined_call_operand.vmem [shape: f32[4,1], index: 1, kind: output, shape index: {0}]
  %s2 = inlined_call_operand.vmem [shape: f32[4,1], index: 2, kind: output, shape index: {1}]
  %3 = xla_tuple %s1, %s2
  %s4 = sld [smem:[#allocation0]]
  $region49: #{bottleneck_forward.3} parent=0
    _
  %s6 = ssub.s32 1, %s4
  %s7 = scalar_select 0, %s6, %s4
  loop: start=0, step=1, limit=4
  $region2: #{bottleneck_forward.3} parent=0 // loop_pre_header
    _
  $region3: #{bottleneck_forward.3} parent=0 // loop_header
    %s9 = sphi 0, %s13
    %p10 = scmp.ge.s32.totalorder %s9, 4
    %s16 = sphi 0, %s28
    %s17 = sphi 0, %s24
    %s18 = sphi 0, %s16
    %s19 = sphi 0, %s17
    %s20 = sphi 0, %s18
    %s21 = sphi 0, %s19
    %s33 = sphi 0, %s35
    %s36 = sphi 0, %s33
    %s37 = sphi 0, %s36
    %s53 = sphi 0, %s37
    %s57 = sphi 0, %s57
    %s59 = sphi 0, %s57
    %s60 = sphi 0, %s59
    %s74 = sphi 0, %s60
    %s78 = sphi 0, %s78
    %s80 = sphi 0, %s78
    %s81 = sphi 0, %s80
    %s95 = sphi 0, %s81
  $region4: #{bottleneck_forward.3} parent=0 // loop_header_branch
    %12 = sbr.rel (%p10) target = $region8
  $region5: #{bottleneck_forward.3} parent=0 // loop_body
    %s14 = ssub.s32 %s9, 1
    %s15 = ssub.s32 %s9, 2
    %s22 = sadd.s32 1, %s17
    %p23 = scmp.ge.s32.totalorder %s22, 1
    %s24 = scalar_select %p23, 0, %s22
    %s25 = sadd.s32 1, %s16
    %s26 = scalar_select %p23, %s25, %s16
    %p27 = scmp.ge.s32.totalorder %s26, 2
    %s28 = scalar_select %p27, 0, %s26
    %s29 = ssub.s32 %s16, %s28
    %s30 = ssub.s32 %s17, %s24
    %s31 = sor.u32 %s29, %s30
    %p32 = scmp.eq.s32.totalorder %s31, 0
    %s34 = sadd.s32 %s33, 1
    %s35 = scalar_select %p32, %s33, %s34
    %p38 = pneg %p32
    %p39 = scmp.eq.s32.totalorder %s9, 1
    %p40 = por %p38, %p39
    %p41 = scmp.ne.s32.totalorder %s33, %s36
    %p42 = scmp.eq.s32.totalorder %s9, 0
    %p43 = por %p41, %p42
    %p44 = scmp.ne.s32.totalorder %s33, %s36
    %p45 = scmp.eq.s32.totalorder %s14, 1
    %p46 = por %p44, %p45
    %p47 = scmp.ne.s32.totalorder %s36, %s37
    %p48 = scmp.eq.s32.totalorder %s14, 0
    %p49 = por %p47, %p48
    %p50 = scmp.ne.s32.totalorder %s36, %s37
    %p51 = scmp.eq.s32.totalorder %s15, 1
    %p52 = por %p50, %p51
    %p54 = scmp.ne.s32.totalorder %s37, %s53
    %p55 = scmp.eq.s32.totalorder %s15, 0
    %p56 = por %p54, %p55
    %s58 = sadd.s32 %s57, 1
    %p61 = scmp.eq.s32.totalorder %s9, 1
    %p62 = scmp.ne.s32.totalorder %s57, %s59
    %p63 = scmp.eq.s32.totalorder %s9, 0
    %p64 = por %p62, %p63
    %p65 = scmp.ne.s32.totalorder %s57, %s59
    %p66 = scmp.eq.s32.totalorder %s14, 1
    %p67 = por %p65, %p66
    %p68 = scmp.ne.s32.totalorder %s59, %s60
    %p69 = scmp.eq.s32.totalorder %s14, 0
    %p70 = por %p68, %p69
    %p71 = scmp.ne.s32.totalorder %s59, %s60
    %p72 = scmp.eq.s32.totalorder %s15, 1
    %p73 = por %p71, %p72
    %p75 = scmp.ne.s32.totalorder %s60, %s74
    %p76 = scmp.eq.s32.totalorder %s15, 0
    %p77 = por %p75, %p76
    %s79 = sadd.s32 %s78, 1
    %p82 = scmp.eq.s32.totalorder %s9, 1
    %p83 = scmp.ne.s32.totalorder %s78, %s80
    %p84 = scmp.eq.s32.totalorder %s9, 0
    %p85 = por %p83, %p84
    %p86 = scmp.ne.s32.totalorder %s78, %s80
    %p87 = scmp.eq.s32.totalorder %s14, 1
    %p88 = por %p86, %p87
    %p89 = scmp.ne.s32.totalorder %s80, %s81
    %p90 = scmp.eq.s32.totalorder %s14, 0
    %p91 = por %p89, %p90
    %p92 = scmp.ne.s32.totalorder %s80, %s81
    %p93 = scmp.eq.s32.totalorder %s15, 1
    %p94 = por %p92, %p93
    %p96 = scmp.ne.s32.totalorder %s81, %s95
    %p97 = scmp.eq.s32.totalorder %s15, 0
    %p98 = por %p96, %p97
    %p99 = scmp.le.s32.totalorder 1, %s9
    %p100 = scmp.lt.s32.totalorder %s9, 3
    %p101 = pnand %p99, %p100
    %p102 = pneg %p101
    // Predicated region
    $region9: #{bottleneck_forward.3} parent=5 // pred_check
      _
    $region10: #{bottleneck_forward.3} parent=5 // pred_check_branch
      %104 = sbr.rel (%p101) target = $region12
    $region11: #{bottleneck_forward.3} parent=5 // pred_region
      %s105 = ssub.s32 %s9, 1
    $region12: #{bottleneck_forward.3} parent=5 // pred_fallthru
      _
    %p106 = scmp.lt.s32.totalorder %s9, 2
    // Predicated region
    $region13: #{bottleneck_forward.3} parent=5 // pred_check
      %p107 = pneg %p106
    $region14: #{bottleneck_forward.3} parent=5 // pred_check_branch
      %109 = sbr.rel (%p107) target = $region16
    $region15: #{bottleneck_forward.3} parent=5 // pred_region
      // Predicated region
      $region17: #{bottleneck_forward.3} parent=15 // pred_check
        %p110 = pneg %p43
      $region18: #{bottleneck_forward.3} parent=15 // pred_check_branch
        %112 = sbr.rel (%p110) target = $region20
      $region19: #{bottleneck_forward.3} parent=15 // pred_region
        %s113 = smul.u32 2, %s17
        %p114 = scmp.lt.s32.totalorder %s16, 1
        %s115 = scalar_select %p114, %s16, 1
        %p116 = scmp.lt.s32.totalorder %s113, 1
        %s117 = scalar_select %p116, %s113, 1
        %s118 = smul.addr %s115, 2
        %s119 = sadd.s32 %s117, %s118
        %s120 = smul.addr %s119, 4
        %s121 = scalar_lea.vmem %s0, %s120
        %s122 = smul.u32 2, %s17
      $region20: #{bottleneck_forward.3} parent=15 // pred_fallthru
        _
    $region16: #{bottleneck_forward.3} parent=5 // pred_fallthru
      _
    %p123 = scmp.le.s32.totalorder 1, %s9
    %p124 = scmp.lt.s32.totalorder %s9, 3
    %p125 = pnand %p123, %p124
    %p126 = pneg %p125
    // Predicated region
    $region21: #{bottleneck_forward.3} parent=5 // pred_check
      _
    $region22: #{bottleneck_forward.3} parent=5 // pred_check_branch
      %128 = sbr.rel (%p125) target = $region24
    $region23: #{bottleneck_forward.3} parent=5 // pred_region
      %s129 = ssub.s32 %s9, 1
      %s130 = smul.u32 2, %s19
      %p131 = scmp.lt.s32.totalorder %s18, 1
      %s132 = scalar_select %p131, %s18, 1
      %p133 = scmp.lt.s32.totalorder %s130, 1
      %s134 = scalar_select %p133, %s130, 1
      %s135 = smul.addr %s132, 2
      %s136 = sadd.s32 %s134, %s135
      %s137 = smul.addr %s136, 4
      %s138 = scalar_lea.vmem %s0, %s137
      %p139 = pneg %p49
      %p140 = pneg %p46
      %p141 = pneg %p70
      %p142 = pneg %p67
      %p143 = pneg %p91
      %p144 = pneg %p88
      %s145 = smul.u32 2, %s19
      %p146 = scmp.lt.s32.totalorder %s18, 1
      %s147 = scalar_select %p146, %s18, 1
      %p148 = scmp.lt.s32.totalorder %s145, 1
      %s149 = scalar_select %p148, %s145, 1
      %s150 = smul.addr %s147, 2
      %s151 = sadd.s32 %s149, %s150
      %s152 = smul.addr %s151, 4
      %s153 = scalar_lea.vmem %s0, %s152
      %s154 = smul.u32 2, %s19
      %p155 = scmp.eq.s32.totalorder %s18, 0
      %p156 = scmp.eq.s32.totalorder %s19, 0
      %p157 = pnand %p155, %p156
      %p158 = pneg %p157
      // Predicated region
      $region25: #{bottleneck_forward.3} parent=23 // pred_check
        _
      $region26: #{bottleneck_forward.3} parent=23 // pred_check_branch
        %160 = sbr.rel (%p157) target = $region28
      $region27: #{bottleneck_forward.3} parent=23 // pred_region
        %vm161 = vcmask 3072
        %162 = vst.msk [vmem:[%s1] sm:$0xf] %vm161, 0.0
        %163 = vst.msk [vmem:[%s2] sm:$0xf] %vm161, 0.0
      $region28: #{bottleneck_forward.3} parent=23 // pred_fallthru
        _
      %v164 = vld [vmem:[%s153] sm:$0xff]
      %v165 = vld [vmem:[%s1] sm:$0xf]
      %v167 = vcombine.high %v164, %v164
      %vm169 = vcmask 1043456
      %v170 = vsel %vm169, %v164, 0.0
      %v171 = vsel %vm169, %v167, 0.0
      %v172 = vadd.f32 %v170, %v171
      %173 = vadd.xlane.f32.xlu0 %v172
      %v174 = vpop.xlane.xlu0 %173
      %v175 = vadd.f32 %v165, %v174
      %vm176 = vcmask 3072
      %177 = vst.msk [vmem:[%s1] sm:$0xf] %vm176, %v175
      %v178 = vld [vmem:[%s2] sm:$0xf]
      %v179 = vmul.f32 %v164, %v164
      %v181 = vcombine.high %v179, %v179
      %v183 = vsel %vm169, %v179, 0.0
      %v184 = vsel %vm169, %v181, 0.0
      %v185 = vadd.f32 %v183, %v184
      %186 = vadd.xlane.f32.xlu0 %v185
      %v187 = vpop.xlane.xlu0 %186
      %v188 = vadd.f32 %v178, %v187
      %189 = vst.msk [vmem:[%s2] sm:$0xf] %vm176, %v188
      // Predicated region
      $region29: #{bottleneck_forward.3} parent=23 // pred_check
        %p190 = pneg %p67
      $region30: #{bottleneck_forward.3} parent=23 // pred_check_branch
        %192 = sbr.rel (%p190) target = $region32
      $region31: #{bottleneck_forward.3} parent=23 // pred_region
        _
      $region32: #{bottleneck_forward.3} parent=23 // pred_fallthru
        _
      // Predicated region
      $region33: #{bottleneck_forward.3} parent=23 // pred_check
        %p193 = pneg %p88
      $region34: #{bottleneck_forward.3} parent=23 // pred_check_branch
        %195 = sbr.rel (%p193) target = $region36
      $region35: #{bottleneck_forward.3} parent=23 // pred_region
        _
      $region36: #{bottleneck_forward.3} parent=23 // pred_fallthru
        _
      // Predicated region
      $region37: #{bottleneck_forward.3} parent=23 // pred_check
        %p196 = pneg %p67
      $region38: #{bottleneck_forward.3} parent=23 // pred_check_branch
        %198 = sbr.rel (%p196) target = $region40
      $region39: #{bottleneck_forward.3} parent=23 // pred_region
        _
      $region40: #{bottleneck_forward.3} parent=23 // pred_fallthru
        _
      // Predicated region
      $region41: #{bottleneck_forward.3} parent=23 // pred_check
        %p199 = pneg %p88
      $region42: #{bottleneck_forward.3} parent=23 // pred_check_branch
        %201 = sbr.rel (%p199) target = $region44
      $region43: #{bottleneck_forward.3} parent=23 // pred_region
        _
      $region44: #{bottleneck_forward.3} parent=23 // pred_fallthru
        _
    $region24: #{bottleneck_forward.3} parent=5 // pred_fallthru
      _
    %p202 = scmp.le.s32.totalorder 2, %s9
    // Predicated region
    $region45: #{bottleneck_forward.3} parent=5 // pred_check
      %p203 = pneg %p202
    $region46: #{bottleneck_forward.3} parent=5 // pred_check_branch
      %205 = sbr.rel (%p203) target = $region48
    $region47: #{bottleneck_forward.3} parent=5 // pred_region
      %s206 = ssub.s32 %s9, 2
    $region48: #{bottleneck_forward.3} parent=5 // pred_fallthru
      _
  $region6: #{bottleneck_forward.3} parent=0 // loop_footer
    %s13 = sadd.s32 1, %s9
  $region7: #{bottleneck_forward.3} parent=0 // loop_footer_branch
    %8 = sbr.rel target = $region3
  $region8: #{bottleneck_forward.3} parent=0 // loop_exit
    _

// kernel: bottleneck_forward.4
$region0: #{bottleneck_forward.4}
  #allocation0 [shape = 'u32[]', space=smem, size = 0x4, offset = 0x4, fixed_abs, tag = 'smem constant byte address 0x4 - core index']
  #allocation1 [shape = 'u32[144,128]{1,0:T(1,128)}', space=vmem, size = 0x12000, scoped, tag = 'internal scratch']
  %s0 = inlined_call_operand.vmem [shape: f32[2,4,256], index: 0, kind: input, shape index: {}]
  %s1 = inlined_call_operand.vmem [shape: f32[4,1], index: 1, kind: input, shape index: {}]
  %s2 = inlined_call_operand.vmem [shape: f32[4,1], index: 2, kind: input, shape index: {}]
  %s3 = inlined_call_operand.vmem [shape: f32[16,4], index: 3, kind: input, shape index: {}]
  %s4 = inlined_call_operand.vmem [shape: f32[16,1], index: 4, kind: output, shape index: {0}]
  %s5 = inlined_call_operand.vmem [shape: f32[16,1], index: 5, kind: output, shape index: {1}]
  %6 = xla_tuple %s4, %s5
  %s7 = sld [smem:[#allocation0]]
  $region61: #{bottleneck_forward.4} parent=0
    _
  %s9 = ssub.s32 1, %s7
  %s10 = scalar_select 0, %s9, %s7
  loop: start=0, step=1, limit=4
  $region2: #{bottleneck_forward.4} parent=0 // loop_pre_header
    _
  $region3: #{bottleneck_forward.4} parent=0 // loop_header
    %s12 = sphi 0, %s16
    %p13 = scmp.ge.s32.totalorder %s12, 4
    %s19 = sphi 0, %s31
    %s20 = sphi 0, %s27
    %s21 = sphi 0, %s19
    %s22 = sphi 0, %s20
    %s23 = sphi 0, %s21
    %s24 = sphi 0, %s22
    %s36 = sphi 0, %s38
    %s39 = sphi 0, %s36
    %s40 = sphi 0, %s39
    %s56 = sphi 0, %s40
    %s60 = sphi 0, %s60
    %s62 = sphi 0, %s60
    %s63 = sphi 0, %s62
    %s77 = sphi 0, %s63
    %s81 = sphi 0, %s81
    %s83 = sphi 0, %s81
    %s84 = sphi 0, %s83
    %s98 = sphi 0, %s84
    %s102 = sphi 0, %s102
    %s104 = sphi 0, %s102
    %s105 = sphi 0, %s104
    %s119 = sphi 0, %s105
    %s123 = sphi 0, %s123
    %s125 = sphi 0, %s123
    %s126 = sphi 0, %s125
    %s140 = sphi 0, %s126
    %s144 = sphi 0, %s144
    %s146 = sphi 0, %s144
    %s147 = sphi 0, %s146
    %s161 = sphi 0, %s147
  $region4: #{bottleneck_forward.4} parent=0 // loop_header_branch
    %15 = sbr.rel (%p13) target = $region8
  $region5: #{bottleneck_forward.4} parent=0 // loop_body
    %s17 = ssub.s32 %s12, 1
    %s18 = ssub.s32 %s12, 2
    %s25 = sadd.s32 1, %s20
    %p26 = scmp.ge.s32.totalorder %s25, 1
    %s27 = scalar_select %p26, 0, %s25
    %s28 = sadd.s32 1, %s19
    %s29 = scalar_select %p26, %s28, %s19
    %p30 = scmp.ge.s32.totalorder %s29, 2
    %s31 = scalar_select %p30, 0, %s29
    %s32 = ssub.s32 %s19, %s31
    %s33 = ssub.s32 %s20, %s27
    %s34 = sor.u32 %s32, %s33
    %p35 = scmp.eq.s32.totalorder %s34, 0
    %s37 = sadd.s32 %s36, 1
    %s38 = scalar_select %p35, %s36, %s37
    %p41 = pneg %p35
    %p42 = scmp.eq.s32.totalorder %s12, 1
    %p43 = por %p41, %p42
    %p44 = scmp.ne.s32.totalorder %s36, %s39
    %p45 = scmp.eq.s32.totalorder %s12, 0
    %p46 = por %p44, %p45
    %p47 = scmp.ne.s32.totalorder %s36, %s39
    %p48 = scmp.eq.s32.totalorder %s17, 1
    %p49 = por %p47, %p48
    %p50 = scmp.ne.s32.totalorder %s39, %s40
    %p51 = scmp.eq.s32.totalorder %s17, 0
    %p52 = por %p50, %p51
    %p53 = scmp.ne.s32.totalorder %s39, %s40
    %p54 = scmp.eq.s32.totalorder %s18, 1
    %p55 = por %p53, %p54
    %p57 = scmp.ne.s32.totalorder %s40, %s56
    %p58 = scmp.eq.s32.totalorder %s18, 0
    %p59 = por %p57, %p58
    %s61 = sadd.s32 %s60, 1
    %p64 = scmp.eq.s32.totalorder %s12, 1
    %p65 = scmp.ne.s32.totalorder %s60, %s62
    %p66 = scmp.eq.s32.totalorder %s12, 0
    %p67 = por %p65, %p66
    %p68 = scmp.ne.s32.totalorder %s60, %s62
    %p69 = scmp.eq.s32.totalorder %s17, 1
    %p70 = por %p68, %p69
    %p71 = scmp.ne.s32.totalorder %s62, %s63
    %p72 = scmp.eq.s32.totalorder %s17, 0
    %p73 = por %p71, %p72
    %p74 = scmp.ne.s32.totalorder %s62, %s63
    %p75 = scmp.eq.s32.totalorder %s18, 1
    %p76 = por %p74, %p75
    %p78 = scmp.ne.s32.totalorder %s63, %s77
    %p79 = scmp.eq.s32.totalorder %s18, 0
    %p80 = por %p78, %p79
    %s82 = sadd.s32 %s81, 1
    %p85 = scmp.eq.s32.totalorder %s12, 1
    %p86 = scmp.ne.s32.totalorder %s81, %s83
    %p87 = scmp.eq.s32.totalorder %s12, 0
    %p88 = por %p86, %p87
    %p89 = scmp.ne.s32.totalorder %s81, %s83
    %p90 = scmp.eq.s32.totalorder %s17, 1
    %p91 = por %p89, %p90
    %p92 = scmp.ne.s32.totalorder %s83, %s84
    %p93 = scmp.eq.s32.totalorder %s17, 0
    %p94 = por %p92, %p93
    %p95 = scmp.ne.s32.totalorder %s83, %s84
    %p96 = scmp.eq.s32.totalorder %s18, 1
    %p97 = por %p95, %p96
    %p99 = scmp.ne.s32.totalorder %s84, %s98
    %p100 = scmp.eq.s32.totalorder %s18, 0
    %p101 = por %p99, %p100
    %s103 = sadd.s32 %s102, 1
    %p106 = scmp.eq.s32.totalorder %s12, 1
    %p107 = scmp.ne.s32.totalorder %s102, %s104
    %p108 = scmp.eq.s32.totalorder %s12, 0
    %p109 = por %p107, %p108
    %p110 = scmp.ne.s32.totalorder %s102, %s104
    %p111 = scmp.eq.s32.totalorder %s17, 1
    %p112 = por %p110, %p111
    %p113 = scmp.ne.s32.totalorder %s104, %s105
    %p114 = scmp.eq.s32.totalorder %s17, 0
    %p115 = por %p113, %p114
    %p116 = scmp.ne.s32.totalorder %s104, %s105
    %p117 = scmp.eq.s32.totalorder %s18, 1
    %p118 = por %p116, %p117
    %p120 = scmp.ne.s32.totalorder %s105, %s119
    %p121 = scmp.eq.s32.totalorder %s18, 0
    %p122 = por %p120, %p121
    %s124 = sadd.s32 %s123, 1
    %p127 = scmp.eq.s32.totalorder %s12, 1
    %p128 = scmp.ne.s32.totalorder %s123, %s125
    %p129 = scmp.eq.s32.totalorder %s12, 0
    %p130 = por %p128, %p129
    %p131 = scmp.ne.s32.totalorder %s123, %s125
    %p132 = scmp.eq.s32.totalorder %s17, 1
    %p133 = por %p131, %p132
    %p134 = scmp.ne.s32.totalorder %s125, %s126
    %p135 = scmp.eq.s32.totalorder %s17, 0
    %p136 = por %p134, %p135
    %p137 = scmp.ne.s32.totalorder %s125, %s126
    %p138 = scmp.eq.s32.totalorder %s18, 1
    %p139 = por %p137, %p138
    %p141 = scmp.ne.s32.totalorder %s126, %s140
    %p142 = scmp.eq.s32.totalorder %s18, 0
    %p143 = por %p141, %p142
    %s145 = sadd.s32 %s144, 1
    %p148 = scmp.eq.s32.totalorder %s12, 1
    %p149 = scmp.ne.s32.totalorder %s144, %s146
    %p150 = scmp.eq.s32.totalorder %s12, 0
    %p151 = por %p149, %p150
    %p152 = scmp.ne.s32.totalorder %s144, %s146
    %p153 = scmp.eq.s32.totalorder %s17, 1
    %p154 = por %p152, %p153
    %p155 = scmp.ne.s32.totalorder %s146, %s147
    %p156 = scmp.eq.s32.totalorder %s17, 0
    %p157 = por %p155, %p156
    %p158 = scmp.ne.s32.totalorder %s146, %s147
    %p159 = scmp.eq.s32.totalorder %s18, 1
    %p160 = por %p158, %p159
    %p162 = scmp.ne.s32.totalorder %s147, %s161
    %p163 = scmp.eq.s32.totalorder %s18, 0
    %p164 = por %p162, %p163
    %p165 = scmp.le.s32.totalorder 1, %s12
    %p166 = scmp.lt.s32.totalorder %s12, 3
    %p167 = pnand %p165, %p166
    %p168 = pneg %p167
    // Predicated region
    $region9: #{bottleneck_forward.4} parent=5 // pred_check
      _
    $region10: #{bottleneck_forward.4} parent=5 // pred_check_branch
      %170 = sbr.rel (%p167) target = $region12
    $region11: #{bottleneck_forward.4} parent=5 // pred_region
      %s171 = ssub.s32 %s12, 1
      // Predicated region
      $region13: #{bottleneck_forward.4} parent=11 // pred_check
        %p172 = pneg %p73
      $region14: #{bottleneck_forward.4} parent=11 // pred_check_branch
        %174 = sbr.rel (%p172) target = $region16
      $region15: #{bottleneck_forward.4} parent=11 // pred_region
        _
      $region16: #{bottleneck_forward.4} parent=11 // pred_fallthru
        _
      // Predicated region
      $region17: #{bottleneck_forward.4} parent=11 // pred_check
        %p175 = pneg %p94
      $region18: #{bottleneck_forward.4} parent=11 // pred_check_branch
        %177 = sbr.rel (%p175) target = $region20
      $region19: #{bottleneck_forward.4} parent=11 // pred_region
        _
      $region20: #{bottleneck_forward.4} parent=11 // pred_fallthru
        _
      // Predicated region
      $region21: #{bottleneck_forward.4} parent=11 // pred_check
        %p178 = pneg %p115
      $region22: #{bottleneck_forward.4} parent=11 // pred_check_branch
        %180 = sbr.rel (%p178) target = $region24
      $region23: #{bottleneck_forward.4} parent=11 // pred_region
        _
      $region24: #{bottleneck_forward.4} parent=11 // pred_fallthru
        _
    $region12: #{bottleneck_forward.4} parent=5 // pred_fallthru
      _
    %p181 = scmp.lt.s32.totalorder %s12, 2
    // Predicated region
    $region25: #{bottleneck_forward.4} parent=5 // pred_check
      %p182 = pneg %p181
    $region26: #{bottleneck_forward.4} parent=5 // pred_check_branch
      %184 = sbr.rel (%p182) target = $region28
    $region27: #{bottleneck_forward.4} parent=5 // pred_region
      // Predicated region
      $region29: #{bottleneck_forward.4} parent=27 // pred_check
        %p185 = pneg %p46
      $region30: #{bottleneck_forward.4} parent=27 // pred_check_branch
        %187 = sbr.rel (%p185) target = $region32
      $region31: #{bottleneck_forward.4} parent=27 // pred_region
        %s188 = smul.u32 2, %s20
        %p189 = scmp.lt.s32.totalorder %s19, 1
        %s190 = scalar_select %p189, %s19, 1
        %p191 = scmp.lt.s32.totalorder %s188, 1
        %s192 = scalar_select %p191, %s188, 1
        %s193 = smul.addr %s190, 2
        %s194 = sadd.s32 %s192, %s193
        %s195 = smul.addr %s194, 4
        %s196 = scalar_lea.vmem %s0, %s195
        %s197 = smul.u32 2, %s20
      $region32: #{bottleneck_forward.4} parent=27 // pred_fallthru
        _
    $region28: #{bottleneck_forward.4} parent=5 // pred_fallthru
      _
    %p198 = scmp.le.s32.totalorder 1, %s12
    %p199 = scmp.lt.s32.totalorder %s12, 3
    %p200 = pnand %p198, %p199
    %p201 = pneg %p200
    // Predicated region
    $region33: #{bottleneck_forward.4} parent=5 // pred_check
      _
    $region34: #{bottleneck_forward.4} parent=5 // pred_check_branch
      %203 = sbr.rel (%p200) target = $region36
    $region35: #{bottleneck_forward.4} parent=5 // pred_region
      %s204 = ssub.s32 %s12, 1
      %s205 = smul.u32 2, %s22
      %p206 = scmp.lt.s32.totalorder %s21, 1
      %s207 = scalar_select %p206, %s21, 1
      %p208 = scmp.lt.s32.totalorder %s205, 1
      %s209 = scalar_select %p208, %s205, 1
      %s210 = smul.addr %s207, 2
      %s211 = sadd.s32 %s209, %s210
      %s212 = smul.addr %s211, 4
      %s213 = scalar_lea.vmem %s0, %s212
      %p214 = pneg %p52
      %p215 = pneg %p49
      %p216 = pneg %p73
      %p217 = pneg %p70
      %p218 = pneg %p94
      %p219 = pneg %p91
      %p220 = pneg %p115
      %p221 = pneg %p112
      %p222 = pneg %p136
      %p223 = pneg %p133
      %p224 = pneg %p157
      %p225 = pneg %p154
      %s226 = smul.u32 2, %s22
      %p227 = scmp.lt.s32.totalorder %s21, 1
      %s228 = scalar_select %p227, %s21, 1
      %p229 = scmp.lt.s32.totalorder %s226, 1
      %s230 = scalar_select %p229, %s226, 1
      %s231 = smul.addr %s228, 2
      %s232 = sadd.s32 %s230, %s231
      %s233 = smul.addr %s232, 4
      %s234 = scalar_lea.vmem %s0, %s233
      %s235 = smul.u32 2, %s22
      %p236 = scmp.eq.s32.totalorder %s21, 0
      %p237 = scmp.eq.s32.totalorder %s22, 0
      %p238 = pnand %p236, %p237
      %p239 = pneg %p238
      // Predicated region
      $region37: #{bottleneck_forward.4} parent=35 // pred_check
        _
      $region38: #{bottleneck_forward.4} parent=35 // pred_check_branch
        %241 = sbr.rel (%p238) target = $region40
      $region39: #{bottleneck_forward.4} parent=35 // pred_region
        %vm242 = vcmask 7168
        %243 = vst.msk [vmem:[%s4] sm:$0xff] %vm242, 0.0
        %244 = vst.msk [vmem:[%s4 + $0x8] sm:$0xff] %vm242, 0.0
        %245 = vst.msk [vmem:[%s5] sm:$0xff] %vm242, 0.0
        %246 = vst.msk [vmem:[%s5 + $0x8] sm:$0xff] %vm242, 0.0
      $region40: #{bottleneck_forward.4} parent=35 // pred_fallthru
        _
      %v247 = vld [vmem:[%s234] sm:$0xff]
      %v248 = vld [vmem:[%s1] sm:$0xf]
      %250 = vset.pattern.permute.xlu0 0
      %251 = vperm.xlu0 %250, %v248
      %v252 = vpop.permute.xlu0 %251
      %v254 = vunpack.c.l.s4 839922192
      %v255 = vunpack.c.0.s8 %v254
      %v256 = vlaneseq
      %v257 = vshrl.u32 %v256, 7
      %v258 = vsub.s32 %v255, %v257
      %v259 = vrot.slane %v252, %v258
      %v261 = vmul.f32 %v247, %v259
      %v262 = vld [vmem:[%s2] sm:$0xf]
      %264 = vset.pattern.permute.xlu0 0
      %265 = vperm.xlu0 %264, %v262
      %v266 = vpop.permute.xlu0 %265
      %v268 = vunpack.c.l.s4 839922192
      %v269 = vunpack.c.0.s8 %v268
      %v270 = vlaneseq
      %v271 = vshrl.u32 %v270, 7
      %v272 = vsub.s32 %v269, %v271
      %v273 = vrot.slane %v266, %v272
      %v275 = vadd.f32 %v261, %v273
      %v276 = vmax.f32 %v275, 0.0
      %v277 = vld [vmem:[%s3] sm:$0xff]
      %v278 = vld [vmem:[%s3 + $0x8] sm:$0xff]
      %v280 = vcombine.high %v276, %v276
      %vm281 = vcmask 31744
      %v283 = vsel %vm281, %v277, 0
      %v286 = vsel %vm281, %v278, 0
      %vm288 = vcmask 1043456
      %v289 = vsel %vm288, %v276, 0
      %v291 = vsel %vm288, %v280, 0
      %v293 = vand.u32 %v291, 4294901760
      %294 = vmatprep.subr.mxu0 %v293
      %v295 = vand.u32 %v289, 4294901760
      %296 = vmatpush1.msra.mxu0 %v295
      %297 = vmatprep.subr.mxu0 0.0
      %298 = vmatpush1.msra.mxu0 0.0
      %299 = vmatprep.subr.mxu0 0.0
      %300 = vmatpush1.msra.mxu0 0.0
      %301 = vmatprep.subr.mxu0 0.0
      %302 = vmatpush1.msra.mxu0 0.0
      %303 = vmatprep.subr.mxu0 0.0
      %304 = vmatpush1.msra.mxu0 0.0
      %305 = vmatprep.subr.mxu0 0.0
      %306 = vmatpush1.msra.mxu0 0.0
      %307 = vmatprep.subr.mxu0 0.0
      %308 = vmatpush1.msra.mxu0 0.0
      %309 = vmatprep.subr.mxu0 0.0
      %310 = vmatpush1.msra.mxu0 0.0
      %311 = vmatprep.subr.mxu0 0.0
      %312 = vmatpush1.msra.mxu0 0.0
      %313 = vmatprep.subr.mxu0 0.0
      %314 = vmatpush1.msra.mxu0 0.0
      %315 = vmatprep.subr.mxu0 0.0
      %316 = vmatpush1.msra.mxu0 0.0
      %317 = vmatprep.subr.mxu0 0.0
      %318 = vmatpush1.msra.mxu0 0.0
      %319 = vmatprep.subr.mxu0 0.0
      %320 = vmatpush1.msra.mxu0 0.0
      %321 = vmatprep.subr.mxu0 0.0
      %322 = vmatpush1.msra.mxu0 0.0
      %323 = vmatprep.subr.mxu0 0.0
      %324 = vmatpush1.msra.mxu0 0.0
      %325 = vmatprep.subr.mxu0 0.0
      %326 = vmatpush1.msra.mxu0 0.0
      %327 = vmatprep.subr.mxu0 0.0
      %328 = vmatpush1.msra.mxu0 0.0
      %329 = vmatprep.subr.mxu0 0.0
      %330 = vmatpush1.msra.mxu0 0.0
      %331 = vmatprep.subr.mxu0 0.0
      %332 = vmatpush1.msra.mxu0 0.0
      %333 = vmatprep.subr.mxu0 0.0
      %334 = vmatpush1.msra.mxu0 0.0
      %335 = vmatprep.subr.mxu0 0.0
      %336 = vmatpush1.msra.mxu0 0.0
      %337 = vmatprep.subr.mxu0 0.0
      %338 = vmatpush1.msra.mxu0 0.0
      %339 = vmatprep.subr.mxu0 0.0
      %340 = vmatpush1.msra.mxu0 0.0
      %341 = vmatprep.subr.mxu0 0.0
      %342 = vmatpush1.msra.mxu0 0.0
      %343 = vmatprep.subr.mxu0 0.0
      %344 = vmatpush1.msra.mxu0 0.0
      %345 = vmatprep.subr.mxu0 0.0
      %346 = vmatpush1.msra.mxu0 0.0
      %347 = vmatprep.subr.mxu0 0.0
      %348 = vmatpush1.msra.mxu0 0.0
      %349 = vmatprep.subr.mxu0 0.0
      %350 = vmatpush1.msra.mxu0 0.0
      %351 = vmatprep.subr.mxu0 0.0
      %352 = vmatpush1.msra.mxu0 0.0
      %353 = vmatprep.subr.mxu0 0.0
      %354 = vmatpush1.msra.mxu0 0.0
      %355 = vmatprep.subr.mxu0 0.0
      %356 = vmatpush1.msra.mxu0 0.0
      %357 = vmatprep.subr.mxu0 0.0
      %358 = vmatpush1.msra.mxu0 0.0
      %359 = vmatprep.mubr.f32.mxu0 0.0
      %v360 = vand.u32 %v283, 4294901760
      %v361 = vsub.f32 %v283, %v360
      %v362 = vand.u32 %v361, 4294901760
      %v363 = vsub.f32 %v361, %v362
      %v364 = vand.u32 %v363, 4294901760
      %365 = vmatmul.mubr.f32.gmra.mrb[0].mxu0 %v364
      %v366 = vpop.f32.mrb[0].mxu0
      %v367 = vadd.f32 0.0, %v366
      %v368 = vpop.f32.mrb[0].mxu0
      %v369 = vadd.f32 0.0, %v368
      %370 = vmatprep.mubr.f32.mxu0 0.0
      %v371 = vand.u32 %v286, 4294901760
      %v372 = vsub.f32 %v286, %v371
      %v373 = vand.u32 %v372, 4294901760
      %v374 = vsub.f32 %v372, %v373
      %v375 = vand.u32 %v374, 4294901760
      %376 = vmatmul.mubr.f32.gmra.mrb[0].mxu0 %v375
      %v377 = vpop.f32.mrb[0].mxu0
      %v378 = vadd.f32 0.0, %v377
      %v379 = vpop.f32.mrb[0].mxu0
      %v380 = vadd.f32 0.0, %v379
      %381 = vdwg.mxu0
      %v382 = vand.u32 %v291, 4294901760
      %v383 = vsub.f32 %v291, %v382
      %v384 = vand.u32 %v383, 4294901760
      %v385 = vsub.f32 %v383, %v384
      %v386 = vand.u32 %v385, 4294901760
      %387 = vmatprep.subr.mxu0 %v386
      %v388 = vand.u32 %v289, 4294901760
      %v389 = vsub.f32 %v289, %v388
      %v390 = vand.u32 %v389, 4294901760
      %v391 = vsub.f32 %v389, %v390
      %v392 = vand.u32 %v391, 4294901760
      %393 = vmatpush1.msra.mxu0 %v392
      %394 = vmatprep.subr.mxu0 0.0
      %395 = vmatpush1.msra.mxu0 0.0
      %396 = vmatprep.subr.mxu0 0.0
      %397 = vmatpush1.msra.mxu0 0.0
      %398 = vmatprep.subr.mxu0 0.0
      %399 = vmatpush1.msra.mxu0 0.0
      %400 = vmatprep.subr.mxu0 0.0
      %401 = vmatpush1.msra.mxu0 0.0
      %402 = vmatprep.subr.mxu0 0.0
      %403 = vmatpush1.msra.mxu0 0.0
      %404 = vmatprep.subr.mxu0 0.0
      %405 = vmatpush1.msra.mxu0 0.0
      %406 = vmatprep.subr.mxu0 0.0
      %407 = vmatpush1.msra.mxu0 0.0
      %408 = vmatprep.subr.mxu0 0.0
      %409 = vmatpush1.msra.mxu0 0.0
      %410 = vmatprep.subr.mxu0 0.0
      %411 = vmatpush1.msra.mxu0 0.0
      %412 = vmatprep.subr.mxu0 0.0
      %413 = vmatpush1.msra.mxu0 0.0
      %414 = vmatprep.subr.mxu0 0.0
      %415 = vmatpush1.msra.mxu0 0.0
      %416 = vmatprep.subr.mxu0 0.0
      %417 = vmatpush1.msra.mxu0 0.0
      %418 = vmatprep.subr.mxu0 0.0
      %419 = vmatpush1.msra.mxu0 0.0
      %420 = vmatprep.subr.mxu0 0.0
      %421 = vmatpush1.msra.mxu0 0.0
      %422 = vmatprep.subr.mxu0 0.0
      %423 = vmatpush1.msra.mxu0 0.0
      %424 = vmatprep.subr.mxu0 0.0
      %425 = vmatpush1.msra.mxu0 0.0
      %426 = vmatprep.subr.mxu0 0.0
      %427 = vmatpush1.msra.mxu0 0.0
      %428 = vmatprep.subr.mxu0 0.0
      %429 = vmatpush1.msra.mxu0 0.0
      %430 = vmatprep.subr.mxu0 0.0
      %431 = vmatpush1.msra.mxu0 0.0
      %432 = vmatprep.subr.mxu0 0.0
      %433 = vmatpush1.msra.mxu0 0.0
      %434 = vmatprep.subr.mxu0 0.0
      %435 = vmatpush1.msra.mxu0 0.0
      %436 = vmatprep.subr.mxu0 0.0
      %437 = vmatpush1.msra.mxu0 0.0
      %438 = vmatprep.subr.mxu0 0.0
      %439 = vmatpush1.msra.mxu0 0.0
      %440 = vmatprep.subr.mxu0 0.0
      %441 = vmatpush1.msra.mxu0 0.0
      %442 = vmatprep.subr.mxu0 0.0
      %443 = vmatpush1.msra.mxu0 0.0
      %444 = vmatprep.subr.mxu0 0.0
      %445 = vmatpush1.msra.mxu0 0.0
      %446 = vmatprep.subr.mxu0 0.0
      %447 = vmatpush1.msra.mxu0 0.0
      %448 = vmatprep.subr.mxu0 0.0
      %449 = vmatpush1.msra.mxu0 0.0
      %450 = vmatprep.subr.mxu0 0.0
      %451 = vmatpush1.msra.mxu0 0.0
      %452 = vmatprep.subr.mxu0 0.0
      %453 = vmatpush1.msra.mxu0 0.0
      %454 = vmatprep.subr.mxu0 0.0
      %455 = vmatpush1.msra.mxu0 0.0
      %456 = vmatprep.mubr.f32.mxu0 0.0
      %v457 = vand.u32 %v283, 4294901760
      %458 = vmatmul.mubr.f32.gmra.mrb[0].mxu0 %v457
      %v459 = vpop.f32.mrb[0].mxu0
      %v460 = vadd.f32 %v367, %v459
      %v461 = vpop.f32.mrb[0].mxu0
      %v462 = vadd.f32 %v369, %v461
      %463 = vmatprep.mubr.f32.mxu0 0.0
      %v464 = vand.u32 %v286, 4294901760
      %465 = vmatmul.mubr.f32.gmra.mrb[0].mxu0 %v464
      %v466 = vpop.f32.mrb[0].mxu0
      %v467 = vadd.f32 %v378, %v466
      %v468 = vpop.f32.mrb[0].mxu0
      %v469 = vadd.f32 %v380, %v468
      %470 = vdwg.mxu0
      %v471 = vand.u32 %v291, 4294901760
      %v472 = vsub.f32 %v291, %v471
      %473 = vmatprep.subr.mxu0 %v472
      %v474 = vand.u32 %v289, 4294901760
      %v475 = vsub.f32 %v289, %v474
      %476 = vmatpush1.msra.mxu0 %v475
      %477 = vmatprep.subr.mxu0 0.0
      %478 = vmatpush1.msra.mxu0 0.0
      %479 = vmatprep.subr.mxu0 0.0
      %480 = vmatpush1.msra.mxu0 0.0
      %481 = vmatprep.subr.mxu0 0.0
      %482 = vmatpush1.msra.mxu0 0.0
      %483 = vmatprep.subr.mxu0 0.0
      %484 = vmatpush1.msra.mxu0 0.0
      %485 = vmatprep.subr.mxu0 0.0
      %486 = vmatpush1.msra.mxu0 0.0
      %487 = vmatprep.subr.mxu0 0.0
      %488 = vmatpush1.msra.mxu0 0.0
      %489 = vmatprep.subr.mxu0 0.0
      %490 = vmatpush1.msra.mxu0 0.0
      %491 = vmatprep.subr.mxu0 0.0
      %492 = vmatpush1.msra.mxu0 0.0
      %493 = vmatprep.subr.mxu0 0.0
      %494 = vmatpush1.msra.mxu0 0.0
      %495 = vmatprep.subr.mxu0 0.0
      %496 = vmatpush1.msra.mxu0 0.0
      %497 = vmatprep.subr.mxu0 0.0
      %498 = vmatpush1.msra.mxu0 0.0
      %499 = vmatprep.subr.mxu0 0.0
      %500 = vmatpush1.msra.mxu0 0.0
      %501 = vmatprep.subr.mxu0 0.0
      %502 = vmatpush1.msra.mxu0 0.0
      %503 = vmatprep.subr.mxu0 0.0
      %504 = vmatpush1.msra.mxu0 0.0
      %505 = vmatprep.subr.mxu0 0.0
      %506 = vmatpush1.msra.mxu0 0.0
      %507 = vmatprep.subr.mxu0 0.0
      %508 = vmatpush1.msra.mxu0 0.0
      %509 = vmatprep.subr.mxu0 0.0
      %510 = vmatpush1.msra.mxu0 0.0
      %511 = vmatprep.subr.mxu0 0.0
      %512 = vmatpush1.msra.mxu0 0.0
      %513 = vmatprep.subr.mxu0 0.0
      %514 = vmatpush1.msra.mxu0 0.0
      %515 = vmatprep.subr.mxu0 0.0
      %516 = vmatpush1.msra.mxu0 0.0
      %517 = vmatprep.subr.mxu0 0.0
      %518 = vmatpush1.msra.mxu0 0.0
      %519 = vmatprep.subr.mxu0 0.0
      %520 = vmatpush1.msra.mxu0 0.0
      %521 = vmatprep.subr.mxu0 0.0
      %522 = vmatpush1.msra.mxu0 0.0
      %523 = vmatprep.subr.mxu0 0.0
      %524 = vmatpush1.msra.mxu0 0.0
      %525 = vmatprep.subr.mxu0 0.0
      %526 = vmatpush1.msra.mxu0 0.0
      %527 = vmatprep.subr.mxu0 0.0
      %528 = vmatpush1.msra.mxu0 0.0
      %529 = vmatprep.subr.mxu0 0.0
      %530 = vmatpush1.msra.mxu0 0.0
      %531 = vmatprep.subr.mxu0 0.0
      %532 = vmatpush1.msra.mxu0 0.0
      %533 = vmatprep.subr.mxu0 0.0
      %534 = vmatpush1.msra.mxu0 0.0
      %535 = vmatprep.subr.mxu0 0.0
      %536 = vmatpush1.msra.mxu0 0.0
      %537 = vmatprep.subr.mxu0 0.0
      %538 = vmatpush1.msra.mxu0 0.0
      %539 = vmatprep.mubr.f32.mxu0 0.0
      %v540 = vand.u32 %v283, 4294901760
      %v541 = vsub.f32 %v283, %v540
      %542 = vmatmul.mubr.f32.gmra.mrb[0].mxu0 %v541
      %v543 = vpop.f32.mrb[0].mxu0
      %v544 = vadd.f32 %v460, %v543
      %v545 = vpop.f32.mrb[0].mxu0
      %v546 = vadd.f32 %v462, %v545
      %547 = vmatprep.mubr.f32.mxu0 0.0
      %v548 = vand.u32 %v286, 4294901760
      %v549 = vsub.f32 %v286, %v548
      %550 = vmatmul.mubr.f32.gmra.mrb[0].mxu0 %v549
      %v551 = vpop.f32.mrb[0].mxu0
      %v552 = vadd.f32 %v467, %v551
      %v553 = vpop.f32.mrb[0].mxu0
      %v554 = vadd.f32 %v469, %v553
      %555 = vdwg.mxu0
      %v556 = vand.u32 %v291, 4294901760
      %557 = vmatprep.subr.mxu0 %v556
      %v558 = vand.u32 %v289, 4294901760
      %559 = vmatpush1.msra.mxu0 %v558
      %560 = vmatprep.subr.mxu0 0.0
      %561 = vmatpush1.msra.mxu0 0.0
      %562 = vmatprep.subr.mxu0 0.0
      %563 = vmatpush1.msra.mxu0 0.0
      %564 = vmatprep.subr.mxu0 0.0
      %565 = vmatpush1.msra.mxu0 0.0
      %566 = vmatprep.subr.mxu0 0.0
      %567 = vmatpush1.msra.mxu0 0.0
      %568 = vmatprep.subr.mxu0 0.0
      %569 = vmatpush1.msra.mxu0 0.0
      %570 = vmatprep.subr.mxu0 0.0
      %571 = vmatpush1.msra.mxu0 0.0
      %572 = vmatprep.subr.mxu0 0.0
      %573 = vmatpush1.msra.mxu0 0.0
      %574 = vmatprep.subr.mxu0 0.0
      %575 = vmatpush1.msra.mxu0 0.0
      %576 = vmatprep.subr.mxu0 0.0
      %577 = vmatpush1.msra.mxu0 0.0
      %578 = vmatprep.subr.mxu0 0.0
      %579 = vmatpush1.msra.mxu0 0.0
      %580 = vmatprep.subr.mxu0 0.0
      %581 = vmatpush1.msra.mxu0 0.0
      %582 = vmatprep.subr.mxu0 0.0
      %583 = vmatpush1.msra.mxu0 0.0
      %584 = vmatprep.subr.mxu0 0.0
      %585 = vmatpush1.msra.mxu0 0.0
      %586 = vmatprep.subr.mxu0 0.0
      %587 = vmatpush1.msra.mxu0 0.0
      %588 = vmatprep.subr.mxu0 0.0
      %589 = vmatpush1.msra.mxu0 0.0
      %590 = vmatprep.subr.mxu0 0.0
      %591 = vmatpush1.msra.mxu0 0.0
      %592 = vmatprep.subr.mxu0 0.0
      %593 = vmatpush1.msra.mxu0 0.0
      %594 = vmatprep.subr.mxu0 0.0
      %595 = vmatpush1.msra.mxu0 0.0
      %596 = vmatprep.subr.mxu0 0.0
      %597 = vmatpush1.msra.mxu0 0.0
      %598 = vmatprep.subr.mxu0 0.0
      %599 = vmatpush1.msra.mxu0 0.0
      %600 = vmatprep.subr.mxu0 0.0
      %601 = vmatpush1.msra.mxu0 0.0
      %602 = vmatprep.subr.mxu0 0.0
      %603 = vmatpush1.msra.mxu0 0.0
      %604 = vmatprep.subr.mxu0 0.0
      %605 = vmatpush1.msra.mxu0 0.0
      %606 = vmatprep.subr.mxu0 0.0
      %607 = vmatpush1.msra.mxu0 0.0
      %608 = vmatprep.subr.mxu0 0.0
      %609 = vmatpush1.msra.mxu0 0.0
      %610 = vmatprep.subr.mxu0 0.0
      %611 = vmatpush1.msra.mxu0 0.0
      %612 = vmatprep.subr.mxu0 0.0
      %613 = vmatpush1.msra.mxu0 0.0
      %614 = vmatprep.subr.mxu0 0.0
      %615 = vmatpush1.msra.mxu0 0.0
      %616 = vmatprep.subr.mxu0 0.0
      %617 = vmatpush1.msra.mxu0 0.0
      %618 = vmatprep.subr.mxu0 0.0
      %619 = vmatpush1.msra.mxu0 0.0
      %620 = vmatprep.subr.mxu0 0.0
      %621 = vmatpush1.msra.mxu0 0.0
      %622 = vmatprep.mubr.f32.mxu0 0.0
      %v623 = vand.u32 %v283, 4294901760
      %v624 = vsub.f32 %v283, %v623
      %v625 = vand.u32 %v624, 4294901760
      %626 = vmatmul.mubr.f32.gmra.mrb[0].mxu0 %v625
      %v627 = vpop.f32.mrb[0].mxu0
      %v628 = vadd.f32 %v544, %v627
      %v629 = vpop.f32.mrb[0].mxu0
      %v630 = vadd.f32 %v546, %v629
      %631 = vmatprep.mubr.f32.mxu0 0.0
      %v632 = vand.u32 %v286, 4294901760
      %v633 = vsub.f32 %v286, %v632
      %v634 = vand.u32 %v633, 4294901760
      %635 = vmatmul.mubr.f32.gmra.mrb[0].mxu0 %v634
      %v636 = vpop.f32.mrb[0].mxu0
      %v637 = vadd.f32 %v552, %v636
      %v638 = vpop.f32.mrb[0].mxu0
      %v639 = vadd.f32 %v554, %v638
      %640 = vdwg.mxu0
      %v641 = vand.u32 %v291, 4294901760
      %v642 = vsub.f32 %v291, %v641
      %v643 = vand.u32 %v642, 4294901760
      %644 = vmatprep.subr.mxu0 %v643
      %v645 = vand.u32 %v289, 4294901760
      %v646 = vsub.f32 %v289, %v645
      %v647 = vand.u32 %v646, 4294901760
      %648 = vmatpush1.msra.mxu0 %v647
      %649 = vmatprep.subr.mxu0 0.0
      %650 = vmatpush1.msra.mxu0 0.0
      %651 = vmatprep.subr.mxu0 0.0
      %652 = vmatpush1.msra.mxu0 0.0
      %653 = vmatprep.subr.mxu0 0.0
      %654 = vmatpush1.msra.mxu0 0.0
      %655 = vmatprep.subr.mxu0 0.0
      %656 = vmatpush1.msra.mxu0 0.0
      %657 = vmatprep.subr.mxu0 0.0
      %658 = vmatpush1.msra.mxu0 0.0
      %659 = vmatprep.subr.mxu0 0.0
      %660 = vmatpush1.msra.mxu0 0.0
      %661 = vmatprep.subr.mxu0 0.0
      %662 = vmatpush1.msra.mxu0 0.0
      %663 = vmatprep.subr.mxu0 0.0
      %664 = vmatpush1.msra.mxu0 0.0
      %665 = vmatprep.subr.mxu0 0.0
      %666 = vmatpush1.msra.mxu0 0.0
      %667 = vmatprep.subr.mxu0 0.0
      %668 = vmatpush1.msra.mxu0 0.0
      %669 = vmatprep.subr.mxu0 0.0
      %670 = vmatpush1.msra.mxu0 0.0
      %671 = vmatprep.subr.mxu0 0.0
      %672 = vmatpush1.msra.mxu0 0.0
      %673 = vmatprep.subr.mxu0 0.0
      %674 = vmatpush1.msra.mxu0 0.0
      %675 = vmatprep.subr.mxu0 0.0
      %676 = vmatpush1.msra.mxu0 0.0
      %677 = vmatprep.subr.mxu0 0.0
      %678 = vmatpush1.msra.mxu0 0.0
      %679 = vmatprep.subr.mxu0 0.0
      %680 = vmatpush1.msra.mxu0 0.0
      %681 = vmatprep.subr.mxu0 0.0
      %682 = vmatpush1.msra.mxu0 0.0
      %683 = vmatprep.subr.mxu0 0.0
      %684 = vmatpush1.msra.mxu0 0.0
      %685 = vmatprep.subr.mxu0 0.0
      %686 = vmatpush1.msra.mxu0 0.0
      %687 = vmatprep.subr.mxu0 0.0
      %688 = vmatpush1.msra.mxu0 0.0
      %689 = vmatprep.subr.mxu0 0.0
      %690 = vmatpush1.msra.mxu0 0.0
      %691 = vmatprep.subr.mxu0 0.0
      %692 = vmatpush1.msra.mxu0 0.0
      %693 = vmatprep.subr.mxu0 0.0
      %694 = vmatpush1.msra.mxu0 0.0
      %695 = vmatprep.subr.mxu0 0.0
      %696 = vmatpush1.msra.mxu0 0.0
      %697 = vmatprep.subr.mxu0 0.0
      %698 = vmatpush1.msra.mxu0 0.0
      %699 = vmatprep.subr.mxu0 0.0
      %700 = vmatpush1.msra.mxu0 0.0
      %701 = vmatprep.subr.mxu0 0.0
      %702 = vmatpush1.msra.mxu0 0.0
      %703 = vmatprep.subr.mxu0 0.0
      %704 = vmatpush1.msra.mxu0 0.0
      %705 = vmatprep.subr.mxu0 0.0
      %706 = vmatpush1.msra.mxu0 0.0
      %707 = vmatprep.subr.mxu0 0.0
      %708 = vmatpush1.msra.mxu0 0.0
      %709 = vmatprep.subr.mxu0 0.0
      %710 = vmatpush1.msra.mxu0 0.0
      %711 = vmatprep.mubr.f32.mxu0 0.0
      %v712 = vand.u32 %v283, 4294901760
      %713 = vmatmul.mubr.f32.gmra.mrb[0].mxu0 %v712
      %v714 = vpop.f32.mrb[0].mxu0
      %v715 = vadd.f32 %v628, %v714
      %v716 = vpop.f32.mrb[0].mxu0
      %v717 = vadd.f32 %v630, %v716
      %718 = vmatprep.mubr.f32.mxu0 0.0
      %v719 = vand.u32 %v286, 4294901760
      %720 = vmatmul.mubr.f32.gmra.mrb[0].mxu0 %v719
      %v721 = vpop.f32.mrb[0].mxu0
      %v722 = vadd.f32 %v637, %v721
      %v723 = vpop.f32.mrb[0].mxu0
      %v724 = vadd.f32 %v639, %v723
      %725 = vdwg.mxu0
      %v726 = vand.u32 %v291, 4294901760
      %727 = vmatprep.subr.mxu0 %v726
      %v728 = vand.u32 %v289, 4294901760
      %729 = vmatpush1.msra.mxu0 %v728
      %730 = vmatprep.subr.mxu0 0.0
      %731 = vmatpush1.msra.mxu0 0.0
      %732 = vmatprep.subr.mxu0 0.0
      %733 = vmatpush1.msra.mxu0 0.0
      %734 = vmatprep.subr.mxu0 0.0
      %735 = vmatpush1.msra.mxu0 0.0
      %736 = vmatprep.subr.mxu0 0.0
      %737 = vmatpush1.msra.mxu0 0.0
      %738 = vmatprep.subr.mxu0 0.0
      %739 = vmatpush1.msra.mxu0 0.0
      %740 = vmatprep.subr.mxu0 0.0
      %741 = vmatpush1.msra.mxu0 0.0
      %742 = vmatprep.subr.mxu0 0.0
      %743 = vmatpush1.msra.mxu0 0.0
      %744 = vmatprep.subr.mxu0 0.0
      %745 = vmatpush1.msra.mxu0 0.0
      %746 = vmatprep.subr.mxu0 0.0
      %747 = vmatpush1.msra.mxu0 0.0
      %748 = vmatprep.subr.mxu0 0.0
      %749 = vmatpush1.msra.mxu0 0.0
      %750 = vmatprep.subr.mxu0 0.0
      %751 = vmatpush1.msra.mxu0 0.0
      %752 = vmatprep.subr.mxu0 0.0
      %753 = vmatpush1.msra.mxu0 0.0
      %754 = vmatprep.subr.mxu0 0.0
      %755 = vmatpush1.msra.mxu0 0.0
      %756 = vmatprep.subr.mxu0 0.0
      %757 = vmatpush1.msra.mxu0 0.0
      %758 = vmatprep.subr.mxu0 0.0
      %759 = vmatpush1.msra.mxu0 0.0
      %760 = vmatprep.subr.mxu0 0.0
      %761 = vmatpush1.msra.mxu0 0.0
      %762 = vmatprep.subr.mxu0 0.0
      %763 = vmatpush1.msra.mxu0 0.0
      %764 = vmatprep.subr.mxu0 0.0
      %765 = vmatpush1.msra.mxu0 0.0
      %766 = vmatprep.subr.mxu0 0.0
      %767 = vmatpush1.msra.mxu0 0.0
      %768 = vmatprep.subr.mxu0 0.0
      %769 = vmatpush1.msra.mxu0 0.0
      %770 = vmatprep.subr.mxu0 0.0
      %771 = vmatpush1.msra.mxu0 0.0
      %772 = vmatprep.subr.mxu0 0.0
      %773 = vmatpush1.msra.mxu0 0.0
      %774 = vmatprep.subr.mxu0 0.0
      %775 = vmatpush1.msra.mxu0 0.0
      %776 = vmatprep.subr.mxu0 0.0
      %777 = vmatpush1.msra.mxu0 0.0
      %778 = vmatprep.subr.mxu0 0.0
      %779 = vmatpush1.msra.mxu0 0.0
      %780 = vmatprep.subr.mxu0 0.0
      %781 = vmatpush1.msra.mxu0 0.0
      %782 = vmatprep.subr.mxu0 0.0
      %783 = vmatpush1.msra.mxu0 0.0
      %784 = vmatprep.subr.mxu0 0.0
      %785 = vmatpush1.msra.mxu0 0.0
      %786 = vmatprep.subr.mxu0 0.0
      %787 = vmatpush1.msra.mxu0 0.0
      %788 = vmatprep.subr.mxu0 0.0
      %789 = vmatpush1.msra.mxu0 0.0
      %790 = vmatprep.subr.mxu0 0.0
      %791 = vmatpush1.msra.mxu0 0.0
      %792 = vmatprep.mubr.f32.mxu0 0.0
      %v793 = vand.u32 %v283, 4294901760
      %794 = vmatmul.mubr.f32.gmra.mrb[0].mxu0 %v793
      %v795 = vpop.f32.mrb[0].mxu0
      %v796 = vadd.f32 %v715, %v795
      %v797 = vpop.f32.mrb[0].mxu0
      %v798 = vadd.f32 %v717, %v797
      %799 = vmatprep.mubr.f32.mxu0 0.0
      %v800 = vand.u32 %v286, 4294901760
      %801 = vmatmul.mubr.f32.gmra.mrb[0].mxu0 %v800
      %v802 = vpop.f32.mrb[0].mxu0
      %v803 = vadd.f32 %v722, %v802
      %v804 = vpop.f32.mrb[0].mxu0
      %v805 = vadd.f32 %v724, %v804
      %806 = vdwg.mxu0
      %v807 = vld [vmem:[%s4] sm:$0xff]
      %v808 = vld [vmem:[%s4 + $0x8] sm:$0xff]
      %v809 = vadd.f32 %v796, %v798
      %810 = vadd.xlane.f32.xlu0 %v809
      %v811 = vpop.xlane.xlu0 %810
      %v812 = vadd.f32 %v803, %v805
      %813 = vadd.xlane.f32.xlu0 %v812
      %v814 = vpop.xlane.xlu0 %813
      %v815 = vadd.f32 %v807, %v811
      %v816 = vadd.f32 %v808, %v814
      %vm817 = vcmask 7168
      %818 = vst.msk [vmem:[%s4] sm:$0xff] %vm817, %v815
      %819 = vst.msk [vmem:[%s4 + $0x8] sm:$0xff] %vm817, %v816
      %v820 = vld [vmem:[%s5] sm:$0xff]
      %v821 = vld [vmem:[%s5 + $0x8] sm:$0xff]
      %v822 = vmul.f32 %v796, %v796
      %v823 = vmul.f32 %v798, %v798
      %v824 = vmul.f32 %v803, %v803
      %v825 = vmul.f32 %v805, %v805
      %v826 = vadd.f32 %v822, %v823
      %827 = vadd.xlane.f32.xlu0 %v826
      %v828 = vpop.xlane.xlu0 %827
      %v829 = vadd.f32 %v824, %v825
      %830 = vadd.xlane.f32.xlu0 %v829
      %v831 = vpop.xlane.xlu0 %830
      %v832 = vadd.f32 %v820, %v828
      %v833 = vadd.f32 %v821, %v831
      %834 = vst.msk [vmem:[%s5] sm:$0xff] %vm817, %v832
      %835 = vst.msk [vmem:[%s5 + $0x8] sm:$0xff] %vm817, %v833
      // Predicated region
      $region41: #{bottleneck_forward.4} parent=35 // pred_check
        %p836 = pneg %p133
      $region42: #{bottleneck_forward.4} parent=35 // pred_check_branch
        %838 = sbr.rel (%p836) target = $region44
      $region43: #{bottleneck_forward.4} parent=35 // pred_region
        _
      $region44: #{bottleneck_forward.4} parent=35 // pred_fallthru
        _
      // Predicated region
      $region45: #{bottleneck_forward.4} parent=35 // pred_check
        %p839 = pneg %p154
      $region46: #{bottleneck_forward.4} parent=35 // pred_check_branch
        %841 = sbr.rel (%p839) target = $region48
      $region47: #{bottleneck_forward.4} parent=35 // pred_region
        _
      $region48: #{bottleneck_forward.4} parent=35 // pred_fallthru
        _
      // Predicated region
      $region49: #{bottleneck_forward.4} parent=35 // pred_check
        %p842 = pneg %p133
      $region50: #{bottleneck_forward.4} parent=35 // pred_check_branch
        %844 = sbr.rel (%p842) target = $region52
      $region51: #{bottleneck_forward.4} parent=35 // pred_region
        _
      $region52: #{bottleneck_forward.4} parent=35 // pred_fallthru
        _
      // Predicated region
      $region53: #{bottleneck_forward.4} parent=35 // pred_check
        %p845 = pneg %p154
      $region54: #{bottleneck_forward.4} parent=35 // pred_check_branch
        %847 = sbr.rel (%p845) target = $region56
      $region55: #{bottleneck_forward.4} parent=35 // pred_region
        _
      $region56: #{bottleneck_forward.4} parent=35 // pred_fallthru
        _
    $region36: #{bottleneck_forward.4} parent=5 // pred_fallthru
      _
    %p848 = scmp.le.s32.totalorder 2, %s12
    // Predicated region
    $region57: #{bottleneck_forward.4} parent=5 // pred_check
      %p849 = pneg %p848
    $region58: #{bottleneck_forward.4} parent=5 // pred_check_branch
      %851 = sbr.rel (%p849) target = $region60
    $region59: #{bottleneck_forward.4} parent=5 // pred_region
      %s852 = ssub.s32 %s12, 2
    $region60: #{bottleneck_forward.4} parent=5 // pred_fallthru
      _
  $region6: #{bottleneck_forward.4} parent=0 // loop_footer
    %s16 = sadd.s32 1, %s12
  $region7: #{bottleneck_forward.4} parent=0 // loop_footer_branch
    %11 = sbr.rel target = $region3
  $region8: #{bottleneck_forward.4} parent=0 // loop_exit
    _

// kernel: bottleneck_forward.5
$region0: #{bottleneck_forward.5}
  #allocation0 [shape = 'u32[]', space=smem, size = 0x4, offset = 0x4, fixed_abs, tag = 'smem constant byte address 0x4 - core index']
  #allocation1 [shape = 'u32[144,128]{1,0:T(1,128)}', space=vmem, size = 0x12000, scoped, tag = 'internal scratch']
  #allocation2 [shape = 'f32[16,512]{1,0:T(8,128)}', space=vmem, size = 0x8000, scoped, tag = 'scratch operand']
  #allocation3 [shape = 'f32[4,256]{1,0:T(4,128)}', space=vmem, size = 0x1000, scoped, tag = 'scratch operand']
  %s0 = inlined_call_operand.vmem [shape: f32[2,4,256], index: 0, kind: input, shape index: {}]
  %s1 = inlined_call_operand.vmem [shape: f32[4,1], index: 1, kind: input, shape index: {}]
  %s2 = inlined_call_operand.vmem [shape: f32[4,1], index: 2, kind: input, shape index: {}]
  %s3 = inlined_call_operand.vmem [shape: f32[16,4], index: 3, kind: input, shape index: {}]
  %s4 = inlined_call_operand.vmem [shape: f32[16,1], index: 4, kind: input, shape index: {}]
  %s5 = inlined_call_operand.vmem [shape: f32[16,1], index: 5, kind: input, shape index: {}]
  %s6 = inlined_call_operand.vmem [shape: f32[9,4,16], index: 6, kind: input, shape index: {}]
  %s7 = inlined_call_operand.vmem [shape: f32[2,256], index: 7, kind: input, shape index: {}]
  %s8 = inlined_call_operand.vmem [shape: f32[2,8,256], index: 8, kind: output, shape index: {}]
  %s9 = sld [smem:[#allocation0]]
  $region65: #{bottleneck_forward.5} parent=0
    _
  %s11 = ssub.s32 1, %s9
  %s12 = scalar_select 0, %s11, %s9
  loop: start=0, step=1, limit=4
  $region2: #{bottleneck_forward.5} parent=0 // loop_pre_header
    _
  $region3: #{bottleneck_forward.5} parent=0 // loop_header
    %s14 = sphi 0, %s18
    %p15 = scmp.ge.s32.totalorder %s14, 4
    %s24 = sphi 0, %s26
    %s27 = sphi 0, %s24
    %s28 = sphi 0, %s27
    %s44 = sphi 0, %s28
    %s48 = sphi 0, %s48
    %s50 = sphi 0, %s48
    %s51 = sphi 0, %s50
    %s65 = sphi 0, %s51
    %s69 = sphi 0, %s69
    %s71 = sphi 0, %s69
    %s72 = sphi 0, %s71
    %s86 = sphi 0, %s72
    %s90 = sphi 0, %s90
    %s92 = sphi 0, %s90
    %s93 = sphi 0, %s92
    %s107 = sphi 0, %s93
    %s111 = sphi 0, %s111
    %s113 = sphi 0, %s111
    %s114 = sphi 0, %s113
    %s128 = sphi 0, %s114
    %s132 = sphi 0, %s132
    %s134 = sphi 0, %s132
    %s135 = sphi 0, %s134
    %s149 = sphi 0, %s135
    %s153 = sphi 0, %s153
    %s155 = sphi 0, %s153
    %s156 = sphi 0, %s155
    %s170 = sphi 0, %s156
    %s174 = sphi 0, %s174
    %s176 = sphi 0, %s174
    %s177 = sphi 0, %s176
    %s191 = sphi 0, %s177
    %s197 = sphi 0, %s199
    %s200 = sphi 0, %s197
    %s201 = sphi 0, %s200
    %s217 = sphi 0, %s201
  $region4: #{bottleneck_forward.5} parent=0 // loop_header_branch
    %17 = sbr.rel (%p15) target = $region8
  $region5: #{bottleneck_forward.5} parent=0 // loop_body
    %s19 = ssub.s32 %s14, 1
    %s20 = ssub.s32 %s14, 2
    %s21 = sadd.s32 %s14, 1
    %s22 = ssub.s32 %s14, %s21
    %p23 = scmp.eq.s32.totalorder %s22, 0
    %s25 = sadd.s32 %s24, 1
    %s26 = scalar_select %p23, %s24, %s25
    %p29 = pneg %p23
    %p30 = scmp.eq.s32.totalorder %s14, 1
    %p31 = por %p29, %p30
    %p32 = scmp.ne.s32.totalorder %s24, %s27
    %p33 = scmp.eq.s32.totalorder %s14, 0
    %p34 = por %p32, %p33
    %p35 = scmp.ne.s32.totalorder %s24, %s27
    %p36 = scmp.eq.s32.totalorder %s19, 1
    %p37 = por %p35, %p36
    %p38 = scmp.ne.s32.totalorder %s27, %s28
    %p39 = scmp.eq.s32.totalorder %s19, 0
    %p40 = por %p38, %p39
    %p41 = scmp.ne.s32.totalorder %s27, %s28
    %p42 = scmp.eq.s32.totalorder %s20, 1
    %p43 = por %p41, %p42
    %p45 = scmp.ne.s32.totalorder %s28, %s44
    %p46 = scmp.eq.s32.totalorder %s20, 0
    %p47 = por %p45, %p46
    %s49 = sadd.s32 %s48, 1
    %p52 = scmp.eq.s32.totalorder %s14, 1
    %p53 = scmp.ne.s32.totalorder %s48, %s50
    %p54 = scmp.eq.s32.totalorder %s14, 0
    %p55 = por %p53, %p54
    %p56 = scmp.ne.s32.totalorder %s48, %s50
    %p57 = scmp.eq.s32.totalorder %s19, 1
    %p58 = por %p56, %p57
    %p59 = scmp.ne.s32.totalorder %s50, %s51
    %p60 = scmp.eq.s32.totalorder %s19, 0
    %p61 = por %p59, %p60
    %p62 = scmp.ne.s32.totalorder %s50, %s51
    %p63 = scmp.eq.s32.totalorder %s20, 1
    %p64 = por %p62, %p63
    %p66 = scmp.ne.s32.totalorder %s51, %s65
    %p67 = scmp.eq.s32.totalorder %s20, 0
    %p68 = por %p66, %p67
    %s70 = sadd.s32 %s69, 1
    %p73 = scmp.eq.s32.totalorder %s14, 1
    %p74 = scmp.ne.s32.totalorder %s69, %s71
    %p75 = scmp.eq.s32.totalorder %s14, 0
    %p76 = por %p74, %p75
    %p77 = scmp.ne.s32.totalorder %s69, %s71
    %p78 = scmp.eq.s32.totalorder %s19, 1
    %p79 = por %p77, %p78
    %p80 = scmp.ne.s32.totalorder %s71, %s72
    %p81 = scmp.eq.s32.totalorder %s19, 0
    %p82 = por %p80, %p81
    %p83 = scmp.ne.s32.totalorder %s71, %s72
    %p84 = scmp.eq.s32.totalorder %s20, 1
    %p85 = por %p83, %p84
    %p87 = scmp.ne.s32.totalorder %s72, %s86
    %p88 = scmp.eq.s32.totalorder %s20, 0
    %p89 = por %p87, %p88
    %s91 = sadd.s32 %s90, 1
    %p94 = scmp.eq.s32.totalorder %s14, 1
    %p95 = scmp.ne.s32.totalorder %s90, %s92
    %p96 = scmp.eq.s32.totalorder %s14, 0
    %p97 = por %p95, %p96
    %p98 = scmp.ne.s32.totalorder %s90, %s92
    %p99 = scmp.eq.s32.totalorder %s19, 1
    %p100 = por %p98, %p99
    %p101 = scmp.ne.s32.totalorder %s92, %s93
    %p102 = scmp.eq.s32.totalorder %s19, 0
    %p103 = por %p101, %p102
    %p104 = scmp.ne.s32.totalorder %s92, %s93
    %p105 = scmp.eq.s32.totalorder %s20, 1
    %p106 = por %p104, %p105
    %p108 = scmp.ne.s32.totalorder %s93, %s107
    %p109 = scmp.eq.s32.totalorder %s20, 0
    %p110 = por %p108, %p109
    %s112 = sadd.s32 %s111, 1
    %p115 = scmp.eq.s32.totalorder %s14, 1
    %p116 = scmp.ne.s32.totalorder %s111, %s113
    %p117 = scmp.eq.s32.totalorder %s14, 0
    %p118 = por %p116, %p117
    %p119 = scmp.ne.s32.totalorder %s111, %s113
    %p120 = scmp.eq.s32.totalorder %s19, 1
    %p121 = por %p119, %p120
    %p122 = scmp.ne.s32.totalorder %s113, %s114
    %p123 = scmp.eq.s32.totalorder %s19, 0
    %p124 = por %p122, %p123
    %p125 = scmp.ne.s32.totalorder %s113, %s114
    %p126 = scmp.eq.s32.totalorder %s20, 1
    %p127 = por %p125, %p126
    %p129 = scmp.ne.s32.totalorder %s114, %s128
    %p130 = scmp.eq.s32.totalorder %s20, 0
    %p131 = por %p129, %p130
    %s133 = sadd.s32 %s132, 1
    %p136 = scmp.eq.s32.totalorder %s14, 1
    %p137 = scmp.ne.s32.totalorder %s132, %s134
    %p138 = scmp.eq.s32.totalorder %s14, 0
    %p139 = por %p137, %p138
    %p140 = scmp.ne.s32.totalorder %s132, %s134
    %p141 = scmp.eq.s32.totalorder %s19, 1
    %p142 = por %p140, %p141
    %p143 = scmp.ne.s32.totalorder %s134, %s135
    %p144 = scmp.eq.s32.totalorder %s19, 0
    %p145 = por %p143, %p144
    %p146 = scmp.ne.s32.totalorder %s134, %s135
    %p147 = scmp.eq.s32.totalorder %s20, 1
    %p148 = por %p146, %p147
    %p150 = scmp.ne.s32.totalorder %s135, %s149
    %p151 = scmp.eq.s32.totalorder %s20, 0
    %p152 = por %p150, %p151
    %s154 = sadd.s32 %s153, 1
    %p157 = scmp.eq.s32.totalorder %s14, 1
    %p158 = scmp.ne.s32.totalorder %s153, %s155
    %p159 = scmp.eq.s32.totalorder %s14, 0
    %p160 = por %p158, %p159
    %p161 = scmp.ne.s32.totalorder %s153, %s155
    %p162 = scmp.eq.s32.totalorder %s19, 1
    %p163 = por %p161, %p162
    %p164 = scmp.ne.s32.totalorder %s155, %s156
    %p165 = scmp.eq.s32.totalorder %s19, 0
    %p166 = por %p164, %p165
    %p167 = scmp.ne.s32.totalorder %s155, %s156
    %p168 = scmp.eq.s32.totalorder %s20, 1
    %p169 = por %p167, %p168
    %p171 = scmp.ne.s32.totalorder %s156, %s170
    %p172 = scmp.eq.s32.totalorder %s20, 0
    %p173 = por %p171, %p172
    %s175 = sadd.s32 %s174, 1
    %p178 = scmp.eq.s32.totalorder %s14, 1
    %p179 = scmp.ne.s32.totalorder %s174, %s176
    %p180 = scmp.eq.s32.totalorder %s14, 0
    %p181 = por %p179, %p180
    %p182 = scmp.ne.s32.totalorder %s174, %s176
    %p183 = scmp.eq.s32.totalorder %s19, 1
    %p184 = por %p182, %p183
    %p185 = scmp.ne.s32.totalorder %s176, %s177
    %p186 = scmp.eq.s32.totalorder %s19, 0
    %p187 = por %p185, %p186
    %p188 = scmp.ne.s32.totalorder %s176, %s177
    %p189 = scmp.eq.s32.totalorder %s20, 1
    %p190 = por %p188, %p189
    %p192 = scmp.ne.s32.totalorder %s177, %s191
    %p193 = scmp.eq.s32.totalorder %s20, 0
    %p194 = por %p192, %p193
    %s195 = ssub.s32 %s14, %s21
    %p196 = scmp.eq.s32.totalorder %s195, 0
    %s198 = sadd.s32 %s197, 1
    %s199 = scalar_select %p196, %s197, %s198
    %p202 = pneg %p196
    %p203 = scmp.eq.s32.totalorder %s14, 1
    %p204 = por %p202, %p203
    %p205 = scmp.ne.s32.totalorder %s197, %s200
    %p206 = scmp.eq.s32.totalorder %s14, 0
    %p207 = por %p205, %p206
    %p208 = scmp.ne.s32.totalorder %s197, %s200
    %p209 = scmp.eq.s32.totalorder %s19, 1
    %p210 = por %p208, %p209
    %p211 = scmp.ne.s32.totalorder %s200, %s201
    %p212 = scmp.eq.s32.totalorder %s19, 0
    %p213 = por %p211, %p212
    %p214 = scmp.ne.s32.totalorder %s200, %s201
    %p215 = scmp.eq.s32.totalorder %s20, 1
    %p216 = por %p214, %p215
    %p218 = scmp.ne.s32.totalorder %s201, %s217
    %p219 = scmp.eq.s32.totalorder %s20, 0
    %p220 = por %p218, %p219
    %p221 = scmp.le.s32.totalorder 1, %s14
    %p222 = scmp.lt.s32.totalorder %s14, 3
    %p223 = pnand %p221, %p222
    %p224 = pneg %p223
    // Predicated region
    $region9: #{bottleneck_forward.5} parent=5 // pred_check
      _
    $region10: #{bottleneck_forward.5} parent=5 // pred_check_branch
      %226 = sbr.rel (%p223) target = $region12
    $region11: #{bottleneck_forward.5} parent=5 // pred_region
      %s227 = ssub.s32 %s14, 1
      // Predicated region
      $region13: #{bottleneck_forward.5} parent=11 // pred_check
        %p228 = pneg %p61
      $region14: #{bottleneck_forward.5} parent=11 // pred_check_branch
        %230 = sbr.rel (%p228) target = $region16
      $region15: #{bottleneck_forward.5} parent=11 // pred_region
        _
      $region16: #{bottleneck_forward.5} parent=11 // pred_fallthru
        _
      // Predicated region
      $region17: #{bottleneck_forward.5} parent=11 // pred_check
        %p231 = pneg %p82
      $region18: #{bottleneck_forward.5} parent=11 // pred_check_branch
        %233 = sbr.rel (%p231) target = $region20
      $region19: #{bottleneck_forward.5} parent=11 // pred_region
        _
      $region20: #{bottleneck_forward.5} parent=11 // pred_fallthru
        _
      // Predicated region
      $region21: #{bottleneck_forward.5} parent=11 // pred_check
        %p234 = pneg %p103
      $region22: #{bottleneck_forward.5} parent=11 // pred_check_branch
        %236 = sbr.rel (%p234) target = $region24
      $region23: #{bottleneck_forward.5} parent=11 // pred_region
        _
      $region24: #{bottleneck_forward.5} parent=11 // pred_fallthru
        _
      // Predicated region
      $region25: #{bottleneck_forward.5} parent=11 // pred_check
        %p237 = pneg %p124
      $region26: #{bottleneck_forward.5} parent=11 // pred_check_branch
        %239 = sbr.rel (%p237) target = $region28
      $region27: #{bottleneck_forward.5} parent=11 // pred_region
        _
      $region28: #{bottleneck_forward.5} parent=11 // pred_fallthru
        _
      // Predicated region
      $region29: #{bottleneck_forward.5} parent=11 // pred_check
        %p240 = pneg %p145
      $region30: #{bottleneck_forward.5} parent=11 // pred_check_branch
        %242 = sbr.rel (%p240) target = $region32
      $region31: #{bottleneck_forward.5} parent=11 // pred_region
        _
      $region32: #{bottleneck_forward.5} parent=11 // pred_fallthru
        _
      // Predicated region
      $region33: #{bottleneck_forward.5} parent=11 // pred_check
        %p243 = pneg %p166
      $region34: #{bottleneck_forward.5} parent=11 // pred_check_branch
        %245 = sbr.rel (%p243) target = $region36
      $region35: #{bottleneck_forward.5} parent=11 // pred_region
        _
      $region36: #{bottleneck_forward.5} parent=11 // pred_fallthru
        _
      // Predicated region
      $region37: #{bottleneck_forward.5} parent=11 // pred_check
        %p246 = pneg %p187
      $region38: #{bottleneck_forward.5} parent=11 // pred_check_branch
        %248 = sbr.rel (%p246) target = $region40
      $region39: #{bottleneck_forward.5} parent=11 // pred_region
        _
      $region40: #{bottleneck_forward.5} parent=11 // pred_fallthru
        _
    $region12: #{bottleneck_forward.5} parent=5 // pred_fallthru
      _
    %p249 = scmp.lt.s32.totalorder %s14, 2
    // Predicated region
    $region41: #{bottleneck_forward.5} parent=5 // pred_check
      %p250 = pneg %p249
    $region42: #{bottleneck_forward.5} parent=5 // pred_check_branch
      %252 = sbr.rel (%p250) target = $region44
    $region43: #{bottleneck_forward.5} parent=5 // pred_region
      // Predicated region
      $region45: #{bottleneck_forward.5} parent=43 // pred_check
        %p253 = pneg %p34
      $region46: #{bottleneck_forward.5} parent=43 // pred_check_branch
        %255 = sbr.rel (%p253) target = $region48
      $region47: #{bottleneck_forward.5} parent=43 // pred_region
        %p256 = scmp.lt.s32.totalorder %s14, 1
        %s257 = scalar_select %p256, %s14, 1
        %s258 = smul.addr %s257, 2
        %s259 = smul.addr %s258, 4
        %s260 = scalar_lea.vmem %s0, %s259
      $region48: #{bottleneck_forward.5} parent=43 // pred_fallthru
        _
    $region44: #{bottleneck_forward.5} parent=5 // pred_fallthru
      _
    %p261 = scmp.le.s32.totalorder 1, %s14
    %p262 = scmp.lt.s32.totalorder %s14, 3
    %p263 = pnand %p261, %p262
    %p264 = pneg %p263
    // Predicated region
    $region49: #{bottleneck_forward.5} parent=5 // pred_check
      _
    $region50: #{bottleneck_forward.5} parent=5 // pred_check_branch
      %266 = sbr.rel (%p263) target = $region52
    $region51: #{bottleneck_forward.5} parent=5 // pred_region
      %s267 = ssub.s32 %s14, 1
      %p268 = scmp.lt.s32.totalorder %s19, 1
      %s269 = scalar_select %p268, %s19, 1
      %s270 = smul.addr %s269, 2
      %s271 = smul.addr %s270, 4
      %s272 = scalar_lea.vmem %s0, %s271
      %p273 = pneg %p40
      %p274 = pneg %p37
      %p275 = pneg %p61
      %p276 = pneg %p58
      %p277 = pneg %p82
      %p278 = pneg %p79
      %p279 = pneg %p103
      %p280 = pneg %p100
      %p281 = pneg %p124
      %p282 = pneg %p121
      %p283 = pneg %p145
      %p284 = pneg %p142
      %p285 = pneg %p166
      %p286 = pneg %p163
      %p287 = pneg %p187
      %p288 = pneg %p184
      %p289 = pneg %p213
      %p290 = pneg %p210
      %p291 = scmp.lt.s32.totalorder %s19, 1
      %s292 = scalar_select %p291, %s19, 1
      %s293 = smul.addr %s292, 2
      %s294 = smul.addr %s293, 8
      %s295 = scalar_lea.vmem %s8, %s294
      %p296 = scmp.lt.s32.totalorder %s19, 1
      %s297 = scalar_select %p296, %s19, 1
      %s298 = smul.addr %s297, 2
      %s299 = smul.addr %s298, 4
      %s300 = scalar_lea.vmem %s0, %s299
      %p301 = scmp.lt.s32.totalorder %s19, 1
      %s302 = scalar_select %p301, %s19, 1
      %s303 = smul.addr %s302, 2
      %s304 = smul.addr %s303, 8
      %s305 = scalar_lea.vmem %s8, %s304
      %v306 = vld [vmem:[%s300] sm:$0xff]
      %v308 = vcombine.high %v306, %v306
      %310 = vst [vmem:[%s305] sm:$0xf] %v306
      %311 = vst [vmem:[%s305 + $0x8] sm:$0xf] %v308
      %v312 = vld [vmem:[%s1] sm:$0xf]
      %314 = vset.pattern.permute.xlu0 0
      %315 = vperm.xlu0 %314, %v312
      %v316 = vpop.permute.xlu0 %315
      %v318 = vunpack.c.l.s4 839922192
      %v319 = vunpack.c.0.s8 %v318
      %v320 = vlaneseq
      %v321 = vshrl.u32 %v320, 7
      %v322 = vsub.s32 %v319, %v321
      %v323 = vrot.slane %v316, %v322
      %v325 = vmul.f32 %v306, %v323
      %v326 = vld [vmem:[%s2] sm:$0xf]
      %328 = vset.pattern.permute.xlu0 0
      %329 = vperm.xlu0 %328, %v326
      %v330 = vpop.permute.xlu0 %329
      %v332 = vunpack.c.l.s4 839922192
      %v333 = vunpack.c.0.s8 %v332
      %v334 = vlaneseq
      %v335 = vshrl.u32 %v334, 7
      %v336 = vsub.s32 %v333, %v335
      %v337 = vrot.slane %v330, %v336
      %v339 = vadd.f32 %v325, %v337
      %v340 = vmax.f32 %v339, 0.0
      %v341 = vld [vmem:[%s3] sm:$0xff]
      %v342 = vld [vmem:[%s3 + $0x8] sm:$0xff]
      %v344 = vcombine.high %v340, %v340
      %vm345 = vcmask 31744
      %v347 = vsel %vm345, %v341, 0
      %v350 = vsel %vm345, %v342, 0
      %vm352 = vcmask 1043456
      %v353 = vsel %vm352, %v340, 0
      %v355 = vsel %vm352, %v344, 0
      %v357 = vand.u32 %v355, 4294901760
      %358 = vmatprep.subr.mxu0 %v357
      %v359 = vand.u32 %v353, 4294901760
      %360 = vmatpush1.msra.mxu0 %v359
      %361 = vmatprep.subr.mxu0 0.0
      %362 = vmatpush1.msra.mxu0 0.0
      %363 = vmatprep.subr.mxu0 0.0
      %364 = vmatpush1.msra.mxu0 0.0
      %365 = vmatprep.subr.mxu0 0.0
      %366 = vmatpush1.msra.mxu0 0.0
      %367 = vmatprep.subr.mxu0 0.0
      %368 = vmatpush1.msra.mxu0 0.0
      %369 = vmatprep.subr.mxu0 0.0
      %370 = vmatpush1.msra.mxu0 0.0
      %371 = vmatprep.subr.mxu0 0.0
      %372 = vmatpush1.msra.mxu0 0.0
      %373 = vmatprep.subr.mxu0 0.0
      %374 = vmatpush1.msra.mxu0 0.0
      %375 = vmatprep.subr.mxu0 0.0
      %376 = vmatpush1.msra.mxu0 0.0
      %377 = vmatprep.subr.mxu0 0.0
      %378 = vmatpush1.msra.mxu0 0.0
      %379 = vmatprep.subr.mxu0 0.0
      %380 = vmatpush1.msra.mxu0 0.0
      %381 = vmatprep.subr.mxu0 0.0
      %382 = vmatpush1.msra.mxu0 0.0
      %383 = vmatprep.subr.mxu0 0.0
      %384 = vmatpush1.msra.mxu0 0.0
      %385 = vmatprep.subr.mxu0 0.0
      %386 = vmatpush1.msra.mxu0 0.0
      %387 = vmatprep.subr.mxu0 0.0
      %388 = vmatpush1.msra.mxu0 0.0
      %389 = vmatprep.subr.mxu0 0.0
      %390 = vmatpush1.msra.mxu0 0.0
      %391 = vmatprep.subr.mxu0 0.0
      %392 = vmatpush1.msra.mxu0 0.0
      %393 = vmatprep.subr.mxu0 0.0
      %394 = vmatpush1.msra.mxu0 0.0
      %395 = vmatprep.subr.mxu0 0.0
      %396 = vmatpush1.msra.mxu0 0.0
      %397 = vmatprep.subr.mxu0 0.0
      %398 = vmatpush1.msra.mxu0 0.0
      %399 = vmatprep.subr.mxu0 0.0
      %400 = vmatpush1.msra.mxu0 0.0
      %401 = vmatprep.subr.mxu0 0.0
      %402 = vmatpush1.msra.mxu0 0.0
      %403 = vmatprep.subr.mxu0 0.0
      %404 = vmatpush1.msra.mxu0 0.0
      %405 = vmatprep.subr.mxu0 0.0
      %406 = vmatpush1.msra.mxu0 0.0
      %407 = vmatprep.subr.mxu0 0.0
      %408 = vmatpush1.msra.mxu0 0.0
      %409 = vmatprep.subr.mxu0 0.0
      %410 = vmatpush1.msra.mxu0 0.0
      %411 = vmatprep.subr.mxu0 0.0
      %412 = vmatpush1.msra.mxu0 0.0
      %413 = vmatprep.subr.mxu0 0.0
      %414 = vmatpush1.msra.mxu0 0.0
      %415 = vmatprep.subr.mxu0 0.0
      %416 = vmatpush1.msra.mxu0 0.0
      %417 = vmatprep.subr.mxu0 0.0
      %418 = vmatpush1.msra.mxu0 0.0
      %419 = vmatprep.subr.mxu0 0.0
      %420 = vmatpush1.msra.mxu0 0.0
      %421 = vmatprep.subr.mxu0 0.0
      %422 = vmatpush1.msra.mxu0 0.0
      %423 = vmatprep.mubr.f32.mxu0 0.0
      %v424 = vand.u32 %v347, 4294901760
      %v425 = vsub.f32 %v347, %v424
      %v426 = vand.u32 %v425, 4294901760
      %v427 = vsub.f32 %v425, %v426
      %v428 = vand.u32 %v427, 4294901760
      %429 = vmatmul.mubr.f32.gmra.mrb[0].mxu0 %v428
      %v430 = vpop.f32.mrb[0].mxu0
      %v431 = vadd.f32 0.0, %v430
      %v432 = vpop.f32.mrb[0].mxu0
      %v433 = vadd.f32 0.0, %v432
      %434 = vmatprep.mubr.f32.mxu0 0.0
      %v435 = vand.u32 %v350, 4294901760
      %v436 = vsub.f32 %v350, %v435
      %v437 = vand.u32 %v436, 4294901760
      %v438 = vsub.f32 %v436, %v437
      %v439 = vand.u32 %v438, 4294901760
      %440 = vmatmul.mubr.f32.gmra.mrb[0].mxu0 %v439
      %v441 = vpop.f32.mrb[0].mxu0
      %v442 = vadd.f32 0.0, %v441
      %v443 = vpop.f32.mrb[0].mxu0
      %v444 = vadd.f32 0.0, %v443
      %445 = vdwg.mxu0
      %v446 = vand.u32 %v355, 4294901760
      %v447 = vsub.f32 %v355, %v446
      %v448 = vand.u32 %v447, 4294901760
      %v449 = vsub.f32 %v447, %v448
      %v450 = vand.u32 %v449, 4294901760
      %451 = vmatprep.subr.mxu0 %v450
      %v452 = vand.u32 %v353, 4294901760
      %v453 = vsub.f32 %v353, %v452
      %v454 = vand.u32 %v453, 4294901760
      %v455 = vsub.f32 %v453, %v454
      %v456 = vand.u32 %v455, 4294901760
      %457 = vmatpush1.msra.mxu0 %v456
      %458 = vmatprep.subr.mxu0 0.0
      %459 = vmatpush1.msra.mxu0 0.0
      %460 = vmatprep.subr.mxu0 0.0
      %461 = vmatpush1.msra.mxu0 0.0
      %462 = vmatprep.subr.mxu0 0.0
      %463 = vmatpush1.msra.mxu0 0.0
      %464 = vmatprep.subr.mxu0 0.0
      %465 = vmatpush1.msra.mxu0 0.0
      %466 = vmatprep.subr.mxu0 0.0
      %467 = vmatpush1.msra.mxu0 0.0
      %468 = vmatprep.subr.mxu0 0.0
      %469 = vmatpush1.msra.mxu0 0.0
      %470 = vmatprep.subr.mxu0 0.0
      %471 = vmatpush1.msra.mxu0 0.0
      %472 = vmatprep.subr.mxu0 0.0
      %473 = vmatpush1.msra.mxu0 0.0
      %474 = vmatprep.subr.mxu0 0.0
      %475 = vmatpush1.msra.mxu0 0.0
      %476 = vmatprep.subr.mxu0 0.0
      %477 = vmatpush1.msra.mxu0 0.0
      %478 = vmatprep.subr.mxu0 0.0
      %479 = vmatpush1.msra.mxu0 0.0
      %480 = vmatprep.subr.mxu0 0.0
      %481 = vmatpush1.msra.mxu0 0.0
      %482 = vmatprep.subr.mxu0 0.0
      %483 = vmatpush1.msra.mxu0 0.0
      %484 = vmatprep.subr.mxu0 0.0
      %485 = vmatpush1.msra.mxu0 0.0
      %486 = vmatprep.subr.mxu0 0.0
      %487 = vmatpush1.msra.mxu0 0.0
      %488 = vmatprep.subr.mxu0 0.0
      %489 = vmatpush1.msra.mxu0 0.0
      %490 = vmatprep.subr.mxu0 0.0
      %491 = vmatpush1.msra.mxu0 0.0
      %492 = vmatprep.subr.mxu0 0.0
      %493 = vmatpush1.msra.mxu0 0.0
      %494 = vmatprep.subr.mxu0 0.0
      %495 = vmatpush1.msra.mxu0 0.0
      %496 = vmatprep.subr.mxu0 0.0
      %497 = vmatpush1.msra.mxu0 0.0
      %498 = vmatprep.subr.mxu0 0.0
      %499 = vmatpush1.msra.mxu0 0.0
      %500 = vmatprep.subr.mxu0 0.0
      %501 = vmatpush1.msra.mxu0 0.0
      %502 = vmatprep.subr.mxu0 0.0
      %503 = vmatpush1.msra.mxu0 0.0
      %504 = vmatprep.subr.mxu0 0.0
      %505 = vmatpush1.msra.mxu0 0.0
      %506 = vmatprep.subr.mxu0 0.0
      %507 = vmatpush1.msra.mxu0 0.0
      %508 = vmatprep.subr.mxu0 0.0
      %509 = vmatpush1.msra.mxu0 0.0
      %510 = vmatprep.subr.mxu0 0.0
      %511 = vmatpush1.msra.mxu0 0.0
      %512 = vmatprep.subr.mxu0 0.0
      %513 = vmatpush1.msra.mxu0 0.0
      %514 = vmatprep.subr.mxu0 0.0
      %515 = vmatpush1.msra.mxu0 0.0
      %516 = vmatprep.subr.mxu0 0.0
      %517 = vmatpush1.msra.mxu0 0.0
      %518 = vmatprep.subr.mxu0 0.0
      %519 = vmatpush1.msra.mxu0 0.0
      %520 = vmatprep.mubr.f32.mxu0 0.0
      %v521 = vand.u32 %v347, 4294901760
      %522 = vmatmul.mubr.f32.gmra.mrb[0].mxu0 %v521
      %v523 = vpop.f32.mrb[0].mxu0
      %v524 = vadd.f32 %v431, %v523
      %v525 = vpop.f32.mrb[0].mxu0
      %v526 = vadd.f32 %v433, %v525
      %527 = vmatprep.mubr.f32.mxu0 0.0
      %v528 = vand.u32 %v350, 4294901760
      %529 = vmatmul.mubr.f32.gmra.mrb[0].mxu0 %v528
      %v530 = vpop.f32.mrb[0].mxu0
      %v531 = vadd.f32 %v442, %v530
      %v532 = vpop.f32.mrb[0].mxu0
      %v533 = vadd.f32 %v444, %v532
      %534 = vdwg.mxu0
      %v535 = vand.u32 %v355, 4294901760
      %v536 = vsub.f32 %v355, %v535
      %537 = vmatprep.subr.mxu0 %v536
      %v538 = vand.u32 %v353, 4294901760
      %v539 = vsub.f32 %v353, %v538
      %540 = vmatpush1.msra.mxu0 %v539
      %541 = vmatprep.subr.mxu0 0.0
      %542 = vmatpush1.msra.mxu0 0.0
      %543 = vmatprep.subr.mxu0 0.0
      %544 = vmatpush1.msra.mxu0 0.0
      %545 = vmatprep.subr.mxu0 0.0
      %546 = vmatpush1.msra.mxu0 0.0
      %547 = vmatprep.subr.mxu0 0.0
      %548 = vmatpush1.msra.mxu0 0.0
      %549 = vmatprep.subr.mxu0 0.0
      %550 = vmatpush1.msra.mxu0 0.0
      %551 = vmatprep.subr.mxu0 0.0
      %552 = vmatpush1.msra.mxu0 0.0
      %553 = vmatprep.subr.mxu0 0.0
      %554 = vmatpush1.msra.mxu0 0.0
      %555 = vmatprep.subr.mxu0 0.0
      %556 = vmatpush1.msra.mxu0 0.0
      %557 = vmatprep.subr.mxu0 0.0
      %558 = vmatpush1.msra.mxu0 0.0
      %559 = vmatprep.subr.mxu0 0.0
      %560 = vmatpush1.msra.mxu0 0.0
      %561 = vmatprep.subr.mxu0 0.0
      %562 = vmatpush1.msra.mxu0 0.0
      %563 = vmatprep.subr.mxu0 0.0
      %564 = vmatpush1.msra.mxu0 0.0
      %565 = vmatprep.subr.mxu0 0.0
      %566 = vmatpush1.msra.mxu0 0.0
      %567 = vmatprep.subr.mxu0 0.0
      %568 = vmatpush1.msra.mxu0 0.0
      %569 = vmatprep.subr.mxu0 0.0
      %570 = vmatpush1.msra.mxu0 0.0
      %571 = vmatprep.subr.mxu0 0.0
      %572 = vmatpush1.msra.mxu0 0.0
      %573 = vmatprep.subr.mxu0 0.0
      %574 = vmatpush1.msra.mxu0 0.0
      %575 = vmatprep.subr.mxu0 0.0
      %576 = vmatpush1.msra.mxu0 0.0
      %577 = vmatprep.subr.mxu0 0.0
      %578 = vmatpush1.msra.mxu0 0.0
      %579 = vmatprep.subr.mxu0 0.0
      %580 = vmatpush1.msra.mxu0 0.0
      %581 = vmatprep.subr.mxu0 0.0
      %582 = vmatpush1.msra.mxu0 0.0
      %583 = vmatprep.subr.mxu0 0.0
      %584 = vmatpush1.msra.mxu0 0.0
      %585 = vmatprep.subr.mxu0 0.0
      %586 = vmatpush1.msra.mxu0 0.0
      %587 = vmatprep.subr.mxu0 0.0
      %588 = vmatpush1.msra.mxu0 0.0
      %589 = vmatprep.subr.mxu0 0.0
      %590 = vmatpush1.msra.mxu0 0.0
      %591 = vmatprep.subr.mxu0 0.0
      %592 = vmatpush1.msra.mxu0 0.0
      %593 = vmatprep.subr.mxu0 0.0
      %594 = vmatpush1.msra.mxu0 0.0
      %595 = vmatprep.subr.mxu0 0.0
      %596 = vmatpush1.msra.mxu0 0.0
      %597 = vmatprep.subr.mxu0 0.0
      %598 = vmatpush1.msra.mxu0 0.0
      %599 = vmatprep.subr.mxu0 0.0
      %600 = vmatpush1.msra.mxu0 0.0
      %601 = vmatprep.subr.mxu0 0.0
      %602 = vmatpush1.msra.mxu0 0.0
      %603 = vmatprep.mubr.f32.mxu0 0.0
      %v604 = vand.u32 %v347, 4294901760
      %v605 = vsub.f32 %v347, %v604
      %606 = vmatmul.mubr.f32.gmra.mrb[0].mxu0 %v605
      %v607 = vpop.f32.mrb[0].mxu0
      %v608 = vadd.f32 %v524, %v607
      %v609 = vpop.f32.mrb[0].mxu0
      %v610 = vadd.f32 %v526, %v609
      %611 = vmatprep.mubr.f32.mxu0 0.0
      %v612 = vand.u32 %v350, 4294901760
      %v613 = vsub.f32 %v350, %v612
      %614 = vmatmul.mubr.f32.gmra.mrb[0].mxu0 %v613
      %v615 = vpop.f32.mrb[0].mxu0
      %v616 = vadd.f32 %v531, %v615
      %v617 = vpop.f32.mrb[0].mxu0
      %v618 = vadd.f32 %v533, %v617
      %619 = vdwg.mxu0
      %v620 = vand.u32 %v355, 4294901760
      %621 = vmatprep.subr.mxu0 %v620
      %v622 = vand.u32 %v353, 4294901760
      %623 = vmatpush1.msra.mxu0 %v622
      %624 = vmatprep.subr.mxu0 0.0
      %625 = vmatpush1.msra.mxu0 0.0
      %626 = vmatprep.subr.mxu0 0.0
      %627 = vmatpush1.msra.mxu0 0.0
      %628 = vmatprep.subr.mxu0 0.0
      %629 = vmatpush1.msra.mxu0 0.0
      %630 = vmatprep.subr.mxu0 0.0
      %631 = vmatpush1.msra.mxu0 0.0
      %632 = vmatprep.subr.mxu0 0.0
      %633 = vmatpush1.msra.mxu0 0.0
      %634 = vmatprep.subr.mxu0 0.0
      %635 = vmatpush1.msra.mxu0 0.0
      %636 = vmatprep.subr.mxu0 0.0
      %637 = vmatpush1.msra.mxu0 0.0
      %638 = vmatprep.subr.mxu0 0.0
      %639 = vmatpush1.msra.mxu0 0.0
      %640 = vmatprep.subr.mxu0 0.0
      %641 = vmatpush1.msra.mxu0 0.0
      %642 = vmatprep.subr.mxu0 0.0
      %643 = vmatpush1.msra.mxu0 0.0
      %644 = vmatprep.subr.mxu0 0.0
      %645 = vmatpush1.msra.mxu0 0.0
      %646 = vmatprep.subr.mxu0 0.0
      %647 = vmatpush1.msra.mxu0 0.0
      %648 = vmatprep.subr.mxu0 0.0
      %649 = vmatpush1.msra.mxu0 0.0
      %650 = vmatprep.subr.mxu0 0.0
      %651 = vmatpush1.msra.mxu0 0.0
      %652 = vmatprep.subr.mxu0 0.0
      %653 = vmatpush1.msra.mxu0 0.0
      %654 = vmatprep.subr.mxu0 0.0
      %655 = vmatpush1.msra.mxu0 0.0
      %656 = vmatprep.subr.mxu0 0.0
      %657 = vmatpush1.msra.mxu0 0.0
      %658 = vmatprep.subr.mxu0 0.0
      %659 = vmatpush1.msra.mxu0 0.0
      %660 = vmatprep.subr.mxu0 0.0
      %661 = vmatpush1.msra.mxu0 0.0
      %662 = vmatprep.subr.mxu0 0.0
      %663 = vmatpush1.msra.mxu0 0.0
      %664 = vmatprep.subr.mxu0 0.0
      %665 = vmatpush1.msra.mxu0 0.0
      %666 = vmatprep.subr.mxu0 0.0
      %667 = vmatpush1.msra.mxu0 0.0
      %668 = vmatprep.subr.mxu0 0.0
      %669 = vmatpush1.msra.mxu0 0.0
      %670 = vmatprep.subr.mxu0 0.0
      %671 = vmatpush1.msra.mxu0 0.0
      %672 = vmatprep.subr.mxu0 0.0
      %673 = vmatpush1.msra.mxu0 0.0
      %674 = vmatprep.subr.mxu0 0.0
      %675 = vmatpush1.msra.mxu0 0.0
      %676 = vmatprep.subr.mxu0 0.0
      %677 = vmatpush1.msra.mxu0 0.0
      %678 = vmatprep.subr.mxu0 0.0
      %679 = vmatpush1.msra.mxu0 0.0
      %680 = vmatprep.subr.mxu0 0.0
      %681 = vmatpush1.msra.mxu0 0.0
      %682 = vmatprep.subr.mxu0 0.0
      %683 = vmatpush1.msra.mxu0 0.0
      %684 = vmatprep.subr.mxu0 0.0
      %685 = vmatpush1.msra.mxu0 0.0
      %686 = vmatprep.mubr.f32.mxu0 0.0
      %v687 = vand.u32 %v347, 4294901760
      %v688 = vsub.f32 %v347, %v687
      %v689 = vand.u32 %v688, 4294901760
      %690 = vmatmul.mubr.f32.gmra.mrb[0].mxu0 %v689
      %v691 = vpop.f32.mrb[0].mxu0
      %v692 = vadd.f32 %v608, %v691
      %v693 = vpop.f32.mrb[0].mxu0
      %v694 = vadd.f32 %v610, %v693
      %695 = vmatprep.mubr.f32.mxu0 0.0
      %v696 = vand.u32 %v350, 4294901760
      %v697 = vsub.f32 %v350, %v696
      %v698 = vand.u32 %v697, 4294901760
      %699 = vmatmul.mubr.f32.gmra.mrb[0].mxu0 %v698
      %v700 = vpop.f32.mrb[0].mxu0
      %v701 = vadd.f32 %v616, %v700
      %v702 = vpop.f32.mrb[0].mxu0
      %v703 = vadd.f32 %v618, %v702
      %704 = vdwg.mxu0
      %v705 = vand.u32 %v355, 4294901760
      %v706 = vsub.f32 %v355, %v705
      %v707 = vand.u32 %v706, 4294901760
      %708 = vmatprep.subr.mxu0 %v707
      %v709 = vand.u32 %v353, 4294901760
      %v710 = vsub.f32 %v353, %v709
      %v711 = vand.u32 %v710, 4294901760
      %712 = vmatpush1.msra.mxu0 %v711
      %713 = vmatprep.subr.mxu0 0.0
      %714 = vmatpush1.msra.mxu0 0.0
      %715 = vmatprep.subr.mxu0 0.0
      %716 = vmatpush1.msra.mxu0 0.0
      %717 = vmatprep.subr.mxu0 0.0
      %718 = vmatpush1.msra.mxu0 0.0
      %719 = vmatprep.subr.mxu0 0.0
      %720 = vmatpush1.msra.mxu0 0.0
      %721 = vmatprep.subr.mxu0 0.0
      %722 = vmatpush1.msra.mxu0 0.0
      %723 = vmatprep.subr.mxu0 0.0
      %724 = vmatpush1.msra.mxu0 0.0
      %725 = vmatprep.subr.mxu0 0.0
      %726 = vmatpush1.msra.mxu0 0.0
      %727 = vmatprep.subr.mxu0 0.0
      %728 = vmatpush1.msra.mxu0 0.0
      %729 = vmatprep.subr.mxu0 0.0
      %730 = vmatpush1.msra.mxu0 0.0
      %731 = vmatprep.subr.mxu0 0.0
      %732 = vmatpush1.msra.mxu0 0.0
      %733 = vmatprep.subr.mxu0 0.0
      %734 = vmatpush1.msra.mxu0 0.0
      %735 = vmatprep.subr.mxu0 0.0
      %736 = vmatpush1.msra.mxu0 0.0
      %737 = vmatprep.subr.mxu0 0.0
      %738 = vmatpush1.msra.mxu0 0.0
      %739 = vmatprep.subr.mxu0 0.0
      %740 = vmatpush1.msra.mxu0 0.0
      %741 = vmatprep.subr.mxu0 0.0
      %742 = vmatpush1.msra.mxu0 0.0
      %743 = vmatprep.subr.mxu0 0.0
      %744 = vmatpush1.msra.mxu0 0.0
      %745 = vmatprep.subr.mxu0 0.0
      %746 = vmatpush1.msra.mxu0 0.0
      %747 = vmatprep.subr.mxu0 0.0
      %748 = vmatpush1.msra.mxu0 0.0
      %749 = vmatprep.subr.mxu0 0.0
      %750 = vmatpush1.msra.mxu0 0.0
      %751 = vmatprep.subr.mxu0 0.0
      %752 = vmatpush1.msra.mxu0 0.0
      %753 = vmatprep.subr.mxu0 0.0
      %754 = vmatpush1.msra.mxu0 0.0
      %755 = vmatprep.subr.mxu0 0.0
      %756 = vmatpush1.msra.mxu0 0.0
      %757 = vmatprep.subr.mxu0 0.0
      %758 = vmatpush1.msra.mxu0 0.0
      %759 = vmatprep.subr.mxu0 0.0
      %760 = vmatpush1.msra.mxu0 0.0
      %761 = vmatprep.subr.mxu0 0.0
      %762 = vmatpush1.msra.mxu0 0.0
      %763 = vmatprep.subr.mxu0 0.0
      %764 = vmatpush1.msra.mxu0 0.0
      %765 = vmatprep.subr.mxu0 0.0
      %766 = vmatpush1.msra.mxu0 0.0
      %767 = vmatprep.subr.mxu0 0.0
      %768 = vmatpush1.msra.mxu0 0.0
      %769 = vmatprep.subr.mxu0 0.0
      %770 = vmatpush1.msra.mxu0 0.0
      %771 = vmatprep.subr.mxu0 0.0
      %772 = vmatpush1.msra.mxu0 0.0
      %773 = vmatprep.subr.mxu0 0.0
      %774 = vmatpush1.msra.mxu0 0.0
      %775 = vmatprep.mubr.f32.mxu0 0.0
      %v776 = vand.u32 %v347, 4294901760
      %777 = vmatmul.mubr.f32.gmra.mrb[0].mxu0 %v776
      %v778 = vpop.f32.mrb[0].mxu0
      %v779 = vadd.f32 %v692, %v778
      %v780 = vpop.f32.mrb[0].mxu0
      %v781 = vadd.f32 %v694, %v780
      %782 = vmatprep.mubr.f32.mxu0 0.0
      %v783 = vand.u32 %v350, 4294901760
      %784 = vmatmul.mubr.f32.gmra.mrb[0].mxu0 %v783
      %v785 = vpop.f32.mrb[0].mxu0
      %v786 = vadd.f32 %v701, %v785
      %v787 = vpop.f32.mrb[0].mxu0
      %v788 = vadd.f32 %v703, %v787
      %789 = vdwg.mxu0
      %v790 = vand.u32 %v355, 4294901760
      %791 = vmatprep.subr.mxu0 %v790
      %v792 = vand.u32 %v353, 4294901760
      %793 = vmatpush1.msra.mxu0 %v792
      %794 = vmatprep.subr.mxu0 0.0
      %795 = vmatpush1.msra.mxu0 0.0
      %796 = vmatprep.subr.mxu0 0.0
      %797 = vmatpush1.msra.mxu0 0.0
      %798 = vmatprep.subr.mxu0 0.0
      %799 = vmatpush1.msra.mxu0 0.0
      %800 = vmatprep.subr.mxu0 0.0
      %801 = vmatpush1.msra.mxu0 0.0
      %802 = vmatprep.subr.mxu0 0.0
      %803 = vmatpush1.msra.mxu0 0.0
      %804 = vmatprep.subr.mxu0 0.0
      %805 = vmatpush1.msra.mxu0 0.0
      %806 = vmatprep.subr.mxu0 0.0
      %807 = vmatpush1.msra.mxu0 0.0
      %808 = vmatprep.subr.mxu0 0.0
      %809 = vmatpush1.msra.mxu0 0.0
      %810 = vmatprep.subr.mxu0 0.0
      %811 = vmatpush1.msra.mxu0 0.0
      %812 = vmatprep.subr.mxu0 0.0
      %813 = vmatpush1.msra.mxu0 0.0
      %814 = vmatprep.subr.mxu0 0.0
      %815 = vmatpush1.msra.mxu0 0.0
      %816 = vmatprep.subr.mxu0 0.0
      %817 = vmatpush1.msra.mxu0 0.0
      %818 = vmatprep.subr.mxu0 0.0
      %819 = vmatpush1.msra.mxu0 0.0
      %820 = vmatprep.subr.mxu0 0.0
      %821 = vmatpush1.msra.mxu0 0.0
      %822 = vmatprep.subr.mxu0 0.0
      %823 = vmatpush1.msra.mxu0 0.0
      %824 = vmatprep.subr.mxu0 0.0
      %825 = vmatpush1.msra.mxu0 0.0
      %826 = vmatprep.subr.mxu0 0.0
      %827 = vmatpush1.msra.mxu0 0.0
      %828 = vmatprep.subr.mxu0 0.0
      %829 = vmatpush1.msra.mxu0 0.0
      %830 = vmatprep.subr.mxu0 0.0
      %831 = vmatpush1.msra.mxu0 0.0
      %832 = vmatprep.subr.mxu0 0.0
      %833 = vmatpush1.msra.mxu0 0.0
      %834 = vmatprep.subr.mxu0 0.0
      %835 = vmatpush1.msra.mxu0 0.0
      %836 = vmatprep.subr.mxu0 0.0
      %837 = vmatpush1.msra.mxu0 0.0
      %838 = vmatprep.subr.mxu0 0.0
      %839 = vmatpush1.msra.mxu0 0.0
      %840 = vmatprep.subr.mxu0 0.0
      %841 = vmatpush1.msra.mxu0 0.0
      %842 = vmatprep.subr.mxu0 0.0
      %843 = vmatpush1.msra.mxu0 0.0
      %844 = vmatprep.subr.mxu0 0.0
      %845 = vmatpush1.msra.mxu0 0.0
      %846 = vmatprep.subr.mxu0 0.0
      %847 = vmatpush1.msra.mxu0 0.0
      %848 = vmatprep.subr.mxu0 0.0
      %849 = vmatpush1.msra.mxu0 0.0
      %850 = vmatprep.subr.mxu0 0.0
      %851 = vmatpush1.msra.mxu0 0.0
      %852 = vmatprep.subr.mxu0 0.0
      %853 = vmatpush1.msra.mxu0 0.0
      %854 = vmatprep.subr.mxu0 0.0
      %855 = vmatpush1.msra.mxu0 0.0
      %856 = vmatprep.mubr.f32.mxu0 0.0
      %v857 = vand.u32 %v347, 4294901760
      %858 = vmatmul.mubr.f32.gmra.mrb[0].mxu0 %v857
      %v859 = vpop.f32.mrb[0].mxu0
      %v860 = vadd.f32 %v779, %v859
      %v861 = vpop.f32.mrb[0].mxu0
      %v862 = vadd.f32 %v781, %v861
      %863 = vmatprep.mubr.f32.mxu0 0.0
      %v864 = vand.u32 %v350, 4294901760
      %865 = vmatmul.mubr.f32.gmra.mrb[0].mxu0 %v864
      %v866 = vpop.f32.mrb[0].mxu0
      %v867 = vadd.f32 %v786, %v866
      %v868 = vpop.f32.mrb[0].mxu0
      %v869 = vadd.f32 %v788, %v868
      %870 = vdwg.mxu0
      %v871 = vld [vmem:[%s4] sm:$0xff]
      %v872 = vld [vmem:[%s4 + $0x8] sm:$0xff]
      %874 = vset.pattern.permute.xlu0 0
      %875 = vperm.xlu0 %874, %v871
      %v876 = vpop.permute.xlu0 %875
      %879 = vset.pattern.permute.xlu0 0
      %880 = vperm.xlu0 %879, %v872
      %v881 = vpop.permute.xlu0 %880
      %v883 = vmul.f32 %v860, %v876
      %v884 = vmul.f32 %v862, %v876
      %v885 = vmul.f32 %v867, %v881
      %v886 = vmul.f32 %v869, %v881
      %v887 = vld [vmem:[%s5] sm:$0xff]
      %v888 = vld [vmem:[%s5 + $0x8] sm:$0xff]
      %890 = vset.pattern.permute.xlu0 0
      %891 = vperm.xlu0 %890, %v887
      %v892 = vpop.permute.xlu0 %891
      %895 = vset.pattern.permute.xlu0 0
      %896 = vperm.xlu0 %895, %v888
      %v897 = vpop.permute.xlu0 %896
      %v899 = vadd.f32 %v883, %v892
      %v900 = vadd.f32 %v884, %v892
      %v901 = vadd.f32 %v885, %v897
      %v902 = vadd.f32 %v886, %v897
      %v903 = vmax.f32 %v899, 0.0
      %v904 = vmax.f32 %v900, 0.0
      %v905 = vmax.f32 %v901, 0.0
      %v906 = vmax.f32 %v902, 0.0
      %907 = vst [vmem:[#allocation2] sm:$0xff] 0.0
      %908 = vst [vmem:[#allocation2 + $0x20] sm:$0xff] 0.0
      %909 = vst [vmem:[#allocation2 + $0x18] sm:$0xff] 0.0
      %910 = vst [vmem:[#allocation2 + $0x38] sm:$0xff] 0.0
      %911 = vst [vmem:[#allocation2 + $0x8] sm:$0xff] %v903
      %912 = vst [vmem:[#allocation2 + $0x10] sm:$0xff] %v904
      %913 = vst [vmem:[#allocation2 + $0x28] sm:$0xff] %v905
      %914 = vst [vmem:[#allocation2 + $0x30] sm:$0xff] %v906
      %v915 = vld [vmem:[%s7] ss:$2 sm:$0x3]
      %s916 = scalar_lea.vmem %s7, 1
      %v917 = vld [vmem:[%s916] ss:$2 sm:$0x3]
      %v918 = vld [vmem:[#allocation2] sm:$0xff]
      %v919 = vld [vmem:[#allocation2 + $0x8] sm:$0xff]
      %v920 = vld [vmem:[#allocation2 + $0x10] sm:$0xff]
      %v921 = vld [vmem:[#allocation2 + $0x20] sm:$0xff]
      %v922 = vld [vmem:[#allocation2 + $0x28] sm:$0xff]
      %v923 = vld [vmem:[#allocation2 + $0x30] sm:$0xff]
      %s924 = scalar_lea.vmem %s6, 4
      %v925 = vld [vmem:[%s924] sm:$0xf]
      %932 = vrot.lane.b32.xlu0 %v918, 16
      %v933 = vpop.permute.xlu0 %932
      %934 = vrot.lane.b32.xlu0 %v919, 16
      %v935 = vpop.permute.xlu0 %934
      %936 = vrot.lane.b32.xlu0 %v920, 16
      %v937 = vpop.permute.xlu0 %936
      %938 = vrot.lane.b32.xlu0 %v921, 16
      %v939 = vpop.permute.xlu0 %938
      %940 = vrot.lane.b32.xlu0 %v922, 16
      %v941 = vpop.permute.xlu0 %940
      %942 = vrot.lane.b32.xlu0 %v923, 16
      %v943 = vpop.permute.xlu0 %942
      %vm944 = vcmask 130048
      %v945 = vsel %vm944, %v933, %v935
      %v946 = vsel %vm944, %v935, %v937
      %v947 = vsel %vm944, %v939, %v941
      %v948 = vsel %vm944, %v941, %v943
      %v954 = vsel %vm944, %v925, 0
      %v956 = vand.u32 %v946, 4294901760
      %957 = vmatprep.subr.mxu0 %v956
      %v958 = vand.u32 %v945, 4294901760
      %959 = vmatpush1.msra.mxu0 %v958
      %v960 = vand.u32 %v948, 4294901760
      %961 = vmatprep.subr.mxu0 %v960
      %v962 = vand.u32 %v947, 4294901760
      %963 = vmatpush1.msra.mxu0 %v962
      %964 = vmatprep.subr.mxu0 0.0
      %965 = vmatpush1.msra.mxu0 0.0
      %966 = vmatprep.subr.mxu0 0.0
      %967 = vmatpush1.msra.mxu0 0.0
      %968 = vmatprep.subr.mxu0 0.0
      %969 = vmatpush1.msra.mxu0 0.0
      %970 = vmatprep.subr.mxu0 0.0
      %971 = vmatpush1.msra.mxu0 0.0
      %972 = vmatprep.subr.mxu0 0.0
      %973 = vmatpush1.msra.mxu0 0.0
      %974 = vmatprep.subr.mxu0 0.0
      %975 = vmatpush1.msra.mxu0 0.0
      %976 = vmatprep.subr.mxu0 0.0
      %977 = vmatpush1.msra.mxu0 0.0
      %978 = vmatprep.subr.mxu0 0.0
      %979 = vmatpush1.msra.mxu0 0.0
      %980 = vmatprep.subr.mxu0 0.0
      %981 = vmatpush1.msra.mxu0 0.0
      %982 = vmatprep.subr.mxu0 0.0
      %983 = vmatpush1.msra.mxu0 0.0
      %984 = vmatprep.subr.mxu0 0.0
      %985 = vmatpush1.msra.mxu0 0.0
      %986 = vmatprep.subr.mxu0 0.0
      %987 = vmatpush1.msra.mxu0 0.0
      %988 = vmatprep.subr.mxu0 0.0
      %989 = vmatpush1.msra.mxu0 0.0
      %990 = vmatprep.subr.mxu0 0.0
      %991 = vmatpush1.msra.mxu0 0.0
      %992 = vmatprep.subr.mxu0 0.0
      %993 = vmatpush1.msra.mxu0 0.0
      %994 = vmatprep.subr.mxu0 0.0
      %995 = vmatpush1.msra.mxu0 0.0
      %996 = vmatprep.subr.mxu0 0.0
      %997 = vmatpush1.msra.mxu0 0.0
      %998 = vmatprep.subr.mxu0 0.0
      %999 = vmatpush1.msra.mxu0 0.0
      %1000 = vmatprep.subr.mxu0 0.0
      %1001 = vmatpush1.msra.mxu0 0.0
      %1002 = vmatprep.subr.mxu0 0.0
      %1003 = vmatpush1.msra.mxu0 0.0
      %1004 = vmatprep.subr.mxu0 0.0
      %1005 = vmatpush1.msra.mxu0 0.0
      %1006 = vmatprep.subr.mxu0 0.0
      %1007 = vmatpush1.msra.mxu0 0.0
      %1008 = vmatprep.subr.mxu0 0.0
      %1009 = vmatpush1.msra.mxu0 0.0
      %1010 = vmatprep.subr.mxu0 0.0
      %1011 = vmatpush1.msra.mxu0 0.0
      %1012 = vmatprep.subr.mxu0 0.0
      %1013 = vmatpush1.msra.mxu0 0.0
      %1014 = vmatprep.subr.mxu0 0.0
      %1015 = vmatpush1.msra.mxu0 0.0
      %1016 = vmatprep.subr.mxu0 0.0
      %1017 = vmatpush1.msra.mxu0 0.0
      %1018 = vmatprep.subr.mxu0 0.0
      %1019 = vmatpush1.msra.mxu0 0.0
      %1020 = vmatprep.subr.mxu0 0.0
      %1021 = vmatpush1.msra.mxu0 0.0
      %1022 = vmatprep.subr.mxu0 0.0
      %1023 = vmatpush1.msra.mxu0 0.0
      %1024 = vmatprep.mubr.f32.mxu0 0.0
      %v1025 = vand.u32 %v954, 4294901760
      %v1026 = vsub.f32 %v954, %v1025
      %v1027 = vand.u32 %v1026, 4294901760
      %v1028 = vsub.f32 %v1026, %v1027
      %v1029 = vand.u32 %v1028, 4294901760
      %1030 = vmatmul.mubr.f32.gmra.mrb[0].mxu0 %v1029
      %v1031 = vpop.f32.mrb[0].mxu0
      %v1032 = vadd.f32 0.0, %v1031
      %v1033 = vpop.f32.mrb[0].mxu0
      %v1034 = vadd.f32 0.0, %v1033
      %1035 = vdwg.mxu0
      %v1036 = vand.u32 %v946, 4294901760
      %v1037 = vsub.f32 %v946, %v1036
      %v1038 = vand.u32 %v1037, 4294901760
      %v1039 = vsub.f32 %v1037, %v1038
      %v1040 = vand.u32 %v1039, 4294901760
      %1041 = vmatprep.subr.mxu0 %v1040
      %v1042 = vand.u32 %v945, 4294901760
      %v1043 = vsub.f32 %v945, %v1042
      %v1044 = vand.u32 %v1043, 4294901760
      %v1045 = vsub.f32 %v1043, %v1044
      %v1046 = vand.u32 %v1045, 4294901760
      %1047 = vmatpush1.msra.mxu0 %v1046
      %v1048 = vand.u32 %v948, 4294901760
      %v1049 = vsub.f32 %v948, %v1048
      %v1050 = vand.u32 %v1049, 4294901760
      %v1051 = vsub.f32 %v1049, %v1050
      %v1052 = vand.u32 %v1051, 4294901760
      %1053 = vmatprep.subr.mxu0 %v1052
      %v1054 = vand.u32 %v947, 4294901760
      %v1055 = vsub.f32 %v947, %v1054
      %v1056 = vand.u32 %v1055, 4294901760
      %v1057 = vsub.f32 %v1055, %v1056
      %v1058 = vand.u32 %v1057, 4294901760
      %1059 = vmatpush1.msra.mxu0 %v1058
      %1060 = vmatprep.subr.mxu0 0.0
      %1061 = vmatpush1.msra.mxu0 0.0
      %1062 = vmatprep.subr.mxu0 0.0
      %1063 = vmatpush1.msra.mxu0 0.0
      %1064 = vmatprep.subr.mxu0 0.0
      %1065 = vmatpush1.msra.mxu0 0.0
      %1066 = vmatprep.subr.mxu0 0.0
      %1067 = vmatpush1.msra.mxu0 0.0
      %1068 = vmatprep.subr.mxu0 0.0
      %1069 = vmatpush1.msra.mxu0 0.0
      %1070 = vmatprep.subr.mxu0 0.0
      %1071 = vmatpush1.msra.mxu0 0.0
      %1072 = vmatprep.subr.mxu0 0.0
      %1073 = vmatpush1.msra.mxu0 0.0
      %1074 = vmatprep.subr.mxu0 0.0
      %1075 = vmatpush1.msra.mxu0 0.0
      %1076 = vmatprep.subr.mxu0 0.0
      %1077 = vmatpush1.msra.mxu0 0.0
      %1078 = vmatprep.subr.mxu0 0.0
      %1079 = vmatpush1.msra.mxu0 0.0
      %1080 = vmatprep.subr.mxu0 0.0
      %1081 = vmatpush1.msra.mxu0 0.0
      %1082 = vmatprep.subr.mxu0 0.0
      %1083 = vmatpush1.msra.mxu0 0.0
      %1084 = vmatprep.subr.mxu0 0.0
      %1085 = vmatpush1.msra.mxu0 0.0
      %1086 = vmatprep.subr.mxu0 0.0
      %1087 = vmatpush1.msra.mxu0 0.0
      %1088 = vmatprep.subr.mxu0 0.0
      %1089 = vmatpush1.msra.mxu0 0.0
      %1090 = vmatprep.subr.mxu0 0.0
      %1091 = vmatpush1.msra.mxu0 0.0
      %1092 = vmatprep.subr.mxu0 0.0
      %1093 = vmatpush1.msra.mxu0 0.0
      %1094 = vmatprep.subr.mxu0 0.0
      %1095 = vmatpush1.msra.mxu0 0.0
      %1096 = vmatprep.subr.mxu0 0.0
      %1097 = vmatpush1.msra.mxu0 0.0
      %1098 = vmatprep.subr.mxu0 0.0
      %1099 = vmatpush1.msra.mxu0 0.0
      %1100 = vmatprep.subr.mxu0 0.0
      %1101 = vmatpush1.msra.mxu0 0.0
      %1102 = vmatprep.subr.mxu0 0.0
      %1103 = vmatpush1.msra.mxu0 0.0
      %1104 = vmatprep.subr.mxu0 0.0
      %1105 = vmatpush1.msra.mxu0 0.0
      %1106 = vmatprep.subr.mxu0 0.0
      %1107 = vmatpush1.msra.mxu0 0.0
      %1108 = vmatprep.subr.mxu0 0.0
      %1109 = vmatpush1.msra.mxu0 0.0
      %1110 = vmatprep.subr.mxu0 0.0
      %1111 = vmatpush1.msra.mxu0 0.0
      %1112 = vmatprep.subr.mxu0 0.0
      %1113 = vmatpush1.msra.mxu0 0.0
      %1114 = vmatprep.subr.mxu0 0.0
      %1115 = vmatpush1.msra.mxu0 0.0
      %1116 = vmatprep.subr.mxu0 0.0
      %1117 = vmatpush1.msra.mxu0 0.0
      %1118 = vmatprep.subr.mxu0 0.0
      %1119 = vmatpush1.msra.mxu0 0.0
      %1120 = vmatprep.mubr.f32.mxu0 0.0
      %v1121 = vand.u32 %v954, 4294901760
      %1122 = vmatmul.mubr.f32.gmra.mrb[0].mxu0 %v1121
      %v1123 = vpop.f32.mrb[0].mxu0
      %v1124 = vadd.f32 %v1032, %v1123
      %v1125 = vpop.f32.mrb[0].mxu0
      %v1126 = vadd.f32 %v1034, %v1125
      %1127 = vdwg.mxu0
      %v1128 = vand.u32 %v946, 4294901760
      %v1129 = vsub.f32 %v946, %v1128
      %1130 = vmatprep.subr.mxu0 %v1129
      %v1131 = vand.u32 %v945, 4294901760
      %v1132 = vsub.f32 %v945, %v1131
      %1133 = vmatpush1.msra.mxu0 %v1132
      %v1134 = vand.u32 %v948, 4294901760
      %v1135 = vsub.f32 %v948, %v1134
      %1136 = vmatprep.subr.mxu0 %v1135
      %v1137 = vand.u32 %v947, 4294901760
      %v1138 = vsub.f32 %v947, %v1137
      %1139 = vmatpush1.msra.mxu0 %v1138
      %1140 = vmatprep.subr.mxu0 0.0
      %1141 = vmatpush1.msra.mxu0 0.0
      %1142 = vmatprep.subr.mxu0 0.0
      %1143 = vmatpush1.msra.mxu0 0.0
      %1144 = vmatprep.subr.mxu0 0.0
      %1145 = vmatpush1.msra.mxu0 0.0
      %1146 = vmatprep.subr.mxu0 0.0
      %1147 = vmatpush1.msra.mxu0 0.0
      %1148 = vmatprep.subr.mxu0 0.0
      %1149 = vmatpush1.msra.mxu0 0.0
      %1150 = vmatprep.subr.mxu0 0.0
      %1151 = vmatpush1.msra.mxu0 0.0
      %1152 = vmatprep.subr.mxu0 0.0
      %1153 = vmatpush1.msra.mxu0 0.0
      %1154 = vmatprep.subr.mxu0 0.0
      %1155 = vmatpush1.msra.mxu0 0.0
      %1156 = vmatprep.subr.mxu0 0.0
      %1157 = vmatpush1.msra.mxu0 0.0
      %1158 = vmatprep.subr.mxu0 0.0
      %1159 = vmatpush1.msra.mxu0 0.0
      %1160 = vmatprep.subr.mxu0 0.0
      %1161 = vmatpush1.msra.mxu0 0.0
      %1162 = vmatprep.subr.mxu0 0.0
      %1163 = vmatpush1.msra.mxu0 0.0
      %1164 = vmatprep.subr.mxu0 0.0
      %1165 = vmatpush1.msra.mxu0 0.0
      %1166 = vmatprep.subr.mxu0 0.0
      %1167 = vmatpush1.msra.mxu0 0.0
      %1168 = vmatprep.subr.mxu0 0.0
      %1169 = vmatpush1.msra.mxu0 0.0
      %1170 = vmatprep.subr.mxu0 0.0
      %1171 = vmatpush1.msra.mxu0 0.0
      %1172 = vmatprep.subr.mxu0 0.0
      %1173 = vmatpush1.msra.mxu0 0.0
      %1174 = vmatprep.subr.mxu0 0.0
      %1175 = vmatpush1.msra.mxu0 0.0
      %1176 = vmatprep.subr.mxu0 0.0
      %1177 = vmatpush1.msra.mxu0 0.0
      %1178 = vmatprep.subr.mxu0 0.0
      %1179 = vmatpush1.msra.mxu0 0.0
      %1180 = vmatprep.subr.mxu0 0.0
      %1181 = vmatpush1.msra.mxu0 0.0
      %1182 = vmatprep.subr.mxu0 0.0
      %1183 = vmatpush1.msra.mxu0 0.0
      %1184 = vmatprep.subr.mxu0 0.0
      %1185 = vmatpush1.msra.mxu0 0.0
      %1186 = vmatprep.subr.mxu0 0.0
      %1187 = vmatpush1.msra.mxu0 0.0
      %1188 = vmatprep.subr.mxu0 0.0
      %1189 = vmatpush1.msra.mxu0 0.0
      %1190 = vmatprep.subr.mxu0 0.0
      %1191 = vmatpush1.msra.mxu0 0.0
      %1192 = vmatprep.subr.mxu0 0.0
      %1193 = vmatpush1.msra.mxu0 0.0
      %1194 = vmatprep.subr.mxu0 0.0
      %1195 = vmatpush1.msra.mxu0 0.0
      %1196 = vmatprep.subr.mxu0 0.0
      %1197 = vmatpush1.msra.mxu0 0.0
      %1198 = vmatprep.subr.mxu0 0.0
      %1199 = vmatpush1.msra.mxu0 0.0
      %1200 = vmatprep.mubr.f32.mxu0 0.0
      %v1201 = vand.u32 %v954, 4294901760
      %v1202 = vsub.f32 %v954, %v1201
      %1203 = vmatmul.mubr.f32.gmra.mrb[0].mxu0 %v1202
      %v1204 = vpop.f32.mrb[0].mxu0
      %v1205 = vadd.f32 %v1124, %v1204
      %v1206 = vpop.f32.mrb[0].mxu0
      %v1207 = vadd.f32 %v1126, %v1206
      %1208 = vdwg.mxu0
      %v1209 = vand.u32 %v946, 4294901760
      %1210 = vmatprep.subr.mxu0 %v1209
      %v1211 = vand.u32 %v945, 4294901760
      %1212 = vmatpush1.msra.mxu0 %v1211
      %v1213 = vand.u32 %v948, 4294901760
      %1214 = vmatprep.subr.mxu0 %v1213
      %v1215 = vand.u32 %v947, 4294901760
      %1216 = vmatpush1.msra.mxu0 %v1215
      %1217 = vmatprep.subr.mxu0 0.0
      %1218 = vmatpush1.msra.mxu0 0.0
      %1219 = vmatprep.subr.mxu0 0.0
      %1220 = vmatpush1.msra.mxu0 0.0
      %1221 = vmatprep.subr.mxu0 0.0
      %1222 = vmatpush1.msra.mxu0 0.0
      %1223 = vmatprep.subr.mxu0 0.0
      %1224 = vmatpush1.msra.mxu0 0.0
      %1225 = vmatprep.subr.mxu0 0.0
      %1226 = vmatpush1.msra.mxu0 0.0
      %1227 = vmatprep.subr.mxu0 0.0
      %1228 = vmatpush1.msra.mxu0 0.0
      %1229 = vmatprep.subr.mxu0 0.0
      %1230 = vmatpush1.msra.mxu0 0.0
      %1231 = vmatprep.subr.mxu0 0.0
      %1232 = vmatpush1.msra.mxu0 0.0
      %1233 = vmatprep.subr.mxu0 0.0
      %1234 = vmatpush1.msra.mxu0 0.0
      %1235 = vmatprep.subr.mxu0 0.0
      %1236 = vmatpush1.msra.mxu0 0.0
      %1237 = vmatprep.subr.mxu0 0.0
      %1238 = vmatpush1.msra.mxu0 0.0
      %1239 = vmatprep.subr.mxu0 0.0
      %1240 = vmatpush1.msra.mxu0 0.0
      %1241 = vmatprep.subr.mxu0 0.0
      %1242 = vmatpush1.msra.mxu0 0.0
      %1243 = vmatprep.subr.mxu0 0.0
      %1244 = vmatpush1.msra.mxu0 0.0
      %1245 = vmatprep.subr.mxu0 0.0
      %1246 = vmatpush1.msra.mxu0 0.0
      %1247 = vmatprep.subr.mxu0 0.0
      %1248 = vmatpush1.msra.mxu0 0.0
      %1249 = vmatprep.subr.mxu0 0.0
      %1250 = vmatpush1.msra.mxu0 0.0
      %1251 = vmatprep.subr.mxu0 0.0
      %1252 = vmatpush1.msra.mxu0 0.0
      %1253 = vmatprep.subr.mxu0 0.0
      %1254 = vmatpush1.msra.mxu0 0.0
      %1255 = vmatprep.subr.mxu0 0.0
      %1256 = vmatpush1.msra.mxu0 0.0
      %1257 = vmatprep.subr.mxu0 0.0
      %1258 = vmatpush1.msra.mxu0 0.0
      %1259 = vmatprep.subr.mxu0 0.0
      %1260 = vmatpush1.msra.mxu0 0.0
      %1261 = vmatprep.subr.mxu0 0.0
      %1262 = vmatpush1.msra.mxu0 0.0
      %1263 = vmatprep.subr.mxu0 0.0
      %1264 = vmatpush1.msra.mxu0 0.0
      %1265 = vmatprep.subr.mxu0 0.0
      %1266 = vmatpush1.msra.mxu0 0.0
      %1267 = vmatprep.subr.mxu0 0.0
      %1268 = vmatpush1.msra.mxu0 0.0
      %1269 = vmatprep.subr.mxu0 0.0
      %1270 = vmatpush1.msra.mxu0 0.0
      %1271 = vmatprep.subr.mxu0 0.0
      %1272 = vmatpush1.msra.mxu0 0.0
      %1273 = vmatprep.subr.mxu0 0.0
      %1274 = vmatpush1.msra.mxu0 0.0
      %1275 = vmatprep.subr.mxu0 0.0
      %1276 = vmatpush1.msra.mxu0 0.0
      %1277 = vmatprep.mubr.f32.mxu0 0.0
      %v1278 = vand.u32 %v954, 4294901760
      %v1279 = vsub.f32 %v954, %v1278
      %v1280 = vand.u32 %v1279, 4294901760
      %1281 = vmatmul.mubr.f32.gmra.mrb[0].mxu0 %v1280
      %v1282 = vpop.f32.mrb[0].mxu0
      %v1283 = vadd.f32 %v1205, %v1282
      %v1284 = vpop.f32.mrb[0].mxu0
      %v1285 = vadd.f32 %v1207, %v1284
      %1286 = vdwg.mxu0
      %v1287 = vand.u32 %v946, 4294901760
      %v1288 = vsub.f32 %v946, %v1287
      %v1289 = vand.u32 %v1288, 4294901760
      %1290 = vmatprep.subr.mxu0 %v1289
      %v1291 = vand.u32 %v945, 4294901760
      %v1292 = vsub.f32 %v945, %v1291
      %v1293 = vand.u32 %v1292, 4294901760
      %1294 = vmatpush1.msra.mxu0 %v1293
      %v1295 = vand.u32 %v948, 4294901760
      %v1296 = vsub.f32 %v948, %v1295
      %v1297 = vand.u32 %v1296, 4294901760
      %1298 = vmatprep.subr.mxu0 %v1297
      %v1299 = vand.u32 %v947, 4294901760
      %v1300 = vsub.f32 %v947, %v1299
      %v1301 = vand.u32 %v1300, 4294901760
      %1302 = vmatpush1.msra.mxu0 %v1301
      %1303 = vmatprep.subr.mxu0 0.0
      %1304 = vmatpush1.msra.mxu0 0.0
      %1305 = vmatprep.subr.mxu0 0.0
      %1306 = vmatpush1.msra.mxu0 0.0
      %1307 = vmatprep.subr.mxu0 0.0
      %1308 = vmatpush1.msra.mxu0 0.0
      %1309 = vmatprep.subr.mxu0 0.0
      %1310 = vmatpush1.msra.mxu0 0.0
      %1311 = vmatprep.subr.mxu0 0.0
      %1312 = vmatpush1.msra.mxu0 0.0
      %1313 = vmatprep.subr.mxu0 0.0
      %1314 = vmatpush1.msra.mxu0 0.0
      %1315 = vmatprep.subr.mxu0 0.0
      %1316 = vmatpush1.msra.mxu0 0.0
      %1317 = vmatprep.subr.mxu0 0.0
      %1318 = vmatpush1.msra.mxu0 0.0
      %1319 = vmatprep.subr.mxu0 0.0
      %1320 = vmatpush1.msra.mxu0 0.0
      %1321 = vmatprep.subr.mxu0 0.0
      %1322 = vmatpush1.msra.mxu0 0.0
      %1323 = vmatprep.subr.mxu0 0.0
      %1324 = vmatpush1.msra.mxu0 0.0
      %1325 = vmatprep.subr.mxu0 0.0
      %1326 = vmatpush1.msra.mxu0 0.0
      %1327 = vmatprep.subr.mxu0 0.0
      %1328 = vmatpush1.msra.mxu0 0.0
      %1329 = vmatprep.subr.mxu0 0.0
      %1330 = vmatpush1.msra.mxu0 0.0
      %1331 = vmatprep.subr.mxu0 0.0
      %1332 = vmatpush1.msra.mxu0 0.0
      %1333 = vmatprep.subr.mxu0 0.0
      %1334 = vmatpush1.msra.mxu0 0.0
      %1335 = vmatprep.subr.mxu0 0.0
      %1336 = vmatpush1.msra.mxu0 0.0
      %1337 = vmatprep.subr.mxu0 0.0
      %1338 = vmatpush1.msra.mxu0 0.0
      %1339 = vmatprep.subr.mxu0 0.0
      %1340 = vmatpush1.msra.mxu0 0.0
      %1341 = vmatprep.subr.mxu0 0.0
      %1342 = vmatpush1.msra.mxu0 0.0
      %1343 = vmatprep.subr.mxu0 0.0
      %1344 = vmatpush1.msra.mxu0 0.0
      %1345 = vmatprep.subr.mxu0 0.0
      %1346 = vmatpush1.msra.mxu0 0.0
      %1347 = vmatprep.subr.mxu0 0.0
      %1348 = vmatpush1.msra.mxu0 0.0
      %1349 = vmatprep.subr.mxu0 0.0
      %1350 = vmatpush1.msra.mxu0 0.0
      %1351 = vmatprep.subr.mxu0 0.0
      %1352 = vmatpush1.msra.mxu0 0.0
      %1353 = vmatprep.subr.mxu0 0.0
      %1354 = vmatpush1.msra.mxu0 0.0
      %1355 = vmatprep.subr.mxu0 0.0
      %1356 = vmatpush1.msra.mxu0 0.0
      %1357 = vmatprep.subr.mxu0 0.0
      %1358 = vmatpush1.msra.mxu0 0.0
      %1359 = vmatprep.subr.mxu0 0.0
      %1360 = vmatpush1.msra.mxu0 0.0
      %1361 = vmatprep.subr.mxu0 0.0
      %1362 = vmatpush1.msra.mxu0 0.0
      %1363 = vmatprep.mubr.f32.mxu0 0.0
      %v1364 = vand.u32 %v954, 4294901760
      %1365 = vmatmul.mubr.f32.gmra.mrb[0].mxu0 %v1364
      %v1366 = vpop.f32.mrb[0].mxu0
      %v1367 = vadd.f32 %v1283, %v1366
      %v1368 = vpop.f32.mrb[0].mxu0
      %v1369 = vadd.f32 %v1285, %v1368
      %1370 = vdwg.mxu0
      %v1371 = vand.u32 %v946, 4294901760
      %1372 = vmatprep.subr.mxu0 %v1371
      %v1373 = vand.u32 %v945, 4294901760
      %1374 = vmatpush1.msra.mxu0 %v1373
      %v1375 = vand.u32 %v948, 4294901760
      %1376 = vmatprep.subr.mxu0 %v1375
      %v1377 = vand.u32 %v947, 4294901760
      %1378 = vmatpush1.msra.mxu0 %v1377
      %1379 = vmatprep.subr.mxu0 0.0
      %1380 = vmatpush1.msra.mxu0 0.0
      %1381 = vmatprep.subr.mxu0 0.0
      %1382 = vmatpush1.msra.mxu0 0.0
      %1383 = vmatprep.subr.mxu0 0.0
      %1384 = vmatpush1.msra.mxu0 0.0
      %1385 = vmatprep.subr.mxu0 0.0
      %1386 = vmatpush1.msra.mxu0 0.0
      %1387 = vmatprep.subr.mxu0 0.0
      %1388 = vmatpush1.msra.mxu0 0.0
      %1389 = vmatprep.subr.mxu0 0.0
      %1390 = vmatpush1.msra.mxu0 0.0
      %1391 = vmatprep.subr.mxu0 0.0
      %1392 = vmatpush1.msra.mxu0 0.0
      %1393 = vmatprep.subr.mxu0 0.0
      %1394 = vmatpush1.msra.mxu0 0.0
      %1395 = vmatprep.subr.mxu0 0.0
      %1396 = vmatpush1.msra.mxu0 0.0
      %1397 = vmatprep.subr.mxu0 0.0
      %1398 = vmatpush1.msra.mxu0 0.0
      %1399 = vmatprep.subr.mxu0 0.0
      %1400 = vmatpush1.msra.mxu0 0.0
      %1401 = vmatprep.subr.mxu0 0.0
      %1402 = vmatpush1.msra.mxu0 0.0
      %1403 = vmatprep.subr.mxu0 0.0
      %1404 = vmatpush1.msra.mxu0 0.0
      %1405 = vmatprep.subr.mxu0 0.0
      %1406 = vmatpush1.msra.mxu0 0.0
      %1407 = vmatprep.subr.mxu0 0.0
      %1408 = vmatpush1.msra.mxu0 0.0
      %1409 = vmatprep.subr.mxu0 0.0
      %1410 = vmatpush1.msra.mxu0 0.0
      %1411 = vmatprep.subr.mxu0 0.0
      %1412 = vmatpush1.msra.mxu0 0.0
      %1413 = vmatprep.subr.mxu0 0.0
      %1414 = vmatpush1.msra.mxu0 0.0
      %1415 = vmatprep.subr.mxu0 0.0
      %1416 = vmatpush1.msra.mxu0 0.0
      %1417 = vmatprep.subr.mxu0 0.0
      %1418 = vmatpush1.msra.mxu0 0.0
      %1419 = vmatprep.subr.mxu0 0.0
      %1420 = vmatpush1.msra.mxu0 0.0
      %1421 = vmatprep.subr.mxu0 0.0
      %1422 = vmatpush1.msra.mxu0 0.0
      %1423 = vmatprep.subr.mxu0 0.0
      %1424 = vmatpush1.msra.mxu0 0.0
      %1425 = vmatprep.subr.mxu0 0.0
      %1426 = vmatpush1.msra.mxu0 0.0
      %1427 = vmatprep.subr.mxu0 0.0
      %1428 = vmatpush1.msra.mxu0 0.0
      %1429 = vmatprep.subr.mxu0 0.0
      %1430 = vmatpush1.msra.mxu0 0.0
      %1431 = vmatprep.subr.mxu0 0.0
      %1432 = vmatpush1.msra.mxu0 0.0
      %1433 = vmatprep.subr.mxu0 0.0
      %1434 = vmatpush1.msra.mxu0 0.0
      %1435 = vmatprep.subr.mxu0 0.0
      %1436 = vmatpush1.msra.mxu0 0.0
      %1437 = vmatprep.subr.mxu0 0.0
      %1438 = vmatpush1.msra.mxu0 0.0
      %1439 = vmatprep.mubr.f32.mxu0 0.0
      %v1440 = vand.u32 %v954, 4294901760
      %1441 = vmatmul.mubr.f32.gmra.mrb[0].mxu0 %v1440
      %v1442 = vpop.f32.mrb[0].mxu0
      %v1443 = vadd.f32 %v1367, %v1442
      %v1444 = vpop.f32.mrb[0].mxu0
      %v1445 = vadd.f32 %v1369, %v1444
      %1446 = vdwg.mxu0
      %v1449 = vcombine.low %v1443, %v1445
      %1451 = vst [vmem:[#allocation3] sm:$0xff] %v1449
      %v1452 = vld [vmem:[#allocation3] sm:$0xff]
      %v1453 = vld [vmem:[#allocation2 + $0x8] sm:$0xff]
      %v1454 = vld [vmem:[#allocation2 + $0x10] sm:$0xff]
      %v1455 = vld [vmem:[#allocation2 + $0x28] sm:$0xff]
      %v1456 = vld [vmem:[#allocation2 + $0x30] sm:$0xff]
      %s1457 = scalar_lea.vmem %s6, 16
      %v1458 = vld [vmem:[%s1457] sm:$0xf]
      %v1460 = vsel %vm944, %v1458, 0
      %v1462 = vand.u32 %v1454, 4294901760
      %1463 = vmatprep.subr.mxu0 %v1462
      %v1464 = vand.u32 %v1453, 4294901760
      %1465 = vmatpush1.msra.mxu0 %v1464
      %v1466 = vand.u32 %v1456, 4294901760
      %1467 = vmatprep.subr.mxu0 %v1466
      %v1468 = vand.u32 %v1455, 4294901760
      %1469 = vmatpush1.msra.mxu0 %v1468
      %1470 = vmatprep.subr.mxu0 0.0
      %1471 = vmatpush1.msra.mxu0 0.0
      %1472 = vmatprep.subr.mxu0 0.0
      %1473 = vmatpush1.msra.mxu0 0.0
      %1474 = vmatprep.subr.mxu0 0.0
      %1475 = vmatpush1.msra.mxu0 0.0
      %1476 = vmatprep.subr.mxu0 0.0
      %1477 = vmatpush1.msra.mxu0 0.0
      %1478 = vmatprep.subr.mxu0 0.0
      %1479 = vmatpush1.msra.mxu0 0.0
      %1480 = vmatprep.subr.mxu0 0.0
      %1481 = vmatpush1.msra.mxu0 0.0
      %1482 = vmatprep.subr.mxu0 0.0
      %1483 = vmatpush1.msra.mxu0 0.0
      %1484 = vmatprep.subr.mxu0 0.0
      %1485 = vmatpush1.msra.mxu0 0.0
      %1486 = vmatprep.subr.mxu0 0.0
      %1487 = vmatpush1.msra.mxu0 0.0
      %1488 = vmatprep.subr.mxu0 0.0
      %1489 = vmatpush1.msra.mxu0 0.0
      %1490 = vmatprep.subr.mxu0 0.0
      %1491 = vmatpush1.msra.mxu0 0.0
      %1492 = vmatprep.subr.mxu0 0.0
      %1493 = vmatpush1.msra.mxu0 0.0
      %1494 = vmatprep.subr.mxu0 0.0
      %1495 = vmatpush1.msra.mxu0 0.0
      %1496 = vmatprep.subr.mxu0 0.0
      %1497 = vmatpush1.msra.mxu0 0.0
      %1498 = vmatprep.subr.mxu0 0.0
      %1499 = vmatpush1.msra.mxu0 0.0
      %1500 = vmatprep.subr.mxu0 0.0
      %1501 = vmatpush1.msra.mxu0 0.0
      %1502 = vmatprep.subr.mxu0 0.0
      %1503 = vmatpush1.msra.mxu0 0.0
      %1504 = vmatprep.subr.mxu0 0.0
      %1505 = vmatpush1.msra.mxu0 0.0
      %1506 = vmatprep.subr.mxu0 0.0
      %1507 = vmatpush1.msra.mxu0 0.0
      %1508 = vmatprep.subr.mxu0 0.0
      %1509 = vmatpush1.msra.mxu0 0.0
      %1510 = vmatprep.subr.mxu0 0.0
      %1511 = vmatpush1.msra.mxu0 0.0
      %1512 = vmatprep.subr.mxu0 0.0
      %1513 = vmatpush1.msra.mxu0 0.0
      %1514 = vmatprep.subr.mxu0 0.0
      %1515 = vmatpush1.msra.mxu0 0.0
      %1516 = vmatprep.subr.mxu0 0.0
      %1517 = vmatpush1.msra.mxu0 0.0
      %1518 = vmatprep.subr.mxu0 0.0
      %1519 = vmatpush1.msra.mxu0 0.0
      %1520 = vmatprep.subr.mxu0 0.0
      %1521 = vmatpush1.msra.mxu0 0.0
      %1522 = vmatprep.subr.mxu0 0.0
      %1523 = vmatpush1.msra.mxu0 0.0
      %1524 = vmatprep.subr.mxu0 0.0
      %1525 = vmatpush1.msra.mxu0 0.0
      %1526 = vmatprep.subr.mxu0 0.0
      %1527 = vmatpush1.msra.mxu0 0.0
      %1528 = vmatprep.subr.mxu0 0.0
      %1529 = vmatpush1.msra.mxu0 0.0
      %1530 = vmatprep.mubr.f32.mxu0 0.0
      %v1531 = vand.u32 %v1460, 4294901760
      %v1532 = vsub.f32 %v1460, %v1531
      %v1533 = vand.u32 %v1532, 4294901760
      %v1534 = vsub.f32 %v1532, %v1533
      %v1535 = vand.u32 %v1534, 4294901760
      %1536 = vmatmul.mubr.f32.gmra.mrb[0].mxu0 %v1535
      %v1537 = vpop.f32.mrb[0].mxu0
      %v1538 = vadd.f32 0.0, %v1537
      %v1539 = vpop.f32.mrb[0].mxu0
      %v1540 = vadd.f32 0.0, %v1539
      %1541 = vdwg.mxu0
      %v1542 = vand.u32 %v1454, 4294901760
      %v1543 = vsub.f32 %v1454, %v1542
      %v1544 = vand.u32 %v1543, 4294901760
      %v1545 = vsub.f32 %v1543, %v1544
      %v1546 = vand.u32 %v1545, 4294901760
      %1547 = vmatprep.subr.mxu0 %v1546
      %v1548 = vand.u32 %v1453, 4294901760
      %v1549 = vsub.f32 %v1453, %v1548
      %v1550 = vand.u32 %v1549, 4294901760
      %v1551 = vsub.f32 %v1549, %v1550
      %v1552 = vand.u32 %v1551, 4294901760
      %1553 = vmatpush1.msra.mxu0 %v1552
      %v1554 = vand.u32 %v1456, 4294901760
      %v1555 = vsub.f32 %v1456, %v1554
      %v1556 = vand.u32 %v1555, 4294901760
      %v1557 = vsub.f32 %v1555, %v1556
      %v1558 = vand.u32 %v1557, 4294901760
      %1559 = vmatprep.subr.mxu0 %v1558
      %v1560 = vand.u32 %v1455, 4294901760
      %v1561 = vsub.f32 %v1455, %v1560
      %v1562 = vand.u32 %v1561, 4294901760
      %v1563 = vsub.f32 %v1561, %v1562
      %v1564 = vand.u32 %v1563, 4294901760
      %1565 = vmatpush1.msra.mxu0 %v1564
      %1566 = vmatprep.subr.mxu0 0.0
      %1567 = vmatpush1.msra.mxu0 0.0
      %1568 = vmatprep.subr.mxu0 0.0
      %1569 = vmatpush1.msra.mxu0 0.0
      %1570 = vmatprep.subr.mxu0 0.0
      %1571 = vmatpush1.msra.mxu0 0.0
      %1572 = vmatprep.subr.mxu0 0.0
      %1573 = vmatpush1.msra.mxu0 0.0
      %1574 = vmatprep.subr.mxu0 0.0
      %1575 = vmatpush1.msra.mxu0 0.0
      %1576 = vmatprep.subr.mxu0 0.0
      %1577 = vmatpush1.msra.mxu0 0.0
      %1578 = vmatprep.subr.mxu0 0.0
      %1579 = vmatpush1.msra.mxu0 0.0
      %1580 = vmatprep.subr.mxu0 0.0
      %1581 = vmatpush1.msra.mxu0 0.0
      %1582 = vmatprep.subr.mxu0 0.0
      %1583 = vmatpush1.msra.mxu0 0.0
      %1584 = vmatprep.subr.mxu0 0.0
      %1585 = vmatpush1.msra.mxu0 0.0
      %1586 = vmatprep.subr.mxu0 0.0
      %1587 = vmatpush1.msra.mxu0 0.0
      %1588 = vmatprep.subr.mxu0 0.0
      %1589 = vmatpush1.msra.mxu0 0.0
      %1590 = vmatprep.subr.mxu0 0.0
      %1591 = vmatpush1.msra.mxu0 0.0
      %1592 = vmatprep.subr.mxu0 0.0
      %1593 = vmatpush1.msra.mxu0 0.0
      %1594 = vmatprep.subr.mxu0 0.0
      %1595 = vmatpush1.msra.mxu0 0.0
      %1596 = vmatprep.subr.mxu0 0.0
      %1597 = vmatpush1.msra.mxu0 0.0
      %1598 = vmatprep.subr.mxu0 0.0
      %1599 = vmatpush1.msra.mxu0 0.0
      %1600 = vmatprep.subr.mxu0 0.0
      %1601 = vmatpush1.msra.mxu0 0.0
      %1602 = vmatprep.subr.mxu0 0.0
      %1603 = vmatpush1.msra.mxu0 0.0
      %1604 = vmatprep.subr.mxu0 0.0
      %1605 = vmatpush1.msra.mxu0 0.0
      %1606 = vmatprep.subr.mxu0 0.0
      %1607 = vmatpush1.msra.mxu0 0.0
      %1608 = vmatprep.subr.mxu0 0.0
      %1609 = vmatpush1.msra.mxu0 0.0
      %1610 = vmatprep.subr.mxu0 0.0
      %1611 = vmatpush1.msra.mxu0 0.0
      %1612 = vmatprep.subr.mxu0 0.0
      %1613 = vmatpush1.msra.mxu0 0.0
      %1614 = vmatprep.subr.mxu0 0.0
      %1615 = vmatpush1.msra.mxu0 0.0
      %1616 = vmatprep.subr.mxu0 0.0
      %1617 = vmatpush1.msra.mxu0 0.0
      %1618 = vmatprep.subr.mxu0 0.0
      %1619 = vmatpush1.msra.mxu0 0.0
      %1620 = vmatprep.subr.mxu0 0.0
      %1621 = vmatpush1.msra.mxu0 0.0
      %1622 = vmatprep.subr.mxu0 0.0
      %1623 = vmatpush1.msra.mxu0 0.0
      %1624 = vmatprep.subr.mxu0 0.0
      %1625 = vmatpush1.msra.mxu0 0.0
      %1626 = vmatprep.mubr.f32.mxu0 0.0
      %v1627 = vand.u32 %v1460, 4294901760
      %1628 = vmatmul.mubr.f32.gmra.mrb[0].mxu0 %v1627
      %v1629 = vpop.f32.mrb[0].mxu0
      %v1630 = vadd.f32 %v1538, %v1629
      %v1631 = vpop.f32.mrb[0].mxu0
      %v1632 = vadd.f32 %v1540, %v1631
      %1633 = vdwg.mxu0
      %v1634 = vand.u32 %v1454, 4294901760
      %v1635 = vsub.f32 %v1454, %v1634
      %1636 = vmatprep.subr.mxu0 %v1635
      %v1637 = vand.u32 %v1453, 4294901760
      %v1638 = vsub.f32 %v1453, %v1637
      %1639 = vmatpush1.msra.mxu0 %v1638
      %v1640 = vand.u32 %v1456, 4294901760
      %v1641 = vsub.f32 %v1456, %v1640
      %1642 = vmatprep.subr.mxu0 %v1641
      %v1643 = vand.u32 %v1455, 4294901760
      %v1644 = vsub.f32 %v1455, %v1643
      %1645 = vmatpush1.msra.mxu0 %v1644
      %1646 = vmatprep.subr.mxu0 0.0
      %1647 = vmatpush1.msra.mxu0 0.0
      %1648 = vmatprep.subr.mxu0 0.0
      %1649 = vmatpush1.msra.mxu0 0.0
      %1650 = vmatprep.subr.mxu0 0.0
      %1651 = vmatpush1.msra.mxu0 0.0
      %1652 = vmatprep.subr.mxu0 0.0
      %1653 = vmatpush1.msra.mxu0 0.0
      %1654 = vmatprep.subr.mxu0 0.0
      %1655 = vmatpush1.msra.mxu0 0.0
      %1656 = vmatprep.subr.mxu0 0.0
      %1657 = vmatpush1.msra.mxu0 0.0
      %1658 = vmatprep.subr.mxu0 0.0
      %1659 = vmatpush1.msra.mxu0 0.0
      %1660 = vmatprep.subr.mxu0 0.0
      %1661 = vmatpush1.msra.mxu0 0.0
      %1662 = vmatprep.subr.mxu0 0.0
      %1663 = vmatpush1.msra.mxu0 0.0
      %1664 = vmatprep.subr.mxu0 0.0
      %1665 = vmatpush1.msra.mxu0 0.0
      %1666 = vmatprep.subr.mxu0 0.0
      %1667 = vmatpush1.msra.mxu0 0.0
      %1668 = vmatprep.subr.mxu0 0.0
      %1669 = vmatpush1.msra.mxu0 0.0
      %1670 = vmatprep.subr.mxu0 0.0
      %1671 = vmatpush1.msra.mxu0 0.0
      %1672 = vmatprep.subr.mxu0 0.0
      %1673 = vmatpush1.msra.mxu0 0.0
      %1674 = vmatprep.subr.mxu0 0.0
      %1675 = vmatpush1.msra.mxu0 0.0
      %1676 = vmatprep.subr.mxu0 0.0
      %1677 = vmatpush1.msra.mxu0 0.0
      %1678 = vmatprep.subr.mxu0 0.0
      %1679 = vmatpush1.msra.mxu0 0.0
      %1680 = vmatprep.subr.mxu0 0.0
      %1681 = vmatpush1.msra.mxu0 0.0
      %1682 = vmatprep.subr.mxu0 0.0
      %1683 = vmatpush1.msra.mxu0 0.0
      %1684 = vmatprep.subr.mxu0 0.0
      %1685 = vmatpush1.msra.mxu0 0.0
      %1686 = vmatprep.subr.mxu0 0.0
      %1687 = vmatpush1.msra.mxu0 0.0
      %1688 = vmatprep.subr.mxu0 0.0
      %1689 = vmatpush1.msra.mxu0 0.0
      %1690 = vmatprep.subr.mxu0 0.0
      %1691 = vmatpush1.msra.mxu0 0.0
      %1692 = vmatprep.subr.mxu0 0.0
      %1693 = vmatpush1.msra.mxu0 0.0
      %1694 = vmatprep.subr.mxu0 0.0
      %1695 = vmatpush1.msra.mxu0 0.0
      %1696 = vmatprep.subr.mxu0 0.0
      %1697 = vmatpush1.msra.mxu0 0.0
      %1698 = vmatprep.subr.mxu0 0.0
      %1699 = vmatpush1.msra.mxu0 0.0
      %1700 = vmatprep.subr.mxu0 0.0
      %1701 = vmatpush1.msra.mxu0 0.0
      %1702 = vmatprep.subr.mxu0 0.0
      %1703 = vmatpush1.msra.mxu0 0.0
      %1704 = vmatprep.subr.mxu0 0.0
      %1705 = vmatpush1.msra.mxu0 0.0
      %1706 = vmatprep.mubr.f32.mxu0 0.0
      %v1707 = vand.u32 %v1460, 4294901760
      %v1708 = vsub.f32 %v1460, %v1707
      %1709 = vmatmul.mubr.f32.gmra.mrb[0].mxu0 %v1708
      %v1710 = vpop.f32.mrb[0].mxu0
      %v1711 = vadd.f32 %v1630, %v1710
      %v1712 = vpop.f32.mrb[0].mxu0
      %v1713 = vadd.f32 %v1632, %v1712
      %1714 = vdwg.mxu0
      %v1715 = vand.u32 %v1454, 4294901760
      %1716 = vmatprep.subr.mxu0 %v1715
      %v1717 = vand.u32 %v1453, 4294901760
      %1718 = vmatpush1.msra.mxu0 %v1717
      %v1719 = vand.u32 %v1456, 4294901760
      %1720 = vmatprep.subr.mxu0 %v1719
      %v1721 = vand.u32 %v1455, 4294901760
      %1722 = vmatpush1.msra.mxu0 %v1721
      %1723 = vmatprep.subr.mxu0 0.0
      %1724 = vmatpush1.msra.mxu0 0.0
      %1725 = vmatprep.subr.mxu0 0.0
      %1726 = vmatpush1.msra.mxu0 0.0
      %1727 = vmatprep.subr.mxu0 0.0
      %1728 = vmatpush1.msra.mxu0 0.0
      %1729 = vmatprep.subr.mxu0 0.0
      %1730 = vmatpush1.msra.mxu0 0.0
      %1731 = vmatprep.subr.mxu0 0.0
      %1732 = vmatpush1.msra.mxu0 0.0
      %1733 = vmatprep.subr.mxu0 0.0
      %1734 = vmatpush1.msra.mxu0 0.0
      %1735 = vmatprep.subr.mxu0 0.0
      %1736 = vmatpush1.msra.mxu0 0.0
      %1737 = vmatprep.subr.mxu0 0.0
      %1738 = vmatpush1.msra.mxu0 0.0
      %1739 = vmatprep.subr.mxu0 0.0
      %1740 = vmatpush1.msra.mxu0 0.0
      %1741 = vmatprep.subr.mxu0 0.0
      %1742 = vmatpush1.msra.mxu0 0.0
      %1743 = vmatprep.subr.mxu0 0.0
      %1744 = vmatpush1.msra.mxu0 0.0
      %1745 = vmatprep.subr.mxu0 0.0
      %1746 = vmatpush1.msra.mxu0 0.0
      %1747 = vmatprep.subr.mxu0 0.0
      %1748 = vmatpush1.msra.mxu0 0.0
      %1749 = vmatprep.subr.mxu0 0.0
      %1750 = vmatpush1.msra.mxu0 0.0
      %1751 = vmatprep.subr.mxu0 0.0
      %1752 = vmatpush1.msra.mxu0 0.0
      %1753 = vmatprep.subr.mxu0 0.0
      %1754 = vmatpush1.msra.mxu0 0.0
      %1755 = vmatprep.subr.mxu0 0.0
      %1756 = vmatpush1.msra.mxu0 0.0
      %1757 = vmatprep.subr.mxu0 0.0
      %1758 = vmatpush1.msra.mxu0 0.0
      %1759 = vmatprep.subr.mxu0 0.0
      %1760 = vmatpush1.msra.mxu0 0.0
      %1761 = vmatprep.subr.mxu0 0.0
      %1762 = vmatpush1.msra.mxu0 0.0
      %1763 = vmatprep.subr.mxu0 0.0
      %1764 = vmatpush1.msra.mxu0 0.0
      %1765 = vmatprep.subr.mxu0 0.0
      %1766 = vmatpush1.msra.mxu0 0.0
      %1767 = vmatprep.subr.mxu0 0.0
      %1768 = vmatpush1.msra.mxu0 0.0
      %1769 = vmatprep.subr.mxu0 0.0
      %1770 = vmatpush1.msra.mxu0 0.0
      %1771 = vmatprep.subr.mxu0 0.0
      %1772 = vmatpush1.msra.mxu0 0.0
      %1773 = vmatprep.subr.mxu0 0.0
      %1774 = vmatpush1.msra.mxu0 0.0
      %1775 = vmatprep.subr.mxu0 0.0
      %1776 = vmatpush1.msra.mxu0 0.0
      %1777 = vmatprep.subr.mxu0 0.0
      %1778 = vmatpush1.msra.mxu0 0.0
      %1779 = vmatprep.subr.mxu0 0.0
      %1780 = vmatpush1.msra.mxu0 0.0
      %1781 = vmatprep.subr.mxu0 0.0
      %1782 = vmatpush1.msra.mxu0 0.0
      %1783 = vmatprep.mubr.f32.mxu0 0.0
      %v1784 = vand.u32 %v1460, 4294901760
      %v1785 = vsub.f32 %v1460, %v1784
      %v1786 = vand.u32 %v1785, 4294901760
      %1787 = vmatmul.mubr.f32.gmra.mrb[0].mxu0 %v1786
      %v1788 = vpop.f32.mrb[0].mxu0
      %v1789 = vadd.f32 %v1711, %v1788
      %v1790 = vpop.f32.mrb[0].mxu0
      %v1791 = vadd.f32 %v1713, %v1790
      %1792 = vdwg.mxu0
      %v1793 = vand.u32 %v1454, 4294901760
      %v1794 = vsub.f32 %v1454, %v1793
      %v1795 = vand.u32 %v1794, 4294901760
      %1796 = vmatprep.subr.mxu0 %v1795
      %v1797 = vand.u32 %v1453, 4294901760
      %v1798 = vsub.f32 %v1453, %v1797
      %v1799 = vand.u32 %v1798, 4294901760
      %1800 = vmatpush1.msra.mxu0 %v1799
      %v1801 = vand.u32 %v1456, 4294901760
      %v1802 = vsub.f32 %v1456, %v1801
      %v1803 = vand.u32 %v1802, 4294901760
      %1804 = vmatprep.subr.mxu0 %v1803
      %v1805 = vand.u32 %v1455, 4294901760
      %v1806 = vsub.f32 %v1455, %v1805
      %v1807 = vand.u32 %v1806, 4294901760
      %1808 = vmatpush1.msra.mxu0 %v1807
      %1809 = vmatprep.subr.mxu0 0.0
      %1810 = vmatpush1.msra.mxu0 0.0
      %1811 = vmatprep.subr.mxu0 0.0
      %1812 = vmatpush1.msra.mxu0 0.0
      %1813 = vmatprep.subr.mxu0 0.0
      %1814 = vmatpush1.msra.mxu0 0.0
      %1815 = vmatprep.subr.mxu0 0.0
      %1816 = vmatpush1.msra.mxu0 0.0
      %1817 = vmatprep.subr.mxu0 0.0
      %1818 = vmatpush1.msra.mxu0 0.0
      %1819 = vmatprep.subr.mxu0 0.0
      %1820 = vmatpush1.msra.mxu0 0.0
      %1821 = vmatprep.subr.mxu0 0.0
      %1822 = vmatpush1.msra.mxu0 0.0
      %1823 = vmatprep.subr.mxu0 0.0
      %1824 = vmatpush1.msra.mxu0 0.0
      %1825 = vmatprep.subr.mxu0 0.0
      %1826 = vmatpush1.msra.mxu0 0.0
      %1827 = vmatprep.subr.mxu0 0.0
      %1828 = vmatpush1.msra.mxu0 0.0
      %1829 = vmatprep.subr.mxu0 0.0
      %1830 = vmatpush1.msra.mxu0 0.0
      %1831 = vmatprep.subr.mxu0 0.0
      %1832 = vmatpush1.msra.mxu0 0.0
      %1833 = vmatprep.subr.mxu0 0.0
      %1834 = vmatpush1.msra.mxu0 0.0
      %1835 = vmatprep.subr.mxu0 0.0
      %1836 = vmatpush1.msra.mxu0 0.0
      %1837 = vmatprep.subr.mxu0 0.0
      %1838 = vmatpush1.msra.mxu0 0.0
      %1839 = vmatprep.subr.mxu0 0.0
      %1840 = vmatpush1.msra.mxu0 0.0
      %1841 = vmatprep.subr.mxu0 0.0
      %1842 = vmatpush1.msra.mxu0 0.0
      %1843 = vmatprep.subr.mxu0 0.0
      %1844 = vmatpush1.msra.mxu0 0.0
      %1845 = vmatprep.subr.mxu0 0.0
      %1846 = vmatpush1.msra.mxu0 0.0
      %1847 = vmatprep.subr.mxu0 0.0
      %1848 = vmatpush1.msra.mxu0 0.0
      %1849 = vmatprep.subr.mxu0 0.0
      %1850 = vmatpush1.msra.mxu0 0.0
      %1851 = vmatprep.subr.mxu0 0.0
      %1852 = vmatpush1.msra.mxu0 0.0
      %1853 = vmatprep.subr.mxu0 0.0
      %1854 = vmatpush1.msra.mxu0 0.0
      %1855 = vmatprep.subr.mxu0 0.0
      %1856 = vmatpush1.msra.mxu0 0.0
      %1857 = vmatprep.subr.mxu0 0.0
      %1858 = vmatpush1.msra.mxu0 0.0
      %1859 = vmatprep.subr.mxu0 0.0
      %1860 = vmatpush1.msra.mxu0 0.0
      %1861 = vmatprep.subr.mxu0 0.0
      %1862 = vmatpush1.msra.mxu0 0.0
      %1863 = vmatprep.subr.mxu0 0.0
      %1864 = vmatpush1.msra.mxu0 0.0
      %1865 = vmatprep.subr.mxu0 0.0
      %1866 = vmatpush1.msra.mxu0 0.0
      %1867 = vmatprep.subr.mxu0 0.0
      %1868 = vmatpush1.msra.mxu0 0.0
      %1869 = vmatprep.mubr.f32.mxu0 0.0
      %v1870 = vand.u32 %v1460, 4294901760
      %1871 = vmatmul.mubr.f32.gmra.mrb[0].mxu0 %v1870
      %v1872 = vpop.f32.mrb[0].mxu0
      %v1873 = vadd.f32 %v1789, %v1872
      %v1874 = vpop.f32.mrb[0].mxu0
      %v1875 = vadd.f32 %v1791, %v1874
      %1876 = vdwg.mxu0
      %v1877 = vand.u32 %v1454, 4294901760
      %1878 = vmatprep.subr.mxu0 %v1877
      %v1879 = vand.u32 %v1453, 4294901760
      %1880 = vmatpush1.msra.mxu0 %v1879
      %v1881 = vand.u32 %v1456, 4294901760
      %1882 = vmatprep.subr.mxu0 %v1881
      %v1883 = vand.u32 %v1455, 4294901760
      %1884 = vmatpush1.msra.mxu0 %v1883
      %1885 = vmatprep.subr.mxu0 0.0
      %1886 = vmatpush1.msra.mxu0 0.0
      %1887 = vmatprep.subr.mxu0 0.0
      %1888 = vmatpush1.msra.mxu0 0.0
      %1889 = vmatprep.subr.mxu0 0.0
      %1890 = vmatpush1.msra.mxu0 0.0
      %1891 = vmatprep.subr.mxu0 0.0
      %1892 = vmatpush1.msra.mxu0 0.0
      %1893 = vmatprep.subr.mxu0 0.0
      %1894 = vmatpush1.msra.mxu0 0.0
      %1895 = vmatprep.subr.mxu0 0.0
      %1896 = vmatpush1.msra.mxu0 0.0
      %1897 = vmatprep.subr.mxu0 0.0
      %1898 = vmatpush1.msra.mxu0 0.0
      %1899 = vmatprep.subr.mxu0 0.0
      %1900 = vmatpush1.msra.mxu0 0.0
      %1901 = vmatprep.subr.mxu0 0.0
      %1902 = vmatpush1.msra.mxu0 0.0
      %1903 = vmatprep.subr.mxu0 0.0
      %1904 = vmatpush1.msra.mxu0 0.0
      %1905 = vmatprep.subr.mxu0 0.0
      %1906 = vmatpush1.msra.mxu0 0.0
      %1907 = vmatprep.subr.mxu0 0.0
      %1908 = vmatpush1.msra.mxu0 0.0
      %1909 = vmatprep.subr.mxu0 0.0
      %1910 = vmatpush1.msra.mxu0 0.0
      %1911 = vmatprep.subr.mxu0 0.0
      %1912 = vmatpush1.msra.mxu0 0.0
      %1913 = vmatprep.subr.mxu0 0.0
      %1914 = vmatpush1.msra.mxu0 0.0
      %1915 = vmatprep.subr.mxu0 0.0
      %1916 = vmatpush1.msra.mxu0 0.0
      %1917 = vmatprep.subr.mxu0 0.0
      %1918 = vmatpush1.msra.mxu0 0.0
      %1919 = vmatprep.subr.mxu0 0.0
      %1920 = vmatpush1.msra.mxu0 0.0
      %1921 = vmatprep.subr.mxu0 0.0
      %1922 = vmatpush1.msra.mxu0 0.0
      %1923 = vmatprep.subr.mxu0 0.0
      %1924 = vmatpush1.msra.mxu0 0.0
      %1925 = vmatprep.subr.mxu0 0.0
      %1926 = vmatpush1.msra.mxu0 0.0
      %1927 = vmatprep.subr.mxu0 0.0
      %1928 = vmatpush1.msra.mxu0 0.0
      %1929 = vmatprep.subr.mxu0 0.0
      %1930 = vmatpush1.msra.mxu0 0.0
      %1931 = vmatprep.subr.mxu0 0.0
      %1932 = vmatpush1.msra.mxu0 0.0
      %1933 = vmatprep.subr.mxu0 0.0
      %1934 = vmatpush1.msra.mxu0 0.0
      %1935 = vmatprep.subr.mxu0 0.0
      %1936 = vmatpush1.msra.mxu0 0.0
      %1937 = vmatprep.subr.mxu0 0.0
      %1938 = vmatpush1.msra.mxu0 0.0
      %1939 = vmatprep.subr.mxu0 0.0
      %1940 = vmatpush1.msra.mxu0 0.0
      %1941 = vmatprep.subr.mxu0 0.0
      %1942 = vmatpush1.msra.mxu0 0.0
      %1943 = vmatprep.subr.mxu0 0.0
      %1944 = vmatpush1.msra.mxu0 0.0
      %1945 = vmatprep.mubr.f32.mxu0 0.0
      %v1946 = vand.u32 %v1460, 4294901760
      %1947 = vmatmul.mubr.f32.gmra.mrb[0].mxu0 %v1946
      %v1948 = vpop.f32.mrb[0].mxu0
      %v1949 = vadd.f32 %v1873, %v1948
      %v1950 = vpop.f32.mrb[0].mxu0
      %v1951 = vadd.f32 %v1875, %v1950
      %1952 = vdwg.mxu0
      %v1955 = vcombine.low %v1949, %v1951
      %v1957 = vadd.f32 %v1452, %v1955
      %1958 = vst [vmem:[#allocation3] sm:$0xff] %v1957
      %v1959 = vld [vmem:[#allocation3] sm:$0xff]
      %v1960 = vld [vmem:[#allocation2 + $0x8] sm:$0xff]
      %v1961 = vld [vmem:[#allocation2 + $0x10] sm:$0xff]
      %v1962 = vld [vmem:[#allocation2 + $0x18] sm:$0xff]
      %v1963 = vld [vmem:[#allocation2 + $0x28] sm:$0xff]
      %v1964 = vld [vmem:[#allocation2 + $0x30] sm:$0xff]
      %v1965 = vld [vmem:[#allocation2 + $0x38] sm:$0xff]
      %s1966 = scalar_lea.vmem %s6, 28
      %v1967 = vld [vmem:[%s1966] sm:$0xf]
      %1974 = vrot.lane.b32.xlu0 %v1960, 112
      %v1975 = vpop.permute.xlu0 %1974
      %1976 = vrot.lane.b32.xlu0 %v1961, 112
      %v1977 = vpop.permute.xlu0 %1976
      %1978 = vrot.lane.b32.xlu0 %v1962, 112
      %v1979 = vpop.permute.xlu0 %1978
      %1980 = vrot.lane.b32.xlu0 %v1963, 112
      %v1981 = vpop.permute.xlu0 %1980
      %1982 = vrot.lane.b32.xlu0 %v1964, 112
      %v1983 = vpop.permute.xlu0 %1982
      %1984 = vrot.lane.b32.xlu0 %v1965, 112
      %v1985 = vpop.permute.xlu0 %1984
      %vm1986 = vcmask 916480
      %v1987 = vsel %vm1986, %v1975, %v1977
      %v1988 = vsel %vm1986, %v1977, %v1979
      %v1989 = vsel %vm1986, %v1981, %v1983
      %v1990 = vsel %vm1986, %v1983, %v1985
      %v1996 = vsel %vm944, %v1967, 0
      %v1998 = vand.u32 %v1988, 4294901760
      %1999 = vmatprep.subr.mxu0 %v1998
      %v2000 = vand.u32 %v1987, 4294901760
      %2001 = vmatpush1.msra.mxu0 %v2000
      %v2002 = vand.u32 %v1990, 4294901760
      %2003 = vmatprep.subr.mxu0 %v2002
      %v2004 = vand.u32 %v1989, 4294901760
      %2005 = vmatpush1.msra.mxu0 %v2004
      %2006 = vmatprep.subr.mxu0 0.0
      %2007 = vmatpush1.msra.mxu0 0.0
      %2008 = vmatprep.subr.mxu0 0.0
      %2009 = vmatpush1.msra.mxu0 0.0
      %2010 = vmatprep.subr.mxu0 0.0
      %2011 = vmatpush1.msra.mxu0 0.0
      %2012 = vmatprep.subr.mxu0 0.0
      %2013 = vmatpush1.msra.mxu0 0.0
      %2014 = vmatprep.subr.mxu0 0.0
      %2015 = vmatpush1.msra.mxu0 0.0
      %2016 = vmatprep.subr.mxu0 0.0
      %2017 = vmatpush1.msra.mxu0 0.0
      %2018 = vmatprep.subr.mxu0 0.0
      %2019 = vmatpush1.msra.mxu0 0.0
      %2020 = vmatprep.subr.mxu0 0.0
      %2021 = vmatpush1.msra.mxu0 0.0
      %2022 = vmatprep.subr.mxu0 0.0
      %2023 = vmatpush1.msra.mxu0 0.0
      %2024 = vmatprep.subr.mxu0 0.0
      %2025 = vmatpush1.msra.mxu0 0.0
      %2026 = vmatprep.subr.mxu0 0.0
      %2027 = vmatpush1.msra.mxu0 0.0
      %2028 = vmatprep.subr.mxu0 0.0
      %2029 = vmatpush1.msra.mxu0 0.0
      %2030 = vmatprep.subr.mxu0 0.0
      %2031 = vmatpush1.msra.mxu0 0.0
      %2032 = vmatprep.subr.mxu0 0.0
      %2033 = vmatpush1.msra.mxu0 0.0
      %2034 = vmatprep.subr.mxu0 0.0
      %2035 = vmatpush1.msra.mxu0 0.0
      %2036 = vmatprep.subr.mxu0 0.0
      %2037 = vmatpush1.msra.mxu0 0.0
      %2038 = vmatprep.subr.mxu0 0.0
      %2039 = vmatpush1.msra.mxu0 0.0
      %2040 = vmatprep.subr.mxu0 0.0
      %2041 = vmatpush1.msra.mxu0 0.0
      %2042 = vmatprep.subr.mxu0 0.0
      %2043 = vmatpush1.msra.mxu0 0.0
      %2044 = vmatprep.subr.mxu0 0.0
      %2045 = vmatpush1.msra.mxu0 0.0
      %2046 = vmatprep.subr.mxu0 0.0
      %2047 = vmatpush1.msra.mxu0 0.0
      %2048 = vmatprep.subr.mxu0 0.0
      %2049 = vmatpush1.msra.mxu0 0.0
      %2050 = vmatprep.subr.mxu0 0.0
      %2051 = vmatpush1.msra.mxu0 0.0
      %2052 = vmatprep.subr.mxu0 0.0
      %2053 = vmatpush1.msra.mxu0 0.0
      %2054 = vmatprep.subr.mxu0 0.0
      %2055 = vmatpush1.msra.mxu0 0.0
      %2056 = vmatprep.subr.mxu0 0.0
      %2057 = vmatpush1.msra.mxu0 0.0
      %2058 = vmatprep.subr.mxu0 0.0
      %2059 = vmatpush1.msra.mxu0 0.0
      %2060 = vmatprep.subr.mxu0 0.0
      %2061 = vmatpush1.msra.mxu0 0.0
      %2062 = vmatprep.subr.mxu0 0.0
      %2063 = vmatpush1.msra.mxu0 0.0
      %2064 = vmatprep.subr.mxu0 0.0
      %2065 = vmatpush1.msra.mxu0 0.0
      %2066 = vmatprep.mubr.f32.mxu0 0.0
      %v2067 = vand.u32 %v1996, 4294901760
      %v2068 = vsub.f32 %v1996, %v2067
      %v2069 = vand.u32 %v2068, 4294901760
      %v2070 = vsub.f32 %v2068, %v2069
      %v2071 = vand.u32 %v2070, 4294901760
      %2072 = vmatmul.mubr.f32.gmra.mrb[0].mxu0 %v2071
      %v2073 = vpop.f32.mrb[0].mxu0
      %v2074 = vadd.f32 0.0, %v2073
      %v2075 = vpop.f32.mrb[0].mxu0
      %v2076 = vadd.f32 0.0, %v2075
      %2077 = vdwg.mxu0
      %v2078 = vand.u32 %v1988, 4294901760
      %v2079 = vsub.f32 %v1988, %v2078
      %v2080 = vand.u32 %v2079, 4294901760
      %v2081 = vsub.f32 %v2079, %v2080
      %v2082 = vand.u32 %v2081, 4294901760
      %2083 = vmatprep.subr.mxu0 %v2082
      %v2084 = vand.u32 %v1987, 4294901760
      %v2085 = vsub.f32 %v1987, %v2084
      %v2086 = vand.u32 %v2085, 4294901760
      %v2087 = vsub.f32 %v2085, %v2086
      %v2088 = vand.u32 %v2087, 4294901760
      %2089 = vmatpush1.msra.mxu0 %v2088
      %v2090 = vand.u32 %v1990, 4294901760
      %v2091 = vsub.f32 %v1990, %v2090
      %v2092 = vand.u32 %v2091, 4294901760
      %v2093 = vsub.f32 %v2091, %v2092
      %v2094 = vand.u32 %v2093, 4294901760
      %2095 = vmatprep.subr.mxu0 %v2094
      %v2096 = vand.u32 %v1989, 4294901760
      %v2097 = vsub.f32 %v1989, %v2096
      %v2098 = vand.u32 %v2097, 4294901760
      %v2099 = vsub.f32 %v2097, %v2098
      %v2100 = vand.u32 %v2099, 4294901760
      %2101 = vmatpush1.msra.mxu0 %v2100
      %2102 = vmatprep.subr.mxu0 0.0
      %2103 = vmatpush1.msra.mxu0 0.0
      %2104 = vmatprep.subr.mxu0 0.0
      %2105 = vmatpush1.msra.mxu0 0.0
      %2106 = vmatprep.subr.mxu0 0.0
      %2107 = vmatpush1.msra.mxu0 0.0
      %2108 = vmatprep.subr.mxu0 0.0
      %2109 = vmatpush1.msra.mxu0 0.0
      %2110 = vmatprep.subr.mxu0 0.0
      %2111 = vmatpush1.msra.mxu0 0.0
      %2112 = vmatprep.subr.mxu0 0.0
      %2113 = vmatpush1.msra.mxu0 0.0
      %2114 = vmatprep.subr.mxu0 0.0
      %2115 = vmatpush1.msra.mxu0 0.0
      %2116 = vmatprep.subr.mxu0 0.0
      %2117 = vmatpush1.msra.mxu0 0.0
      %2118 = vmatprep.subr.mxu0 0.0
      %2119 = vmatpush1.msra.mxu0 0.0
      %2120 = vmatprep.subr.mxu0 0.0
      %2121 = vmatpush1.msra.mxu0 0.0
      %2122 = vmatprep.subr.mxu0 0.0
      %2123 = vmatpush1.msra.mxu0 0.0
      %2124 = vmatprep.subr.mxu0 0.0
      %2125 = vmatpush1.msra.mxu0 0.0
      %2126 = vmatprep.subr.mxu0 0.0
      %2127 = vmatpush1.msra.mxu0 0.0
      %2128 = vmatprep.subr.mxu0 0.0
      %2129 = vmatpush1.msra.mxu0 0.0
      %2130 = vmatprep.subr.mxu0 0.0
      %2131 = vmatpush1.msra.mxu0 0.0
      %2132 = vmatprep.subr.mxu0 0.0
      %2133 = vmatpush1.msra.mxu0 0.0
      %2134 = vmatprep.subr.mxu0 0.0
      %2135 = vmatpush1.msra.mxu0 0.0
      %2136 = vmatprep.subr.mxu0 0.0
      %2137 = vmatpush1.msra.mxu0 0.0
      %2138 = vmatprep.subr.mxu0 0.0
      %2139 = vmatpush1.msra.mxu0 0.0
      %2140 = vmatprep.subr.mxu0 0.0
      %2141 = vmatpush1.msra.mxu0 0.0
      %2142 = vmatprep.subr.mxu0 0.0
      %2143 = vmatpush1.msra.mxu0 0.0
      %2144 = vmatprep.subr.mxu0 0.0
      %2145 = vmatpush1.msra.mxu0 0.0
      %2146 = vmatprep.subr.mxu0 0.0
      %2147 = vmatpush1.msra.mxu0 0.0
      %2148 = vmatprep.subr.mxu0 0.0
      %2149 = vmatpush1.msra.mxu0 0.0
      %2150 = vmatprep.subr.mxu0 0.0
      %2151 = vmatpush1.msra.mxu0 0.0
      %2152 = vmatprep.subr.mxu0 0.0
      %2153 = vmatpush1.msra.mxu0 0.0
      %2154 = vmatprep.subr.mxu0 0.0
      %2155 = vmatpush1.msra.mxu0 0.0
      %2156 = vmatprep.subr.mxu0 0.0
      %2157 = vmatpush1.msra.mxu0 0.0
      %2158 = vmatprep.subr.mxu0 0.0
      %2159 = vmatpush1.msra.mxu0 0.0
      %2160 = vmatprep.subr.mxu0 0.0
      %2161 = vmatpush1.msra.mxu0 0.0
      %2162 = vmatprep.mubr.f32.mxu0 0.0
      %v2163 = vand.u32 %v1996, 4294901760
      %2164 = vmatmul.mubr.f32.gmra.mrb[0].mxu0 %v2163
      %v2165 = vpop.f32.mrb[0].mxu0
      %v2166 = vadd.f32 %v2074, %v2165
      %v2167 = vpop.f32.mrb[0].mxu0
      %v2168 = vadd.f32 %v2076, %v2167
      %2169 = vdwg.mxu0
      %v2170 = vand.u32 %v1988, 4294901760
      %v2171 = vsub.f32 %v1988, %v2170
      %2172 = vmatprep.subr.mxu0 %v2171
      %v2173 = vand.u32 %v1987, 4294901760
      %v2174 = vsub.f32 %v1987, %v2173
      %2175 = vmatpush1.msra.mxu0 %v2174
      %v2176 = vand.u32 %v1990, 4294901760
      %v2177 = vsub.f32 %v1990, %v2176
      %2178 = vmatprep.subr.mxu0 %v2177
      %v2179 = vand.u32 %v1989, 4294901760
      %v2180 = vsub.f32 %v1989, %v2179
      %2181 = vmatpush1.msra.mxu0 %v2180
      %2182 = vmatprep.subr.mxu0 0.0
      %2183 = vmatpush1.msra.mxu0 0.0
      %2184 = vmatprep.subr.mxu0 0.0
      %2185 = vmatpush1.msra.mxu0 0.0
      %2186 = vmatprep.subr.mxu0 0.0
      %2187 = vmatpush1.msra.mxu0 0.0
      %2188 = vmatprep.subr.mxu0 0.0
      %2189 = vmatpush1.msra.mxu0 0.0
      %2190 = vmatprep.subr.mxu0 0.0
      %2191 = vmatpush1.msra.mxu0 0.0
      %2192 = vmatprep.subr.mxu0 0.0
      %2193 = vmatpush1.msra.mxu0 0.0
      %2194 = vmatprep.subr.mxu0 0.0
      %2195 = vmatpush1.msra.mxu0 0.0
      %2196 = vmatprep.subr.mxu0 0.0
      %2197 = vmatpush1.msra.mxu0 0.0
      %2198 = vmatprep.subr.mxu0 0.0
      %2199 = vmatpush1.msra.mxu0 0.0
      %2200 = vmatprep.subr.mxu0 0.0
      %2201 = vmatpush1.msra.mxu0 0.0
      %2202 = vmatprep.subr.mxu0 0.0
      %2203 = vmatpush1.msra.mxu0 0.0
      %2204 = vmatprep.subr.mxu0 0.0
      %2205 = vmatpush1.msra.mxu0 0.0
      %2206 = vmatprep.subr.mxu0 0.0
      %2207 = vmatpush1.msra.mxu0 0.0
      %2208 = vmatprep.subr.mxu0 0.0
      %2209 = vmatpush1.msra.mxu0 0.0
      %2210 = vmatprep.subr.mxu0 0.0
      %2211 = vmatpush1.msra.mxu0 0.0
      %2212 = vmatprep.subr.mxu0 0.0
      %2213 = vmatpush1.msra.mxu0 0.0
      %2214 = vmatprep.subr.mxu0 0.0
      %2215 = vmatpush1.msra.mxu0 0.0
      %2216 = vmatprep.subr.mxu0 0.0
      %2217 = vmatpush1.msra.mxu0 0.0
      %2218 = vmatprep.subr.mxu0 0.0
      %2219 = vmatpush1.msra.mxu0 0.0
      %2220 = vmatprep.subr.mxu0 0.0
      %2221 = vmatpush1.msra.mxu0 0.0
      %2222 = vmatprep.subr.mxu0 0.0
      %2223 = vmatpush1.msra.mxu0 0.0
      %2224 = vmatprep.subr.mxu0 0.0
      %2225 = vmatpush1.msra.mxu0 0.0
      %2226 = vmatprep.subr.mxu0 0.0
      %2227 = vmatpush1.msra.mxu0 0.0
      %2228 = vmatprep.subr.mxu0 0.0
      %2229 = vmatpush1.msra.mxu0 0.0
      %2230 = vmatprep.subr.mxu0 0.0
      %2231 = vmatpush1.msra.mxu0 0.0
      %2232 = vmatprep.subr.mxu0 0.0
      %2233 = vmatpush1.msra.mxu0 0.0
      %2234 = vmatprep.subr.mxu0 0.0
      %2235 = vmatpush1.msra.mxu0 0.0
      %2236 = vmatprep.subr.mxu0 0.0
      %2237 = vmatpush1.msra.mxu0 0.0
      %2238 = vmatprep.subr.mxu0 0.0
      %2239 = vmatpush1.msra.mxu0 0.0
      %2240 = vmatprep.subr.mxu0 0.0
      %2241 = vmatpush1.msra.mxu0 0.0
      %2242 = vmatprep.mubr.f32.mxu0 0.0
      %v2243 = vand.u32 %v1996, 4294901760
      %v2244 = vsub.f32 %v1996, %v2243
      %2245 = vmatmul.mubr.f32.gmra.mrb[0].mxu0 %v2244
      %v2246 = vpop.f32.mrb[0].mxu0
      %v2247 = vadd.f32 %v2166, %v2246
      %v2248 = vpop.f32.mrb[0].mxu0
      %v2249 = vadd.f32 %v2168, %v2248
      %2250 = vdwg.mxu0
      %v2251 = vand.u32 %v1988, 4294901760
      %2252 = vmatprep.subr.mxu0 %v2251
      %v2253 = vand.u32 %v1987, 4294901760
      %2254 = vmatpush1.msra.mxu0 %v2253
      %v2255 = vand.u32 %v1990, 4294901760
      %2256 = vmatprep.subr.mxu0 %v2255
      %v2257 = vand.u32 %v1989, 4294901760
      %2258 = vmatpush1.msra.mxu0 %v2257
      %2259 = vmatprep.subr.mxu0 0.0
      %2260 = vmatpush1.msra.mxu0 0.0
      %2261 = vmatprep.subr.mxu0 0.0
      %2262 = vmatpush1.msra.mxu0 0.0
      %2263 = vmatprep.subr.mxu0 0.0
      %2264 = vmatpush1.msra.mxu0 0.0
      %2265 = vmatprep.subr.mxu0 0.0
      %2266 = vmatpush1.msra.mxu0 0.0
      %2267 = vmatprep.subr.mxu0 0.0
      %2268 = vmatpush1.msra.mxu0 0.0
      %2269 = vmatprep.subr.mxu0 0.0
      %2270 = vmatpush1.msra.mxu0 0.0
      %2271 = vmatprep.subr.mxu0 0.0
      %2272 = vmatpush1.msra.mxu0 0.0
      %2273 = vmatprep.subr.mxu0 0.0
      %2274 = vmatpush1.msra.mxu0 0.0
      %2275 = vmatprep.subr.mxu0 0.0
      %2276 = vmatpush1.msra.mxu0 0.0
      %2277 = vmatprep.subr.mxu0 0.0
      %2278 = vmatpush1.msra.mxu0 0.0
      %2279 = vmatprep.subr.mxu0 0.0
      %2280 = vmatpush1.msra.mxu0 0.0
      %2281 = vmatprep.subr.mxu0 0.0
      %2282 = vmatpush1.msra.mxu0 0.0
      %2283 = vmatprep.subr.mxu0 0.0
      %2284 = vmatpush1.msra.mxu0 0.0
      %2285 = vmatprep.subr.mxu0 0.0
      %2286 = vmatpush1.msra.mxu0 0.0
      %2287 = vmatprep.subr.mxu0 0.0
      %2288 = vmatpush1.msra.mxu0 0.0
      %2289 = vmatprep.subr.mxu0 0.0
      %2290 = vmatpush1.msra.mxu0 0.0
      %2291 = vmatprep.subr.mxu0 0.0
      %2292 = vmatpush1.msra.mxu0 0.0
      %2293 = vmatprep.subr.mxu0 0.0
      %2294 = vmatpush1.msra.mxu0 0.0
      %2295 = vmatprep.subr.mxu0 0.0
      %2296 = vmatpush1.msra.mxu0 0.0
      %2297 = vmatprep.subr.mxu0 0.0
      %2298 = vmatpush1.msra.mxu0 0.0
      %2299 = vmatprep.subr.mxu0 0.0
      %2300 = vmatpush1.msra.mxu0 0.0
      %2301 = vmatprep.subr.mxu0 0.0
      %2302 = vmatpush1.msra.mxu0 0.0
      %2303 = vmatprep.subr.mxu0 0.0
      %2304 = vmatpush1.msra.mxu0 0.0
      %2305 = vmatprep.subr.mxu0 0.0
      %2306 = vmatpush1.msra.mxu0 0.0
      %2307 = vmatprep.subr.mxu0 0.0
      %2308 = vmatpush1.msra.mxu0 0.0
      %2309 = vmatprep.subr.mxu0 0.0
      %2310 = vmatpush1.msra.mxu0 0.0
      %2311 = vmatprep.subr.mxu0 0.0
      %2312 = vmatpush1.msra.mxu0 0.0
      %2313 = vmatprep.subr.mxu0 0.0
      %2314 = vmatpush1.msra.mxu0 0.0
      %2315 = vmatprep.subr.mxu0 0.0
      %2316 = vmatpush1.msra.mxu0 0.0
      %2317 = vmatprep.subr.mxu0 0.0
      %2318 = vmatpush1.msra.mxu0 0.0
      %2319 = vmatprep.mubr.f32.mxu0 0.0
      %v2320 = vand.u32 %v1996, 4294901760
      %v2321 = vsub.f32 %v1996, %v2320
      %v2322 = vand.u32 %v2321, 4294901760
      %2323 = vmatmul.mubr.f32.gmra.mrb[0].mxu0 %v2322
      %v2324 = vpop.f32.mrb[0].mxu0
      %v2325 = vadd.f32 %v2247, %v2324
      %v2326 = vpop.f32.mrb[0].mxu0
      %v2327 = vadd.f32 %v2249, %v2326
      %2328 = vdwg.mxu0
      %v2329 = vand.u32 %v1988, 4294901760
      %v2330 = vsub.f32 %v1988, %v2329
      %v2331 = vand.u32 %v2330, 4294901760
      %2332 = vmatprep.subr.mxu0 %v2331
      %v2333 = vand.u32 %v1987, 4294901760
      %v2334 = vsub.f32 %v1987, %v2333
      %v2335 = vand.u32 %v2334, 4294901760
      %2336 = vmatpush1.msra.mxu0 %v2335
      %v2337 = vand.u32 %v1990, 4294901760
      %v2338 = vsub.f32 %v1990, %v2337
      %v2339 = vand.u32 %v2338, 4294901760
      %2340 = vmatprep.subr.mxu0 %v2339
      %v2341 = vand.u32 %v1989, 4294901760
      %v2342 = vsub.f32 %v1989, %v2341
      %v2343 = vand.u32 %v2342, 4294901760
      %2344 = vmatpush1.msra.mxu0 %v2343
      %2345 = vmatprep.subr.mxu0 0.0
      %2346 = vmatpush1.msra.mxu0 0.0
      %2347 = vmatprep.subr.mxu0 0.0
      %2348 = vmatpush1.msra.mxu0 0.0
      %2349 = vmatprep.subr.mxu0 0.0
      %2350 = vmatpush1.msra.mxu0 0.0
      %2351 = vmatprep.subr.mxu0 0.0
      %2352 = vmatpush1.msra.mxu0 0.0
      %2353 = vmatprep.subr.mxu0 0.0
      %2354 = vmatpush1.msra.mxu0 0.0
      %2355 = vmatprep.subr.mxu0 0.0
      %2356 = vmatpush1.msra.mxu0 0.0
      %2357 = vmatprep.subr.mxu0 0.0
      %2358 = vmatpush1.msra.mxu0 0.0
      %2359 = vmatprep.subr.mxu0 0.0
      %2360 = vmatpush1.msra.mxu0 0.0
      %2361 = vmatprep.subr.mxu0 0.0
      %2362 = vmatpush1.msra.mxu0 0.0
      %2363 = vmatprep.subr.mxu0 0.0
      %2364 = vmatpush1.msra.mxu0 0.0
      %2365 = vmatprep.subr.mxu0 0.0
      %2366 = vmatpush1.msra.mxu0 0.0
      %2367 = vmatprep.subr.mxu0 0.0
      %2368 = vmatpush1.msra.mxu0 0.0
      %2369 = vmatprep.subr.mxu0 0.0
      %2370 = vmatpush1.msra.mxu0 0.0
      %2371 = vmatprep.subr.mxu0 0.0
      %2372 = vmatpush1.msra.mxu0 0.0
      %2373 = vmatprep.subr.mxu0 0.0
      %2374 = vmatpush1.msra.mxu0 0.0
      %2375 = vmatprep.subr.mxu0 0.0
      %2376 = vmatpush1.msra.mxu0 0.0
      %2377 = vmatprep.subr.mxu0 0.0
      %2378 = vmatpush1.msra.mxu0 0.0
      %2379 = vmatprep.subr.mxu0 0.0
      %2380 = vmatpush1.msra.mxu0 0.0
      %2381 = vmatprep.subr.mxu0 0.0
      %2382 = vmatpush1.msra.mxu0 0.0
      %2383 = vmatprep.subr.mxu0 0.0
      %2384 = vmatpush1.msra.mxu0 0.0
      %2385 = vmatprep.subr.mxu0 0.0
      %2386 = vmatpush1.msra.mxu0 0.0
      %2387 = vmatprep.subr.mxu0 0.0
      %2388 = vmatpush1.msra.mxu0 0.0
      %2389 = vmatprep.subr.mxu0 0.0
      %2390 = vmatpush1.msra.mxu0 0.0
      %2391 = vmatprep.subr.mxu0 0.0
      %2392 = vmatpush1.msra.mxu0 0.0
      %2393 = vmatprep.subr.mxu0 0.0
      %2394 = vmatpush1.msra.mxu0 0.0
      %2395 = vmatprep.subr.mxu0 0.0
      %2396 = vmatpush1.msra.mxu0 0.0
      %2397 = vmatprep.subr.mxu0 0.0
      %2398 = vmatpush1.msra.mxu0 0.0
      %2399 = vmatprep.subr.mxu0 0.0
      %2400 = vmatpush1.msra.mxu0 0.0
      %2401 = vmatprep.subr.mxu0 0.0
      %2402 = vmatpush1.msra.mxu0 0.0
      %2403 = vmatprep.subr.mxu0 0.0
      %2404 = vmatpush1.msra.mxu0 0.0
      %2405 = vmatprep.mubr.f32.mxu0 0.0
      %v2406 = vand.u32 %v1996, 4294901760
      %2407 = vmatmul.mubr.f32.gmra.mrb[0].mxu0 %v2406
      %v2408 = vpop.f32.mrb[0].mxu0
      %v2409 = vadd.f32 %v2325, %v2408
      %v2410 = vpop.f32.mrb[0].mxu0
      %v2411 = vadd.f32 %v2327, %v2410
      %2412 = vdwg.mxu0
      %v2413 = vand.u32 %v1988, 4294901760
      %2414 = vmatprep.subr.mxu0 %v2413
      %v2415 = vand.u32 %v1987, 4294901760
      %2416 = vmatpush1.msra.mxu0 %v2415
      %v2417 = vand.u32 %v1990, 4294901760
      %2418 = vmatprep.subr.mxu0 %v2417
      %v2419 = vand.u32 %v1989, 4294901760
      %2420 = vmatpush1.msra.mxu0 %v2419
      %2421 = vmatprep.subr.mxu0 0.0
      %2422 = vmatpush1.msra.mxu0 0.0
      %2423 = vmatprep.subr.mxu0 0.0
      %2424 = vmatpush1.msra.mxu0 0.0
      %2425 = vmatprep.subr.mxu0 0.0
      %2426 = vmatpush1.msra.mxu0 0.0
      %2427 = vmatprep.subr.mxu0 0.0
      %2428 = vmatpush1.msra.mxu0 0.0
      %2429 = vmatprep.subr.mxu0 0.0
      %2430 = vmatpush1.msra.mxu0 0.0
      %2431 = vmatprep.subr.mxu0 0.0
      %2432 = vmatpush1.msra.mxu0 0.0
      %2433 = vmatprep.subr.mxu0 0.0
      %2434 = vmatpush1.msra.mxu0 0.0
      %2435 = vmatprep.subr.mxu0 0.0
      %2436 = vmatpush1.msra.mxu0 0.0
      %2437 = vmatprep.subr.mxu0 0.0
      %2438 = vmatpush1.msra.mxu0 0.0
      %2439 = vmatprep.subr.mxu0 0.0
      %2440 = vmatpush1.msra.mxu0 0.0
      %2441 = vmatprep.subr.mxu0 0.0
      %2442 = vmatpush1.msra.mxu0 0.0
      %2443 = vmatprep.subr.mxu0 0.0
      %2444 = vmatpush1.msra.mxu0 0.0
      %2445 = vmatprep.subr.mxu0 0.0
      %2446 = vmatpush1.msra.mxu0 0.0
      %2447 = vmatprep.subr.mxu0 0.0
      %2448 = vmatpush1.msra.mxu0 0.0
      %2449 = vmatprep.subr.mxu0 0.0
      %2450 = vmatpush1.msra.mxu0 0.0
      %2451 = vmatprep.subr.mxu0 0.0
      %2452 = vmatpush1.msra.mxu0 0.0
      %2453 = vmatprep.subr.mxu0 0.0
      %2454 = vmatpush1.msra.mxu0 0.0
      %2455 = vmatprep.subr.mxu0 0.0
      %2456 = vmatpush1.msra.mxu0 0.0
      %2457 = vmatprep.subr.mxu0 0.0
      %2458 = vmatpush1.msra.mxu0 0.0
      %2459 = vmatprep.subr.mxu0 0.0
      %2460 = vmatpush1.msra.mxu0 0.0
      %2461 = vmatprep.subr.mxu0 0.0
      %2462 = vmatpush1.msra.mxu0 0.0
      %2463 = vmatprep.subr.mxu0 0.0
      %2464 = vmatpush1.msra.mxu0 0.0
      %2465 = vmatprep.subr.mxu0 0.0
      %2466 = vmatpush1.msra.mxu0 0.0
      %2467 = vmatprep.subr.mxu0 0.0
      %2468 = vmatpush1.msra.mxu0 0.0
      %2469 = vmatprep.subr.mxu0 0.0
      %2470 = vmatpush1.msra.mxu0 0.0
      %2471 = vmatprep.subr.mxu0 0.0
      %2472 = vmatpush1.msra.mxu0 0.0
      %2473 = vmatprep.subr.mxu0 0.0
      %2474 = vmatpush1.msra.mxu0 0.0
      %2475 = vmatprep.subr.mxu0 0.0
      %2476 = vmatpush1.msra.mxu0 0.0
      %2477 = vmatprep.subr.mxu0 0.0
      %2478 = vmatpush1.msra.mxu0 0.0
      %2479 = vmatprep.subr.mxu0 0.0
      %2480 = vmatpush1.msra.mxu0 0.0
      %2481 = vmatprep.mubr.f32.mxu0 0.0
      %v2482 = vand.u32 %v1996, 4294901760
      %2483 = vmatmul.mubr.f32.gmra.mrb[0].mxu0 %v2482
      %v2484 = vpop.f32.mrb[0].mxu0
      %v2485 = vadd.f32 %v2409, %v2484
      %v2486 = vpop.f32.mrb[0].mxu0
      %v2487 = vadd.f32 %v2411, %v2486
      %2488 = vdwg.mxu0
      %v2491 = vcombine.low %v2485, %v2487
      %v2493 = vadd.f32 %v1959, %v2491
      %2494 = vst [vmem:[#allocation3] sm:$0xff] %v2493
      %v2495 = vld [vmem:[#allocation3] sm:$0xff]
      %v2496 = vld [vmem:[#allocation2] sm:$0xff]
      %v2497 = vld [vmem:[#allocation2 + $0x8] sm:$0xff]
      %v2498 = vld [vmem:[#allocation2 + $0x10] sm:$0xff]
      %v2499 = vld [vmem:[#allocation2 + $0x20] sm:$0xff]
      %v2500 = vld [vmem:[#allocation2 + $0x28] sm:$0xff]
      %v2501 = vld [vmem:[#allocation2 + $0x30] sm:$0xff]
      %v2502 = vld [vmem:[%s6] sm:$0xf]
      %s2503 = scalar_lea.vmem %s6, 12
      %v2504 = vld [vmem:[%s2503] sm:$0xf]
      %2511 = vrot.lane.b32.xlu0 %v2496, 1
      %v2512 = vpop.permute.xlu0 %2511
      %2513 = vrot.lane.b32.xlu0 %v2497, 1
      %v2514 = vpop.permute.xlu0 %2513
      %2515 = vrot.lane.b32.xlu0 %v2498, 1
      %v2516 = vpop.permute.xlu0 %2515
      %2517 = vrot.lane.b32.xlu0 %v2499, 1
      %v2518 = vpop.permute.xlu0 %2517
      %2519 = vrot.lane.b32.xlu0 %v2500, 1
      %v2520 = vpop.permute.xlu0 %2519
      %2521 = vrot.lane.b32.xlu0 %v2501, 1
      %v2522 = vpop.permute.xlu0 %2521
      %vm2523 = vcmask 7168
      %v2524 = vsel %vm2523, %v2512, %v2514
      %v2525 = vsel %vm2523, %v2514, %v2516
      %v2526 = vsel %vm2523, %v2518, %v2520
      %v2527 = vsel %vm2523, %v2520, %v2522
      %v2533 = vsel %vm944, %v2504, 0
      %v2535 = vand.u32 %v2525, 4294901760
      %2536 = vmatprep.subr.mxu0 %v2535
      %v2537 = vand.u32 %v2524, 4294901760
      %2538 = vmatpush1.msra.mxu0 %v2537
      %v2539 = vand.u32 %v2527, 4294901760
      %2540 = vmatprep.subr.mxu0 %v2539
      %v2541 = vand.u32 %v2526, 4294901760
      %2542 = vmatpush1.msra.mxu0 %v2541
      %2543 = vmatprep.subr.mxu0 0.0
      %2544 = vmatpush1.msra.mxu0 0.0
      %2545 = vmatprep.subr.mxu0 0.0
      %2546 = vmatpush1.msra.mxu0 0.0
      %2547 = vmatprep.subr.mxu0 0.0
      %2548 = vmatpush1.msra.mxu0 0.0
      %2549 = vmatprep.subr.mxu0 0.0
      %2550 = vmatpush1.msra.mxu0 0.0
      %2551 = vmatprep.subr.mxu0 0.0
      %2552 = vmatpush1.msra.mxu0 0.0
      %2553 = vmatprep.subr.mxu0 0.0
      %2554 = vmatpush1.msra.mxu0 0.0
      %2555 = vmatprep.subr.mxu0 0.0
      %2556 = vmatpush1.msra.mxu0 0.0
      %2557 = vmatprep.subr.mxu0 0.0
      %2558 = vmatpush1.msra.mxu0 0.0
      %2559 = vmatprep.subr.mxu0 0.0
      %2560 = vmatpush1.msra.mxu0 0.0
      %2561 = vmatprep.subr.mxu0 0.0
      %2562 = vmatpush1.msra.mxu0 0.0
      %2563 = vmatprep.subr.mxu0 0.0
      %2564 = vmatpush1.msra.mxu0 0.0
      %2565 = vmatprep.subr.mxu0 0.0
      %2566 = vmatpush1.msra.mxu0 0.0
      %2567 = vmatprep.subr.mxu0 0.0
      %2568 = vmatpush1.msra.mxu0 0.0
      %2569 = vmatprep.subr.mxu0 0.0
      %2570 = vmatpush1.msra.mxu0 0.0
      %2571 = vmatprep.subr.mxu0 0.0
      %2572 = vmatpush1.msra.mxu0 0.0
      %2573 = vmatprep.subr.mxu0 0.0
      %2574 = vmatpush1.msra.mxu0 0.0
      %2575 = vmatprep.subr.mxu0 0.0
      %2576 = vmatpush1.msra.mxu0 0.0
      %2577 = vmatprep.subr.mxu0 0.0
      %2578 = vmatpush1.msra.mxu0 0.0
      %2579 = vmatprep.subr.mxu0 0.0
      %2580 = vmatpush1.msra.mxu0 0.0
      %2581 = vmatprep.subr.mxu0 0.0
      %2582 = vmatpush1.msra.mxu0 0.0
      %2583 = vmatprep.subr.mxu0 0.0
      %2584 = vmatpush1.msra.mxu0 0.0
      %2585 = vmatprep.subr.mxu0 0.0
      %2586 = vmatpush1.msra.mxu0 0.0
      %2587 = vmatprep.subr.mxu0 0.0
      %2588 = vmatpush1.msra.mxu0 0.0
      %2589 = vmatprep.subr.mxu0 0.0
      %2590 = vmatpush1.msra.mxu0 0.0
      %2591 = vmatprep.subr.mxu0 0.0
      %2592 = vmatpush1.msra.mxu0 0.0
      %2593 = vmatprep.subr.mxu0 0.0
      %2594 = vmatpush1.msra.mxu0 0.0
      %2595 = vmatprep.subr.mxu0 0.0
      %2596 = vmatpush1.msra.mxu0 0.0
      %2597 = vmatprep.subr.mxu0 0.0
      %2598 = vmatpush1.msra.mxu0 0.0
      %2599 = vmatprep.subr.mxu0 0.0
      %2600 = vmatpush1.msra.mxu0 0.0
      %2601 = vmatprep.subr.mxu0 0.0
      %2602 = vmatpush1.msra.mxu0 0.0
      %2603 = vmatprep.mubr.f32.mxu0 0.0
      %v2604 = vand.u32 %v2533, 4294901760
      %v2605 = vsub.f32 %v2533, %v2604
      %v2606 = vand.u32 %v2605, 4294901760
      %v2607 = vsub.f32 %v2605, %v2606
      %v2608 = vand.u32 %v2607, 4294901760
      %2609 = vmatmul.mubr.f32.gmra.mrb[0].mxu0 %v2608
      %v2610 = vpop.f32.mrb[0].mxu0
      %v2611 = vadd.f32 0.0, %v2610
      %v2612 = vpop.f32.mrb[0].mxu0
      %v2613 = vadd.f32 0.0, %v2612
      %2614 = vdwg.mxu0
      %v2615 = vand.u32 %v2525, 4294901760
      %v2616 = vsub.f32 %v2525, %v2615
      %v2617 = vand.u32 %v2616, 4294901760
      %v2618 = vsub.f32 %v2616, %v2617
      %v2619 = vand.u32 %v2618, 4294901760
      %2620 = vmatprep.subr.mxu0 %v2619
      %v2621 = vand.u32 %v2524, 4294901760
      %v2622 = vsub.f32 %v2524, %v2621
      %v2623 = vand.u32 %v2622, 4294901760
      %v2624 = vsub.f32 %v2622, %v2623
      %v2625 = vand.u32 %v2624, 4294901760
      %2626 = vmatpush1.msra.mxu0 %v2625
      %v2627 = vand.u32 %v2527, 4294901760
      %v2628 = vsub.f32 %v2527, %v2627
      %v2629 = vand.u32 %v2628, 4294901760
      %v2630 = vsub.f32 %v2628, %v2629
      %v2631 = vand.u32 %v2630, 4294901760
      %2632 = vmatprep.subr.mxu0 %v2631
      %v2633 = vand.u32 %v2526, 4294901760
      %v2634 = vsub.f32 %v2526, %v2633
      %v2635 = vand.u32 %v2634, 4294901760
      %v2636 = vsub.f32 %v2634, %v2635
      %v2637 = vand.u32 %v2636, 4294901760
      %2638 = vmatpush1.msra.mxu0 %v2637
      %2639 = vmatprep.subr.mxu0 0.0
      %2640 = vmatpush1.msra.mxu0 0.0
      %2641 = vmatprep.subr.mxu0 0.0
      %2642 = vmatpush1.msra.mxu0 0.0
      %2643 = vmatprep.subr.mxu0 0.0
      %2644 = vmatpush1.msra.mxu0 0.0
      %2645 = vmatprep.subr.mxu0 0.0
      %2646 = vmatpush1.msra.mxu0 0.0
      %2647 = vmatprep.subr.mxu0 0.0
      %2648 = vmatpush1.msra.mxu0 0.0
      %2649 = vmatprep.subr.mxu0 0.0
      %2650 = vmatpush1.msra.mxu0 0.0
      %2651 = vmatprep.subr.mxu0 0.0
      %2652 = vmatpush1.msra.mxu0 0.0
      %2653 = vmatprep.subr.mxu0 0.0
      %2654 = vmatpush1.msra.mxu0 0.0
      %2655 = vmatprep.subr.mxu0 0.0
      %2656 = vmatpush1.msra.mxu0 0.0
      %2657 = vmatprep.subr.mxu0 0.0
      %2658 = vmatpush1.msra.mxu0 0.0
      %2659 = vmatprep.subr.mxu0 0.0
      %2660 = vmatpush1.msra.mxu0 0.0
      %2661 = vmatprep.subr.mxu0 0.0
      %2662 = vmatpush1.msra.mxu0 0.0
      %2663 = vmatprep.subr.mxu0 0.0
      %2664 = vmatpush1.msra.mxu0 0.0
      %2665 = vmatprep.subr.mxu0 0.0
      %2666 = vmatpush1.msra.mxu0 0.0
      %2667 = vmatprep.subr.mxu0 0.0
      %2668 = vmatpush1.msra.mxu0 0.0
      %2669 = vmatprep.subr.mxu0 0.0
      %2670 = vmatpush1.msra.mxu0 0.0
      %2671 = vmatprep.subr.mxu0 0.0
      %2672 = vmatpush1.msra.mxu0 0.0
      %2673 = vmatprep.subr.mxu0 0.0
      %2674 = vmatpush1.msra.mxu0 0.0
      %2675 = vmatprep.subr.mxu0 0.0
      %2676 = vmatpush1.msra.mxu0 0.0
      %2677 = vmatprep.subr.mxu0 0.0
      %2678 = vmatpush1.msra.mxu0 0.0
      %2679 = vmatprep.subr.mxu0 0.0
      %2680 = vmatpush1.msra.mxu0 0.0
      %2681 = vmatprep.subr.mxu0 0.0
      %2682 = vmatpush1.msra.mxu0 0.0
      %2683 = vmatprep.subr.mxu0 0.0
      %2684 = vmatpush1.msra.mxu0 0.0
      %2685 = vmatprep.subr.mxu0 0.0
      %2686 = vmatpush1.msra.mxu0 0.0
      %2687 = vmatprep.subr.mxu0 0.0
      %2688 = vmatpush1.msra.mxu0 0.0
      %2689 = vmatprep.subr.mxu0 0.0
      %2690 = vmatpush1.msra.mxu0 0.0
      %2691 = vmatprep.subr.mxu0 0.0
      %2692 = vmatpush1.msra.mxu0 0.0
      %2693 = vmatprep.subr.mxu0 0.0
      %2694 = vmatpush1.msra.mxu0 0.0
      %2695 = vmatprep.subr.mxu0 0.0
      %2696 = vmatpush1.msra.mxu0 0.0
      %2697 = vmatprep.subr.mxu0 0.0
      %2698 = vmatpush1.msra.mxu0 0.0
      %2699 = vmatprep.mubr.f32.mxu0 0.0
      %v2700 = vand.u32 %v2533, 4294901760
      %2701 = vmatmul.mubr.f32.gmra.mrb[0].mxu0 %v2700
      %v2702 = vpop.f32.mrb[0].mxu0
      %v2703 = vadd.f32 %v2611, %v2702
      %v2704 = vpop.f32.mrb[0].mxu0
      %v2705 = vadd.f32 %v2613, %v2704
      %2706 = vdwg.mxu0
      %v2707 = vand.u32 %v2525, 4294901760
      %v2708 = vsub.f32 %v2525, %v2707
      %2709 = vmatprep.subr.mxu0 %v2708
      %v2710 = vand.u32 %v2524, 4294901760
      %v2711 = vsub.f32 %v2524, %v2710
      %2712 = vmatpush1.msra.mxu0 %v2711
      %v2713 = vand.u32 %v2527, 4294901760
      %v2714 = vsub.f32 %v2527, %v2713
      %2715 = vmatprep.subr.mxu0 %v2714
      %v2716 = vand.u32 %v2526, 4294901760
      %v2717 = vsub.f32 %v2526, %v2716
      %2718 = vmatpush1.msra.mxu0 %v2717
      %2719 = vmatprep.subr.mxu0 0.0
      %2720 = vmatpush1.msra.mxu0 0.0
      %2721 = vmatprep.subr.mxu0 0.0
      %2722 = vmatpush1.msra.mxu0 0.0
      %2723 = vmatprep.subr.mxu0 0.0
      %2724 = vmatpush1.msra.mxu0 0.0
      %2725 = vmatprep.subr.mxu0 0.0
      %2726 = vmatpush1.msra.mxu0 0.0
      %2727 = vmatprep.subr.mxu0 0.0
      %2728 = vmatpush1.msra.mxu0 0.0
      %2729 = vmatprep.subr.mxu0 0.0
      %2730 = vmatpush1.msra.mxu0 0.0
      %2731 = vmatprep.subr.mxu0 0.0
      %2732 = vmatpush1.msra.mxu0 0.0
      %2733 = vmatprep.subr.mxu0 0.0
      %2734 = vmatpush1.msra.mxu0 0.0
      %2735 = vmatprep.subr.mxu0 0.0
      %2736 = vmatpush1.msra.mxu0 0.0
      %2737 = vmatprep.subr.mxu0 0.0
      %2738 = vmatpush1.msra.mxu0 0.0
      %2739 = vmatprep.subr.mxu0 0.0
      %2740 = vmatpush1.msra.mxu0 0.0
      %2741 = vmatprep.subr.mxu0 0.0
      %2742 = vmatpush1.msra.mxu0 0.0
      %2743 = vmatprep.subr.mxu0 0.0
      %2744 = vmatpush1.msra.mxu0 0.0
      %2745 = vmatprep.subr.mxu0 0.0
      %2746 = vmatpush1.msra.mxu0 0.0
      %2747 = vmatprep.subr.mxu0 0.0
      %2748 = vmatpush1.msra.mxu0 0.0
      %2749 = vmatprep.subr.mxu0 0.0
      %2750 = vmatpush1.msra.mxu0 0.0
      %2751 = vmatprep.subr.mxu0 0.0
      %2752 = vmatpush1.msra.mxu0 0.0
      %2753 = vmatprep.subr.mxu0 0.0
      %2754 = vmatpush1.msra.mxu0 0.0
      %2755 = vmatprep.subr.mxu0 0.0
      %2756 = vmatpush1.msra.mxu0 0.0
      %2757 = vmatprep.subr.mxu0 0.0
      %2758 = vmatpush1.msra.mxu0 0.0
      %2759 = vmatprep.subr.mxu0 0.0
      %2760 = vmatpush1.msra.mxu0 0.0
      %2761 = vmatprep.subr.mxu0 0.0
      %2762 = vmatpush1.msra.mxu0 0.0
      %2763 = vmatprep.subr.mxu0 0.0
      %2764 = vmatpush1.msra.mxu0 0.0
      %2765 = vmatprep.subr.mxu0 0.0
      %2766 = vmatpush1.msra.mxu0 0.0
      %2767 = vmatprep.subr.mxu0 0.0
      %2768 = vmatpush1.msra.mxu0 0.0
      %2769 = vmatprep.subr.mxu0 0.0
      %2770 = vmatpush1.msra.mxu0 0.0
      %2771 = vmatprep.subr.mxu0 0.0
      %2772 = vmatpush1.msra.mxu0 0.0
      %2773 = vmatprep.subr.mxu0 0.0
      %2774 = vmatpush1.msra.mxu0 0.0
      %2775 = vmatprep.subr.mxu0 0.0
      %2776 = vmatpush1.msra.mxu0 0.0
      %2777 = vmatprep.subr.mxu0 0.0
      %2778 = vmatpush1.msra.mxu0 0.0
      %2779 = vmatprep.mubr.f32.mxu0 0.0
      %v2780 = vand.u32 %v2533, 4294901760
      %v2781 = vsub.f32 %v2533, %v2780
      %2782 = vmatmul.mubr.f32.gmra.mrb[0].mxu0 %v2781
      %v2783 = vpop.f32.mrb[0].mxu0
      %v2784 = vadd.f32 %v2703, %v2783
      %v2785 = vpop.f32.mrb[0].mxu0
      %v2786 = vadd.f32 %v2705, %v2785
      %2787 = vdwg.mxu0
      %v2788 = vand.u32 %v2525, 4294901760
      %2789 = vmatprep.subr.mxu0 %v2788
      %v2790 = vand.u32 %v2524, 4294901760
      %2791 = vmatpush1.msra.mxu0 %v2790
      %v2792 = vand.u32 %v2527, 4294901760
      %2793 = vmatprep.subr.mxu0 %v2792
      %v2794 = vand.u32 %v2526, 4294901760
      %2795 = vmatpush1.msra.mxu0 %v2794
      %2796 = vmatprep.subr.mxu0 0.0
      %2797 = vmatpush1.msra.mxu0 0.0
      %2798 = vmatprep.subr.mxu0 0.0
      %2799 = vmatpush1.msra.mxu0 0.0
      %2800 = vmatprep.subr.mxu0 0.0
      %2801 = vmatpush1.msra.mxu0 0.0
      %2802 = vmatprep.subr.mxu0 0.0
      %2803 = vmatpush1.msra.mxu0 0.0
      %2804 = vmatprep.subr.mxu0 0.0
      %2805 = vmatpush1.msra.mxu0 0.0
      %2806 = vmatprep.subr.mxu0 0.0
      %2807 = vmatpush1.msra.mxu0 0.0
      %2808 = vmatprep.subr.mxu0 0.0
      %2809 = vmatpush1.msra.mxu0 0.0
      %2810 = vmatprep.subr.mxu0 0.0
      %2811 = vmatpush1.msra.mxu0 0.0
      %2812 = vmatprep.subr.mxu0 0.0
      %2813 = vmatpush1.msra.mxu0 0.0
      %2814 = vmatprep.subr.mxu0 0.0
      %2815 = vmatpush1.msra.mxu0 0.0
      %2816 = vmatprep.subr.mxu0 0.0
      %2817 = vmatpush1.msra.mxu0 0.0
      %2818 = vmatprep.subr.mxu0 0.0
      %2819 = vmatpush1.msra.mxu0 0.0
      %2820 = vmatprep.subr.mxu0 0.0
      %2821 = vmatpush1.msra.mxu0 0.0
      %2822 = vmatprep.subr.mxu0 0.0
      %2823 = vmatpush1.msra.mxu0 0.0
      %2824 = vmatprep.subr.mxu0 0.0
      %2825 = vmatpush1.msra.mxu0 0.0
      %2826 = vmatprep.subr.mxu0 0.0
      %2827 = vmatpush1.msra.mxu0 0.0
      %2828 = vmatprep.subr.mxu0 0.0
      %2829 = vmatpush1.msra.mxu0 0.0
      %2830 = vmatprep.subr.mxu0 0.0
      %2831 = vmatpush1.msra.mxu0 0.0
      %2832 = vmatprep.subr.mxu0 0.0
      %2833 = vmatpush1.msra.mxu0 0.0
      %2834 = vmatprep.subr.mxu0 0.0
      %2835 = vmatpush1.msra.mxu0 0.0
      %2836 = vmatprep.subr.mxu0 0.0
      %2837 = vmatpush1.msra.mxu0 0.0
      %2838 = vmatprep.subr.mxu0 0.0
      %2839 = vmatpush1.msra.mxu0 0.0
      %2840 = vmatprep.subr.mxu0 0.0
      %2841 = vmatpush1.msra.mxu0 0.0
      %2842 = vmatprep.subr.mxu0 0.0
      %2843 = vmatpush1.msra.mxu0 0.0
      %2844 = vmatprep.subr.mxu0 0.0
      %2845 = vmatpush1.msra.mxu0 0.0
      %2846 = vmatprep.subr.mxu0 0.0
      %2847 = vmatpush1.msra.mxu0 0.0
      %2848 = vmatprep.subr.mxu0 0.0
      %2849 = vmatpush1.msra.mxu0 0.0
      %2850 = vmatprep.subr.mxu0 0.0
      %2851 = vmatpush1.msra.mxu0 0.0
      %2852 = vmatprep.subr.mxu0 0.0
      %2853 = vmatpush1.msra.mxu0 0.0
      %2854 = vmatprep.subr.mxu0 0.0
      %2855 = vmatpush1.msra.mxu0 0.0
      %2856 = vmatprep.mubr.f32.mxu0 0.0
      %v2857 = vand.u32 %v2533, 4294901760
      %v2858 = vsub.f32 %v2533, %v2857
      %v2859 = vand.u32 %v2858, 4294901760
      %2860 = vmatmul.mubr.f32.gmra.mrb[0].mxu0 %v2859
      %v2861 = vpop.f32.mrb[0].mxu0
      %v2862 = vadd.f32 %v2784, %v2861
      %v2863 = vpop.f32.mrb[0].mxu0
      %v2864 = vadd.f32 %v2786, %v2863
      %2865 = vdwg.mxu0
      %v2866 = vand.u32 %v2525, 4294901760
      %v2867 = vsub.f32 %v2525, %v2866
      %v2868 = vand.u32 %v2867, 4294901760
      %2869 = vmatprep.subr.mxu0 %v2868
      %v2870 = vand.u32 %v2524, 4294901760
      %v2871 = vsub.f32 %v2524, %v2870
      %v2872 = vand.u32 %v2871, 4294901760
      %2873 = vmatpush1.msra.mxu0 %v2872
      %v2874 = vand.u32 %v2527, 4294901760
      %v2875 = vsub.f32 %v2527, %v2874
      %v2876 = vand.u32 %v2875, 4294901760
      %2877 = vmatprep.subr.mxu0 %v2876
      %v2878 = vand.u32 %v2526, 4294901760
      %v2879 = vsub.f32 %v2526, %v2878
      %v2880 = vand.u32 %v2879, 4294901760
      %2881 = vmatpush1.msra.mxu0 %v2880
      %2882 = vmatprep.subr.mxu0 0.0
      %2883 = vmatpush1.msra.mxu0 0.0
      %2884 = vmatprep.subr.mxu0 0.0
      %2885 = vmatpush1.msra.mxu0 0.0
      %2886 = vmatprep.subr.mxu0 0.0
      %2887 = vmatpush1.msra.mxu0 0.0
      %2888 = vmatprep.subr.mxu0 0.0
      %2889 = vmatpush1.msra.mxu0 0.0
      %2890 = vmatprep.subr.mxu0 0.0
      %2891 = vmatpush1.msra.mxu0 0.0
      %2892 = vmatprep.subr.mxu0 0.0
      %2893 = vmatpush1.msra.mxu0 0.0
      %2894 = vmatprep.subr.mxu0 0.0
      %2895 = vmatpush1.msra.mxu0 0.0
      %2896 = vmatprep.subr.mxu0 0.0
      %2897 = vmatpush1.msra.mxu0 0.0
      %2898 = vmatprep.subr.mxu0 0.0
      %2899 = vmatpush1.msra.mxu0 0.0
      %2900 = vmatprep.subr.mxu0 0.0
      %2901 = vmatpush1.msra.mxu0 0.0
      %2902 = vmatprep.subr.mxu0 0.0
      %2903 = vmatpush1.msra.mxu0 0.0
      %2904 = vmatprep.subr.mxu0 0.0
      %2905 = vmatpush1.msra.mxu0 0.0
      %2906 = vmatprep.subr.mxu0 0.0
      %2907 = vmatpush1.msra.mxu0 0.0
      %2908 = vmatprep.subr.mxu0 0.0
      %2909 = vmatpush1.msra.mxu0 0.0
      %2910 = vmatprep.subr.mxu0 0.0
      %2911 = vmatpush1.msra.mxu0 0.0
      %2912 = vmatprep.subr.mxu0 0.0
      %2913 = vmatpush1.msra.mxu0 0.0
      %2914 = vmatprep.subr.mxu0 0.0
      %2915 = vmatpush1.msra.mxu0 0.0
      %2916 = vmatprep.subr.mxu0 0.0
      %2917 = vmatpush1.msra.mxu0 0.0
      %2918 = vmatprep.subr.mxu0 0.0
      %2919 = vmatpush1.msra.mxu0 0.0
      %2920 = vmatprep.subr.mxu0 0.0
      %2921 = vmatpush1.msra.mxu0 0.0
      %2922 = vmatprep.subr.mxu0 0.0
      %2923 = vmatpush1.msra.mxu0 0.0
      %2924 = vmatprep.subr.mxu0 0.0
      %2925 = vmatpush1.msra.mxu0 0.0
      %2926 = vmatprep.subr.mxu0 0.0
      %2927 = vmatpush1.msra.mxu0 0.0
      %2928 = vmatprep.subr.mxu0 0.0
      %2929 = vmatpush1.msra.mxu0 0.0
      %2930 = vmatprep.subr.mxu0 0.0
      %2931 = vmatpush1.msra.mxu0 0.0
      %2932 = vmatprep.subr.mxu0 0.0
      %2933 = vmatpush1.msra.mxu0 0.0
      %2934 = vmatprep.subr.mxu0 0.0
      %2935 = vmatpush1.msra.mxu0 0.0
      %2936 = vmatprep.subr.mxu0 0.0
      %2937 = vmatpush1.msra.mxu0 0.0
      %2938 = vmatprep.subr.mxu0 0.0
      %2939 = vmatpush1.msra.mxu0 0.0
      %2940 = vmatprep.subr.mxu0 0.0
      %2941 = vmatpush1.msra.mxu0 0.0
      %2942 = vmatprep.mubr.f32.mxu0 0.0
      %v2943 = vand.u32 %v2533, 4294901760
      %2944 = vmatmul.mubr.f32.gmra.mrb[0].mxu0 %v2943
      %v2945 = vpop.f32.mrb[0].mxu0
      %v2946 = vadd.f32 %v2862, %v2945
      %v2947 = vpop.f32.mrb[0].mxu0
      %v2948 = vadd.f32 %v2864, %v2947
      %2949 = vdwg.mxu0
      %v2950 = vand.u32 %v2525, 4294901760
      %2951 = vmatprep.subr.mxu0 %v2950
      %v2952 = vand.u32 %v2524, 4294901760
      %2953 = vmatpush1.msra.mxu0 %v2952
      %v2954 = vand.u32 %v2527, 4294901760
      %2955 = vmatprep.subr.mxu0 %v2954
      %v2956 = vand.u32 %v2526, 4294901760
      %2957 = vmatpush1.msra.mxu0 %v2956
      %2958 = vmatprep.subr.mxu0 0.0
      %2959 = vmatpush1.msra.mxu0 0.0
      %2960 = vmatprep.subr.mxu0 0.0
      %2961 = vmatpush1.msra.mxu0 0.0
      %2962 = vmatprep.subr.mxu0 0.0
      %2963 = vmatpush1.msra.mxu0 0.0
      %2964 = vmatprep.subr.mxu0 0.0
      %2965 = vmatpush1.msra.mxu0 0.0
      %2966 = vmatprep.subr.mxu0 0.0
      %2967 = vmatpush1.msra.mxu0 0.0
      %2968 = vmatprep.subr.mxu0 0.0
      %2969 = vmatpush1.msra.mxu0 0.0
      %2970 = vmatprep.subr.mxu0 0.0
      %2971 = vmatpush1.msra.mxu0 0.0
      %2972 = vmatprep.subr.mxu0 0.0
      %2973 = vmatpush1.msra.mxu0 0.0
      %2974 = vmatprep.subr.mxu0 0.0
      %2975 = vmatpush1.msra.mxu0 0.0
      %2976 = vmatprep.subr.mxu0 0.0
      %2977 = vmatpush1.msra.mxu0 0.0
      %2978 = vmatprep.subr.mxu0 0.0
      %2979 = vmatpush1.msra.mxu0 0.0
      %2980 = vmatprep.subr.mxu0 0.0
      %2981 = vmatpush1.msra.mxu0 0.0
      %2982 = vmatprep.subr.mxu0 0.0
      %2983 = vmatpush1.msra.mxu0 0.0
      %2984 = vmatprep.subr.mxu0 0.0
      %2985 = vmatpush1.msra.mxu0 0.0
      %2986 = vmatprep.subr.mxu0 0.0
      %2987 = vmatpush1.msra.mxu0 0.0
      %2988 = vmatprep.subr.mxu0 0.0
      %2989 = vmatpush1.msra.mxu0 0.0
      %2990 = vmatprep.subr.mxu0 0.0
      %2991 = vmatpush1.msra.mxu0 0.0
      %2992 = vmatprep.subr.mxu0 0.0
      %2993 = vmatpush1.msra.mxu0 0.0
      %2994 = vmatprep.subr.mxu0 0.0
      %2995 = vmatpush1.msra.mxu0 0.0
      %2996 = vmatprep.subr.mxu0 0.0
      %2997 = vmatpush1.msra.mxu0 0.0
      %2998 = vmatprep.subr.mxu0 0.0
      %2999 = vmatpush1.msra.mxu0 0.0
      %3000 = vmatprep.subr.mxu0 0.0
      %3001 = vmatpush1.msra.mxu0 0.0
      %3002 = vmatprep.subr.mxu0 0.0
      %3003 = vmatpush1.msra.mxu0 0.0
      %3004 = vmatprep.subr.mxu0 0.0
      %3005 = vmatpush1.msra.mxu0 0.0
      %3006 = vmatprep.subr.mxu0 0.0
      %3007 = vmatpush1.msra.mxu0 0.0
      %3008 = vmatprep.subr.mxu0 0.0
      %3009 = vmatpush1.msra.mxu0 0.0
      %3010 = vmatprep.subr.mxu0 0.0
      %3011 = vmatpush1.msra.mxu0 0.0
      %3012 = vmatprep.subr.mxu0 0.0
      %3013 = vmatpush1.msra.mxu0 0.0
      %3014 = vmatprep.subr.mxu0 0.0
      %3015 = vmatpush1.msra.mxu0 0.0
      %3016 = vmatprep.subr.mxu0 0.0
      %3017 = vmatpush1.msra.mxu0 0.0
      %3018 = vmatprep.mubr.f32.mxu0 0.0
      %v3019 = vand.u32 %v2533, 4294901760
      %3020 = vmatmul.mubr.f32.gmra.mrb[0].mxu0 %v3019
      %v3021 = vpop.f32.mrb[0].mxu0
      %v3022 = vadd.f32 %v2946, %v3021
      %v3023 = vpop.f32.mrb[0].mxu0
      %v3024 = vadd.f32 %v2948, %v3023
      %3025 = vdwg.mxu0
      %3026 = vrot.lane.b32.xlu0 %v2496, 17
      %v3027 = vpop.permute.xlu0 %3026
      %3028 = vrot.lane.b32.xlu0 %v2497, 17
      %v3029 = vpop.permute.xlu0 %3028
      %3030 = vrot.lane.b32.xlu0 %v2498, 17
      %v3031 = vpop.permute.xlu0 %3030
      %3032 = vrot.lane.b32.xlu0 %v2499, 17
      %v3033 = vpop.permute.xlu0 %3032
      %3034 = vrot.lane.b32.xlu0 %v2500, 17
      %v3035 = vpop.permute.xlu0 %3034
      %3036 = vrot.lane.b32.xlu0 %v2501, 17
      %v3037 = vpop.permute.xlu0 %3036
      %vm3038 = vcmask 138240
      %v3039 = vsel %vm3038, %v3027, %v3029
      %v3040 = vsel %vm3038, %v3029, %v3031
      %v3041 = vsel %vm3038, %v3033, %v3035
      %v3042 = vsel %vm3038, %v3035, %v3037
      %v3048 = vsel %vm944, %v2502, 0
      %v3050 = vand.u32 %v3040, 4294901760
      %3051 = vmatprep.subr.mxu0 %v3050
      %v3052 = vand.u32 %v3039, 4294901760
      %3053 = vmatpush1.msra.mxu0 %v3052
      %v3054 = vand.u32 %v3042, 4294901760
      %3055 = vmatprep.subr.mxu0 %v3054
      %v3056 = vand.u32 %v3041, 4294901760
      %3057 = vmatpush1.msra.mxu0 %v3056
      %3058 = vmatprep.subr.mxu0 0.0
      %3059 = vmatpush1.msra.mxu0 0.0
      %3060 = vmatprep.subr.mxu0 0.0
      %3061 = vmatpush1.msra.mxu0 0.0
      %3062 = vmatprep.subr.mxu0 0.0
      %3063 = vmatpush1.msra.mxu0 0.0
      %3064 = vmatprep.subr.mxu0 0.0
      %3065 = vmatpush1.msra.mxu0 0.0
      %3066 = vmatprep.subr.mxu0 0.0
      %3067 = vmatpush1.msra.mxu0 0.0
      %3068 = vmatprep.subr.mxu0 0.0
      %3069 = vmatpush1.msra.mxu0 0.0
      %3070 = vmatprep.subr.mxu0 0.0
      %3071 = vmatpush1.msra.mxu0 0.0
      %3072 = vmatprep.subr.mxu0 0.0
      %3073 = vmatpush1.msra.mxu0 0.0
      %3074 = vmatprep.subr.mxu0 0.0
      %3075 = vmatpush1.msra.mxu0 0.0
      %3076 = vmatprep.subr.mxu0 0.0
      %3077 = vmatpush1.msra.mxu0 0.0
      %3078 = vmatprep.subr.mxu0 0.0
      %3079 = vmatpush1.msra.mxu0 0.0
      %3080 = vmatprep.subr.mxu0 0.0
      %3081 = vmatpush1.msra.mxu0 0.0
      %3082 = vmatprep.subr.mxu0 0.0
      %3083 = vmatpush1.msra.mxu0 0.0
      %3084 = vmatprep.subr.mxu0 0.0
      %3085 = vmatpush1.msra.mxu0 0.0
      %3086 = vmatprep.subr.mxu0 0.0
      %3087 = vmatpush1.msra.mxu0 0.0
      %3088 = vmatprep.subr.mxu0 0.0
      %3089 = vmatpush1.msra.mxu0 0.0
      %3090 = vmatprep.subr.mxu0 0.0
      %3091 = vmatpush1.msra.mxu0 0.0
      %3092 = vmatprep.subr.mxu0 0.0
      %3093 = vmatpush1.msra.mxu0 0.0
      %3094 = vmatprep.subr.mxu0 0.0
      %3095 = vmatpush1.msra.mxu0 0.0
      %3096 = vmatprep.subr.mxu0 0.0
      %3097 = vmatpush1.msra.mxu0 0.0
      %3098 = vmatprep.subr.mxu0 0.0
      %3099 = vmatpush1.msra.mxu0 0.0
      %3100 = vmatprep.subr.mxu0 0.0
      %3101 = vmatpush1.msra.mxu0 0.0
      %3102 = vmatprep.subr.mxu0 0.0
      %3103 = vmatpush1.msra.mxu0 0.0
      %3104 = vmatprep.subr.mxu0 0.0
      %3105 = vmatpush1.msra.mxu0 0.0
      %3106 = vmatprep.subr.mxu0 0.0
      %3107 = vmatpush1.msra.mxu0 0.0
      %3108 = vmatprep.subr.mxu0 0.0
      %3109 = vmatpush1.msra.mxu0 0.0
      %3110 = vmatprep.subr.mxu0 0.0
      %3111 = vmatpush1.msra.mxu0 0.0
      %3112 = vmatprep.subr.mxu0 0.0
      %3113 = vmatpush1.msra.mxu0 0.0
      %3114 = vmatprep.subr.mxu0 0.0
      %3115 = vmatpush1.msra.mxu0 0.0
      %3116 = vmatprep.subr.mxu0 0.0
      %3117 = vmatpush1.msra.mxu0 0.0
      %3118 = vmatprep.mubr.f32.mxu0 0.0
      %v3119 = vand.u32 %v3048, 4294901760
      %v3120 = vsub.f32 %v3048, %v3119
      %v3121 = vand.u32 %v3120, 4294901760
      %v3122 = vsub.f32 %v3120, %v3121
      %v3123 = vand.u32 %v3122, 4294901760
      %3124 = vmatmul.mubr.f32.gmra.mrb[0].mxu0 %v3123
      %v3125 = vpop.f32.mrb[0].mxu0
      %v3126 = vadd.f32 %v3022, %v3125
      %v3127 = vpop.f32.mrb[0].mxu0
      %v3128 = vadd.f32 %v3024, %v3127
      %3129 = vdwg.mxu0
      %v3130 = vand.u32 %v3040, 4294901760
      %v3131 = vsub.f32 %v3040, %v3130
      %v3132 = vand.u32 %v3131, 4294901760
      %v3133 = vsub.f32 %v3131, %v3132
      %v3134 = vand.u32 %v3133, 4294901760
      %3135 = vmatprep.subr.mxu0 %v3134
      %v3136 = vand.u32 %v3039, 4294901760
      %v3137 = vsub.f32 %v3039, %v3136
      %v3138 = vand.u32 %v3137, 4294901760
      %v3139 = vsub.f32 %v3137, %v3138
      %v3140 = vand.u32 %v3139, 4294901760
      %3141 = vmatpush1.msra.mxu0 %v3140
      %v3142 = vand.u32 %v3042, 4294901760
      %v3143 = vsub.f32 %v3042, %v3142
      %v3144 = vand.u32 %v3143, 4294901760
      %v3145 = vsub.f32 %v3143, %v3144
      %v3146 = vand.u32 %v3145, 4294901760
      %3147 = vmatprep.subr.mxu0 %v3146
      %v3148 = vand.u32 %v3041, 4294901760
      %v3149 = vsub.f32 %v3041, %v3148
      %v3150 = vand.u32 %v3149, 4294901760
      %v3151 = vsub.f32 %v3149, %v3150
      %v3152 = vand.u32 %v3151, 4294901760
      %3153 = vmatpush1.msra.mxu0 %v3152
      %3154 = vmatprep.subr.mxu0 0.0
      %3155 = vmatpush1.msra.mxu0 0.0
      %3156 = vmatprep.subr.mxu0 0.0
      %3157 = vmatpush1.msra.mxu0 0.0
      %3158 = vmatprep.subr.mxu0 0.0
      %3159 = vmatpush1.msra.mxu0 0.0
      %3160 = vmatprep.subr.mxu0 0.0
      %3161 = vmatpush1.msra.mxu0 0.0
      %3162 = vmatprep.subr.mxu0 0.0
      %3163 = vmatpush1.msra.mxu0 0.0
      %3164 = vmatprep.subr.mxu0 0.0
      %3165 = vmatpush1.msra.mxu0 0.0
      %3166 = vmatprep.subr.mxu0 0.0
      %3167 = vmatpush1.msra.mxu0 0.0
      %3168 = vmatprep.subr.mxu0 0.0
      %3169 = vmatpush1.msra.mxu0 0.0
      %3170 = vmatprep.subr.mxu0 0.0
      %3171 = vmatpush1.msra.mxu0 0.0
      %3172 = vmatprep.subr.mxu0 0.0
      %3173 = vmatpush1.msra.mxu0 0.0
      %3174 = vmatprep.subr.mxu0 0.0
      %3175 = vmatpush1.msra.mxu0 0.0
      %3176 = vmatprep.subr.mxu0 0.0
      %3177 = vmatpush1.msra.mxu0 0.0
      %3178 = vmatprep.subr.mxu0 0.0
      %3179 = vmatpush1.msra.mxu0 0.0
      %3180 = vmatprep.subr.mxu0 0.0
      %3181 = vmatpush1.msra.mxu0 0.0
      %3182 = vmatprep.subr.mxu0 0.0
      %3183 = vmatpush1.msra.mxu0 0.0
      %3184 = vmatprep.subr.mxu0 0.0
      %3185 = vmatpush1.msra.mxu0 0.0
      %3186 = vmatprep.subr.mxu0 0.0
      %3187 = vmatpush1.msra.mxu0 0.0
      %3188 = vmatprep.subr.mxu0 0.0
      %3189 = vmatpush1.msra.mxu0 0.0
      %3190 = vmatprep.subr.mxu0 0.0
      %3191 = vmatpush1.msra.mxu0 0.0
      %3192 = vmatprep.subr.mxu0 0.0
      %3193 = vmatpush1.msra.mxu0 0.0
      %3194 = vmatprep.subr.mxu0 0.0
      %3195 = vmatpush1.msra.mxu0 0.0
      %3196 = vmatprep.subr.mxu0 0.0
      %3197 = vmatpush1.msra.mxu0 0.0
      %3198 = vmatprep.subr.mxu0 0.0
      %3199 = vmatpush1.msra.mxu0 0.0
      %3200 = vmatprep.subr.mxu0 0.0
      %3201 = vmatpush1.msra.mxu0 0.0
      %3202 = vmatprep.subr.mxu0 0.0
      %3203 = vmatpush1.msra.mxu0 0.0
      %3204 = vmatprep.subr.mxu0 0.0
      %3205 = vmatpush1.msra.mxu0 0.0
      %3206 = vmatprep.subr.mxu0 0.0
      %3207 = vmatpush1.msra.mxu0 0.0
      %3208 = vmatprep.subr.mxu0 0.0
      %3209 = vmatpush1.msra.mxu0 0.0
      %3210 = vmatprep.subr.mxu0 0.0
      %3211 = vmatpush1.msra.mxu0 0.0
      %3212 = vmatprep.subr.mxu0 0.0
      %3213 = vmatpush1.msra.mxu0 0.0
      %3214 = vmatprep.mubr.f32.mxu0 0.0
      %v3215 = vand.u32 %v3048, 4294901760
      %3216 = vmatmul.mubr.f32.gmra.mrb[0].mxu0 %v3215
      %v3217 = vpop.f32.mrb[0].mxu0
      %v3218 = vadd.f32 %v3126, %v3217
      %v3219 = vpop.f32.mrb[0].mxu0
      %v3220 = vadd.f32 %v3128, %v3219
      %3221 = vdwg.mxu0
      %v3222 = vand.u32 %v3040, 4294901760
      %v3223 = vsub.f32 %v3040, %v3222
      %3224 = vmatprep.subr.mxu0 %v3223
      %v3225 = vand.u32 %v3039, 4294901760
      %v3226 = vsub.f32 %v3039, %v3225
      %3227 = vmatpush1.msra.mxu0 %v3226
      %v3228 = vand.u32 %v3042, 4294901760
      %v3229 = vsub.f32 %v3042, %v3228
      %3230 = vmatprep.subr.mxu0 %v3229
      %v3231 = vand.u32 %v3041, 4294901760
      %v3232 = vsub.f32 %v3041, %v3231
      %3233 = vmatpush1.msra.mxu0 %v3232
      %3234 = vmatprep.subr.mxu0 0.0
      %3235 = vmatpush1.msra.mxu0 0.0
      %3236 = vmatprep.subr.mxu0 0.0
      %3237 = vmatpush1.msra.mxu0 0.0
      %3238 = vmatprep.subr.mxu0 0.0
      %3239 = vmatpush1.msra.mxu0 0.0
      %3240 = vmatprep.subr.mxu0 0.0
      %3241 = vmatpush1.msra.mxu0 0.0
      %3242 = vmatprep.subr.mxu0 0.0
      %3243 = vmatpush1.msra.mxu0 0.0
      %3244 = vmatprep.subr.mxu0 0.0
      %3245 = vmatpush1.msra.mxu0 0.0
      %3246 = vmatprep.subr.mxu0 0.0
      %3247 = vmatpush1.msra.mxu0 0.0
      %3248 = vmatprep.subr.mxu0 0.0
      %3249 = vmatpush1.msra.mxu0 0.0
      %3250 = vmatprep.subr.mxu0 0.0
      %3251 = vmatpush1.msra.mxu0 0.0
      %3252 = vmatprep.subr.mxu0 0.0
      %3253 = vmatpush1.msra.mxu0 0.0
      %3254 = vmatprep.subr.mxu0 0.0
      %3255 = vmatpush1.msra.mxu0 0.0
      %3256 = vmatprep.subr.mxu0 0.0
      %3257 = vmatpush1.msra.mxu0 0.0
      %3258 = vmatprep.subr.mxu0 0.0
      %3259 = vmatpush1.msra.mxu0 0.0
      %3260 = vmatprep.subr.mxu0 0.0
      %3261 = vmatpush1.msra.mxu0 0.0
      %3262 = vmatprep.subr.mxu0 0.0
      %3263 = vmatpush1.msra.mxu0 0.0
      %3264 = vmatprep.subr.mxu0 0.0
      %3265 = vmatpush1.msra.mxu0 0.0
      %3266 = vmatprep.subr.mxu0 0.0
      %3267 = vmatpush1.msra.mxu0 0.0
      %3268 = vmatprep.subr.mxu0 0.0
      %3269 = vmatpush1.msra.mxu0 0.0
      %3270 = vmatprep.subr.mxu0 0.0
      %3271 = vmatpush1.msra.mxu0 0.0
      %3272 = vmatprep.subr.mxu0 0.0
      %3273 = vmatpush1.msra.mxu0 0.0
      %3274 = vmatprep.subr.mxu0 0.0
      %3275 = vmatpush1.msra.mxu0 0.0
      %3276 = vmatprep.subr.mxu0 0.0
      %3277 = vmatpush1.msra.mxu0 0.0
      %3278 = vmatprep.subr.mxu0 0.0
      %3279 = vmatpush1.msra.mxu0 0.0
      %3280 = vmatprep.subr.mxu0 0.0
      %3281 = vmatpush1.msra.mxu0 0.0
      %3282 = vmatprep.subr.mxu0 0.0
      %3283 = vmatpush1.msra.mxu0 0.0
      %3284 = vmatprep.subr.mxu0 0.0
      %3285 = vmatpush1.msra.mxu0 0.0
      %3286 = vmatprep.subr.mxu0 0.0
      %3287 = vmatpush1.msra.mxu0 0.0
      %3288 = vmatprep.subr.mxu0 0.0
      %3289 = vmatpush1.msra.mxu0 0.0
      %3290 = vmatprep.subr.mxu0 0.0
      %3291 = vmatpush1.msra.mxu0 0.0
      %3292 = vmatprep.subr.mxu0 0.0
      %3293 = vmatpush1.msra.mxu0 0.0
      %3294 = vmatprep.mubr.f32.mxu0 0.0
      %v3295 = vand.u32 %v3048, 4294901760
      %v3296 = vsub.f32 %v3048, %v3295
      %3297 = vmatmul.mubr.f32.gmra.mrb[0].mxu0 %v3296
      %v3298 = vpop.f32.mrb[0].mxu0
      %v3299 = vadd.f32 %v3218, %v3298
      %v3300 = vpop.f32.mrb[0].mxu0
      %v3301 = vadd.f32 %v3220, %v3300
      %3302 = vdwg.mxu0
      %v3303 = vand.u32 %v3040, 4294901760
      %3304 = vmatprep.subr.mxu0 %v3303
      %v3305 = vand.u32 %v3039, 4294901760
      %3306 = vmatpush1.msra.mxu0 %v3305
      %v3307 = vand.u32 %v3042, 4294901760
      %3308 = vmatprep.subr.mxu0 %v3307
      %v3309 = vand.u32 %v3041, 4294901760
      %3310 = vmatpush1.msra.mxu0 %v3309
      %3311 = vmatprep.subr.mxu0 0.0
      %3312 = vmatpush1.msra.mxu0 0.0
      %3313 = vmatprep.subr.mxu0 0.0
      %3314 = vmatpush1.msra.mxu0 0.0
      %3315 = vmatprep.subr.mxu0 0.0
      %3316 = vmatpush1.msra.mxu0 0.0
      %3317 = vmatprep.subr.mxu0 0.0
      %3318 = vmatpush1.msra.mxu0 0.0
      %3319 = vmatprep.subr.mxu0 0.0
      %3320 = vmatpush1.msra.mxu0 0.0
      %3321 = vmatprep.subr.mxu0 0.0
      %3322 = vmatpush1.msra.mxu0 0.0
      %3323 = vmatprep.subr.mxu0 0.0
      %3324 = vmatpush1.msra.mxu0 0.0
      %3325 = vmatprep.subr.mxu0 0.0
      %3326 = vmatpush1.msra.mxu0 0.0
      %3327 = vmatprep.subr.mxu0 0.0
      %3328 = vmatpush1.msra.mxu0 0.0
      %3329 = vmatprep.subr.mxu0 0.0
      %3330 = vmatpush1.msra.mxu0 0.0
      %3331 = vmatprep.subr.mxu0 0.0
      %3332 = vmatpush1.msra.mxu0 0.0
      %3333 = vmatprep.subr.mxu0 0.0
      %3334 = vmatpush1.msra.mxu0 0.0
      %3335 = vmatprep.subr.mxu0 0.0
      %3336 = vmatpush1.msra.mxu0 0.0
      %3337 = vmatprep.subr.mxu0 0.0
      %3338 = vmatpush1.msra.mxu0 0.0
      %3339 = vmatprep.subr.mxu0 0.0
      %3340 = vmatpush1.msra.mxu0 0.0
      %3341 = vmatprep.subr.mxu0 0.0
      %3342 = vmatpush1.msra.mxu0 0.0
      %3343 = vmatprep.subr.mxu0 0.0
      %3344 = vmatpush1.msra.mxu0 0.0
      %3345 = vmatprep.subr.mxu0 0.0
      %3346 = vmatpush1.msra.mxu0 0.0
      %3347 = vmatprep.subr.mxu0 0.0
      %3348 = vmatpush1.msra.mxu0 0.0
      %3349 = vmatprep.subr.mxu0 0.0
      %3350 = vmatpush1.msra.mxu0 0.0
      %3351 = vmatprep.subr.mxu0 0.0
      %3352 = vmatpush1.msra.mxu0 0.0
      %3353 = vmatprep.subr.mxu0 0.0
      %3354 = vmatpush1.msra.mxu0 0.0
      %3355 = vmatprep.subr.mxu0 0.0
      %3356 = vmatpush1.msra.mxu0 0.0
      %3357 = vmatprep.subr.mxu0 0.0
      %3358 = vmatpush1.msra.mxu0 0.0
      %3359 = vmatprep.subr.mxu0 0.0
      %3360 = vmatpush1.msra.mxu0 0.0
      %3361 = vmatprep.subr.mxu0 0.0
      %3362 = vmatpush1.msra.mxu0 0.0
      %3363 = vmatprep.subr.mxu0 0.0
      %3364 = vmatpush1.msra.mxu0 0.0
      %3365 = vmatprep.subr.mxu0 0.0
      %3366 = vmatpush1.msra.mxu0 0.0
      %3367 = vmatprep.subr.mxu0 0.0
      %3368 = vmatpush1.msra.mxu0 0.0
      %3369 = vmatprep.subr.mxu0 0.0
      %3370 = vmatpush1.msra.mxu0 0.0
      %3371 = vmatprep.mubr.f32.mxu0 0.0
      %v3372 = vand.u32 %v3048, 4294901760
      %v3373 = vsub.f32 %v3048, %v3372
      %v3374 = vand.u32 %v3373, 4294901760
      %3375 = vmatmul.mubr.f32.gmra.mrb[0].mxu0 %v3374
      %v3376 = vpop.f32.mrb[0].mxu0
      %v3377 = vadd.f32 %v3299, %v3376
      %v3378 = vpop.f32.mrb[0].mxu0
      %v3379 = vadd.f32 %v3301, %v3378
      %3380 = vdwg.mxu0
      %v3381 = vand.u32 %v3040, 4294901760
      %v3382 = vsub.f32 %v3040, %v3381
      %v3383 = vand.u32 %v3382, 4294901760
      %3384 = vmatprep.subr.mxu0 %v3383
      %v3385 = vand.u32 %v3039, 4294901760
      %v3386 = vsub.f32 %v3039, %v3385
      %v3387 = vand.u32 %v3386, 4294901760
      %3388 = vmatpush1.msra.mxu0 %v3387
      %v3389 = vand.u32 %v3042, 4294901760
      %v3390 = vsub.f32 %v3042, %v3389
      %v3391 = vand.u32 %v3390, 4294901760
      %3392 = vmatprep.subr.mxu0 %v3391
      %v3393 = vand.u32 %v3041, 4294901760
      %v3394 = vsub.f32 %v3041, %v3393
      %v3395 = vand.u32 %v3394, 4294901760
      %3396 = vmatpush1.msra.mxu0 %v3395
      %3397 = vmatprep.subr.mxu0 0.0
      %3398 = vmatpush1.msra.mxu0 0.0
      %3399 = vmatprep.subr.mxu0 0.0
      %3400 = vmatpush1.msra.mxu0 0.0
      %3401 = vmatprep.subr.mxu0 0.0
      %3402 = vmatpush1.msra.mxu0 0.0
      %3403 = vmatprep.subr.mxu0 0.0
      %3404 = vmatpush1.msra.mxu0 0.0
      %3405 = vmatprep.subr.mxu0 0.0
      %3406 = vmatpush1.msra.mxu0 0.0
      %3407 = vmatprep.subr.mxu0 0.0
      %3408 = vmatpush1.msra.mxu0 0.0
      %3409 = vmatprep.subr.mxu0 0.0
      %3410 = vmatpush1.msra.mxu0 0.0
      %3411 = vmatprep.subr.mxu0 0.0
      %3412 = vmatpush1.msra.mxu0 0.0
      %3413 = vmatprep.subr.mxu0 0.0
      %3414 = vmatpush1.msra.mxu0 0.0
      %3415 = vmatprep.subr.mxu0 0.0
      %3416 = vmatpush1.msra.mxu0 0.0
      %3417 = vmatprep.subr.mxu0 0.0
      %3418 = vmatpush1.msra.mxu0 0.0
      %3419 = vmatprep.subr.mxu0 0.0
      %3420 = vmatpush1.msra.mxu0 0.0
      %3421 = vmatprep.subr.mxu0 0.0
      %3422 = vmatpush1.msra.mxu0 0.0
      %3423 = vmatprep.subr.mxu0 0.0
      %3424 = vmatpush1.msra.mxu0 0.0
      %3425 = vmatprep.subr.mxu0 0.0
      %3426 = vmatpush1.msra.mxu0 0.0
      %3427 = vmatprep.subr.mxu0 0.0
      %3428 = vmatpush1.msra.mxu0 0.0
      %3429 = vmatprep.subr.mxu0 0.0
      %3430 = vmatpush1.msra.mxu0 0.0
      %3431 = vmatprep.subr.mxu0 0.0
      %3432 = vmatpush1.msra.mxu0 0.0
      %3433 = vmatprep.subr.mxu0 0.0
      %3434 = vmatpush1.msra.mxu0 0.0
      %3435 = vmatprep.subr.mxu0 0.0
      %3436 = vmatpush1.msra.mxu0 0.0
      %3437 = vmatprep.subr.mxu0 0.0
      %3438 = vmatpush1.msra.mxu0 0.0
      %3439 = vmatprep.subr.mxu0 0.0
      %3440 = vmatpush1.msra.mxu0 0.0
      %3441 = vmatprep.subr.mxu0 0.0
      %3442 = vmatpush1.msra.mxu0 0.0
      %3443 = vmatprep.subr.mxu0 0.0
      %3444 = vmatpush1.msra.mxu0 0.0
      %3445 = vmatprep.subr.mxu0 0.0
      %3446 = vmatpush1.msra.mxu0 0.0
      %3447 = vmatprep.subr.mxu0 0.0
      %3448 = vmatpush1.msra.mxu0 0.0
      %3449 = vmatprep.subr.mxu0 0.0
      %3450 = vmatpush1.msra.mxu0 0.0
      %3451 = vmatprep.subr.mxu0 0.0
      %3452 = vmatpush1.msra.mxu0 0.0
      %3453 = vmatprep.subr.mxu0 0.0
      %3454 = vmatpush1.msra.mxu0 0.0
      %3455 = vmatprep.subr.mxu0 0.0
      %3456 = vmatpush1.msra.mxu0 0.0
      %3457 = vmatprep.mubr.f32.mxu0 0.0
      %v3458 = vand.u32 %v3048, 4294901760
      %3459 = vmatmul.mubr.f32.gmra.mrb[0].mxu0 %v3458
      %v3460 = vpop.f32.mrb[0].mxu0
      %v3461 = vadd.f32 %v3377, %v3460
      %v3462 = vpop.f32.mrb[0].mxu0
      %v3463 = vadd.f32 %v3379, %v3462
      %3464 = vdwg.mxu0
      %v3465 = vand.u32 %v3040, 4294901760
      %3466 = vmatprep.subr.mxu0 %v3465
      %v3467 = vand.u32 %v3039, 4294901760
      %3468 = vmatpush1.msra.mxu0 %v3467
      %v3469 = vand.u32 %v3042, 4294901760
      %3470 = vmatprep.subr.mxu0 %v3469
      %v3471 = vand.u32 %v3041, 4294901760
      %3472 = vmatpush1.msra.mxu0 %v3471
      %3473 = vmatprep.subr.mxu0 0.0
      %3474 = vmatpush1.msra.mxu0 0.0
      %3475 = vmatprep.subr.mxu0 0.0
      %3476 = vmatpush1.msra.mxu0 0.0
      %3477 = vmatprep.subr.mxu0 0.0
      %3478 = vmatpush1.msra.mxu0 0.0
      %3479 = vmatprep.subr.mxu0 0.0
      %3480 = vmatpush1.msra.mxu0 0.0
      %3481 = vmatprep.subr.mxu0 0.0
      %3482 = vmatpush1.msra.mxu0 0.0
      %3483 = vmatprep.subr.mxu0 0.0
      %3484 = vmatpush1.msra.mxu0 0.0
      %3485 = vmatprep.subr.mxu0 0.0
      %3486 = vmatpush1.msra.mxu0 0.0
      %3487 = vmatprep.subr.mxu0 0.0
      %3488 = vmatpush1.msra.mxu0 0.0
      %3489 = vmatprep.subr.mxu0 0.0
      %3490 = vmatpush1.msra.mxu0 0.0
      %3491 = vmatprep.subr.mxu0 0.0
      %3492 = vmatpush1.msra.mxu0 0.0
      %3493 = vmatprep.subr.mxu0 0.0
      %3494 = vmatpush1.msra.mxu0 0.0
      %3495 = vmatprep.subr.mxu0 0.0
      %3496 = vmatpush1.msra.mxu0 0.0
      %3497 = vmatprep.subr.mxu0 0.0
      %3498 = vmatpush1.msra.mxu0 0.0
      %3499 = vmatprep.subr.mxu0 0.0
      %3500 = vmatpush1.msra.mxu0 0.0
      %3501 = vmatprep.subr.mxu0 0.0
      %3502 = vmatpush1.msra.mxu0 0.0
      %3503 = vmatprep.subr.mxu0 0.0
      %3504 = vmatpush1.msra.mxu0 0.0
      %3505 = vmatprep.subr.mxu0 0.0
      %3506 = vmatpush1.msra.mxu0 0.0
      %3507 = vmatprep.subr.mxu0 0.0
      %3508 = vmatpush1.msra.mxu0 0.0
      %3509 = vmatprep.subr.mxu0 0.0
      %3510 = vmatpush1.msra.mxu0 0.0
      %3511 = vmatprep.subr.mxu0 0.0
      %3512 = vmatpush1.msra.mxu0 0.0
      %3513 = vmatprep.subr.mxu0 0.0
      %3514 = vmatpush1.msra.mxu0 0.0
      %3515 = vmatprep.subr.mxu0 0.0
      %3516 = vmatpush1.msra.mxu0 0.0
      %3517 = vmatprep.subr.mxu0 0.0
      %3518 = vmatpush1.msra.mxu0 0.0
      %3519 = vmatprep.subr.mxu0 0.0
      %3520 = vmatpush1.msra.mxu0 0.0
      %3521 = vmatprep.subr.mxu0 0.0
      %3522 = vmatpush1.msra.mxu0 0.0
      %3523 = vmatprep.subr.mxu0 0.0
      %3524 = vmatpush1.msra.mxu0 0.0
      %3525 = vmatprep.subr.mxu0 0.0
      %3526 = vmatpush1.msra.mxu0 0.0
      %3527 = vmatprep.subr.mxu0 0.0
      %3528 = vmatpush1.msra.mxu0 0.0
      %3529 = vmatprep.subr.mxu0 0.0
      %3530 = vmatpush1.msra.mxu0 0.0
      %3531 = vmatprep.subr.mxu0 0.0
      %3532 = vmatpush1.msra.mxu0 0.0
      %3533 = vmatprep.mubr.f32.mxu0 0.0
      %v3534 = vand.u32 %v3048, 4294901760
      %3535 = vmatmul.mubr.f32.gmra.mrb[0].mxu0 %v3534
      %v3536 = vpop.f32.mrb[0].mxu0
      %v3537 = vadd.f32 %v3461, %v3536
      %v3538 = vpop.f32.mrb[0].mxu0
      %v3539 = vadd.f32 %v3463, %v3538
      %3540 = vdwg.mxu0
      %v3541 = vld [vmem:[#allocation2 + $0x8] sm:$0xff]
      %v3542 = vld [vmem:[#allocation2 + $0x10] sm:$0xff]
      %v3543 = vld [vmem:[#allocation2 + $0x18] sm:$0xff]
      %v3544 = vld [vmem:[#allocation2 + $0x28] sm:$0xff]
      %v3545 = vld [vmem:[#allocation2 + $0x30] sm:$0xff]
      %v3546 = vld [vmem:[#allocation2 + $0x38] sm:$0xff]
      %s3547 = scalar_lea.vmem %s6, 24
      %v3548 = vld [vmem:[%s3547] sm:$0xf]
      %3555 = vrot.lane.b32.xlu0 %v3541, 113
      %v3556 = vpop.permute.xlu0 %3555
      %3557 = vrot.lane.b32.xlu0 %v3542, 113
      %v3558 = vpop.permute.xlu0 %3557
      %3559 = vrot.lane.b32.xlu0 %v3543, 113
      %v3560 = vpop.permute.xlu0 %3559
      %3561 = vrot.lane.b32.xlu0 %v3544, 113
      %v3562 = vpop.permute.xlu0 %3561
      %3563 = vrot.lane.b32.xlu0 %v3545, 113
      %v3564 = vpop.permute.xlu0 %3563
      %3565 = vrot.lane.b32.xlu0 %v3546, 113
      %v3566 = vpop.permute.xlu0 %3565
      %vm3567 = vcmask 924672
      %v3568 = vsel %vm3567, %v3556, %v3558
      %v3569 = vsel %vm3567, %v3558, %v3560
      %v3570 = vsel %vm3567, %v3562, %v3564
      %v3571 = vsel %vm3567, %v3564, %v3566
      %v3577 = vsel %vm944, %v3548, 0
      %v3579 = vand.u32 %v3569, 4294901760
      %3580 = vmatprep.subr.mxu0 %v3579
      %v3581 = vand.u32 %v3568, 4294901760
      %3582 = vmatpush1.msra.mxu0 %v3581
      %v3583 = vand.u32 %v3571, 4294901760
      %3584 = vmatprep.subr.mxu0 %v3583
      %v3585 = vand.u32 %v3570, 4294901760
      %3586 = vmatpush1.msra.mxu0 %v3585
      %3587 = vmatprep.subr.mxu0 0.0
      %3588 = vmatpush1.msra.mxu0 0.0
      %3589 = vmatprep.subr.mxu0 0.0
      %3590 = vmatpush1.msra.mxu0 0.0
      %3591 = vmatprep.subr.mxu0 0.0
      %3592 = vmatpush1.msra.mxu0 0.0
      %3593 = vmatprep.subr.mxu0 0.0
      %3594 = vmatpush1.msra.mxu0 0.0
      %3595 = vmatprep.subr.mxu0 0.0
      %3596 = vmatpush1.msra.mxu0 0.0
      %3597 = vmatprep.subr.mxu0 0.0
      %3598 = vmatpush1.msra.mxu0 0.0
      %3599 = vmatprep.subr.mxu0 0.0
      %3600 = vmatpush1.msra.mxu0 0.0
      %3601 = vmatprep.subr.mxu0 0.0
      %3602 = vmatpush1.msra.mxu0 0.0
      %3603 = vmatprep.subr.mxu0 0.0
      %3604 = vmatpush1.msra.mxu0 0.0
      %3605 = vmatprep.subr.mxu0 0.0
      %3606 = vmatpush1.msra.mxu0 0.0
      %3607 = vmatprep.subr.mxu0 0.0
      %3608 = vmatpush1.msra.mxu0 0.0
      %3609 = vmatprep.subr.mxu0 0.0
      %3610 = vmatpush1.msra.mxu0 0.0
      %3611 = vmatprep.subr.mxu0 0.0
      %3612 = vmatpush1.msra.mxu0 0.0
      %3613 = vmatprep.subr.mxu0 0.0
      %3614 = vmatpush1.msra.mxu0 0.0
      %3615 = vmatprep.subr.mxu0 0.0
      %3616 = vmatpush1.msra.mxu0 0.0
      %3617 = vmatprep.subr.mxu0 0.0
      %3618 = vmatpush1.msra.mxu0 0.0
      %3619 = vmatprep.subr.mxu0 0.0
      %3620 = vmatpush1.msra.mxu0 0.0
      %3621 = vmatprep.subr.mxu0 0.0
      %3622 = vmatpush1.msra.mxu0 0.0
      %3623 = vmatprep.subr.mxu0 0.0
      %3624 = vmatpush1.msra.mxu0 0.0
      %3625 = vmatprep.subr.mxu0 0.0
      %3626 = vmatpush1.msra.mxu0 0.0
      %3627 = vmatprep.subr.mxu0 0.0
      %3628 = vmatpush1.msra.mxu0 0.0
      %3629 = vmatprep.subr.mxu0 0.0
      %3630 = vmatpush1.msra.mxu0 0.0
      %3631 = vmatprep.subr.mxu0 0.0
      %3632 = vmatpush1.msra.mxu0 0.0
      %3633 = vmatprep.subr.mxu0 0.0
      %3634 = vmatpush1.msra.mxu0 0.0
      %3635 = vmatprep.subr.mxu0 0.0
      %3636 = vmatpush1.msra.mxu0 0.0
      %3637 = vmatprep.subr.mxu0 0.0
      %3638 = vmatpush1.msra.mxu0 0.0
      %3639 = vmatprep.subr.mxu0 0.0
      %3640 = vmatpush1.msra.mxu0 0.0
      %3641 = vmatprep.subr.mxu0 0.0
      %3642 = vmatpush1.msra.mxu0 0.0
      %3643 = vmatprep.subr.mxu0 0.0
      %3644 = vmatpush1.msra.mxu0 0.0
      %3645 = vmatprep.subr.mxu0 0.0
      %3646 = vmatpush1.msra.mxu0 0.0
      %3647 = vmatprep.mubr.f32.mxu0 0.0
      %v3648 = vand.u32 %v3577, 4294901760
      %v3649 = vsub.f32 %v3577, %v3648
      %v3650 = vand.u32 %v3649, 4294901760
      %v3651 = vsub.f32 %v3649, %v3650
      %v3652 = vand.u32 %v3651, 4294901760
      %3653 = vmatmul.mubr.f32.gmra.mrb[0].mxu0 %v3652
      %v3654 = vpop.f32.mrb[0].mxu0
      %v3655 = vadd.f32 0.0, %v3654
      %v3656 = vpop.f32.mrb[0].mxu0
      %v3657 = vadd.f32 0.0, %v3656
      %3658 = vdwg.mxu0
      %v3659 = vand.u32 %v3569, 4294901760
      %v3660 = vsub.f32 %v3569, %v3659
      %v3661 = vand.u32 %v3660, 4294901760
      %v3662 = vsub.f32 %v3660, %v3661
      %v3663 = vand.u32 %v3662, 4294901760
      %3664 = vmatprep.subr.mxu0 %v3663
      %v3665 = vand.u32 %v3568, 4294901760
      %v3666 = vsub.f32 %v3568, %v3665
      %v3667 = vand.u32 %v3666, 4294901760
      %v3668 = vsub.f32 %v3666, %v3667
      %v3669 = vand.u32 %v3668, 4294901760
      %3670 = vmatpush1.msra.mxu0 %v3669
      %v3671 = vand.u32 %v3571, 4294901760
      %v3672 = vsub.f32 %v3571, %v3671
      %v3673 = vand.u32 %v3672, 4294901760
      %v3674 = vsub.f32 %v3672, %v3673
      %v3675 = vand.u32 %v3674, 4294901760
      %3676 = vmatprep.subr.mxu0 %v3675
      %v3677 = vand.u32 %v3570, 4294901760
      %v3678 = vsub.f32 %v3570, %v3677
      %v3679 = vand.u32 %v3678, 4294901760
      %v3680 = vsub.f32 %v3678, %v3679
      %v3681 = vand.u32 %v3680, 4294901760
      %3682 = vmatpush1.msra.mxu0 %v3681
      %3683 = vmatprep.subr.mxu0 0.0
      %3684 = vmatpush1.msra.mxu0 0.0
      %3685 = vmatprep.subr.mxu0 0.0
      %3686 = vmatpush1.msra.mxu0 0.0
      %3687 = vmatprep.subr.mxu0 0.0
      %3688 = vmatpush1.msra.mxu0 0.0
      %3689 = vmatprep.subr.mxu0 0.0
      %3690 = vmatpush1.msra.mxu0 0.0
      %3691 = vmatprep.subr.mxu0 0.0
      %3692 = vmatpush1.msra.mxu0 0.0
      %3693 = vmatprep.subr.mxu0 0.0
      %3694 = vmatpush1.msra.mxu0 0.0
      %3695 = vmatprep.subr.mxu0 0.0
      %3696 = vmatpush1.msra.mxu0 0.0
      %3697 = vmatprep.subr.mxu0 0.0
      %3698 = vmatpush1.msra.mxu0 0.0
      %3699 = vmatprep.subr.mxu0 0.0
      %3700 = vmatpush1.msra.mxu0 0.0
      %3701 = vmatprep.subr.mxu0 0.0
      %3702 = vmatpush1.msra.mxu0 0.0
      %3703 = vmatprep.subr.mxu0 0.0
      %3704 = vmatpush1.msra.mxu0 0.0
      %3705 = vmatprep.subr.mxu0 0.0
      %3706 = vmatpush1.msra.mxu0 0.0
      %3707 = vmatprep.subr.mxu0 0.0
      %3708 = vmatpush1.msra.mxu0 0.0
      %3709 = vmatprep.subr.mxu0 0.0
      %3710 = vmatpush1.msra.mxu0 0.0
      %3711 = vmatprep.subr.mxu0 0.0
      %3712 = vmatpush1.msra.mxu0 0.0
      %3713 = vmatprep.subr.mxu0 0.0
      %3714 = vmatpush1.msra.mxu0 0.0
      %3715 = vmatprep.subr.mxu0 0.0
      %3716 = vmatpush1.msra.mxu0 0.0
      %3717 = vmatprep.subr.mxu0 0.0
      %3718 = vmatpush1.msra.mxu0 0.0
      %3719 = vmatprep.subr.mxu0 0.0
      %3720 = vmatpush1.msra.mxu0 0.0
      %3721 = vmatprep.subr.mxu0 0.0
      %3722 = vmatpush1.msra.mxu0 0.0
      %3723 = vmatprep.subr.mxu0 0.0
      %3724 = vmatpush1.msra.mxu0 0.0
      %3725 = vmatprep.subr.mxu0 0.0
      %3726 = vmatpush1.msra.mxu0 0.0
      %3727 = vmatprep.subr.mxu0 0.0
      %3728 = vmatpush1.msra.mxu0 0.0
      %3729 = vmatprep.subr.mxu0 0.0
      %3730 = vmatpush1.msra.mxu0 0.0
      %3731 = vmatprep.subr.mxu0 0.0
      %3732 = vmatpush1.msra.mxu0 0.0
      %3733 = vmatprep.subr.mxu0 0.0
      %3734 = vmatpush1.msra.mxu0 0.0
      %3735 = vmatprep.subr.mxu0 0.0
      %3736 = vmatpush1.msra.mxu0 0.0
      %3737 = vmatprep.subr.mxu0 0.0
      %3738 = vmatpush1.msra.mxu0 0.0
      %3739 = vmatprep.subr.mxu0 0.0
      %3740 = vmatpush1.msra.mxu0 0.0
      %3741 = vmatprep.subr.mxu0 0.0
      %3742 = vmatpush1.msra.mxu0 0.0
      %3743 = vmatprep.mubr.f32.mxu0 0.0
      %v3744 = vand.u32 %v3577, 4294901760
      %3745 = vmatmul.mubr.f32.gmra.mrb[0].mxu0 %v3744
      %v3746 = vpop.f32.mrb[0].mxu0
      %v3747 = vadd.f32 %v3655, %v3746
      %v3748 = vpop.f32.mrb[0].mxu0
      %v3749 = vadd.f32 %v3657, %v3748
      %3750 = vdwg.mxu0
      %v3751 = vand.u32 %v3569, 4294901760
      %v3752 = vsub.f32 %v3569, %v3751
      %3753 = vmatprep.subr.mxu0 %v3752
      %v3754 = vand.u32 %v3568, 4294901760
      %v3755 = vsub.f32 %v3568, %v3754
      %3756 = vmatpush1.msra.mxu0 %v3755
      %v3757 = vand.u32 %v3571, 4294901760
      %v3758 = vsub.f32 %v3571, %v3757
      %3759 = vmatprep.subr.mxu0 %v3758
      %v3760 = vand.u32 %v3570, 4294901760
      %v3761 = vsub.f32 %v3570, %v3760
      %3762 = vmatpush1.msra.mxu0 %v3761
      %3763 = vmatprep.subr.mxu0 0.0
      %3764 = vmatpush1.msra.mxu0 0.0
      %3765 = vmatprep.subr.mxu0 0.0
      %3766 = vmatpush1.msra.mxu0 0.0
      %3767 = vmatprep.subr.mxu0 0.0
      %3768 = vmatpush1.msra.mxu0 0.0
      %3769 = vmatprep.subr.mxu0 0.0
      %3770 = vmatpush1.msra.mxu0 0.0
      %3771 = vmatprep.subr.mxu0 0.0
      %3772 = vmatpush1.msra.mxu0 0.0
      %3773 = vmatprep.subr.mxu0 0.0
      %3774 = vmatpush1.msra.mxu0 0.0
      %3775 = vmatprep.subr.mxu0 0.0
      %3776 = vmatpush1.msra.mxu0 0.0
      %3777 = vmatprep.subr.mxu0 0.0
      %3778 = vmatpush1.msra.mxu0 0.0
      %3779 = vmatprep.subr.mxu0 0.0
      %3780 = vmatpush1.msra.mxu0 0.0
      %3781 = vmatprep.subr.mxu0 0.0
      %3782 = vmatpush1.msra.mxu0 0.0
      %3783 = vmatprep.subr.mxu0 0.0
      %3784 = vmatpush1.msra.mxu0 0.0
      %3785 = vmatprep.subr.mxu0 0.0
      %3786 = vmatpush1.msra.mxu0 0.0
      %3787 = vmatprep.subr.mxu0 0.0
      %3788 = vmatpush1.msra.mxu0 0.0
      %3789 = vmatprep.subr.mxu0 0.0
      %3790 = vmatpush1.msra.mxu0 0.0
      %3791 = vmatprep.subr.mxu0 0.0
      %3792 = vmatpush1.msra.mxu0 0.0
      %3793 = vmatprep.subr.mxu0 0.0
      %3794 = vmatpush1.msra.mxu0 0.0
      %3795 = vmatprep.subr.mxu0 0.0
      %3796 = vmatpush1.msra.mxu0 0.0
      %3797 = vmatprep.subr.mxu0 0.0
      %3798 = vmatpush1.msra.mxu0 0.0
      %3799 = vmatprep.subr.mxu0 0.0
      %3800 = vmatpush1.msra.mxu0 0.0
      %3801 = vmatprep.subr.mxu0 0.0
      %3802 = vmatpush1.msra.mxu0 0.0
      %3803 = vmatprep.subr.mxu0 0.0
      %3804 = vmatpush1.msra.mxu0 0.0
      %3805 = vmatprep.subr.mxu0 0.0
      %3806 = vmatpush1.msra.mxu0 0.0
      %3807 = vmatprep.subr.mxu0 0.0
      %3808 = vmatpush1.msra.mxu0 0.0
      %3809 = vmatprep.subr.mxu0 0.0
      %3810 = vmatpush1.msra.mxu0 0.0
      %3811 = vmatprep.subr.mxu0 0.0
      %3812 = vmatpush1.msra.mxu0 0.0
      %3813 = vmatprep.subr.mxu0 0.0
      %3814 = vmatpush1.msra.mxu0 0.0
      %3815 = vmatprep.subr.mxu0 0.0
      %3816 = vmatpush1.msra.mxu0 0.0
      %3817 = vmatprep.subr.mxu0 0.0
      %3818 = vmatpush1.msra.mxu0 0.0
      %3819 = vmatprep.subr.mxu0 0.0
      %3820 = vmatpush1.msra.mxu0 0.0
      %3821 = vmatprep.subr.mxu0 0.0
      %3822 = vmatpush1.msra.mxu0 0.0
      %3823 = vmatprep.mubr.f32.mxu0 0.0
      %v3824 = vand.u32 %v3577, 4294901760
      %v3825 = vsub.f32 %v3577, %v3824
      %3826 = vmatmul.mubr.f32.gmra.mrb[0].mxu0 %v3825
      %v3827 = vpop.f32.mrb[0].mxu0
      %v3828 = vadd.f32 %v3747, %v3827
      %v3829 = vpop.f32.mrb[0].mxu0
      %v3830 = vadd.f32 %v3749, %v3829
      %3831 = vdwg.mxu0
      %v3832 = vand.u32 %v3569, 4294901760
      %3833 = vmatprep.subr.mxu0 %v3832
      %v3834 = vand.u32 %v3568, 4294901760
      %3835 = vmatpush1.msra.mxu0 %v3834
      %v3836 = vand.u32 %v3571, 4294901760
      %3837 = vmatprep.subr.mxu0 %v3836
      %v3838 = vand.u32 %v3570, 4294901760
      %3839 = vmatpush1.msra.mxu0 %v3838
      %3840 = vmatprep.subr.mxu0 0.0
      %3841 = vmatpush1.msra.mxu0 0.0
      %3842 = vmatprep.subr.mxu0 0.0
      %3843 = vmatpush1.msra.mxu0 0.0
      %3844 = vmatprep.subr.mxu0 0.0
      %3845 = vmatpush1.msra.mxu0 0.0
      %3846 = vmatprep.subr.mxu0 0.0
      %3847 = vmatpush1.msra.mxu0 0.0
      %3848 = vmatprep.subr.mxu0 0.0
      %3849 = vmatpush1.msra.mxu0 0.0
      %3850 = vmatprep.subr.mxu0 0.0
      %3851 = vmatpush1.msra.mxu0 0.0
      %3852 = vmatprep.subr.mxu0 0.0
      %3853 = vmatpush1.msra.mxu0 0.0
      %3854 = vmatprep.subr.mxu0 0.0
      %3855 = vmatpush1.msra.mxu0 0.0
      %3856 = vmatprep.subr.mxu0 0.0
      %3857 = vmatpush1.msra.mxu0 0.0
      %3858 = vmatprep.subr.mxu0 0.0
      %3859 = vmatpush1.msra.mxu0 0.0
      %3860 = vmatprep.subr.mxu0 0.0
      %3861 = vmatpush1.msra.mxu0 0.0
      %3862 = vmatprep.subr.mxu0 0.0
      %3863 = vmatpush1.msra.mxu0 0.0
      %3864 = vmatprep.subr.mxu0 0.0
      %3865 = vmatpush1.msra.mxu0 0.0
      %3866 = vmatprep.subr.mxu0 0.0
      %3867 = vmatpush1.msra.mxu0 0.0
      %3868 = vmatprep.subr.mxu0 0.0
      %3869 = vmatpush1.msra.mxu0 0.0
      %3870 = vmatprep.subr.mxu0 0.0
      %3871 = vmatpush1.msra.mxu0 0.0
      %3872 = vmatprep.subr.mxu0 0.0
      %3873 = vmatpush1.msra.mxu0 0.0
      %3874 = vmatprep.subr.mxu0 0.0
      %3875 = vmatpush1.msra.mxu0 0.0
      %3876 = vmatprep.subr.mxu0 0.0
      %3877 = vmatpush1.msra.mxu0 0.0
      %3878 = vmatprep.subr.mxu0 0.0
      %3879 = vmatpush1.msra.mxu0 0.0
      %3880 = vmatprep.subr.mxu0 0.0
      %3881 = vmatpush1.msra.mxu0 0.0
      %3882 = vmatprep.subr.mxu0 0.0
      %3883 = vmatpush1.msra.mxu0 0.0
      %3884 = vmatprep.subr.mxu0 0.0
      %3885 = vmatpush1.msra.mxu0 0.0
      %3886 = vmatprep.subr.mxu0 0.0
      %3887 = vmatpush1.msra.mxu0 0.0
      %3888 = vmatprep.subr.mxu0 0.0
      %3889 = vmatpush1.msra.mxu0 0.0
      %3890 = vmatprep.subr.mxu0 0.0
      %3891 = vmatpush1.msra.mxu0 0.0
      %3892 = vmatprep.subr.mxu0 0.0
      %3893 = vmatpush1.msra.mxu0 0.0
      %3894 = vmatprep.subr.mxu0 0.0
      %3895 = vmatpush1.msra.mxu0 0.0
      %3896 = vmatprep.subr.mxu0 0.0
      %3897 = vmatpush1.msra.mxu0 0.0
      %3898 = vmatprep.subr.mxu0 0.0
      %3899 = vmatpush1.msra.mxu0 0.0
      %3900 = vmatprep.mubr.f32.mxu0 0.0
      %v3901 = vand.u32 %v3577, 4294901760
      %v3902 = vsub.f32 %v3577, %v3901
      %v3903 = vand.u32 %v3902, 4294901760
      %3904 = vmatmul.mubr.f32.gmra.mrb[0].mxu0 %v3903
      %v3905 = vpop.f32.mrb[0].mxu0
      %v3906 = vadd.f32 %v3828, %v3905
      %v3907 = vpop.f32.mrb[0].mxu0
      %v3908 = vadd.f32 %v3830, %v3907
      %3909 = vdwg.mxu0
      %v3910 = vand.u32 %v3569, 4294901760
      %v3911 = vsub.f32 %v3569, %v3910
      %v3912 = vand.u32 %v3911, 4294901760
      %3913 = vmatprep.subr.mxu0 %v3912
      %v3914 = vand.u32 %v3568, 4294901760
      %v3915 = vsub.f32 %v3568, %v3914
      %v3916 = vand.u32 %v3915, 4294901760
      %3917 = vmatpush1.msra.mxu0 %v3916
      %v3918 = vand.u32 %v3571, 4294901760
      %v3919 = vsub.f32 %v3571, %v3918
      %v3920 = vand.u32 %v3919, 4294901760
      %3921 = vmatprep.subr.mxu0 %v3920
      %v3922 = vand.u32 %v3570, 4294901760
      %v3923 = vsub.f32 %v3570, %v3922
      %v3924 = vand.u32 %v3923, 4294901760
      %3925 = vmatpush1.msra.mxu0 %v3924
      %3926 = vmatprep.subr.mxu0 0.0
      %3927 = vmatpush1.msra.mxu0 0.0
      %3928 = vmatprep.subr.mxu0 0.0
      %3929 = vmatpush1.msra.mxu0 0.0
      %3930 = vmatprep.subr.mxu0 0.0
      %3931 = vmatpush1.msra.mxu0 0.0
      %3932 = vmatprep.subr.mxu0 0.0
      %3933 = vmatpush1.msra.mxu0 0.0
      %3934 = vmatprep.subr.mxu0 0.0
      %3935 = vmatpush1.msra.mxu0 0.0
      %3936 = vmatprep.subr.mxu0 0.0
      %3937 = vmatpush1.msra.mxu0 0.0
      %3938 = vmatprep.subr.mxu0 0.0
      %3939 = vmatpush1.msra.mxu0 0.0
      %3940 = vmatprep.subr.mxu0 0.0
      %3941 = vmatpush1.msra.mxu0 0.0
      %3942 = vmatprep.subr.mxu0 0.0
      %3943 = vmatpush1.msra.mxu0 0.0
      %3944 = vmatprep.subr.mxu0 0.0
      %3945 = vmatpush1.msra.mxu0 0.0
      %3946 = vmatprep.subr.mxu0 0.0
      %3947 = vmatpush1.msra.mxu0 0.0
      %3948 = vmatprep.subr.mxu0 0.0
      %3949 = vmatpush1.msra.mxu0 0.0
      %3950 = vmatprep.subr.mxu0 0.0
      %3951 = vmatpush1.msra.mxu0 0.0
      %3952 = vmatprep.subr.mxu0 0.0
      %3953 = vmatpush1.msra.mxu0 0.0
      %3954 = vmatprep.subr.mxu0 0.0
      %3955 = vmatpush1.msra.mxu0 0.0
      %3956 = vmatprep.subr.mxu0 0.0
      %3957 = vmatpush1.msra.mxu0 0.0
      %3958 = vmatprep.subr.mxu0 0.0
      %3959 = vmatpush1.msra.mxu0 0.0
      %3960 = vmatprep.subr.mxu0 0.0
      %3961 = vmatpush1.msra.mxu0 0.0
      %3962 = vmatprep.subr.mxu0 0.0
      %3963 = vmatpush1.msra.mxu0 0.0
      %3964 = vmatprep.subr.mxu0 0.0
      %3965 = vmatpush1.msra.mxu0 0.0
      %3966 = vmatprep.subr.mxu0 0.0
      %3967 = vmatpush1.msra.mxu0 0.0
      %3968 = vmatprep.subr.mxu0 0.0
      %3969 = vmatpush1.msra.mxu0 0.0
      %3970 = vmatprep.subr.mxu0 0.0
      %3971 = vmatpush1.msra.mxu0 0.0
      %3972 = vmatprep.subr.mxu0 0.0
      %3973 = vmatpush1.msra.mxu0 0.0
      %3974 = vmatprep.subr.mxu0 0.0
      %3975 = vmatpush1.msra.mxu0 0.0
      %3976 = vmatprep.subr.mxu0 0.0
      %3977 = vmatpush1.msra.mxu0 0.0
      %3978 = vmatprep.subr.mxu0 0.0
      %3979 = vmatpush1.msra.mxu0 0.0
      %3980 = vmatprep.subr.mxu0 0.0
      %3981 = vmatpush1.msra.mxu0 0.0
      %3982 = vmatprep.subr.mxu0 0.0
      %3983 = vmatpush1.msra.mxu0 0.0
      %3984 = vmatprep.subr.mxu0 0.0
      %3985 = vmatpush1.msra.mxu0 0.0
      %3986 = vmatprep.mubr.f32.mxu0 0.0
      %v3987 = vand.u32 %v3577, 4294901760
      %3988 = vmatmul.mubr.f32.gmra.mrb[0].mxu0 %v3987
      %v3989 = vpop.f32.mrb[0].mxu0
      %v3990 = vadd.f32 %v3906, %v3989
      %v3991 = vpop.f32.mrb[0].mxu0
      %v3992 = vadd.f32 %v3908, %v3991
      %3993 = vdwg.mxu0
      %v3994 = vand.u32 %v3569, 4294901760
      %3995 = vmatprep.subr.mxu0 %v3994
      %v3996 = vand.u32 %v3568, 4294901760
      %3997 = vmatpush1.msra.mxu0 %v3996
      %v3998 = vand.u32 %v3571, 4294901760
      %3999 = vmatprep.subr.mxu0 %v3998
      %v4000 = vand.u32 %v3570, 4294901760
      %4001 = vmatpush1.msra.mxu0 %v4000
      %4002 = vmatprep.subr.mxu0 0.0
      %4003 = vmatpush1.msra.mxu0 0.0
      %4004 = vmatprep.subr.mxu0 0.0
      %4005 = vmatpush1.msra.mxu0 0.0
      %4006 = vmatprep.subr.mxu0 0.0
      %4007 = vmatpush1.msra.mxu0 0.0
      %4008 = vmatprep.subr.mxu0 0.0
      %4009 = vmatpush1.msra.mxu0 0.0
      %4010 = vmatprep.subr.mxu0 0.0
      %4011 = vmatpush1.msra.mxu0 0.0
      %4012 = vmatprep.subr.mxu0 0.0
      %4013 = vmatpush1.msra.mxu0 0.0
      %4014 = vmatprep.subr.mxu0 0.0
      %4015 = vmatpush1.msra.mxu0 0.0
      %4016 = vmatprep.subr.mxu0 0.0
      %4017 = vmatpush1.msra.mxu0 0.0
      %4018 = vmatprep.subr.mxu0 0.0
      %4019 = vmatpush1.msra.mxu0 0.0
      %4020 = vmatprep.subr.mxu0 0.0
      %4021 = vmatpush1.msra.mxu0 0.0
      %4022 = vmatprep.subr.mxu0 0.0
      %4023 = vmatpush1.msra.mxu0 0.0
      %4024 = vmatprep.subr.mxu0 0.0
      %4025 = vmatpush1.msra.mxu0 0.0
      %4026 = vmatprep.subr.mxu0 0.0
      %4027 = vmatpush1.msra.mxu0 0.0
      %4028 = vmatprep.subr.mxu0 0.0
      %4029 = vmatpush1.msra.mxu0 0.0
      %4030 = vmatprep.subr.mxu0 0.0
      %4031 = vmatpush1.msra.mxu0 0.0
      %4032 = vmatprep.subr.mxu0 0.0
      %4033 = vmatpush1.msra.mxu0 0.0
      %4034 = vmatprep.subr.mxu0 0.0
      %4035 = vmatpush1.msra.mxu0 0.0
      %4036 = vmatprep.subr.mxu0 0.0
      %4037 = vmatpush1.msra.mxu0 0.0
      %4038 = vmatprep.subr.mxu0 0.0
      %4039 = vmatpush1.msra.mxu0 0.0
      %4040 = vmatprep.subr.mxu0 0.0
      %4041 = vmatpush1.msra.mxu0 0.0
      %4042 = vmatprep.subr.mxu0 0.0
      %4043 = vmatpush1.msra.mxu0 0.0
      %4044 = vmatprep.subr.mxu0 0.0
      %4045 = vmatpush1.msra.mxu0 0.0
      %4046 = vmatprep.subr.mxu0 0.0
      %4047 = vmatpush1.msra.mxu0 0.0
      %4048 = vmatprep.subr.mxu0 0.0
      %4049 = vmatpush1.msra.mxu0 0.0
      %4050 = vmatprep.subr.mxu0 0.0
      %4051 = vmatpush1.msra.mxu0 0.0
      %4052 = vmatprep.subr.mxu0 0.0
      %4053 = vmatpush1.msra.mxu0 0.0
      %4054 = vmatprep.subr.mxu0 0.0
      %4055 = vmatpush1.msra.mxu0 0.0
      %4056 = vmatprep.subr.mxu0 0.0
      %4057 = vmatpush1.msra.mxu0 0.0
      %4058 = vmatprep.subr.mxu0 0.0
      %4059 = vmatpush1.msra.mxu0 0.0
      %4060 = vmatprep.subr.mxu0 0.0
      %4061 = vmatpush1.msra.mxu0 0.0
      %4062 = vmatprep.mubr.f32.mxu0 0.0
      %v4063 = vand.u32 %v3577, 4294901760
      %4064 = vmatmul.mubr.f32.gmra.mrb[0].mxu0 %v4063
      %v4065 = vpop.f32.mrb[0].mxu0
      %v4066 = vadd.f32 %v3990, %v4065
      %v4067 = vpop.f32.mrb[0].mxu0
      %v4068 = vadd.f32 %v3992, %v4067
      %4069 = vdwg.mxu0
      %v4070 = vadd.f32 %v3537, %v4066
      %v4071 = vadd.f32 %v3539, %v4068
      %v4073 = vlaneseq
      %v4074 = vshrl.u32 %v4073, 7
      %v4075 = vsub.s32 0, %v4074
      %v4076 = vrot.slane %v915, %v4075
      %v4077 = vlaneseq
      %v4078 = vshrl.u32 %v4077, 7
      %v4079 = vsub.s32 1, %v4078
      %v4080 = vrot.slane %v915, %v4079
      %v4083 = vmul.f32 %v4070, %v4076
      %v4084 = vmul.f32 %v4071, %v4080
      %v4087 = vcombine.low %v4083, %v4084
      %v4089 = vadd.f32 %v2495, %v4087
      %4090 = vst [vmem:[#allocation3] sm:$0xff] %v4089
      %v4091 = vld [vmem:[#allocation3] sm:$0xff]
      %v4092 = vld [vmem:[#allocation2] sm:$0xff]
      %v4093 = vld [vmem:[#allocation2 + $0x8] sm:$0xff]
      %v4094 = vld [vmem:[#allocation2 + $0x10] sm:$0xff]
      %v4095 = vld [vmem:[#allocation2 + $0x20] sm:$0xff]
      %v4096 = vld [vmem:[#allocation2 + $0x28] sm:$0xff]
      %v4097 = vld [vmem:[#allocation2 + $0x30] sm:$0xff]
      %s4098 = scalar_lea.vmem %s6, 8
      %v4099 = vld [vmem:[%s4098] sm:$0xf]
      %v4100 = vld [vmem:[#allocation2 + $0x8] sm:$0xff]
      %v4101 = vld [vmem:[#allocation2 + $0x10] sm:$0xff]
      %v4102 = vld [vmem:[#allocation2 + $0x18] sm:$0xff]
      %v4103 = vld [vmem:[#allocation2 + $0x28] sm:$0xff]
      %v4104 = vld [vmem:[#allocation2 + $0x30] sm:$0xff]
      %v4105 = vld [vmem:[#allocation2 + $0x38] sm:$0xff]
      %s4106 = scalar_lea.vmem %s6, 20
      %v4107 = vld [vmem:[%s4106] sm:$0xf]
      %4114 = vrot.lane.b32.xlu0 %v4100, 127
      %v4115 = vpop.permute.xlu0 %4114
      %4116 = vrot.lane.b32.xlu0 %v4101, 127
      %v4117 = vpop.permute.xlu0 %4116
      %4118 = vrot.lane.b32.xlu0 %v4102, 127
      %v4119 = vpop.permute.xlu0 %4118
      %4120 = vrot.lane.b32.xlu0 %v4103, 127
      %v4121 = vpop.permute.xlu0 %4120
      %4122 = vrot.lane.b32.xlu0 %v4104, 127
      %v4123 = vpop.permute.xlu0 %4122
      %4124 = vrot.lane.b32.xlu0 %v4105, 127
      %v4125 = vpop.permute.xlu0 %4124
      %vm4126 = vcmask 1039360
      %v4127 = vsel %vm4126, %v4115, %v4117
      %v4128 = vsel %vm4126, %v4117, %v4119
      %v4129 = vsel %vm4126, %v4121, %v4123
      %v4130 = vsel %vm4126, %v4123, %v4125
      %v4136 = vsel %vm944, %v4107, 0
      %v4138 = vand.u32 %v4128, 4294901760
      %4139 = vmatprep.subr.mxu0 %v4138
      %v4140 = vand.u32 %v4127, 4294901760
      %4141 = vmatpush1.msra.mxu0 %v4140
      %v4142 = vand.u32 %v4130, 4294901760
      %4143 = vmatprep.subr.mxu0 %v4142
      %v4144 = vand.u32 %v4129, 4294901760
      %4145 = vmatpush1.msra.mxu0 %v4144
      %4146 = vmatprep.subr.mxu0 0.0
      %4147 = vmatpush1.msra.mxu0 0.0
      %4148 = vmatprep.subr.mxu0 0.0
      %4149 = vmatpush1.msra.mxu0 0.0
      %4150 = vmatprep.subr.mxu0 0.0
      %4151 = vmatpush1.msra.mxu0 0.0
      %4152 = vmatprep.subr.mxu0 0.0
      %4153 = vmatpush1.msra.mxu0 0.0
      %4154 = vmatprep.subr.mxu0 0.0
      %4155 = vmatpush1.msra.mxu0 0.0
      %4156 = vmatprep.subr.mxu0 0.0
      %4157 = vmatpush1.msra.mxu0 0.0
      %4158 = vmatprep.subr.mxu0 0.0
      %4159 = vmatpush1.msra.mxu0 0.0
      %4160 = vmatprep.subr.mxu0 0.0
      %4161 = vmatpush1.msra.mxu0 0.0
      %4162 = vmatprep.subr.mxu0 0.0
      %4163 = vmatpush1.msra.mxu0 0.0
      %4164 = vmatprep.subr.mxu0 0.0
      %4165 = vmatpush1.msra.mxu0 0.0
      %4166 = vmatprep.subr.mxu0 0.0
      %4167 = vmatpush1.msra.mxu0 0.0
      %4168 = vmatprep.subr.mxu0 0.0
      %4169 = vmatpush1.msra.mxu0 0.0
      %4170 = vmatprep.subr.mxu0 0.0
      %4171 = vmatpush1.msra.mxu0 0.0
      %4172 = vmatprep.subr.mxu0 0.0
      %4173 = vmatpush1.msra.mxu0 0.0
      %4174 = vmatprep.subr.mxu0 0.0
      %4175 = vmatpush1.msra.mxu0 0.0
      %4176 = vmatprep.subr.mxu0 0.0
      %4177 = vmatpush1.msra.mxu0 0.0
      %4178 = vmatprep.subr.mxu0 0.0
      %4179 = vmatpush1.msra.mxu0 0.0
      %4180 = vmatprep.subr.mxu0 0.0
      %4181 = vmatpush1.msra.mxu0 0.0
      %4182 = vmatprep.subr.mxu0 0.0
      %4183 = vmatpush1.msra.mxu0 0.0
      %4184 = vmatprep.subr.mxu0 0.0
      %4185 = vmatpush1.msra.mxu0 0.0
      %4186 = vmatprep.subr.mxu0 0.0
      %4187 = vmatpush1.msra.mxu0 0.0
      %4188 = vmatprep.subr.mxu0 0.0
      %4189 = vmatpush1.msra.mxu0 0.0
      %4190 = vmatprep.subr.mxu0 0.0
      %4191 = vmatpush1.msra.mxu0 0.0
      %4192 = vmatprep.subr.mxu0 0.0
      %4193 = vmatpush1.msra.mxu0 0.0
      %4194 = vmatprep.subr.mxu0 0.0
      %4195 = vmatpush1.msra.mxu0 0.0
      %4196 = vmatprep.subr.mxu0 0.0
      %4197 = vmatpush1.msra.mxu0 0.0
      %4198 = vmatprep.subr.mxu0 0.0
      %4199 = vmatpush1.msra.mxu0 0.0
      %4200 = vmatprep.subr.mxu0 0.0
      %4201 = vmatpush1.msra.mxu0 0.0
      %4202 = vmatprep.subr.mxu0 0.0
      %4203 = vmatpush1.msra.mxu0 0.0
      %4204 = vmatprep.subr.mxu0 0.0
      %4205 = vmatpush1.msra.mxu0 0.0
      %4206 = vmatprep.mubr.f32.mxu0 0.0
      %v4207 = vand.u32 %v4136, 4294901760
      %v4208 = vsub.f32 %v4136, %v4207
      %v4209 = vand.u32 %v4208, 4294901760
      %v4210 = vsub.f32 %v4208, %v4209
      %v4211 = vand.u32 %v4210, 4294901760
      %4212 = vmatmul.mubr.f32.gmra.mrb[0].mxu0 %v4211
      %v4213 = vpop.f32.mrb[0].mxu0
      %v4214 = vadd.f32 0.0, %v4213
      %v4215 = vpop.f32.mrb[0].mxu0
      %v4216 = vadd.f32 0.0, %v4215
      %4217 = vdwg.mxu0
      %v4218 = vand.u32 %v4128, 4294901760
      %v4219 = vsub.f32 %v4128, %v4218
      %v4220 = vand.u32 %v4219, 4294901760
      %v4221 = vsub.f32 %v4219, %v4220
      %v4222 = vand.u32 %v4221, 4294901760
      %4223 = vmatprep.subr.mxu0 %v4222
      %v4224 = vand.u32 %v4127, 4294901760
      %v4225 = vsub.f32 %v4127, %v4224
      %v4226 = vand.u32 %v4225, 4294901760
      %v4227 = vsub.f32 %v4225, %v4226
      %v4228 = vand.u32 %v4227, 4294901760
      %4229 = vmatpush1.msra.mxu0 %v4228
      %v4230 = vand.u32 %v4130, 4294901760
      %v4231 = vsub.f32 %v4130, %v4230
      %v4232 = vand.u32 %v4231, 4294901760
      %v4233 = vsub.f32 %v4231, %v4232
      %v4234 = vand.u32 %v4233, 4294901760
      %4235 = vmatprep.subr.mxu0 %v4234
      %v4236 = vand.u32 %v4129, 4294901760
      %v4237 = vsub.f32 %v4129, %v4236
      %v4238 = vand.u32 %v4237, 4294901760
      %v4239 = vsub.f32 %v4237, %v4238
      %v4240 = vand.u32 %v4239, 4294901760
      %4241 = vmatpush1.msra.mxu0 %v4240
      %4242 = vmatprep.subr.mxu0 0.0
      %4243 = vmatpush1.msra.mxu0 0.0
      %4244 = vmatprep.subr.mxu0 0.0
      %4245 = vmatpush1.msra.mxu0 0.0
      %4246 = vmatprep.subr.mxu0 0.0
      %4247 = vmatpush1.msra.mxu0 0.0
      %4248 = vmatprep.subr.mxu0 0.0
      %4249 = vmatpush1.msra.mxu0 0.0
      %4250 = vmatprep.subr.mxu0 0.0
      %4251 = vmatpush1.msra.mxu0 0.0
      %4252 = vmatprep.subr.mxu0 0.0
      %4253 = vmatpush1.msra.mxu0 0.0
      %4254 = vmatprep.subr.mxu0 0.0
      %4255 = vmatpush1.msra.mxu0 0.0
      %4256 = vmatprep.subr.mxu0 0.0
      %4257 = vmatpush1.msra.mxu0 0.0
      %4258 = vmatprep.subr.mxu0 0.0
      %4259 = vmatpush1.msra.mxu0 0.0
      %4260 = vmatprep.subr.mxu0 0.0
      %4261 = vmatpush1.msra.mxu0 0.0
      %4262 = vmatprep.subr.mxu0 0.0
      %4263 = vmatpush1.msra.mxu0 0.0
      %4264 = vmatprep.subr.mxu0 0.0
      %4265 = vmatpush1.msra.mxu0 0.0
      %4266 = vmatprep.subr.mxu0 0.0
      %4267 = vmatpush1.msra.mxu0 0.0
      %4268 = vmatprep.subr.mxu0 0.0
      %4269 = vmatpush1.msra.mxu0 0.0
      %4270 = vmatprep.subr.mxu0 0.0
      %4271 = vmatpush1.msra.mxu0 0.0
      %4272 = vmatprep.subr.mxu0 0.0
      %4273 = vmatpush1.msra.mxu0 0.0
      %4274 = vmatprep.subr.mxu0 0.0
      %4275 = vmatpush1.msra.mxu0 0.0
      %4276 = vmatprep.subr.mxu0 0.0
      %4277 = vmatpush1.msra.mxu0 0.0
      %4278 = vmatprep.subr.mxu0 0.0
      %4279 = vmatpush1.msra.mxu0 0.0
      %4280 = vmatprep.subr.mxu0 0.0
      %4281 = vmatpush1.msra.mxu0 0.0
      %4282 = vmatprep.subr.mxu0 0.0
      %4283 = vmatpush1.msra.mxu0 0.0
      %4284 = vmatprep.subr.mxu0 0.0
      %4285 = vmatpush1.msra.mxu0 0.0
      %4286 = vmatprep.subr.mxu0 0.0
      %4287 = vmatpush1.msra.mxu0 0.0
      %4288 = vmatprep.subr.mxu0 0.0
      %4289 = vmatpush1.msra.mxu0 0.0
      %4290 = vmatprep.subr.mxu0 0.0
      %4291 = vmatpush1.msra.mxu0 0.0
      %4292 = vmatprep.subr.mxu0 0.0
      %4293 = vmatpush1.msra.mxu0 0.0
      %4294 = vmatprep.subr.mxu0 0.0
      %4295 = vmatpush1.msra.mxu0 0.0
      %4296 = vmatprep.subr.mxu0 0.0
      %4297 = vmatpush1.msra.mxu0 0.0
      %4298 = vmatprep.subr.mxu0 0.0
      %4299 = vmatpush1.msra.mxu0 0.0
      %4300 = vmatprep.subr.mxu0 0.0
      %4301 = vmatpush1.msra.mxu0 0.0
      %4302 = vmatprep.mubr.f32.mxu0 0.0
      %v4303 = vand.u32 %v4136, 4294901760
      %4304 = vmatmul.mubr.f32.gmra.mrb[0].mxu0 %v4303
      %v4305 = vpop.f32.mrb[0].mxu0
      %v4306 = vadd.f32 %v4214, %v4305
      %v4307 = vpop.f32.mrb[0].mxu0
      %v4308 = vadd.f32 %v4216, %v4307
      %4309 = vdwg.mxu0
      %v4310 = vand.u32 %v4128, 4294901760
      %v4311 = vsub.f32 %v4128, %v4310
      %4312 = vmatprep.subr.mxu0 %v4311
      %v4313 = vand.u32 %v4127, 4294901760
      %v4314 = vsub.f32 %v4127, %v4313
      %4315 = vmatpush1.msra.mxu0 %v4314
      %v4316 = vand.u32 %v4130, 4294901760
      %v4317 = vsub.f32 %v4130, %v4316
      %4318 = vmatprep.subr.mxu0 %v4317
      %v4319 = vand.u32 %v4129, 4294901760
      %v4320 = vsub.f32 %v4129, %v4319
      %4321 = vmatpush1.msra.mxu0 %v4320
      %4322 = vmatprep.subr.mxu0 0.0
      %4323 = vmatpush1.msra.mxu0 0.0
      %4324 = vmatprep.subr.mxu0 0.0
      %4325 = vmatpush1.msra.mxu0 0.0
      %4326 = vmatprep.subr.mxu0 0.0
      %4327 = vmatpush1.msra.mxu0 0.0
      %4328 = vmatprep.subr.mxu0 0.0
      %4329 = vmatpush1.msra.mxu0 0.0
      %4330 = vmatprep.subr.mxu0 0.0
      %4331 = vmatpush1.msra.mxu0 0.0
      %4332 = vmatprep.subr.mxu0 0.0
      %4333 = vmatpush1.msra.mxu0 0.0
      %4334 = vmatprep.subr.mxu0 0.0
      %4335 = vmatpush1.msra.mxu0 0.0
      %4336 = vmatprep.subr.mxu0 0.0
      %4337 = vmatpush1.msra.mxu0 0.0
      %4338 = vmatprep.subr.mxu0 0.0
      %4339 = vmatpush1.msra.mxu0 0.0
      %4340 = vmatprep.subr.mxu0 0.0
      %4341 = vmatpush1.msra.mxu0 0.0
      %4342 = vmatprep.subr.mxu0 0.0
      %4343 = vmatpush1.msra.mxu0 0.0
      %4344 = vmatprep.subr.mxu0 0.0
      %4345 = vmatpush1.msra.mxu0 0.0
      %4346 = vmatprep.subr.mxu0 0.0
      %4347 = vmatpush1.msra.mxu0 0.0
      %4348 = vmatprep.subr.mxu0 0.0
      %4349 = vmatpush1.msra.mxu0 0.0
      %4350 = vmatprep.subr.mxu0 0.0
      %4351 = vmatpush1.msra.mxu0 0.0
      %4352 = vmatprep.subr.mxu0 0.0
      %4353 = vmatpush1.msra.mxu0 0.0
      %4354 = vmatprep.subr.mxu0 0.0
      %4355 = vmatpush1.msra.mxu0 0.0
      %4356 = vmatprep.subr.mxu0 0.0
      %4357 = vmatpush1.msra.mxu0 0.0
      %4358 = vmatprep.subr.mxu0 0.0
      %4359 = vmatpush1.msra.mxu0 0.0
      %4360 = vmatprep.subr.mxu0 0.0
      %4361 = vmatpush1.msra.mxu0 0.0
      %4362 = vmatprep.subr.mxu0 0.0
      %4363 = vmatpush1.msra.mxu0 0.0
      %4364 = vmatprep.subr.mxu0 0.0
      %4365 = vmatpush1.msra.mxu0 0.0
      %4366 = vmatprep.subr.mxu0 0.0
      %4367 = vmatpush1.msra.mxu0 0.0
      %4368 = vmatprep.subr.mxu0 0.0
      %4369 = vmatpush1.msra.mxu0 0.0
      %4370 = vmatprep.subr.mxu0 0.0
      %4371 = vmatpush1.msra.mxu0 0.0
      %4372 = vmatprep.subr.mxu0 0.0
      %4373 = vmatpush1.msra.mxu0 0.0
      %4374 = vmatprep.subr.mxu0 0.0
      %4375 = vmatpush1.msra.mxu0 0.0
      %4376 = vmatprep.subr.mxu0 0.0
      %4377 = vmatpush1.msra.mxu0 0.0
      %4378 = vmatprep.subr.mxu0 0.0
      %4379 = vmatpush1.msra.mxu0 0.0
      %4380 = vmatprep.subr.mxu0 0.0
      %4381 = vmatpush1.msra.mxu0 0.0
      %4382 = vmatprep.mubr.f32.mxu0 0.0
      %v4383 = vand.u32 %v4136, 4294901760
      %v4384 = vsub.f32 %v4136, %v4383
      %4385 = vmatmul.mubr.f32.gmra.mrb[0].mxu0 %v4384
      %v4386 = vpop.f32.mrb[0].mxu0
      %v4387 = vadd.f32 %v4306, %v4386
      %v4388 = vpop.f32.mrb[0].mxu0
      %v4389 = vadd.f32 %v4308, %v4388
      %4390 = vdwg.mxu0
      %v4391 = vand.u32 %v4128, 4294901760
      %4392 = vmatprep.subr.mxu0 %v4391
      %v4393 = vand.u32 %v4127, 4294901760
      %4394 = vmatpush1.msra.mxu0 %v4393
      %v4395 = vand.u32 %v4130, 4294901760
      %4396 = vmatprep.subr.mxu0 %v4395
      %v4397 = vand.u32 %v4129, 4294901760
      %4398 = vmatpush1.msra.mxu0 %v4397
      %4399 = vmatprep.subr.mxu0 0.0
      %4400 = vmatpush1.msra.mxu0 0.0
      %4401 = vmatprep.subr.mxu0 0.0
      %4402 = vmatpush1.msra.mxu0 0.0
      %4403 = vmatprep.subr.mxu0 0.0
      %4404 = vmatpush1.msra.mxu0 0.0
      %4405 = vmatprep.subr.mxu0 0.0
      %4406 = vmatpush1.msra.mxu0 0.0
      %4407 = vmatprep.subr.mxu0 0.0
      %4408 = vmatpush1.msra.mxu0 0.0
      %4409 = vmatprep.subr.mxu0 0.0
      %4410 = vmatpush1.msra.mxu0 0.0
      %4411 = vmatprep.subr.mxu0 0.0
      %4412 = vmatpush1.msra.mxu0 0.0
      %4413 = vmatprep.subr.mxu0 0.0
      %4414 = vmatpush1.msra.mxu0 0.0
      %4415 = vmatprep.subr.mxu0 0.0
      %4416 = vmatpush1.msra.mxu0 0.0
      %4417 = vmatprep.subr.mxu0 0.0
      %4418 = vmatpush1.msra.mxu0 0.0
      %4419 = vmatprep.subr.mxu0 0.0
      %4420 = vmatpush1.msra.mxu0 0.0
      %4421 = vmatprep.subr.mxu0 0.0
      %4422 = vmatpush1.msra.mxu0 0.0
      %4423 = vmatprep.subr.mxu0 0.0
      %4424 = vmatpush1.msra.mxu0 0.0
      %4425 = vmatprep.subr.mxu0 0.0
      %4426 = vmatpush1.msra.mxu0 0.0
      %4427 = vmatprep.subr.mxu0 0.0
      %4428 = vmatpush1.msra.mxu0 0.0
      %4429 = vmatprep.subr.mxu0 0.0
      %4430 = vmatpush1.msra.mxu0 0.0
      %4431 = vmatprep.subr.mxu0 0.0
      %4432 = vmatpush1.msra.mxu0 0.0
      %4433 = vmatprep.subr.mxu0 0.0
      %4434 = vmatpush1.msra.mxu0 0.0
      %4435 = vmatprep.subr.mxu0 0.0
      %4436 = vmatpush1.msra.mxu0 0.0
      %4437 = vmatprep.subr.mxu0 0.0
      %4438 = vmatpush1.msra.mxu0 0.0
      %4439 = vmatprep.subr.mxu0 0.0
      %4440 = vmatpush1.msra.mxu0 0.0
      %4441 = vmatprep.subr.mxu0 0.0
      %4442 = vmatpush1.msra.mxu0 0.0
      %4443 = vmatprep.subr.mxu0 0.0
      %4444 = vmatpush1.msra.mxu0 0.0
      %4445 = vmatprep.subr.mxu0 0.0
      %4446 = vmatpush1.msra.mxu0 0.0
      %4447 = vmatprep.subr.mxu0 0.0
      %4448 = vmatpush1.msra.mxu0 0.0
      %4449 = vmatprep.subr.mxu0 0.0
      %4450 = vmatpush1.msra.mxu0 0.0
      %4451 = vmatprep.subr.mxu0 0.0
      %4452 = vmatpush1.msra.mxu0 0.0
      %4453 = vmatprep.subr.mxu0 0.0
      %4454 = vmatpush1.msra.mxu0 0.0
      %4455 = vmatprep.subr.mxu0 0.0
      %4456 = vmatpush1.msra.mxu0 0.0
      %4457 = vmatprep.subr.mxu0 0.0
      %4458 = vmatpush1.msra.mxu0 0.0
      %4459 = vmatprep.mubr.f32.mxu0 0.0
      %v4460 = vand.u32 %v4136, 4294901760
      %v4461 = vsub.f32 %v4136, %v4460
      %v4462 = vand.u32 %v4461, 4294901760
      %4463 = vmatmul.mubr.f32.gmra.mrb[0].mxu0 %v4462
      %v4464 = vpop.f32.mrb[0].mxu0
      %v4465 = vadd.f32 %v4387, %v4464
      %v4466 = vpop.f32.mrb[0].mxu0
      %v4467 = vadd.f32 %v4389, %v4466
      %4468 = vdwg.mxu0
      %v4469 = vand.u32 %v4128, 4294901760
      %v4470 = vsub.f32 %v4128, %v4469
      %v4471 = vand.u32 %v4470, 4294901760
      %4472 = vmatprep.subr.mxu0 %v4471
      %v4473 = vand.u32 %v4127, 4294901760
      %v4474 = vsub.f32 %v4127, %v4473
      %v4475 = vand.u32 %v4474, 4294901760
      %4476 = vmatpush1.msra.mxu0 %v4475
      %v4477 = vand.u32 %v4130, 4294901760
      %v4478 = vsub.f32 %v4130, %v4477
      %v4479 = vand.u32 %v4478, 4294901760
      %4480 = vmatprep.subr.mxu0 %v4479
      %v4481 = vand.u32 %v4129, 4294901760
      %v4482 = vsub.f32 %v4129, %v4481
      %v4483 = vand.u32 %v4482, 4294901760
      %4484 = vmatpush1.msra.mxu0 %v4483
      %4485 = vmatprep.subr.mxu0 0.0
      %4486 = vmatpush1.msra.mxu0 0.0
      %4487 = vmatprep.subr.mxu0 0.0
      %4488 = vmatpush1.msra.mxu0 0.0
      %4489 = vmatprep.subr.mxu0 0.0
      %4490 = vmatpush1.msra.mxu0 0.0
      %4491 = vmatprep.subr.mxu0 0.0
      %4492 = vmatpush1.msra.mxu0 0.0
      %4493 = vmatprep.subr.mxu0 0.0
      %4494 = vmatpush1.msra.mxu0 0.0
      %4495 = vmatprep.subr.mxu0 0.0
      %4496 = vmatpush1.msra.mxu0 0.0
      %4497 = vmatprep.subr.mxu0 0.0
      %4498 = vmatpush1.msra.mxu0 0.0
      %4499 = vmatprep.subr.mxu0 0.0
      %4500 = vmatpush1.msra.mxu0 0.0
      %4501 = vmatprep.subr.mxu0 0.0
      %4502 = vmatpush1.msra.mxu0 0.0
      %4503 = vmatprep.subr.mxu0 0.0
      %4504 = vmatpush1.msra.mxu0 0.0
      %4505 = vmatprep.subr.mxu0 0.0
      %4506 = vmatpush1.msra.mxu0 0.0
      %4507 = vmatprep.subr.mxu0 0.0
      %4508 = vmatpush1.msra.mxu0 0.0
      %4509 = vmatprep.subr.mxu0 0.0
      %4510 = vmatpush1.msra.mxu0 0.0
      %4511 = vmatprep.subr.mxu0 0.0
      %4512 = vmatpush1.msra.mxu0 0.0
      %4513 = vmatprep.subr.mxu0 0.0
      %4514 = vmatpush1.msra.mxu0 0.0
      %4515 = vmatprep.subr.mxu0 0.0
      %4516 = vmatpush1.msra.mxu0 0.0
      %4517 = vmatprep.subr.mxu0 0.0
      %4518 = vmatpush1.msra.mxu0 0.0
      %4519 = vmatprep.subr.mxu0 0.0
      %4520 = vmatpush1.msra.mxu0 0.0
      %4521 = vmatprep.subr.mxu0 0.0
      %4522 = vmatpush1.msra.mxu0 0.0
      %4523 = vmatprep.subr.mxu0 0.0
      %4524 = vmatpush1.msra.mxu0 0.0
      %4525 = vmatprep.subr.mxu0 0.0
      %4526 = vmatpush1.msra.mxu0 0.0
      %4527 = vmatprep.subr.mxu0 0.0
      %4528 = vmatpush1.msra.mxu0 0.0
      %4529 = vmatprep.subr.mxu0 0.0
      %4530 = vmatpush1.msra.mxu0 0.0
      %4531 = vmatprep.subr.mxu0 0.0
      %4532 = vmatpush1.msra.mxu0 0.0
      %4533 = vmatprep.subr.mxu0 0.0
      %4534 = vmatpush1.msra.mxu0 0.0
      %4535 = vmatprep.subr.mxu0 0.0
      %4536 = vmatpush1.msra.mxu0 0.0
      %4537 = vmatprep.subr.mxu0 0.0
      %4538 = vmatpush1.msra.mxu0 0.0
      %4539 = vmatprep.subr.mxu0 0.0
      %4540 = vmatpush1.msra.mxu0 0.0
      %4541 = vmatprep.subr.mxu0 0.0
      %4542 = vmatpush1.msra.mxu0 0.0
      %4543 = vmatprep.subr.mxu0 0.0
      %4544 = vmatpush1.msra.mxu0 0.0
      %4545 = vmatprep.mubr.f32.mxu0 0.0
      %v4546 = vand.u32 %v4136, 4294901760
      %4547 = vmatmul.mubr.f32.gmra.mrb[0].mxu0 %v4546
      %v4548 = vpop.f32.mrb[0].mxu0
      %v4549 = vadd.f32 %v4465, %v4548
      %v4550 = vpop.f32.mrb[0].mxu0
      %v4551 = vadd.f32 %v4467, %v4550
      %4552 = vdwg.mxu0
      %v4553 = vand.u32 %v4128, 4294901760
      %4554 = vmatprep.subr.mxu0 %v4553
      %v4555 = vand.u32 %v4127, 4294901760
      %4556 = vmatpush1.msra.mxu0 %v4555
      %v4557 = vand.u32 %v4130, 4294901760
      %4558 = vmatprep.subr.mxu0 %v4557
      %v4559 = vand.u32 %v4129, 4294901760
      %4560 = vmatpush1.msra.mxu0 %v4559
      %4561 = vmatprep.subr.mxu0 0.0
      %4562 = vmatpush1.msra.mxu0 0.0
      %4563 = vmatprep.subr.mxu0 0.0
      %4564 = vmatpush1.msra.mxu0 0.0
      %4565 = vmatprep.subr.mxu0 0.0
      %4566 = vmatpush1.msra.mxu0 0.0
      %4567 = vmatprep.subr.mxu0 0.0
      %4568 = vmatpush1.msra.mxu0 0.0
      %4569 = vmatprep.subr.mxu0 0.0
      %4570 = vmatpush1.msra.mxu0 0.0
      %4571 = vmatprep.subr.mxu0 0.0
      %4572 = vmatpush1.msra.mxu0 0.0
      %4573 = vmatprep.subr.mxu0 0.0
      %4574 = vmatpush1.msra.mxu0 0.0
      %4575 = vmatprep.subr.mxu0 0.0
      %4576 = vmatpush1.msra.mxu0 0.0
      %4577 = vmatprep.subr.mxu0 0.0
      %4578 = vmatpush1.msra.mxu0 0.0
      %4579 = vmatprep.subr.mxu0 0.0
      %4580 = vmatpush1.msra.mxu0 0.0
      %4581 = vmatprep.subr.mxu0 0.0
      %4582 = vmatpush1.msra.mxu0 0.0
      %4583 = vmatprep.subr.mxu0 0.0
      %4584 = vmatpush1.msra.mxu0 0.0
      %4585 = vmatprep.subr.mxu0 0.0
      %4586 = vmatpush1.msra.mxu0 0.0
      %4587 = vmatprep.subr.mxu0 0.0
      %4588 = vmatpush1.msra.mxu0 0.0
      %4589 = vmatprep.subr.mxu0 0.0
      %4590 = vmatpush1.msra.mxu0 0.0
      %4591 = vmatprep.subr.mxu0 0.0
      %4592 = vmatpush1.msra.mxu0 0.0
      %4593 = vmatprep.subr.mxu0 0.0
      %4594 = vmatpush1.msra.mxu0 0.0
      %4595 = vmatprep.subr.mxu0 0.0
      %4596 = vmatpush1.msra.mxu0 0.0
      %4597 = vmatprep.subr.mxu0 0.0
      %4598 = vmatpush1.msra.mxu0 0.0
      %4599 = vmatprep.subr.mxu0 0.0
      %4600 = vmatpush1.msra.mxu0 0.0
      %4601 = vmatprep.subr.mxu0 0.0
      %4602 = vmatpush1.msra.mxu0 0.0
      %4603 = vmatprep.subr.mxu0 0.0
      %4604 = vmatpush1.msra.mxu0 0.0
      %4605 = vmatprep.subr.mxu0 0.0
      %4606 = vmatpush1.msra.mxu0 0.0
      %4607 = vmatprep.subr.mxu0 0.0
      %4608 = vmatpush1.msra.mxu0 0.0
      %4609 = vmatprep.subr.mxu0 0.0
      %4610 = vmatpush1.msra.mxu0 0.0
      %4611 = vmatprep.subr.mxu0 0.0
      %4612 = vmatpush1.msra.mxu0 0.0
      %4613 = vmatprep.subr.mxu0 0.0
      %4614 = vmatpush1.msra.mxu0 0.0
      %4615 = vmatprep.subr.mxu0 0.0
      %4616 = vmatpush1.msra.mxu0 0.0
      %4617 = vmatprep.subr.mxu0 0.0
      %4618 = vmatpush1.msra.mxu0 0.0
      %4619 = vmatprep.subr.mxu0 0.0
      %4620 = vmatpush1.msra.mxu0 0.0
      %4621 = vmatprep.mubr.f32.mxu0 0.0
      %v4622 = vand.u32 %v4136, 4294901760
      %4623 = vmatmul.mubr.f32.gmra.mrb[0].mxu0 %v4622
      %v4624 = vpop.f32.mrb[0].mxu0
      %v4625 = vadd.f32 %v4549, %v4624
      %v4626 = vpop.f32.mrb[0].mxu0
      %v4627 = vadd.f32 %v4551, %v4626
      %4628 = vdwg.mxu0
      %4635 = vrot.lane.b32.xlu0 %v4092, 15
      %v4636 = vpop.permute.xlu0 %4635
      %4637 = vrot.lane.b32.xlu0 %v4093, 15
      %v4638 = vpop.permute.xlu0 %4637
      %4639 = vrot.lane.b32.xlu0 %v4094, 15
      %v4640 = vpop.permute.xlu0 %4639
      %4641 = vrot.lane.b32.xlu0 %v4095, 15
      %v4642 = vpop.permute.xlu0 %4641
      %4643 = vrot.lane.b32.xlu0 %v4096, 15
      %v4644 = vpop.permute.xlu0 %4643
      %4645 = vrot.lane.b32.xlu0 %v4097, 15
      %v4646 = vpop.permute.xlu0 %4645
      %vm4647 = vcmask 121856
      %v4648 = vsel %vm4647, %v4636, %v4638
      %v4649 = vsel %vm4647, %v4638, %v4640
      %v4650 = vsel %vm4647, %v4642, %v4644
      %v4651 = vsel %vm4647, %v4644, %v4646
      %v4657 = vsel %vm944, %v4099, 0
      %v4659 = vand.u32 %v4649, 4294901760
      %4660 = vmatprep.subr.mxu0 %v4659
      %v4661 = vand.u32 %v4648, 4294901760
      %4662 = vmatpush1.msra.mxu0 %v4661
      %v4663 = vand.u32 %v4651, 4294901760
      %4664 = vmatprep.subr.mxu0 %v4663
      %v4665 = vand.u32 %v4650, 4294901760
      %4666 = vmatpush1.msra.mxu0 %v4665
      %4667 = vmatprep.subr.mxu0 0.0
      %4668 = vmatpush1.msra.mxu0 0.0
      %4669 = vmatprep.subr.mxu0 0.0
      %4670 = vmatpush1.msra.mxu0 0.0
      %4671 = vmatprep.subr.mxu0 0.0
      %4672 = vmatpush1.msra.mxu0 0.0
      %4673 = vmatprep.subr.mxu0 0.0
      %4674 = vmatpush1.msra.mxu0 0.0
      %4675 = vmatprep.subr.mxu0 0.0
      %4676 = vmatpush1.msra.mxu0 0.0
      %4677 = vmatprep.subr.mxu0 0.0
      %4678 = vmatpush1.msra.mxu0 0.0
      %4679 = vmatprep.subr.mxu0 0.0
      %4680 = vmatpush1.msra.mxu0 0.0
      %4681 = vmatprep.subr.mxu0 0.0
      %4682 = vmatpush1.msra.mxu0 0.0
      %4683 = vmatprep.subr.mxu0 0.0
      %4684 = vmatpush1.msra.mxu0 0.0
      %4685 = vmatprep.subr.mxu0 0.0
      %4686 = vmatpush1.msra.mxu0 0.0
      %4687 = vmatprep.subr.mxu0 0.0
      %4688 = vmatpush1.msra.mxu0 0.0
      %4689 = vmatprep.subr.mxu0 0.0
      %4690 = vmatpush1.msra.mxu0 0.0
      %4691 = vmatprep.subr.mxu0 0.0
      %4692 = vmatpush1.msra.mxu0 0.0
      %4693 = vmatprep.subr.mxu0 0.0
      %4694 = vmatpush1.msra.mxu0 0.0
      %4695 = vmatprep.subr.mxu0 0.0
      %4696 = vmatpush1.msra.mxu0 0.0
      %4697 = vmatprep.subr.mxu0 0.0
      %4698 = vmatpush1.msra.mxu0 0.0
      %4699 = vmatprep.subr.mxu0 0.0
      %4700 = vmatpush1.msra.mxu0 0.0
      %4701 = vmatprep.subr.mxu0 0.0
      %4702 = vmatpush1.msra.mxu0 0.0
      %4703 = vmatprep.subr.mxu0 0.0
      %4704 = vmatpush1.msra.mxu0 0.0
      %4705 = vmatprep.subr.mxu0 0.0
      %4706 = vmatpush1.msra.mxu0 0.0
      %4707 = vmatprep.subr.mxu0 0.0
      %4708 = vmatpush1.msra.mxu0 0.0
      %4709 = vmatprep.subr.mxu0 0.0
      %4710 = vmatpush1.msra.mxu0 0.0
      %4711 = vmatprep.subr.mxu0 0.0
      %4712 = vmatpush1.msra.mxu0 0.0
      %4713 = vmatprep.subr.mxu0 0.0
      %4714 = vmatpush1.msra.mxu0 0.0
      %4715 = vmatprep.subr.mxu0 0.0
      %4716 = vmatpush1.msra.mxu0 0.0
      %4717 = vmatprep.subr.mxu0 0.0
      %4718 = vmatpush1.msra.mxu0 0.0
      %4719 = vmatprep.subr.mxu0 0.0
      %4720 = vmatpush1.msra.mxu0 0.0
      %4721 = vmatprep.subr.mxu0 0.0
      %4722 = vmatpush1.msra.mxu0 0.0
      %4723 = vmatprep.subr.mxu0 0.0
      %4724 = vmatpush1.msra.mxu0 0.0
      %4725 = vmatprep.subr.mxu0 0.0
      %4726 = vmatpush1.msra.mxu0 0.0
      %4727 = vmatprep.mubr.f32.mxu0 0.0
      %v4728 = vand.u32 %v4657, 4294901760
      %v4729 = vsub.f32 %v4657, %v4728
      %v4730 = vand.u32 %v4729, 4294901760
      %v4731 = vsub.f32 %v4729, %v4730
      %v4732 = vand.u32 %v4731, 4294901760
      %4733 = vmatmul.mubr.f32.gmra.mrb[0].mxu0 %v4732
      %v4734 = vpop.f32.mrb[0].mxu0
      %v4735 = vadd.f32 %v4625, %v4734
      %v4736 = vpop.f32.mrb[0].mxu0
      %v4737 = vadd.f32 %v4627, %v4736
      %4738 = vdwg.mxu0
      %v4739 = vand.u32 %v4649, 4294901760
      %v4740 = vsub.f32 %v4649, %v4739
      %v4741 = vand.u32 %v4740, 4294901760
      %v4742 = vsub.f32 %v4740, %v4741
      %v4743 = vand.u32 %v4742, 4294901760
      %4744 = vmatprep.subr.mxu0 %v4743
      %v4745 = vand.u32 %v4648, 4294901760
      %v4746 = vsub.f32 %v4648, %v4745
      %v4747 = vand.u32 %v4746, 4294901760
      %v4748 = vsub.f32 %v4746, %v4747
      %v4749 = vand.u32 %v4748, 4294901760
      %4750 = vmatpush1.msra.mxu0 %v4749
      %v4751 = vand.u32 %v4651, 4294901760
      %v4752 = vsub.f32 %v4651, %v4751
      %v4753 = vand.u32 %v4752, 4294901760
      %v4754 = vsub.f32 %v4752, %v4753
      %v4755 = vand.u32 %v4754, 4294901760
      %4756 = vmatprep.subr.mxu0 %v4755
      %v4757 = vand.u32 %v4650, 4294901760
      %v4758 = vsub.f32 %v4650, %v4757
      %v4759 = vand.u32 %v4758, 4294901760
      %v4760 = vsub.f32 %v4758, %v4759
      %v4761 = vand.u32 %v4760, 4294901760
      %4762 = vmatpush1.msra.mxu0 %v4761
      %4763 = vmatprep.subr.mxu0 0.0
      %4764 = vmatpush1.msra.mxu0 0.0
      %4765 = vmatprep.subr.mxu0 0.0
      %4766 = vmatpush1.msra.mxu0 0.0
      %4767 = vmatprep.subr.mxu0 0.0
      %4768 = vmatpush1.msra.mxu0 0.0
      %4769 = vmatprep.subr.mxu0 0.0
      %4770 = vmatpush1.msra.mxu0 0.0
      %4771 = vmatprep.subr.mxu0 0.0
      %4772 = vmatpush1.msra.mxu0 0.0
      %4773 = vmatprep.subr.mxu0 0.0
      %4774 = vmatpush1.msra.mxu0 0.0
      %4775 = vmatprep.subr.mxu0 0.0
      %4776 = vmatpush1.msra.mxu0 0.0
      %4777 = vmatprep.subr.mxu0 0.0
      %4778 = vmatpush1.msra.mxu0 0.0
      %4779 = vmatprep.subr.mxu0 0.0
      %4780 = vmatpush1.msra.mxu0 0.0
      %4781 = vmatprep.subr.mxu0 0.0
      %4782 = vmatpush1.msra.mxu0 0.0
      %4783 = vmatprep.subr.mxu0 0.0
      %4784 = vmatpush1.msra.mxu0 0.0
      %4785 = vmatprep.subr.mxu0 0.0
      %4786 = vmatpush1.msra.mxu0 0.0
      %4787 = vmatprep.subr.mxu0 0.0
      %4788 = vmatpush1.msra.mxu0 0.0
      %4789 = vmatprep.subr.mxu0 0.0
      %4790 = vmatpush1.msra.mxu0 0.0
      %4791 = vmatprep.subr.mxu0 0.0
      %4792 = vmatpush1.msra.mxu0 0.0
      %4793 = vmatprep.subr.mxu0 0.0
      %4794 = vmatpush1.msra.mxu0 0.0
      %4795 = vmatprep.subr.mxu0 0.0
      %4796 = vmatpush1.msra.mxu0 0.0
      %4797 = vmatprep.subr.mxu0 0.0
      %4798 = vmatpush1.msra.mxu0 0.0
      %4799 = vmatprep.subr.mxu0 0.0
      %4800 = vmatpush1.msra.mxu0 0.0
      %4801 = vmatprep.subr.mxu0 0.0
      %4802 = vmatpush1.msra.mxu0 0.0
      %4803 = vmatprep.subr.mxu0 0.0
      %4804 = vmatpush1.msra.mxu0 0.0
      %4805 = vmatprep.subr.mxu0 0.0
      %4806 = vmatpush1.msra.mxu0 0.0
      %4807 = vmatprep.subr.mxu0 0.0
      %4808 = vmatpush1.msra.mxu0 0.0
      %4809 = vmatprep.subr.mxu0 0.0
      %4810 = vmatpush1.msra.mxu0 0.0
      %4811 = vmatprep.subr.mxu0 0.0
      %4812 = vmatpush1.msra.mxu0 0.0
      %4813 = vmatprep.subr.mxu0 0.0
      %4814 = vmatpush1.msra.mxu0 0.0
      %4815 = vmatprep.subr.mxu0 0.0
      %4816 = vmatpush1.msra.mxu0 0.0
      %4817 = vmatprep.subr.mxu0 0.0
      %4818 = vmatpush1.msra.mxu0 0.0
      %4819 = vmatprep.subr.mxu0 0.0
      %4820 = vmatpush1.msra.mxu0 0.0
      %4821 = vmatprep.subr.mxu0 0.0
      %4822 = vmatpush1.msra.mxu0 0.0
      %4823 = vmatprep.mubr.f32.mxu0 0.0
      %v4824 = vand.u32 %v4657, 4294901760
      %4825 = vmatmul.mubr.f32.gmra.mrb[0].mxu0 %v4824
      %v4826 = vpop.f32.mrb[0].mxu0
      %v4827 = vadd.f32 %v4735, %v4826
      %v4828 = vpop.f32.mrb[0].mxu0
      %v4829 = vadd.f32 %v4737, %v4828
      %4830 = vdwg.mxu0
      %v4831 = vand.u32 %v4649, 4294901760
      %v4832 = vsub.f32 %v4649, %v4831
      %4833 = vmatprep.subr.mxu0 %v4832
      %v4834 = vand.u32 %v4648, 4294901760
      %v4835 = vsub.f32 %v4648, %v4834
      %4836 = vmatpush1.msra.mxu0 %v4835
      %v4837 = vand.u32 %v4651, 4294901760
      %v4838 = vsub.f32 %v4651, %v4837
      %4839 = vmatprep.subr.mxu0 %v4838
      %v4840 = vand.u32 %v4650, 4294901760
      %v4841 = vsub.f32 %v4650, %v4840
      %4842 = vmatpush1.msra.mxu0 %v4841
      %4843 = vmatprep.subr.mxu0 0.0
      %4844 = vmatpush1.msra.mxu0 0.0
      %4845 = vmatprep.subr.mxu0 0.0
      %4846 = vmatpush1.msra.mxu0 0.0
      %4847 = vmatprep.subr.mxu0 0.0
      %4848 = vmatpush1.msra.mxu0 0.0
      %4849 = vmatprep.subr.mxu0 0.0
      %4850 = vmatpush1.msra.mxu0 0.0
      %4851 = vmatprep.subr.mxu0 0.0
      %4852 = vmatpush1.msra.mxu0 0.0
      %4853 = vmatprep.subr.mxu0 0.0
      %4854 = vmatpush1.msra.mxu0 0.0
      %4855 = vmatprep.subr.mxu0 0.0
      %4856 = vmatpush1.msra.mxu0 0.0
      %4857 = vmatprep.subr.mxu0 0.0
      %4858 = vmatpush1.msra.mxu0 0.0
      %4859 = vmatprep.subr.mxu0 0.0
      %4860 = vmatpush1.msra.mxu0 0.0
      %4861 = vmatprep.subr.mxu0 0.0
      %4862 = vmatpush1.msra.mxu0 0.0
      %4863 = vmatprep.subr.mxu0 0.0
      %4864 = vmatpush1.msra.mxu0 0.0
      %4865 = vmatprep.subr.mxu0 0.0
      %4866 = vmatpush1.msra.mxu0 0.0
      %4867 = vmatprep.subr.mxu0 0.0
      %4868 = vmatpush1.msra.mxu0 0.0
      %4869 = vmatprep.subr.mxu0 0.0
      %4870 = vmatpush1.msra.mxu0 0.0
      %4871 = vmatprep.subr.mxu0 0.0
      %4872 = vmatpush1.msra.mxu0 0.0
      %4873 = vmatprep.subr.mxu0 0.0
      %4874 = vmatpush1.msra.mxu0 0.0
      %4875 = vmatprep.subr.mxu0 0.0
      %4876 = vmatpush1.msra.mxu0 0.0
      %4877 = vmatprep.subr.mxu0 0.0
      %4878 = vmatpush1.msra.mxu0 0.0
      %4879 = vmatprep.subr.mxu0 0.0
      %4880 = vmatpush1.msra.mxu0 0.0
      %4881 = vmatprep.subr.mxu0 0.0
      %4882 = vmatpush1.msra.mxu0 0.0
      %4883 = vmatprep.subr.mxu0 0.0
      %4884 = vmatpush1.msra.mxu0 0.0
      %4885 = vmatprep.subr.mxu0 0.0
      %4886 = vmatpush1.msra.mxu0 0.0
      %4887 = vmatprep.subr.mxu0 0.0
      %4888 = vmatpush1.msra.mxu0 0.0
      %4889 = vmatprep.subr.mxu0 0.0
      %4890 = vmatpush1.msra.mxu0 0.0
      %4891 = vmatprep.subr.mxu0 0.0
      %4892 = vmatpush1.msra.mxu0 0.0
      %4893 = vmatprep.subr.mxu0 0.0
      %4894 = vmatpush1.msra.mxu0 0.0
      %4895 = vmatprep.subr.mxu0 0.0
      %4896 = vmatpush1.msra.mxu0 0.0
      %4897 = vmatprep.subr.mxu0 0.0
      %4898 = vmatpush1.msra.mxu0 0.0
      %4899 = vmatprep.subr.mxu0 0.0
      %4900 = vmatpush1.msra.mxu0 0.0
      %4901 = vmatprep.subr.mxu0 0.0
      %4902 = vmatpush1.msra.mxu0 0.0
      %4903 = vmatprep.mubr.f32.mxu0 0.0
      %v4904 = vand.u32 %v4657, 4294901760
      %v4905 = vsub.f32 %v4657, %v4904
      %4906 = vmatmul.mubr.f32.gmra.mrb[0].mxu0 %v4905
      %v4907 = vpop.f32.mrb[0].mxu0
      %v4908 = vadd.f32 %v4827, %v4907
      %v4909 = vpop.f32.mrb[0].mxu0
      %v4910 = vadd.f32 %v4829, %v4909
      %4911 = vdwg.mxu0
      %v4912 = vand.u32 %v4649, 4294901760
      %4913 = vmatprep.subr.mxu0 %v4912
      %v4914 = vand.u32 %v4648, 4294901760
      %4915 = vmatpush1.msra.mxu0 %v4914
      %v4916 = vand.u32 %v4651, 4294901760
      %4917 = vmatprep.subr.mxu0 %v4916
      %v4918 = vand.u32 %v4650, 4294901760
      %4919 = vmatpush1.msra.mxu0 %v4918
      %4920 = vmatprep.subr.mxu0 0.0
      %4921 = vmatpush1.msra.mxu0 0.0
      %4922 = vmatprep.subr.mxu0 0.0
      %4923 = vmatpush1.msra.mxu0 0.0
      %4924 = vmatprep.subr.mxu0 0.0
      %4925 = vmatpush1.msra.mxu0 0.0
      %4926 = vmatprep.subr.mxu0 0.0
      %4927 = vmatpush1.msra.mxu0 0.0
      %4928 = vmatprep.subr.mxu0 0.0
      %4929 = vmatpush1.msra.mxu0 0.0
      %4930 = vmatprep.subr.mxu0 0.0
      %4931 = vmatpush1.msra.mxu0 0.0
      %4932 = vmatprep.subr.mxu0 0.0
      %4933 = vmatpush1.msra.mxu0 0.0
      %4934 = vmatprep.subr.mxu0 0.0
      %4935 = vmatpush1.msra.mxu0 0.0
      %4936 = vmatprep.subr.mxu0 0.0
      %4937 = vmatpush1.msra.mxu0 0.0
      %4938 = vmatprep.subr.mxu0 0.0
      %4939 = vmatpush1.msra.mxu0 0.0
      %4940 = vmatprep.subr.mxu0 0.0
      %4941 = vmatpush1.msra.mxu0 0.0
      %4942 = vmatprep.subr.mxu0 0.0
      %4943 = vmatpush1.msra.mxu0 0.0
      %4944 = vmatprep.subr.mxu0 0.0
      %4945 = vmatpush1.msra.mxu0 0.0
      %4946 = vmatprep.subr.mxu0 0.0
      %4947 = vmatpush1.msra.mxu0 0.0
      %4948 = vmatprep.subr.mxu0 0.0
      %4949 = vmatpush1.msra.mxu0 0.0
      %4950 = vmatprep.subr.mxu0 0.0
      %4951 = vmatpush1.msra.mxu0 0.0
      %4952 = vmatprep.subr.mxu0 0.0
      %4953 = vmatpush1.msra.mxu0 0.0
      %4954 = vmatprep.subr.mxu0 0.0
      %4955 = vmatpush1.msra.mxu0 0.0
      %4956 = vmatprep.subr.mxu0 0.0
      %4957 = vmatpush1.msra.mxu0 0.0
      %4958 = vmatprep.subr.mxu0 0.0
      %4959 = vmatpush1.msra.mxu0 0.0
      %4960 = vmatprep.subr.mxu0 0.0
      %4961 = vmatpush1.msra.mxu0 0.0
      %4962 = vmatprep.subr.mxu0 0.0
      %4963 = vmatpush1.msra.mxu0 0.0
      %4964 = vmatprep.subr.mxu0 0.0
      %4965 = vmatpush1.msra.mxu0 0.0
      %4966 = vmatprep.subr.mxu0 0.0
      %4967 = vmatpush1.msra.mxu0 0.0
      %4968 = vmatprep.subr.mxu0 0.0
      %4969 = vmatpush1.msra.mxu0 0.0
      %4970 = vmatprep.subr.mxu0 0.0
      %4971 = vmatpush1.msra.mxu0 0.0
      %4972 = vmatprep.subr.mxu0 0.0
      %4973 = vmatpush1.msra.mxu0 0.0
      %4974 = vmatprep.subr.mxu0 0.0
      %4975 = vmatpush1.msra.mxu0 0.0
      %4976 = vmatprep.subr.mxu0 0.0
      %4977 = vmatpush1.msra.mxu0 0.0
      %4978 = vmatprep.subr.mxu0 0.0
      %4979 = vmatpush1.msra.mxu0 0.0
      %4980 = vmatprep.mubr.f32.mxu0 0.0
      %v4981 = vand.u32 %v4657, 4294901760
      %v4982 = vsub.f32 %v4657, %v4981
      %v4983 = vand.u32 %v4982, 4294901760
      %4984 = vmatmul.mubr.f32.gmra.mrb[0].mxu0 %v4983
      %v4985 = vpop.f32.mrb[0].mxu0
      %v4986 = vadd.f32 %v4908, %v4985
      %v4987 = vpop.f32.mrb[0].mxu0
      %v4988 = vadd.f32 %v4910, %v4987
      %4989 = vdwg.mxu0
      %v4990 = vand.u32 %v4649, 4294901760
      %v4991 = vsub.f32 %v4649, %v4990
      %v4992 = vand.u32 %v4991, 4294901760
      %4993 = vmatprep.subr.mxu0 %v4992
      %v4994 = vand.u32 %v4648, 4294901760
      %v4995 = vsub.f32 %v4648, %v4994
      %v4996 = vand.u32 %v4995, 4294901760
      %4997 = vmatpush1.msra.mxu0 %v4996
      %v4998 = vand.u32 %v4651, 4294901760
      %v4999 = vsub.f32 %v4651, %v4998
      %v5000 = vand.u32 %v4999, 4294901760
      %5001 = vmatprep.subr.mxu0 %v5000
      %v5002 = vand.u32 %v4650, 4294901760
      %v5003 = vsub.f32 %v4650, %v5002
      %v5004 = vand.u32 %v5003, 4294901760
      %5005 = vmatpush1.msra.mxu0 %v5004
      %5006 = vmatprep.subr.mxu0 0.0
      %5007 = vmatpush1.msra.mxu0 0.0
      %5008 = vmatprep.subr.mxu0 0.0
      %5009 = vmatpush1.msra.mxu0 0.0
      %5010 = vmatprep.subr.mxu0 0.0
      %5011 = vmatpush1.msra.mxu0 0.0
      %5012 = vmatprep.subr.mxu0 0.0
      %5013 = vmatpush1.msra.mxu0 0.0
      %5014 = vmatprep.subr.mxu0 0.0
      %5015 = vmatpush1.msra.mxu0 0.0
      %5016 = vmatprep.subr.mxu0 0.0
      %5017 = vmatpush1.msra.mxu0 0.0
      %5018 = vmatprep.subr.mxu0 0.0
      %5019 = vmatpush1.msra.mxu0 0.0
      %5020 = vmatprep.subr.mxu0 0.0
      %5021 = vmatpush1.msra.mxu0 0.0
      %5022 = vmatprep.subr.mxu0 0.0
      %5023 = vmatpush1.msra.mxu0 0.0
      %5024 = vmatprep.subr.mxu0 0.0
      %5025 = vmatpush1.msra.mxu0 0.0
      %5026 = vmatprep.subr.mxu0 0.0
      %5027 = vmatpush1.msra.mxu0 0.0
      %5028 = vmatprep.subr.mxu0 0.0
      %5029 = vmatpush1.msra.mxu0 0.0
      %5030 = vmatprep.subr.mxu0 0.0
      %5031 = vmatpush1.msra.mxu0 0.0
      %5032 = vmatprep.subr.mxu0 0.0
      %5033 = vmatpush1.msra.mxu0 0.0
      %5034 = vmatprep.subr.mxu0 0.0
      %5035 = vmatpush1.msra.mxu0 0.0
      %5036 = vmatprep.subr.mxu0 0.0
      %5037 = vmatpush1.msra.mxu0 0.0
      %5038 = vmatprep.subr.mxu0 0.0
      %5039 = vmatpush1.msra.mxu0 0.0
      %5040 = vmatprep.subr.mxu0 0.0
      %5041 = vmatpush1.msra.mxu0 0.0
      %5042 = vmatprep.subr.mxu0 0.0
      %5043 = vmatpush1.msra.mxu0 0.0
      %5044 = vmatprep.subr.mxu0 0.0
      %5045 = vmatpush1.msra.mxu0 0.0
      %5046 = vmatprep.subr.mxu0 0.0
      %5047 = vmatpush1.msra.mxu0 0.0
      %5048 = vmatprep.subr.mxu0 0.0
      %5049 = vmatpush1.msra.mxu0 0.0
      %5050 = vmatprep.subr.mxu0 0.0
      %5051 = vmatpush1.msra.mxu0 0.0
      %5052 = vmatprep.subr.mxu0 0.0
      %5053 = vmatpush1.msra.mxu0 0.0
      %5054 = vmatprep.subr.mxu0 0.0
      %5055 = vmatpush1.msra.mxu0 0.0
      %5056 = vmatprep.subr.mxu0 0.0
      %5057 = vmatpush1.msra.mxu0 0.0
      %5058 = vmatprep.subr.mxu0 0.0
      %5059 = vmatpush1.msra.mxu0 0.0
      %5060 = vmatprep.subr.mxu0 0.0
      %5061 = vmatpush1.msra.mxu0 0.0
      %5062 = vmatprep.subr.mxu0 0.0
      %5063 = vmatpush1.msra.mxu0 0.0
      %5064 = vmatprep.subr.mxu0 0.0
      %5065 = vmatpush1.msra.mxu0 0.0
      %5066 = vmatprep.mubr.f32.mxu0 0.0
      %v5067 = vand.u32 %v4657, 4294901760
      %5068 = vmatmul.mubr.f32.gmra.mrb[0].mxu0 %v5067
      %v5069 = vpop.f32.mrb[0].mxu0
      %v5070 = vadd.f32 %v4986, %v5069
      %v5071 = vpop.f32.mrb[0].mxu0
      %v5072 = vadd.f32 %v4988, %v5071
      %5073 = vdwg.mxu0
      %v5074 = vand.u32 %v4649, 4294901760
      %5075 = vmatprep.subr.mxu0 %v5074
      %v5076 = vand.u32 %v4648, 4294901760
      %5077 = vmatpush1.msra.mxu0 %v5076
      %v5078 = vand.u32 %v4651, 4294901760
      %5079 = vmatprep.subr.mxu0 %v5078
      %v5080 = vand.u32 %v4650, 4294901760
      %5081 = vmatpush1.msra.mxu0 %v5080
      %5082 = vmatprep.subr.mxu0 0.0
      %5083 = vmatpush1.msra.mxu0 0.0
      %5084 = vmatprep.subr.mxu0 0.0
      %5085 = vmatpush1.msra.mxu0 0.0
      %5086 = vmatprep.subr.mxu0 0.0
      %5087 = vmatpush1.msra.mxu0 0.0
      %5088 = vmatprep.subr.mxu0 0.0
      %5089 = vmatpush1.msra.mxu0 0.0
      %5090 = vmatprep.subr.mxu0 0.0
      %5091 = vmatpush1.msra.mxu0 0.0
      %5092 = vmatprep.subr.mxu0 0.0
      %5093 = vmatpush1.msra.mxu0 0.0
      %5094 = vmatprep.subr.mxu0 0.0
      %5095 = vmatpush1.msra.mxu0 0.0
      %5096 = vmatprep.subr.mxu0 0.0
      %5097 = vmatpush1.msra.mxu0 0.0
      %5098 = vmatprep.subr.mxu0 0.0
      %5099 = vmatpush1.msra.mxu0 0.0
      %5100 = vmatprep.subr.mxu0 0.0
      %5101 = vmatpush1.msra.mxu0 0.0
      %5102 = vmatprep.subr.mxu0 0.0
      %5103 = vmatpush1.msra.mxu0 0.0
      %5104 = vmatprep.subr.mxu0 0.0
      %5105 = vmatpush1.msra.mxu0 0.0
      %5106 = vmatprep.subr.mxu0 0.0
      %5107 = vmatpush1.msra.mxu0 0.0
      %5108 = vmatprep.subr.mxu0 0.0
      %5109 = vmatpush1.msra.mxu0 0.0
      %5110 = vmatprep.subr.mxu0 0.0
      %5111 = vmatpush1.msra.mxu0 0.0
      %5112 = vmatprep.subr.mxu0 0.0
      %5113 = vmatpush1.msra.mxu0 0.0
      %5114 = vmatprep.subr.mxu0 0.0
      %5115 = vmatpush1.msra.mxu0 0.0
      %5116 = vmatprep.subr.mxu0 0.0
      %5117 = vmatpush1.msra.mxu0 0.0
      %5118 = vmatprep.subr.mxu0 0.0
      %5119 = vmatpush1.msra.mxu0 0.0
      %5120 = vmatprep.subr.mxu0 0.0
      %5121 = vmatpush1.msra.mxu0 0.0
      %5122 = vmatprep.subr.mxu0 0.0
      %5123 = vmatpush1.msra.mxu0 0.0
      %5124 = vmatprep.subr.mxu0 0.0
      %5125 = vmatpush1.msra.mxu0 0.0
      %5126 = vmatprep.subr.mxu0 0.0
      %5127 = vmatpush1.msra.mxu0 0.0
      %5128 = vmatprep.subr.mxu0 0.0
      %5129 = vmatpush1.msra.mxu0 0.0
      %5130 = vmatprep.subr.mxu0 0.0
      %5131 = vmatpush1.msra.mxu0 0.0
      %5132 = vmatprep.subr.mxu0 0.0
      %5133 = vmatpush1.msra.mxu0 0.0
      %5134 = vmatprep.subr.mxu0 0.0
      %5135 = vmatpush1.msra.mxu0 0.0
      %5136 = vmatprep.subr.mxu0 0.0
      %5137 = vmatpush1.msra.mxu0 0.0
      %5138 = vmatprep.subr.mxu0 0.0
      %5139 = vmatpush1.msra.mxu0 0.0
      %5140 = vmatprep.subr.mxu0 0.0
      %5141 = vmatpush1.msra.mxu0 0.0
      %5142 = vmatprep.mubr.f32.mxu0 0.0
      %v5143 = vand.u32 %v4657, 4294901760
      %5144 = vmatmul.mubr.f32.gmra.mrb[0].mxu0 %v5143
      %v5145 = vpop.f32.mrb[0].mxu0
      %v5146 = vadd.f32 %v5070, %v5145
      %v5147 = vpop.f32.mrb[0].mxu0
      %v5148 = vadd.f32 %v5072, %v5147
      %5149 = vdwg.mxu0
      %s5150 = scalar_lea.vmem %s6, 32
      %v5151 = vld [vmem:[%s5150] sm:$0xf]
      %5152 = vrot.lane.b32.xlu0 %v4100, 111
      %v5153 = vpop.permute.xlu0 %5152
      %5154 = vrot.lane.b32.xlu0 %v4101, 111
      %v5155 = vpop.permute.xlu0 %5154
      %5156 = vrot.lane.b32.xlu0 %v4102, 111
      %v5157 = vpop.permute.xlu0 %5156
      %5158 = vrot.lane.b32.xlu0 %v4103, 111
      %v5159 = vpop.permute.xlu0 %5158
      %5160 = vrot.lane.b32.xlu0 %v4104, 111
      %v5161 = vpop.permute.xlu0 %5160
      %5162 = vrot.lane.b32.xlu0 %v4105, 111
      %v5163 = vpop.permute.xlu0 %5162
      %vm5164 = vcmask 908288
      %v5165 = vsel %vm5164, %v5153, %v5155
      %v5166 = vsel %vm5164, %v5155, %v5157
      %v5167 = vsel %vm5164, %v5159, %v5161
      %v5168 = vsel %vm5164, %v5161, %v5163
      %v5174 = vsel %vm944, %v5151, 0
      %v5176 = vand.u32 %v5166, 4294901760
      %5177 = vmatprep.subr.mxu0 %v5176
      %v5178 = vand.u32 %v5165, 4294901760
      %5179 = vmatpush1.msra.mxu0 %v5178
      %v5180 = vand.u32 %v5168, 4294901760
      %5181 = vmatprep.subr.mxu0 %v5180
      %v5182 = vand.u32 %v5167, 4294901760
      %5183 = vmatpush1.msra.mxu0 %v5182
      %5184 = vmatprep.subr.mxu0 0.0
      %5185 = vmatpush1.msra.mxu0 0.0
      %5186 = vmatprep.subr.mxu0 0.0
      %5187 = vmatpush1.msra.mxu0 0.0
      %5188 = vmatprep.subr.mxu0 0.0
      %5189 = vmatpush1.msra.mxu0 0.0
      %5190 = vmatprep.subr.mxu0 0.0
      %5191 = vmatpush1.msra.mxu0 0.0
      %5192 = vmatprep.subr.mxu0 0.0
      %5193 = vmatpush1.msra.mxu0 0.0
      %5194 = vmatprep.subr.mxu0 0.0
      %5195 = vmatpush1.msra.mxu0 0.0
      %5196 = vmatprep.subr.mxu0 0.0
      %5197 = vmatpush1.msra.mxu0 0.0
      %5198 = vmatprep.subr.mxu0 0.0
      %5199 = vmatpush1.msra.mxu0 0.0
      %5200 = vmatprep.subr.mxu0 0.0
      %5201 = vmatpush1.msra.mxu0 0.0
      %5202 = vmatprep.subr.mxu0 0.0
      %5203 = vmatpush1.msra.mxu0 0.0
      %5204 = vmatprep.subr.mxu0 0.0
      %5205 = vmatpush1.msra.mxu0 0.0
      %5206 = vmatprep.subr.mxu0 0.0
      %5207 = vmatpush1.msra.mxu0 0.0
      %5208 = vmatprep.subr.mxu0 0.0
      %5209 = vmatpush1.msra.mxu0 0.0
      %5210 = vmatprep.subr.mxu0 0.0
      %5211 = vmatpush1.msra.mxu0 0.0
      %5212 = vmatprep.subr.mxu0 0.0
      %5213 = vmatpush1.msra.mxu0 0.0
      %5214 = vmatprep.subr.mxu0 0.0
      %5215 = vmatpush1.msra.mxu0 0.0
      %5216 = vmatprep.subr.mxu0 0.0
      %5217 = vmatpush1.msra.mxu0 0.0
      %5218 = vmatprep.subr.mxu0 0.0
      %5219 = vmatpush1.msra.mxu0 0.0
      %5220 = vmatprep.subr.mxu0 0.0
      %5221 = vmatpush1.msra.mxu0 0.0
      %5222 = vmatprep.subr.mxu0 0.0
      %5223 = vmatpush1.msra.mxu0 0.0
      %5224 = vmatprep.subr.mxu0 0.0
      %5225 = vmatpush1.msra.mxu0 0.0
      %5226 = vmatprep.subr.mxu0 0.0
      %5227 = vmatpush1.msra.mxu0 0.0
      %5228 = vmatprep.subr.mxu0 0.0
      %5229 = vmatpush1.msra.mxu0 0.0
      %5230 = vmatprep.subr.mxu0 0.0
      %5231 = vmatpush1.msra.mxu0 0.0
      %5232 = vmatprep.subr.mxu0 0.0
      %5233 = vmatpush1.msra.mxu0 0.0
      %5234 = vmatprep.subr.mxu0 0.0
      %5235 = vmatpush1.msra.mxu0 0.0
      %5236 = vmatprep.subr.mxu0 0.0
      %5237 = vmatpush1.msra.mxu0 0.0
      %5238 = vmatprep.subr.mxu0 0.0
      %5239 = vmatpush1.msra.mxu0 0.0
      %5240 = vmatprep.subr.mxu0 0.0
      %5241 = vmatpush1.msra.mxu0 0.0
      %5242 = vmatprep.subr.mxu0 0.0
      %5243 = vmatpush1.msra.mxu0 0.0
      %5244 = vmatprep.mubr.f32.mxu0 0.0
      %v5245 = vand.u32 %v5174, 4294901760
      %v5246 = vsub.f32 %v5174, %v5245
      %v5247 = vand.u32 %v5246, 4294901760
      %v5248 = vsub.f32 %v5246, %v5247
      %v5249 = vand.u32 %v5248, 4294901760
      %5250 = vmatmul.mubr.f32.gmra.mrb[0].mxu0 %v5249
      %v5251 = vpop.f32.mrb[0].mxu0
      %v5252 = vadd.f32 0.0, %v5251
      %v5253 = vpop.f32.mrb[0].mxu0
      %v5254 = vadd.f32 0.0, %v5253
      %5255 = vdwg.mxu0
      %v5256 = vand.u32 %v5166, 4294901760
      %v5257 = vsub.f32 %v5166, %v5256
      %v5258 = vand.u32 %v5257, 4294901760
      %v5259 = vsub.f32 %v5257, %v5258
      %v5260 = vand.u32 %v5259, 4294901760
      %5261 = vmatprep.subr.mxu0 %v5260
      %v5262 = vand.u32 %v5165, 4294901760
      %v5263 = vsub.f32 %v5165, %v5262
      %v5264 = vand.u32 %v5263, 4294901760
      %v5265 = vsub.f32 %v5263, %v5264
      %v5266 = vand.u32 %v5265, 4294901760
      %5267 = vmatpush1.msra.mxu0 %v5266
      %v5268 = vand.u32 %v5168, 4294901760
      %v5269 = vsub.f32 %v5168, %v5268
      %v5270 = vand.u32 %v5269, 4294901760
      %v5271 = vsub.f32 %v5269, %v5270
      %v5272 = vand.u32 %v5271, 4294901760
      %5273 = vmatprep.subr.mxu0 %v5272
      %v5274 = vand.u32 %v5167, 4294901760
      %v5275 = vsub.f32 %v5167, %v5274
      %v5276 = vand.u32 %v5275, 4294901760
      %v5277 = vsub.f32 %v5275, %v5276
      %v5278 = vand.u32 %v5277, 4294901760
      %5279 = vmatpush1.msra.mxu0 %v5278
      %5280 = vmatprep.subr.mxu0 0.0
      %5281 = vmatpush1.msra.mxu0 0.0
      %5282 = vmatprep.subr.mxu0 0.0
      %5283 = vmatpush1.msra.mxu0 0.0
      %5284 = vmatprep.subr.mxu0 0.0
      %5285 = vmatpush1.msra.mxu0 0.0
      %5286 = vmatprep.subr.mxu0 0.0
      %5287 = vmatpush1.msra.mxu0 0.0
      %5288 = vmatprep.subr.mxu0 0.0
      %5289 = vmatpush1.msra.mxu0 0.0
      %5290 = vmatprep.subr.mxu0 0.0
      %5291 = vmatpush1.msra.mxu0 0.0
      %5292 = vmatprep.subr.mxu0 0.0
      %5293 = vmatpush1.msra.mxu0 0.0
      %5294 = vmatprep.subr.mxu0 0.0
      %5295 = vmatpush1.msra.mxu0 0.0
      %5296 = vmatprep.subr.mxu0 0.0
      %5297 = vmatpush1.msra.mxu0 0.0
      %5298 = vmatprep.subr.mxu0 0.0
      %5299 = vmatpush1.msra.mxu0 0.0
      %5300 = vmatprep.subr.mxu0 0.0
      %5301 = vmatpush1.msra.mxu0 0.0
      %5302 = vmatprep.subr.mxu0 0.0
      %5303 = vmatpush1.msra.mxu0 0.0
      %5304 = vmatprep.subr.mxu0 0.0
      %5305 = vmatpush1.msra.mxu0 0.0
      %5306 = vmatprep.subr.mxu0 0.0
      %5307 = vmatpush1.msra.mxu0 0.0
      %5308 = vmatprep.subr.mxu0 0.0
      %5309 = vmatpush1.msra.mxu0 0.0
      %5310 = vmatprep.subr.mxu0 0.0
      %5311 = vmatpush1.msra.mxu0 0.0
      %5312 = vmatprep.subr.mxu0 0.0
      %5313 = vmatpush1.msra.mxu0 0.0
      %5314 = vmatprep.subr.mxu0 0.0
      %5315 = vmatpush1.msra.mxu0 0.0
      %5316 = vmatprep.subr.mxu0 0.0
      %5317 = vmatpush1.msra.mxu0 0.0
      %5318 = vmatprep.subr.mxu0 0.0
      %5319 = vmatpush1.msra.mxu0 0.0
      %5320 = vmatprep.subr.mxu0 0.0
      %5321 = vmatpush1.msra.mxu0 0.0
      %5322 = vmatprep.subr.mxu0 0.0
      %5323 = vmatpush1.msra.mxu0 0.0
      %5324 = vmatprep.subr.mxu0 0.0
      %5325 = vmatpush1.msra.mxu0 0.0
      %5326 = vmatprep.subr.mxu0 0.0
      %5327 = vmatpush1.msra.mxu0 0.0
      %5328 = vmatprep.subr.mxu0 0.0
      %5329 = vmatpush1.msra.mxu0 0.0
      %5330 = vmatprep.subr.mxu0 0.0
      %5331 = vmatpush1.msra.mxu0 0.0
      %5332 = vmatprep.subr.mxu0 0.0
      %5333 = vmatpush1.msra.mxu0 0.0
      %5334 = vmatprep.subr.mxu0 0.0
      %5335 = vmatpush1.msra.mxu0 0.0
      %5336 = vmatprep.subr.mxu0 0.0
      %5337 = vmatpush1.msra.mxu0 0.0
      %5338 = vmatprep.subr.mxu0 0.0
      %5339 = vmatpush1.msra.mxu0 0.0
      %5340 = vmatprep.mubr.f32.mxu0 0.0
      %v5341 = vand.u32 %v5174, 4294901760
      %5342 = vmatmul.mubr.f32.gmra.mrb[0].mxu0 %v5341
      %v5343 = vpop.f32.mrb[0].mxu0
      %v5344 = vadd.f32 %v5252, %v5343
      %v5345 = vpop.f32.mrb[0].mxu0
      %v5346 = vadd.f32 %v5254, %v5345
      %5347 = vdwg.mxu0
      %v5348 = vand.u32 %v5166, 4294901760
      %v5349 = vsub.f32 %v5166, %v5348
      %5350 = vmatprep.subr.mxu0 %v5349
      %v5351 = vand.u32 %v5165, 4294901760
      %v5352 = vsub.f32 %v5165, %v5351
      %5353 = vmatpush1.msra.mxu0 %v5352
      %v5354 = vand.u32 %v5168, 4294901760
      %v5355 = vsub.f32 %v5168, %v5354
      %5356 = vmatprep.subr.mxu0 %v5355
      %v5357 = vand.u32 %v5167, 4294901760
      %v5358 = vsub.f32 %v5167, %v5357
      %5359 = vmatpush1.msra.mxu0 %v5358
      %5360 = vmatprep.subr.mxu0 0.0
      %5361 = vmatpush1.msra.mxu0 0.0
      %5362 = vmatprep.subr.mxu0 0.0
      %5363 = vmatpush1.msra.mxu0 0.0
      %5364 = vmatprep.subr.mxu0 0.0
      %5365 = vmatpush1.msra.mxu0 0.0
      %5366 = vmatprep.subr.mxu0 0.0
      %5367 = vmatpush1.msra.mxu0 0.0
      %5368 = vmatprep.subr.mxu0 0.0
      %5369 = vmatpush1.msra.mxu0 0.0
      %5370 = vmatprep.subr.mxu0 0.0
      %5371 = vmatpush1.msra.mxu0 0.0
      %5372 = vmatprep.subr.mxu0 0.0
      %5373 = vmatpush1.msra.mxu0 0.0
      %5374 = vmatprep.subr.mxu0 0.0
      %5375 = vmatpush1.msra.mxu0 0.0
      %5376 = vmatprep.subr.mxu0 0.0
      %5377 = vmatpush1.msra.mxu0 0.0
      %5378 = vmatprep.subr.mxu0 0.0
      %5379 = vmatpush1.msra.mxu0 0.0
      %5380 = vmatprep.subr.mxu0 0.0
      %5381 = vmatpush1.msra.mxu0 0.0
      %5382 = vmatprep.subr.mxu0 0.0
      %5383 = vmatpush1.msra.mxu0 0.0
      %5384 = vmatprep.subr.mxu0 0.0
      %5385 = vmatpush1.msra.mxu0 0.0
      %5386 = vmatprep.subr.mxu0 0.0
      %5387 = vmatpush1.msra.mxu0 0.0
      %5388 = vmatprep.subr.mxu0 0.0
      %5389 = vmatpush1.msra.mxu0 0.0
      %5390 = vmatprep.subr.mxu0 0.0
      %5391 = vmatpush1.msra.mxu0 0.0
      %5392 = vmatprep.subr.mxu0 0.0
      %5393 = vmatpush1.msra.mxu0 0.0
      %5394 = vmatprep.subr.mxu0 0.0
      %5395 = vmatpush1.msra.mxu0 0.0
      %5396 = vmatprep.subr.mxu0 0.0
      %5397 = vmatpush1.msra.mxu0 0.0
      %5398 = vmatprep.subr.mxu0 0.0
      %5399 = vmatpush1.msra.mxu0 0.0
      %5400 = vmatprep.subr.mxu0 0.0
      %5401 = vmatpush1.msra.mxu0 0.0
      %5402 = vmatprep.subr.mxu0 0.0
      %5403 = vmatpush1.msra.mxu0 0.0
      %5404 = vmatprep.subr.mxu0 0.0
      %5405 = vmatpush1.msra.mxu0 0.0
      %5406 = vmatprep.subr.mxu0 0.0
      %5407 = vmatpush1.msra.mxu0 0.0
      %5408 = vmatprep.subr.mxu0 0.0
      %5409 = vmatpush1.msra.mxu0 0.0
      %5410 = vmatprep.subr.mxu0 0.0
      %5411 = vmatpush1.msra.mxu0 0.0
      %5412 = vmatprep.subr.mxu0 0.0
      %5413 = vmatpush1.msra.mxu0 0.0
      %5414 = vmatprep.subr.mxu0 0.0
      %5415 = vmatpush1.msra.mxu0 0.0
      %5416 = vmatprep.subr.mxu0 0.0
      %5417 = vmatpush1.msra.mxu0 0.0
      %5418 = vmatprep.subr.mxu0 0.0
      %5419 = vmatpush1.msra.mxu0 0.0
      %5420 = vmatprep.mubr.f32.mxu0 0.0
      %v5421 = vand.u32 %v5174, 4294901760
      %v5422 = vsub.f32 %v5174, %v5421
      %5423 = vmatmul.mubr.f32.gmra.mrb[0].mxu0 %v5422
      %v5424 = vpop.f32.mrb[0].mxu0
      %v5425 = vadd.f32 %v5344, %v5424
      %v5426 = vpop.f32.mrb[0].mxu0
      %v5427 = vadd.f32 %v5346, %v5426
      %5428 = vdwg.mxu0
      %v5429 = vand.u32 %v5166, 4294901760
      %5430 = vmatprep.subr.mxu0 %v5429
      %v5431 = vand.u32 %v5165, 4294901760
      %5432 = vmatpush1.msra.mxu0 %v5431
      %v5433 = vand.u32 %v5168, 4294901760
      %5434 = vmatprep.subr.mxu0 %v5433
      %v5435 = vand.u32 %v5167, 4294901760
      %5436 = vmatpush1.msra.mxu0 %v5435
      %5437 = vmatprep.subr.mxu0 0.0
      %5438 = vmatpush1.msra.mxu0 0.0
      %5439 = vmatprep.subr.mxu0 0.0
      %5440 = vmatpush1.msra.mxu0 0.0
      %5441 = vmatprep.subr.mxu0 0.0
      %5442 = vmatpush1.msra.mxu0 0.0
      %5443 = vmatprep.subr.mxu0 0.0
      %5444 = vmatpush1.msra.mxu0 0.0
      %5445 = vmatprep.subr.mxu0 0.0
      %5446 = vmatpush1.msra.mxu0 0.0
      %5447 = vmatprep.subr.mxu0 0.0
      %5448 = vmatpush1.msra.mxu0 0.0
      %5449 = vmatprep.subr.mxu0 0.0
      %5450 = vmatpush1.msra.mxu0 0.0
      %5451 = vmatprep.subr.mxu0 0.0
      %5452 = vmatpush1.msra.mxu0 0.0
      %5453 = vmatprep.subr.mxu0 0.0
      %5454 = vmatpush1.msra.mxu0 0.0
      %5455 = vmatprep.subr.mxu0 0.0
      %5456 = vmatpush1.msra.mxu0 0.0
      %5457 = vmatprep.subr.mxu0 0.0
      %5458 = vmatpush1.msra.mxu0 0.0
      %5459 = vmatprep.subr.mxu0 0.0
      %5460 = vmatpush1.msra.mxu0 0.0
      %5461 = vmatprep.subr.mxu0 0.0
      %5462 = vmatpush1.msra.mxu0 0.0
      %5463 = vmatprep.subr.mxu0 0.0
      %5464 = vmatpush1.msra.mxu0 0.0
      %5465 = vmatprep.subr.mxu0 0.0
      %5466 = vmatpush1.msra.mxu0 0.0
      %5467 = vmatprep.subr.mxu0 0.0
      %5468 = vmatpush1.msra.mxu0 0.0
      %5469 = vmatprep.subr.mxu0 0.0
      %5470 = vmatpush1.msra.mxu0 0.0
      %5471 = vmatprep.subr.mxu0 0.0
      %5472 = vmatpush1.msra.mxu0 0.0
      %5473 = vmatprep.subr.mxu0 0.0
      %5474 = vmatpush1.msra.mxu0 0.0
      %5475 = vmatprep.subr.mxu0 0.0
      %5476 = vmatpush1.msra.mxu0 0.0
      %5477 = vmatprep.subr.mxu0 0.0
      %5478 = vmatpush1.msra.mxu0 0.0
      %5479 = vmatprep.subr.mxu0 0.0
      %5480 = vmatpush1.msra.mxu0 0.0
      %5481 = vmatprep.subr.mxu0 0.0
      %5482 = vmatpush1.msra.mxu0 0.0
      %5483 = vmatprep.subr.mxu0 0.0
      %5484 = vmatpush1.msra.mxu0 0.0
      %5485 = vmatprep.subr.mxu0 0.0
      %5486 = vmatpush1.msra.mxu0 0.0
      %5487 = vmatprep.subr.mxu0 0.0
      %5488 = vmatpush1.msra.mxu0 0.0
      %5489 = vmatprep.subr.mxu0 0.0
      %5490 = vmatpush1.msra.mxu0 0.0
      %5491 = vmatprep.subr.mxu0 0.0
      %5492 = vmatpush1.msra.mxu0 0.0
      %5493 = vmatprep.subr.mxu0 0.0
      %5494 = vmatpush1.msra.mxu0 0.0
      %5495 = vmatprep.subr.mxu0 0.0
      %5496 = vmatpush1.msra.mxu0 0.0
      %5497 = vmatprep.mubr.f32.mxu0 0.0
      %v5498 = vand.u32 %v5174, 4294901760
      %v5499 = vsub.f32 %v5174, %v5498
      %v5500 = vand.u32 %v5499, 4294901760
      %5501 = vmatmul.mubr.f32.gmra.mrb[0].mxu0 %v5500
      %v5502 = vpop.f32.mrb[0].mxu0
      %v5503 = vadd.f32 %v5425, %v5502
      %v5504 = vpop.f32.mrb[0].mxu0
      %v5505 = vadd.f32 %v5427, %v5504
      %5506 = vdwg.mxu0
      %v5507 = vand.u32 %v5166, 4294901760
      %v5508 = vsub.f32 %v5166, %v5507
      %v5509 = vand.u32 %v5508, 4294901760
      %5510 = vmatprep.subr.mxu0 %v5509
      %v5511 = vand.u32 %v5165, 4294901760
      %v5512 = vsub.f32 %v5165, %v5511
      %v5513 = vand.u32 %v5512, 4294901760
      %5514 = vmatpush1.msra.mxu0 %v5513
      %v5515 = vand.u32 %v5168, 4294901760
      %v5516 = vsub.f32 %v5168, %v5515
      %v5517 = vand.u32 %v5516, 4294901760
      %5518 = vmatprep.subr.mxu0 %v5517
      %v5519 = vand.u32 %v5167, 4294901760
      %v5520 = vsub.f32 %v5167, %v5519
      %v5521 = vand.u32 %v5520, 4294901760
      %5522 = vmatpush1.msra.mxu0 %v5521
      %5523 = vmatprep.subr.mxu0 0.0
      %5524 = vmatpush1.msra.mxu0 0.0
      %5525 = vmatprep.subr.mxu0 0.0
      %5526 = vmatpush1.msra.mxu0 0.0
      %5527 = vmatprep.subr.mxu0 0.0
      %5528 = vmatpush1.msra.mxu0 0.0
      %5529 = vmatprep.subr.mxu0 0.0
      %5530 = vmatpush1.msra.mxu0 0.0
      %5531 = vmatprep.subr.mxu0 0.0
      %5532 = vmatpush1.msra.mxu0 0.0
      %5533 = vmatprep.subr.mxu0 0.0
      %5534 = vmatpush1.msra.mxu0 0.0
      %5535 = vmatprep.subr.mxu0 0.0
      %5536 = vmatpush1.msra.mxu0 0.0
      %5537 = vmatprep.subr.mxu0 0.0
      %5538 = vmatpush1.msra.mxu0 0.0
      %5539 = vmatprep.subr.mxu0 0.0
      %5540 = vmatpush1.msra.mxu0 0.0
      %5541 = vmatprep.subr.mxu0 0.0
      %5542 = vmatpush1.msra.mxu0 0.0
      %5543 = vmatprep.subr.mxu0 0.0
      %5544 = vmatpush1.msra.mxu0 0.0
      %5545 = vmatprep.subr.mxu0 0.0
      %5546 = vmatpush1.msra.mxu0 0.0
      %5547 = vmatprep.subr.mxu0 0.0
      %5548 = vmatpush1.msra.mxu0 0.0
      %5549 = vmatprep.subr.mxu0 0.0
      %5550 = vmatpush1.msra.mxu0 0.0
      %5551 = vmatprep.subr.mxu0 0.0
      %5552 = vmatpush1.msra.mxu0 0.0
      %5553 = vmatprep.subr.mxu0 0.0
      %5554 = vmatpush1.msra.mxu0 0.0
      %5555 = vmatprep.subr.mxu0 0.0
      %5556 = vmatpush1.msra.mxu0 0.0
      %5557 = vmatprep.subr.mxu0 0.0
      %5558 = vmatpush1.msra.mxu0 0.0
      %5559 = vmatprep.subr.mxu0 0.0
      %5560 = vmatpush1.msra.mxu0 0.0
      %5561 = vmatprep.subr.mxu0 0.0
      %5562 = vmatpush1.msra.mxu0 0.0
      %5563 = vmatprep.subr.mxu0 0.0
      %5564 = vmatpush1.msra.mxu0 0.0
      %5565 = vmatprep.subr.mxu0 0.0
      %5566 = vmatpush1.msra.mxu0 0.0
      %5567 = vmatprep.subr.mxu0 0.0
      %5568 = vmatpush1.msra.mxu0 0.0
      %5569 = vmatprep.subr.mxu0 0.0
      %5570 = vmatpush1.msra.mxu0 0.0
      %5571 = vmatprep.subr.mxu0 0.0
      %5572 = vmatpush1.msra.mxu0 0.0
      %5573 = vmatprep.subr.mxu0 0.0
      %5574 = vmatpush1.msra.mxu0 0.0
      %5575 = vmatprep.subr.mxu0 0.0
      %5576 = vmatpush1.msra.mxu0 0.0
      %5577 = vmatprep.subr.mxu0 0.0
      %5578 = vmatpush1.msra.mxu0 0.0
      %5579 = vmatprep.subr.mxu0 0.0
      %5580 = vmatpush1.msra.mxu0 0.0
      %5581 = vmatprep.subr.mxu0 0.0
      %5582 = vmatpush1.msra.mxu0 0.0
      %5583 = vmatprep.mubr.f32.mxu0 0.0
      %v5584 = vand.u32 %v5174, 4294901760
      %5585 = vmatmul.mubr.f32.gmra.mrb[0].mxu0 %v5584
      %v5586 = vpop.f32.mrb[0].mxu0
      %v5587 = vadd.f32 %v5503, %v5586
      %v5588 = vpop.f32.mrb[0].mxu0
      %v5589 = vadd.f32 %v5505, %v5588
      %5590 = vdwg.mxu0
      %v5591 = vand.u32 %v5166, 4294901760
      %5592 = vmatprep.subr.mxu0 %v5591
      %v5593 = vand.u32 %v5165, 4294901760
      %5594 = vmatpush1.msra.mxu0 %v5593
      %v5595 = vand.u32 %v5168, 4294901760
      %5596 = vmatprep.subr.mxu0 %v5595
      %v5597 = vand.u32 %v5167, 4294901760
      %5598 = vmatpush1.msra.mxu0 %v5597
      %5599 = vmatprep.subr.mxu0 0.0
      %5600 = vmatpush1.msra.mxu0 0.0
      %5601 = vmatprep.subr.mxu0 0.0
      %5602 = vmatpush1.msra.mxu0 0.0
      %5603 = vmatprep.subr.mxu0 0.0
      %5604 = vmatpush1.msra.mxu0 0.0
      %5605 = vmatprep.subr.mxu0 0.0
      %5606 = vmatpush1.msra.mxu0 0.0
      %5607 = vmatprep.subr.mxu0 0.0
      %5608 = vmatpush1.msra.mxu0 0.0
      %5609 = vmatprep.subr.mxu0 0.0
      %5610 = vmatpush1.msra.mxu0 0.0
      %5611 = vmatprep.subr.mxu0 0.0
      %5612 = vmatpush1.msra.mxu0 0.0
      %5613 = vmatprep.subr.mxu0 0.0
      %5614 = vmatpush1.msra.mxu0 0.0
      %5615 = vmatprep.subr.mxu0 0.0
      %5616 = vmatpush1.msra.mxu0 0.0
      %5617 = vmatprep.subr.mxu0 0.0
      %5618 = vmatpush1.msra.mxu0 0.0
      %5619 = vmatprep.subr.mxu0 0.0
      %5620 = vmatpush1.msra.mxu0 0.0
      %5621 = vmatprep.subr.mxu0 0.0
      %5622 = vmatpush1.msra.mxu0 0.0
      %5623 = vmatprep.subr.mxu0 0.0
      %5624 = vmatpush1.msra.mxu0 0.0
      %5625 = vmatprep.subr.mxu0 0.0
      %5626 = vmatpush1.msra.mxu0 0.0
      %5627 = vmatprep.subr.mxu0 0.0
      %5628 = vmatpush1.msra.mxu0 0.0
      %5629 = vmatprep.subr.mxu0 0.0
      %5630 = vmatpush1.msra.mxu0 0.0
      %5631 = vmatprep.subr.mxu0 0.0
      %5632 = vmatpush1.msra.mxu0 0.0
      %5633 = vmatprep.subr.mxu0 0.0
      %5634 = vmatpush1.msra.mxu0 0.0
      %5635 = vmatprep.subr.mxu0 0.0
      %5636 = vmatpush1.msra.mxu0 0.0
      %5637 = vmatprep.subr.mxu0 0.0
      %5638 = vmatpush1.msra.mxu0 0.0
      %5639 = vmatprep.subr.mxu0 0.0
      %5640 = vmatpush1.msra.mxu0 0.0
      %5641 = vmatprep.subr.mxu0 0.0
      %5642 = vmatpush1.msra.mxu0 0.0
      %5643 = vmatprep.subr.mxu0 0.0
      %5644 = vmatpush1.msra.mxu0 0.0
      %5645 = vmatprep.subr.mxu0 0.0
      %5646 = vmatpush1.msra.mxu0 0.0
      %5647 = vmatprep.subr.mxu0 0.0
      %5648 = vmatpush1.msra.mxu0 0.0
      %5649 = vmatprep.subr.mxu0 0.0
      %5650 = vmatpush1.msra.mxu0 0.0
      %5651 = vmatprep.subr.mxu0 0.0
      %5652 = vmatpush1.msra.mxu0 0.0
      %5653 = vmatprep.subr.mxu0 0.0
      %5654 = vmatpush1.msra.mxu0 0.0
      %5655 = vmatprep.subr.mxu0 0.0
      %5656 = vmatpush1.msra.mxu0 0.0
      %5657 = vmatprep.subr.mxu0 0.0
      %5658 = vmatpush1.msra.mxu0 0.0
      %5659 = vmatprep.mubr.f32.mxu0 0.0
      %v5660 = vand.u32 %v5174, 4294901760
      %5661 = vmatmul.mubr.f32.gmra.mrb[0].mxu0 %v5660
      %v5662 = vpop.f32.mrb[0].mxu0
      %v5663 = vadd.f32 %v5587, %v5662
      %v5664 = vpop.f32.mrb[0].mxu0
      %v5665 = vadd.f32 %v5589, %v5664
      %5666 = vdwg.mxu0
      %v5667 = vadd.f32 %v5146, %v5663
      %v5668 = vadd.f32 %v5148, %v5665
      %v5670 = vlaneseq
      %v5671 = vshrl.u32 %v5670, 7
      %v5672 = vsub.s32 0, %v5671
      %v5673 = vrot.slane %v917, %v5672
      %v5674 = vlaneseq
      %v5675 = vshrl.u32 %v5674, 7
      %v5676 = vsub.s32 1, %v5675
      %v5677 = vrot.slane %v917, %v5676
      %v5680 = vmul.f32 %v5667, %v5673
      %v5681 = vmul.f32 %v5668, %v5677
      %v5684 = vcombine.low %v5680, %v5681
      %v5686 = vadd.f32 %v4091, %v5684
      %5687 = vst [vmem:[#allocation3] sm:$0xff] %v5686
      %v5688 = vld [vmem:[#allocation3] sm:$0xff]
      %v5690 = vcombine.low %v5688, %v5688
      %5692 = vst [vmem:[%s305] sm:$0xf0] %v5690
      %5693 = vst [vmem:[%s305 + $0x8] sm:$0xf0] %v5688
      %p5694 = scmp.lt.s32.totalorder %s19, 1
      %s5695 = scalar_select %p5694, %s19, 1
      %s5696 = smul.addr %s5695, 2
      %s5697 = smul.addr %s5696, 8
      %s5698 = scalar_lea.vmem %s8, %s5697
      // Predicated region
      $region53: #{bottleneck_forward.5} parent=51 // pred_check
        %p5699 = pneg %p210
      $region54: #{bottleneck_forward.5} parent=51 // pred_check_branch
        %5701 = sbr.rel (%p5699) target = $region56
      $region55: #{bottleneck_forward.5} parent=51 // pred_region
        _
      $region56: #{bottleneck_forward.5} parent=51 // pred_fallthru
        _
    $region52: #{bottleneck_forward.5} parent=5 // pred_fallthru
      _
    %p5702 = scmp.le.s32.totalorder 2, %s14
    // Predicated region
    $region57: #{bottleneck_forward.5} parent=5 // pred_check
      %p5703 = pneg %p5702
    $region58: #{bottleneck_forward.5} parent=5 // pred_check_branch
      %5705 = sbr.rel (%p5703) target = $region60
    $region59: #{bottleneck_forward.5} parent=5 // pred_region
      %s5706 = ssub.s32 %s14, 2
      // Predicated region
      $region61: #{bottleneck_forward.5} parent=59 // pred_check
        %p5707 = pneg %p216
      $region62: #{bottleneck_forward.5} parent=59 // pred_check_branch
        %5709 = sbr.rel (%p5707) target = $region64
      $region63: #{bottleneck_forward.5} parent=59 // pred_region
        %p5710 = scmp.lt.s32.totalorder %s20, 1
        %s5711 = scalar_select %p5710, %s20, 1
        %s5712 = smul.addr %s5711, 2
        %s5713 = smul.addr %s5712, 8
        %s5714 = scalar_lea.vmem %s8, %s5713
      $region64: #{bottleneck_forward.5} parent=59 // pred_fallthru
        _
    $region60: #{bottleneck_forward.5} parent=5 // pred_fallthru
      _
  $region6: #{bottleneck_forward.5} parent=0 // loop_footer
    %s18 = sadd.s32 1, %s14
  $region7: #{bottleneck_forward.5} parent=0 // loop_footer_branch
    %13 = sbr.rel target = $region3
  $region8: #{bottleneck_forward.5} parent=0 // loop_exit
    _

</llo_original>
